<compile_context>
chip_gen: v7x
topology: tpu7x:2x2x1
jax: 0.10.0
libtpu: 0.0.40
codegen_flags: <defaults>
</compile_context>

<pallas_src>
import jax
import jax.numpy as jnp
from jax.experimental import pallas as pl
from jax.experimental.pallas import tpu as pltpu

# ---------------------------------------------------------------------------
# Geometry (fixed by the PyTorch module)
# ---------------------------------------------------------------------------
C_IN = 3           # laser channels
L_IN = 512         # laser length
C1 = 32            # conv1 out channels (k=5, s=2, p=1)  -> L1 = 255
C2 = 32            # conv2 out channels (k=3, s=2, p=1)  -> L2 = 128
L2 = 128
F_IN = C2 * L2     # 4096 flattened features into fc1
H1 = 256           # fc1 width
H2 = 128           # fc2 width
N_EXTRA = 4        # line_speed, angle_speed, distance, angle
PHASE_LEN = 130    # padded laser length 520 = 4 * 130 (stride-4 phase views)


# ---------------------------------------------------------------------------
# Fused Pallas kernel
# ---------------------------------------------------------------------------
def _actor_fused_kernel(phases_ref, extras_ref,
                        w1_ref, b1_ref, w2_ref, b2_ref,
                        wf1_hbm_ref, bf1_ref, w2a_ref, w2b_ref, bf2_ref,
                        wa_ref, ba_ref,
                        out_ref,
                        wf1_vmem, wf1_sem):
    """Whole ActorNet forward in one kernel invocation (no grid).

    phases_ref : (4*N, 3, 130) f32  stride-4 phase views of the zero-padded laser
                 (row r*N + n holds padded positions 4j + r of batch element n)
    extras_ref : (N, 4)        f32  [line_speed, angle_speed, distance, angle]
    w1_ref     : (5, 32, 3)    f32  conv1 weight, tap-major (w1[k,o,c] = torch[o,c,k])
    w2_ref     : (3, 32, 32)   f32  conv2 weight, tap-major
    wf1_hbm_ref: (4096, 256)  bf16  fc1 weight, left in HBM; DMA'd manually
    out_ref    : (N, 2)        f32  [sigmoid(actor1), tanh(actor2)]
    """
    n_batch = phases_ref.shape[0] // 4

    # Kick off the fc1-weight DMA first so the conv stage hides it.
    wf1_copy = pltpu.make_async_copy(wf1_hbm_ref, wf1_vmem, wf1_sem)
    wf1_copy.start()

    def dot_f32(a, b):
        return jnp.dot(a, b, preferred_element_type=jnp.float32)

    lane = jax.lax.broadcasted_iota(jnp.int32, (C1, L2), 1)
    zero_col = jnp.zeros((C1, 1), jnp.float32)

    # ---------------- conv stage (per batch element; N is small & static) ----
    y2_per_batch = []
    for n in range(n_batch):
        p0 = phases_ref[0 * n_batch + n]   # (3, 130): padded positions 4j + 0
        p1 = phases_ref[1 * n_batch + n]   #                            4j + 1
        p2 = phases_ref[2 * n_batch + n]   #                            4j + 2
        p3 = phases_ref[3 * n_batch + n]   #                            4j + 3

        # conv1 (k=5,s=2,p=1), even output positions t=2j, j=0..127 -> (32,128)
        e1 = (dot_f32(w1_ref[0], p0[:, 0:L2]) +
              dot_f32(w1_ref[1], p1[:, 0:L2]) +
              dot_f32(w1_ref[2], p2[:, 0:L2]) +
              dot_f32(w1_ref[3], p3[:, 0:L2]) +
              dot_f32(w1_ref[4], p0[:, 1:L2 + 1]) + b1_ref[...])
        e1 = jnp.maximum(e1, 0.0)

        # conv1, odd output positions t=2j+1, j=0..126 (col 127 = conv2 right pad)
        o1 = (dot_f32(w1_ref[0], p2[:, 0:L2]) +
              dot_f32(w1_ref[1], p3[:, 0:L2]) +
              dot_f32(w1_ref[2], p0[:, 1:L2 + 1]) +
              dot_f32(w1_ref[3], p1[:, 1:L2 + 1]) +
              dot_f32(w1_ref[4], p2[:, 1:L2 + 1]) + b1_ref[...])
        o1 = jnp.maximum(o1, 0.0)
        o1 = jnp.where(lane == L2 - 1, 0.0, o1)  # y1[255] doesn't exist -> zero pad
        # conv2 tap-0 operand: y1pad[2u] = [0, y1[1], y1[3], ..., y1[253]]
        o1_left = jnp.concatenate([zero_col, o1[:, :L2 - 1]], axis=1)

        # conv2 (k=3,s=2,p=1): y2[:,u] = W0@y1pad[2u] + W1@y1pad[2u+1] + W2@y1pad[2u+2]
        y2 = (dot_f32(w2_ref[0], o1_left) +
              dot_f32(w2_ref[1], e1) +
              dot_f32(w2_ref[2], o1) + b2_ref[...])
        y2_per_batch.append(jnp.maximum(y2, 0.0))           # (32, 128)

    # ---------------- fc1 ----------------------------------------------------
    # y2[co, u] is fc1 feature co*128+u == PyTorch's x.view(N,-1) order, so fc1
    # runs as 32 channel-blocked matmuls against contiguous 128-row bf16 slabs.
    wf1_copy.wait()
    acc = jnp.zeros((n_batch, H1), jnp.float32)
    for co in range(C2):
        rows = [y2_per_batch[n][co:co + 1, :] for n in range(n_batch)]
        x_co = rows[0] if n_batch == 1 else jnp.concatenate(rows, axis=0)  # (N, 128)
        w_co = wf1_vmem[co * L2:(co + 1) * L2, :]                          # (128, 256) bf16
        acc = acc + jnp.dot(x_co.astype(jnp.bfloat16), w_co,
                            preferred_element_type=jnp.float32)
    h1 = jnp.maximum(acc + bf1_ref[...], 0.0)                              # (N, 256)

    # ---------------- fc2 over concat([h1, extras]) as a split matmul --------
    h2 = jnp.maximum(dot_f32(h1, w2a_ref[...]) +
                     dot_f32(extras_ref[...], w2b_ref[...]) + bf2_ref[...], 0.0)

    # ---------------- actor heads: col 0 -> sigmoid, col 1 -> tanh -----------
    logits = dot_f32(h2, wa_ref[...]) + ba_ref[...]                        # (N, 2)
    col = jax.lax.broadcasted_iota(jnp.int32, logits.shape, 1)
    out_ref[...] = jnp.where(col == 0, jax.nn.sigmoid(logits), jnp.tanh(logits))


# ---------------------------------------------------------------------------
# Wrapper
# ---------------------------------------------------------------------------
def actor_net_forward(params, laser, line_speed, angle_speed, distance, angle):
    n = laser.shape[0]
    x = laser.astype(jnp.float32)                                     # (N, 3, 512) NCL
    # conv1's padding=1 on the left; pad the right so padded length is 4*130 and
    # the four stride-4 phase views are uniform (the extra zeros are never read).
    xp = jnp.pad(x, ((0, 0), (0, 0), (1, 4 * PHASE_LEN - L_IN - 1)))  # (N, 3, 520)
    phases = jnp.stack([xp[:, :, r::4] for r in range(4)], axis=0)    # (4, N, 3, 130)
    phases = phases.reshape(4 * n, C_IN, PHASE_LEN)
    extras = jnp.concatenate([line_speed, angle_speed, distance, angle],
                             axis=-1).astype(jnp.float32)             # (N, 4)

    def vmem():
        return pl.BlockSpec(memory_space=pltpu.MemorySpace.VMEM)

    in_specs = ([vmem()] * 6
                + [pl.BlockSpec(memory_space=pl.ANY)]   # w_fc1 stays in HBM; manual DMA
                + [vmem()] * 6)

    # TODO(synk): for large batch, grid over N with dimension_semantics=("parallel",)
    # and per-block phase/extras/out specs so v7x's two TensorCores split the work.
    out = pl.pallas_call(
        _actor_fused_kernel,
        out_shape=jax.ShapeDtypeStruct((n, 2), jnp.float32),
        in_specs=in_specs,
        out_specs=vmem(),
        scratch_shapes=[
            pltpu.VMEM((F_IN, H1), jnp.bfloat16),   # fc1-weight landing buffer
            pltpu.SemaphoreType.DMA,                # its DMA completion semaphore
        ],
    )(phases, extras,
      params["w_cv1"], params["b_cv1"], params["w_cv2"], params["b_cv2"],
      params["w_fc1"], params["b_fc1"], params["w_fc2a"], params["w_fc2b"],
      params["b_fc2"], params["w_actor"], params["b_actor"])
    return out, params["logstd"]


# ---------------------------------------------------------------------------
# Pure-JAX (XLA) reference of the same forward, for numerical validation
# ---------------------------------------------------------------------------
def actor_net_reference(params, laser, line_speed, angle_speed, distance, angle):
    x = laser.astype(jnp.float32)                                    # (N, 3, 512)
    w1 = jnp.transpose(params["w_cv1"], (1, 2, 0))                   # (32, 3, 5)  OIH
    w2 = jnp.transpose(params["w_cv2"], (1, 2, 0))                   # (32, 32, 3) OIH
    dn = ("NCH", "OIH", "NCH")
    y = jax.lax.conv_general_dilated(x, w1, (2,), [(1, 1)], dimension_numbers=dn)
    y = jax.nn.relu(y + params["b_cv1"].reshape(1, C1, 1))           # (N, 32, 255)
    y = jax.lax.conv_general_dilated(y, w2, (2,), [(1, 1)], dimension_numbers=dn)
    y = jax.nn.relu(y + params["b_cv2"].reshape(1, C2, 1))           # (N, 32, 128)
    xf = y.reshape(y.shape[0], -1)                                   # (N, 4096)  co*128+u
    h1 = jax.nn.relu(xf @ params["w_fc1"].astype(jnp.float32) + params["b_fc1"])
    ex = jnp.concatenate([line_speed, angle_speed, distance, angle],
                         axis=-1).astype(jnp.float32)
    h2 = jax.nn.relu(h1 @ params["w_fc2a"] + ex @ params["w_fc2b"] + params["b_fc2"])
    logits = h2 @ params["w_actor"] + params["b_actor"]
    out = jnp.concatenate([jax.nn.sigmoid(logits[:, :1]), jnp.tanh(logits[:, 1:])],
                          axis=-1)
    return out, params["logstd"]


# ---------------------------------------------------------------------------
# Deterministic synthetic parameters (shapes follow ActorNet.__init__, stored in
# kernel-friendly layouts; mapping to the PyTorch tensors is noted inline)
# ---------------------------------------------------------------------------
def init_params(key):
    ks = jax.random.split(key, 10)
    s = 0.05
    return {
        # conv weights tap-major: w_cv1[k, co, ci] == torch conv.weight[co, ci, k]
        "w_cv1": jax.random.normal(ks[0], (5, C1, C_IN), jnp.float32) * s,
        "b_cv1": jax.random.normal(ks[1], (C1, 1), jnp.float32) * s,
        "w_cv2": jax.random.normal(ks[2], (3, C2, C1), jnp.float32) * s,
        "b_cv2": jax.random.normal(ks[3], (C2, 1), jnp.float32) * s,
        # fc1 weight stored (in_features, out_features) == torch fc1.weight.T, in
        # bf16 (row order co*128 + u is exactly PyTorch's x.view(N,-1) order).
        "w_fc1": (jax.random.normal(ks[4], (F_IN, H1), jnp.float32) * s
                  ).astype(jnp.bfloat16),
        "b_fc1": jax.random.normal(ks[5], (1, H1), jnp.float32) * s,
        # fc2 weight pre-split: rows multiplying fc1 output vs the 4 scalar extras.
        "w_fc2a": jax.random.normal(ks[6], (H1, H2), jnp.float32) * s,
        "w_fc2b": jax.random.normal(ks[7], (N_EXTRA, H2), jnp.float32) * s,
        "b_fc2": jax.random.normal(ks[8], (1, H2), jnp.float32) * s,
        # actor1 (sigmoid head) in column 0, actor2 (tanh head) in column 1.
        "w_actor": jax.random.normal(ks[9], (H2, 2), jnp.float32) * s,
        "b_actor": jnp.zeros((1, 2), jnp.float32),
        "logstd": jnp.zeros((2,), jnp.float32),
    }


if __name__ == "__main__":
    key = jax.random.PRNGKey(0)
    kp, k1, k2, k3, k4, k5 = jax.random.split(key, 6)
    params = init_params(kp)

    N = 2
    laser = jax.random.normal(k1, (N, C_IN, L_IN), jnp.float32)   # (N, 3, 512) NCL
    line_speed = jax.random.normal(k2, (N, 1), jnp.float32)
    angle_speed = jax.random.normal(k3, (N, 1), jnp.float32)
    distance = jax.random.normal(k4, (N, 1), jnp.float32)
    angle = jax.random.normal(k5, (N, 1), jnp.float32)

    fwd = jax.jit(actor_net_forward)
    out, logstd = fwd(params, laser, line_speed, angle_speed, distance, angle)
    jax.block_until_ready((out, logstd))

    assert out.shape == (N, 2) and logstd.shape == (2,)
    assert bool(jnp.all((out[:, 0] >= 0.0) & (out[:, 0] <= 1.0)))   # sigmoid head
    assert bool(jnp.all((out[:, 1] >= -1.0) & (out[:, 1] <= 1.0)))  # tanh head

    # Validate against the pure-JAX reference (bf16 fc1 weight in both paths;
    # only the kernel's bf16 activation cast differs -> small tolerance).
    out_ref, logstd_ref = actor_net_reference(params, laser, line_speed,
                                              angle_speed, distance, angle)
    max_diff = float(jnp.max(jnp.abs(out - out_ref)))
    assert max_diff < 1e-2, f"kernel vs reference mismatch: max_diff={max_diff}"
    assert bool(jnp.all(logstd == logstd_ref))

    print("KERNEL_OK")
</pallas_src>

<mosaic_0001>
module attributes {stable_mosaic.version = 11 : i64} {
  func.func @_actor_fused_kernel(%arg0: memref<8x3x130xf32, #tpu.memory_space<vmem>>, %arg1: memref<2x4xf32, #tpu.memory_space<vmem>>, %arg2: memref<5x32x3xf32, #tpu.memory_space<vmem>>, %arg3: memref<32x1xf32, #tpu.memory_space<vmem>>, %arg4: memref<3x32x32xf32, #tpu.memory_space<vmem>>, %arg5: memref<32x1xf32, #tpu.memory_space<vmem>>, %arg6: memref<4096x256xbf16, #tpu.memory_space<any>>, %arg7: memref<1x256xf32, #tpu.memory_space<vmem>>, %arg8: memref<256x128xf32, #tpu.memory_space<vmem>>, %arg9: memref<4x128xf32, #tpu.memory_space<vmem>>, %arg10: memref<1x128xf32, #tpu.memory_space<vmem>>, %arg11: memref<128x2xf32, #tpu.memory_space<vmem>>, %arg12: memref<1x2xf32, #tpu.memory_space<vmem>>, %arg13: memref<2x2xf32, #tpu.memory_space<vmem>>, %arg14: memref<4096x256xbf16, #tpu.memory_space<vmem>>, %arg15: memref<!tpu.dma_semaphore, #tpu.memory_space<semaphore_mem>>) attributes {dimension_semantics = [], scalar_prefetch = 0 : i64, scratch_operands = 2 : i64, tpu.core_type = #tpu.core_type<tc>} {
    tpu.enqueue_dma source(%arg6 : memref<4096x256xbf16, #tpu.memory_space<any>>) target(%arg14 : memref<4096x256xbf16, #tpu.memory_space<vmem>>) target_semaphore(%arg15 : memref<!tpu.dma_semaphore, #tpu.memory_space<semaphore_mem>>)
    %0 = tpu.iota {dimensions = array<i32: 1>} : vector<32x128xi32>
    %cst = arith.constant 0.000000e+00 : f32
    %1 = vector.broadcast %cst : f32 to vector<32x1xf32>
    %c0 = arith.constant 0 : index
    %c0_0 = arith.constant 0 : index
    %c0_1 = arith.constant 0 : index
    %2 = vector.load %arg0[%c0, %c0_0, %c0_1] : memref<8x3x130xf32, #tpu.memory_space<vmem>>, vector<1x3x130xf32>
    %3 = vector.shape_cast %2 : vector<1x3x130xf32> to vector<3x130xf32>
    %c2 = arith.constant 2 : index
    %c0_2 = arith.constant 0 : index
    %c0_3 = arith.constant 0 : index
    %4 = vector.load %arg0[%c2, %c0_2, %c0_3] : memref<8x3x130xf32, #tpu.memory_space<vmem>>, vector<1x3x130xf32>
    %5 = vector.shape_cast %4 : vector<1x3x130xf32> to vector<3x130xf32>
    %c4 = arith.constant 4 : index
    %c0_4 = arith.constant 0 : index
    %c0_5 = arith.constant 0 : index
    %6 = vector.load %arg0[%c4, %c0_4, %c0_5] : memref<8x3x130xf32, #tpu.memory_space<vmem>>, vector<1x3x130xf32>
    %7 = vector.shape_cast %6 : vector<1x3x130xf32> to vector<3x130xf32>
    %c6 = arith.constant 6 : index
    %c0_6 = arith.constant 0 : index
    %c0_7 = arith.constant 0 : index
    %8 = vector.load %arg0[%c6, %c0_6, %c0_7] : memref<8x3x130xf32, #tpu.memory_space<vmem>>, vector<1x3x130xf32>
    %9 = vector.shape_cast %8 : vector<1x3x130xf32> to vector<3x130xf32>
    %c0_8 = arith.constant 0 : index
    %c0_9 = arith.constant 0 : index
    %c0_10 = arith.constant 0 : index
    %10 = vector.load %arg2[%c0_8, %c0_9, %c0_10] : memref<5x32x3xf32, #tpu.memory_space<vmem>>, vector<1x32x3xf32>
    %11 = vector.shape_cast %10 : vector<1x32x3xf32> to vector<32x3xf32>
    %12 = vector.extract_strided_slice %3 {offsets = [0, 0], sizes = [3, 128], strides = [1, 1]} : vector<3x130xf32> to vector<3x128xf32>
    %cst_11 = arith.constant dense<0.000000e+00> : vector<32x128xf32>
    %13 = tpu.matmul %11, %12, %cst_11 {dimension_numbers = #tpu.dot_dimension_numbers<[1], [0], [0], [1], [0, 0, 1, 1], [], []>} : vector<32x3xf32>, vector<3x128xf32>, vector<32x128xf32> -> vector<32x128xf32>
    %c1 = arith.constant 1 : index
    %c0_12 = arith.constant 0 : index
    %c0_13 = arith.constant 0 : index
    %14 = vector.load %arg2[%c1, %c0_12, %c0_13] : memref<5x32x3xf32, #tpu.memory_space<vmem>>, vector<1x32x3xf32>
    %15 = vector.shape_cast %14 : vector<1x32x3xf32> to vector<32x3xf32>
    %16 = vector.extract_strided_slice %5 {offsets = [0, 0], sizes = [3, 128], strides = [1, 1]} : vector<3x130xf32> to vector<3x128xf32>
    %cst_14 = arith.constant dense<0.000000e+00> : vector<32x128xf32>
    %17 = tpu.matmul %15, %16, %cst_14 {dimension_numbers = #tpu.dot_dimension_numbers<[1], [0], [0], [1], [0, 0, 1, 1], [], []>} : vector<32x3xf32>, vector<3x128xf32>, vector<32x128xf32> -> vector<32x128xf32>
    %18 = arith.addf %13, %17 : vector<32x128xf32>
    %c2_15 = arith.constant 2 : index
    %c0_16 = arith.constant 0 : index
    %c0_17 = arith.constant 0 : index
    %19 = vector.load %arg2[%c2_15, %c0_16, %c0_17] : memref<5x32x3xf32, #tpu.memory_space<vmem>>, vector<1x32x3xf32>
    %20 = vector.shape_cast %19 : vector<1x32x3xf32> to vector<32x3xf32>
    %21 = vector.extract_strided_slice %7 {offsets = [0, 0], sizes = [3, 128], strides = [1, 1]} : vector<3x130xf32> to vector<3x128xf32>
    %cst_18 = arith.constant dense<0.000000e+00> : vector<32x128xf32>
    %22 = tpu.matmul %20, %21, %cst_18 {dimension_numbers = #tpu.dot_dimension_numbers<[1], [0], [0], [1], [0, 0, 1, 1], [], []>} : vector<32x3xf32>, vector<3x128xf32>, vector<32x128xf32> -> vector<32x128xf32>
    %23 = arith.addf %18, %22 : vector<32x128xf32>
    %c3 = arith.constant 3 : index
    %c0_19 = arith.constant 0 : index
    %c0_20 = arith.constant 0 : index
    %24 = vector.load %arg2[%c3, %c0_19, %c0_20] : memref<5x32x3xf32, #tpu.memory_space<vmem>>, vector<1x32x3xf32>
    %25 = vector.shape_cast %24 : vector<1x32x3xf32> to vector<32x3xf32>
    %26 = vector.extract_strided_slice %9 {offsets = [0, 0], sizes = [3, 128], strides = [1, 1]} : vector<3x130xf32> to vector<3x128xf32>
    %cst_21 = arith.constant dense<0.000000e+00> : vector<32x128xf32>
    %27 = tpu.matmul %25, %26, %cst_21 {dimension_numbers = #tpu.dot_dimension_numbers<[1], [0], [0], [1], [0, 0, 1, 1], [], []>} : vector<32x3xf32>, vector<3x128xf32>, vector<32x128xf32> -> vector<32x128xf32>
    %28 = arith.addf %23, %27 : vector<32x128xf32>
    %c4_22 = arith.constant 4 : index
    %c0_23 = arith.constant 0 : index
    %c0_24 = arith.constant 0 : index
    %29 = vector.load %arg2[%c4_22, %c0_23, %c0_24] : memref<5x32x3xf32, #tpu.memory_space<vmem>>, vector<1x32x3xf32>
    %30 = vector.shape_cast %29 : vector<1x32x3xf32> to vector<32x3xf32>
    %31 = vector.extract_strided_slice %3 {offsets = [0, 1], sizes = [3, 128], strides = [1, 1]} : vector<3x130xf32> to vector<3x128xf32>
    %cst_25 = arith.constant dense<0.000000e+00> : vector<32x128xf32>
    %32 = tpu.matmul %30, %31, %cst_25 {dimension_numbers = #tpu.dot_dimension_numbers<[1], [0], [0], [1], [0, 0, 1, 1], [], []>} : vector<32x3xf32>, vector<3x128xf32>, vector<32x128xf32> -> vector<32x128xf32>
    %33 = arith.addf %28, %32 : vector<32x128xf32>
    %c0_26 = arith.constant 0 : index
    %c0_27 = arith.constant 0 : index
    %34 = vector.load %arg3[%c0_26, %c0_27] : memref<32x1xf32, #tpu.memory_space<vmem>>, vector<32x1xf32>
    %35 = vector.broadcast %34 : vector<32x1xf32> to vector<32x128xf32>
    %36 = arith.addf %33, %35 : vector<32x128xf32>
    %cst_28 = arith.constant 0.000000e+00 : f32
    %37 = vector.broadcast %cst_28 : f32 to vector<32x128xf32>
    %38 = arith.maximumf %36, %37 : vector<32x128xf32>
    %c0_29 = arith.constant 0 : index
    %c0_30 = arith.constant 0 : index
    %c0_31 = arith.constant 0 : index
    %39 = vector.load %arg2[%c0_29, %c0_30, %c0_31] : memref<5x32x3xf32, #tpu.memory_space<vmem>>, vector<1x32x3xf32>
    %40 = vector.shape_cast %39 : vector<1x32x3xf32> to vector<32x3xf32>
    %41 = vector.extract_strided_slice %7 {offsets = [0, 0], sizes = [3, 128], strides = [1, 1]} : vector<3x130xf32> to vector<3x128xf32>
    %cst_32 = arith.constant dense<0.000000e+00> : vector<32x128xf32>
    %42 = tpu.matmul %40, %41, %cst_32 {dimension_numbers = #tpu.dot_dimension_numbers<[1], [0], [0], [1], [0, 0, 1, 1], [], []>} : vector<32x3xf32>, vector<3x128xf32>, vector<32x128xf32> -> vector<32x128xf32>
    %c1_33 = arith.constant 1 : index
    %c0_34 = arith.constant 0 : index
    %c0_35 = arith.constant 0 : index
    %43 = vector.load %arg2[%c1_33, %c0_34, %c0_35] : memref<5x32x3xf32, #tpu.memory_space<vmem>>, vector<1x32x3xf32>
    %44 = vector.shape_cast %43 : vector<1x32x3xf32> to vector<32x3xf32>
    %45 = vector.extract_strided_slice %9 {offsets = [0, 0], sizes = [3, 128], strides = [1, 1]} : vector<3x130xf32> to vector<3x128xf32>
    %cst_36 = arith.constant dense<0.000000e+00> : vector<32x128xf32>
    %46 = tpu.matmul %44, %45, %cst_36 {dimension_numbers = #tpu.dot_dimension_numbers<[1], [0], [0], [1], [0, 0, 1, 1], [], []>} : vector<32x3xf32>, vector<3x128xf32>, vector<32x128xf32> -> vector<32x128xf32>
    %47 = arith.addf %42, %46 : vector<32x128xf32>
    %c2_37 = arith.constant 2 : index
    %c0_38 = arith.constant 0 : index
    %c0_39 = arith.constant 0 : index
    %48 = vector.load %arg2[%c2_37, %c0_38, %c0_39] : memref<5x32x3xf32, #tpu.memory_space<vmem>>, vector<1x32x3xf32>
    %49 = vector.shape_cast %48 : vector<1x32x3xf32> to vector<32x3xf32>
    %50 = vector.extract_strided_slice %3 {offsets = [0, 1], sizes = [3, 128], strides = [1, 1]} : vector<3x130xf32> to vector<3x128xf32>
    %cst_40 = arith.constant dense<0.000000e+00> : vector<32x128xf32>
    %51 = tpu.matmul %49, %50, %cst_40 {dimension_numbers = #tpu.dot_dimension_numbers<[1], [0], [0], [1], [0, 0, 1, 1], [], []>} : vector<32x3xf32>, vector<3x128xf32>, vector<32x128xf32> -> vector<32x128xf32>
    %52 = arith.addf %47, %51 : vector<32x128xf32>
    %c3_41 = arith.constant 3 : index
    %c0_42 = arith.constant 0 : index
    %c0_43 = arith.constant 0 : index
    %53 = vector.load %arg2[%c3_41, %c0_42, %c0_43] : memref<5x32x3xf32, #tpu.memory_space<vmem>>, vector<1x32x3xf32>
    %54 = vector.shape_cast %53 : vector<1x32x3xf32> to vector<32x3xf32>
    %55 = vector.extract_strided_slice %5 {offsets = [0, 1], sizes = [3, 128], strides = [1, 1]} : vector<3x130xf32> to vector<3x128xf32>
    %cst_44 = arith.constant dense<0.000000e+00> : vector<32x128xf32>
    %56 = tpu.matmul %54, %55, %cst_44 {dimension_numbers = #tpu.dot_dimension_numbers<[1], [0], [0], [1], [0, 0, 1, 1], [], []>} : vector<32x3xf32>, vector<3x128xf32>, vector<32x128xf32> -> vector<32x128xf32>
    %57 = arith.addf %52, %56 : vector<32x128xf32>
    %c4_45 = arith.constant 4 : index
    %c0_46 = arith.constant 0 : index
    %c0_47 = arith.constant 0 : index
    %58 = vector.load %arg2[%c4_45, %c0_46, %c0_47] : memref<5x32x3xf32, #tpu.memory_space<vmem>>, vector<1x32x3xf32>
    %59 = vector.shape_cast %58 : vector<1x32x3xf32> to vector<32x3xf32>
    %60 = vector.extract_strided_slice %7 {offsets = [0, 1], sizes = [3, 128], strides = [1, 1]} : vector<3x130xf32> to vector<3x128xf32>
    %cst_48 = arith.constant dense<0.000000e+00> : vector<32x128xf32>
    %61 = tpu.matmul %59, %60, %cst_48 {dimension_numbers = #tpu.dot_dimension_numbers<[1], [0], [0], [1], [0, 0, 1, 1], [], []>} : vector<32x3xf32>, vector<3x128xf32>, vector<32x128xf32> -> vector<32x128xf32>
    %62 = arith.addf %57, %61 : vector<32x128xf32>
    %c0_49 = arith.constant 0 : index
    %c0_50 = arith.constant 0 : index
    %63 = vector.load %arg3[%c0_49, %c0_50] : memref<32x1xf32, #tpu.memory_space<vmem>>, vector<32x1xf32>
    %64 = vector.broadcast %63 : vector<32x1xf32> to vector<32x128xf32>
    %65 = arith.addf %62, %64 : vector<32x128xf32>
    %cst_51 = arith.constant 0.000000e+00 : f32
    %66 = vector.broadcast %cst_51 : f32 to vector<32x128xf32>
    %67 = arith.maximumf %65, %66 : vector<32x128xf32>
    %c127_i32 = arith.constant 127 : i32
    %68 = vector.broadcast %c127_i32 : i32 to vector<32x128xi32>
    %69 = arith.cmpi eq, %0, %68 : vector<32x128xi32>
    %cst_52 = arith.constant 0.000000e+00 : f32
    %70 = vector.broadcast %cst_52 : f32 to vector<32x128xf32>
    %71 = arith.select %69, %70, %67 : vector<32x128xi1>, vector<32x128xf32>
    %72 = vector.extract_strided_slice %71 {offsets = [0, 0], sizes = [32, 127], strides = [1, 1]} : vector<32x128xf32> to vector<32x127xf32>
    %73 = tpu.concatenate %1, %72 in 1 : vector<32x1xf32>, vector<32x127xf32> -> vector<32x128xf32>
    %c0_53 = arith.constant 0 : index
    %c0_54 = arith.constant 0 : index
    %c0_55 = arith.constant 0 : index
    %74 = vector.load %arg4[%c0_53, %c0_54, %c0_55] : memref<3x32x32xf32, #tpu.memory_space<vmem>>, vector<1x32x32xf32>
    %75 = vector.shape_cast %74 : vector<1x32x32xf32> to vector<32x32xf32>
    %cst_56 = arith.constant dense<0.000000e+00> : vector<32x128xf32>
    %76 = tpu.matmul %75, %73, %cst_56 {dimension_numbers = #tpu.dot_dimension_numbers<[1], [0], [0], [1], [0, 0, 1, 1], [], []>} : vector<32x32xf32>, vector<32x128xf32>, vector<32x128xf32> -> vector<32x128xf32>
    %c1_57 = arith.constant 1 : index
    %c0_58 = arith.constant 0 : index
    %c0_59 = arith.constant 0 : index
    %77 = vector.load %arg4[%c1_57, %c0_58, %c0_59] : memref<3x32x32xf32, #tpu.memory_space<vmem>>, vector<1x32x32xf32>
    %78 = vector.shape_cast %77 : vector<1x32x32xf32> to vector<32x32xf32>
    %cst_60 = arith.constant dense<0.000000e+00> : vector<32x128xf32>
    %79 = tpu.matmul %78, %38, %cst_60 {dimension_numbers = #tpu.dot_dimension_numbers<[1], [0], [0], [1], [0, 0, 1, 1], [], []>} : vector<32x32xf32>, vector<32x128xf32>, vector<32x128xf32> -> vector<32x128xf32>
    %80 = arith.addf %76, %79 : vector<32x128xf32>
    %c2_61 = arith.constant 2 : index
    %c0_62 = arith.constant 0 : index
    %c0_63 = arith.constant 0 : index
    %81 = vector.load %arg4[%c2_61, %c0_62, %c0_63] : memref<3x32x32xf32, #tpu.memory_space<vmem>>, vector<1x32x32xf32>
    %82 = vector.shape_cast %81 : vector<1x32x32xf32> to vector<32x32xf32>
    %cst_64 = arith.constant dense<0.000000e+00> : vector<32x128xf32>
    %83 = tpu.matmul %82, %71, %cst_64 {dimension_numbers = #tpu.dot_dimension_numbers<[1], [0], [0], [1], [0, 0, 1, 1], [], []>} : vector<32x32xf32>, vector<32x128xf32>, vector<32x128xf32> -> vector<32x128xf32>
    %84 = arith.addf %80, %83 : vector<32x128xf32>
    %c0_65 = arith.constant 0 : index
    %c0_66 = arith.constant 0 : index
    %85 = vector.load %arg5[%c0_65, %c0_66] : memref<32x1xf32, #tpu.memory_space<vmem>>, vector<32x1xf32>
    %86 = vector.broadcast %85 : vector<32x1xf32> to vector<32x128xf32>
    %87 = arith.addf %84, %86 : vector<32x128xf32>
    %cst_67 = arith.constant 0.000000e+00 : f32
    %88 = vector.broadcast %cst_67 : f32 to vector<32x128xf32>
    %89 = arith.maximumf %87, %88 : vector<32x128xf32>
    %c1_68 = arith.constant 1 : index
    %c0_69 = arith.constant 0 : index
    %c0_70 = arith.constant 0 : index
    %90 = vector.load %arg0[%c1_68, %c0_69, %c0_70] : memref<8x3x130xf32, #tpu.memory_space<vmem>>, vector<1x3x130xf32>
    %91 = vector.shape_cast %90 : vector<1x3x130xf32> to vector<3x130xf32>
    %c3_71 = arith.constant 3 : index
    %c0_72 = arith.constant 0 : index
    %c0_73 = arith.constant 0 : index
    %92 = vector.load %arg0[%c3_71, %c0_72, %c0_73] : memref<8x3x130xf32, #tpu.memory_space<vmem>>, vector<1x3x130xf32>
    %93 = vector.shape_cast %92 : vector<1x3x130xf32> to vector<3x130xf32>
    %c5 = arith.constant 5 : index
    %c0_74 = arith.constant 0 : index
    %c0_75 = arith.constant 0 : index
    %94 = vector.load %arg0[%c5, %c0_74, %c0_75] : memref<8x3x130xf32, #tpu.memory_space<vmem>>, vector<1x3x130xf32>
    %95 = vector.shape_cast %94 : vector<1x3x130xf32> to vector<3x130xf32>
    %c7 = arith.constant 7 : index
    %c0_76 = arith.constant 0 : index
    %c0_77 = arith.constant 0 : index
    %96 = vector.load %arg0[%c7, %c0_76, %c0_77] : memref<8x3x130xf32, #tpu.memory_space<vmem>>, vector<1x3x130xf32>
    %97 = vector.shape_cast %96 : vector<1x3x130xf32> to vector<3x130xf32>
    %c0_78 = arith.constant 0 : index
    %c0_79 = arith.constant 0 : index
    %c0_80 = arith.constant 0 : index
    %98 = vector.load %arg2[%c0_78, %c0_79, %c0_80] : memref<5x32x3xf32, #tpu.memory_space<vmem>>, vector<1x32x3xf32>
    %99 = vector.shape_cast %98 : vector<1x32x3xf32> to vector<32x3xf32>
    %100 = vector.extract_strided_slice %91 {offsets = [0, 0], sizes = [3, 128], strides = [1, 1]} : vector<3x130xf32> to vector<3x128xf32>
    %cst_81 = arith.constant dense<0.000000e+00> : vector<32x128xf32>
    %101 = tpu.matmul %99, %100, %cst_81 {dimension_numbers = #tpu.dot_dimension_numbers<[1], [0], [0], [1], [0, 0, 1, 1], [], []>} : vector<32x3xf32>, vector<3x128xf32>, vector<32x128xf32> -> vector<32x128xf32>
    %c1_82 = arith.constant 1 : index
    %c0_83 = arith.constant 0 : index
    %c0_84 = arith.constant 0 : index
    %102 = vector.load %arg2[%c1_82, %c0_83, %c0_84] : memref<5x32x3xf32, #tpu.memory_space<vmem>>, vector<1x32x3xf32>
    %103 = vector.shape_cast %102 : vector<1x32x3xf32> to vector<32x3xf32>
    %104 = vector.extract_strided_slice %93 {offsets = [0, 0], sizes = [3, 128], strides = [1, 1]} : vector<3x130xf32> to vector<3x128xf32>
    %cst_85 = arith.constant dense<0.000000e+00> : vector<32x128xf32>
    %105 = tpu.matmul %103, %104, %cst_85 {dimension_numbers = #tpu.dot_dimension_numbers<[1], [0], [0], [1], [0, 0, 1, 1], [], []>} : vector<32x3xf32>, vector<3x128xf32>, vector<32x128xf32> -> vector<32x128xf32>
    %106 = arith.addf %101, %105 : vector<32x128xf32>
    %c2_86 = arith.constant 2 : index
    %c0_87 = arith.constant 0 : index
    %c0_88 = arith.constant 0 : index
    %107 = vector.load %arg2[%c2_86, %c0_87, %c0_88] : memref<5x32x3xf32, #tpu.memory_space<vmem>>, vector<1x32x3xf32>
    %108 = vector.shape_cast %107 : vector<1x32x3xf32> to vector<32x3xf32>
    %109 = vector.extract_strided_slice %95 {offsets = [0, 0], sizes = [3, 128], strides = [1, 1]} : vector<3x130xf32> to vector<3x128xf32>
    %cst_89 = arith.constant dense<0.000000e+00> : vector<32x128xf32>
    %110 = tpu.matmul %108, %109, %cst_89 {dimension_numbers = #tpu.dot_dimension_numbers<[1], [0], [0], [1], [0, 0, 1, 1], [], []>} : vector<32x3xf32>, vector<3x128xf32>, vector<32x128xf32> -> vector<32x128xf32>
    %111 = arith.addf %106, %110 : vector<32x128xf32>
    %c3_90 = arith.constant 3 : index
    %c0_91 = arith.constant 0 : index
    %c0_92 = arith.constant 0 : index
    %112 = vector.load %arg2[%c3_90, %c0_91, %c0_92] : memref<5x32x3xf32, #tpu.memory_space<vmem>>, vector<1x32x3xf32>
    %113 = vector.shape_cast %112 : vector<1x32x3xf32> to vector<32x3xf32>
    %114 = vector.extract_strided_slice %97 {offsets = [0, 0], sizes = [3, 128], strides = [1, 1]} : vector<3x130xf32> to vector<3x128xf32>
    %cst_93 = arith.constant dense<0.000000e+00> : vector<32x128xf32>
    %115 = tpu.matmul %113, %114, %cst_93 {dimension_numbers = #tpu.dot_dimension_numbers<[1], [0], [0], [1], [0, 0, 1, 1], [], []>} : vector<32x3xf32>, vector<3x128xf32>, vector<32x128xf32> -> vector<32x128xf32>
    %116 = arith.addf %111, %115 : vector<32x128xf32>
    %c4_94 = arith.constant 4 : index
    %c0_95 = arith.constant 0 : index
    %c0_96 = arith.constant 0 : index
    %117 = vector.load %arg2[%c4_94, %c0_95, %c0_96] : memref<5x32x3xf32, #tpu.memory_space<vmem>>, vector<1x32x3xf32>
    %118 = vector.shape_cast %117 : vector<1x32x3xf32> to vector<32x3xf32>
    %119 = vector.extract_strided_slice %91 {offsets = [0, 1], sizes = [3, 128], strides = [1, 1]} : vector<3x130xf32> to vector<3x128xf32>
    %cst_97 = arith.constant dense<0.000000e+00> : vector<32x128xf32>
    %120 = tpu.matmul %118, %119, %cst_97 {dimension_numbers = #tpu.dot_dimension_numbers<[1], [0], [0], [1], [0, 0, 1, 1], [], []>} : vector<32x3xf32>, vector<3x128xf32>, vector<32x128xf32> -> vector<32x128xf32>
    %121 = arith.addf %116, %120 : vector<32x128xf32>
    %c0_98 = arith.constant 0 : index
    %c0_99 = arith.constant 0 : index
    %122 = vector.load %arg3[%c0_98, %c0_99] : memref<32x1xf32, #tpu.memory_space<vmem>>, vector<32x1xf32>
    %123 = vector.broadcast %122 : vector<32x1xf32> to vector<32x128xf32>
    %124 = arith.addf %121, %123 : vector<32x128xf32>
    %cst_100 = arith.constant 0.000000e+00 : f32
    %125 = vector.broadcast %cst_100 : f32 to vector<32x128xf32>
    %126 = arith.maximumf %124, %125 : vector<32x128xf32>
    %c0_101 = arith.constant 0 : index
    %c0_102 = arith.constant 0 : index
    %c0_103 = arith.constant 0 : index
    %127 = vector.load %arg2[%c0_101, %c0_102, %c0_103] : memref<5x32x3xf32, #tpu.memory_space<vmem>>, vector<1x32x3xf32>
    %128 = vector.shape_cast %127 : vector<1x32x3xf32> to vector<32x3xf32>
    %129 = vector.extract_strided_slice %95 {offsets = [0, 0], sizes = [3, 128], strides = [1, 1]} : vector<3x130xf32> to vector<3x128xf32>
    %cst_104 = arith.constant dense<0.000000e+00> : vector<32x128xf32>
    %130 = tpu.matmul %128, %129, %cst_104 {dimension_numbers = #tpu.dot_dimension_numbers<[1], [0], [0], [1], [0, 0, 1, 1], [], []>} : vector<32x3xf32>, vector<3x128xf32>, vector<32x128xf32> -> vector<32x128xf32>
    %c1_105 = arith.constant 1 : index
    %c0_106 = arith.constant 0 : index
    %c0_107 = arith.constant 0 : index
    %131 = vector.load %arg2[%c1_105, %c0_106, %c0_107] : memref<5x32x3xf32, #tpu.memory_space<vmem>>, vector<1x32x3xf32>
    %132 = vector.shape_cast %131 : vector<1x32x3xf32> to vector<32x3xf32>
    %133 = vector.extract_strided_slice %97 {offsets = [0, 0], sizes = [3, 128], strides = [1, 1]} : vector<3x130xf32> to vector<3x128xf32>
    %cst_108 = arith.constant dense<0.000000e+00> : vector<32x128xf32>
    %134 = tpu.matmul %132, %133, %cst_108 {dimension_numbers = #tpu.dot_dimension_numbers<[1], [0], [0], [1], [0, 0, 1, 1], [], []>} : vector<32x3xf32>, vector<3x128xf32>, vector<32x128xf32> -> vector<32x128xf32>
    %135 = arith.addf %130, %134 : vector<32x128xf32>
    %c2_109 = arith.constant 2 : index
    %c0_110 = arith.constant 0 : index
    %c0_111 = arith.constant 0 : index
    %136 = vector.load %arg2[%c2_109, %c0_110, %c0_111] : memref<5x32x3xf32, #tpu.memory_space<vmem>>, vector<1x32x3xf32>
    %137 = vector.shape_cast %136 : vector<1x32x3xf32> to vector<32x3xf32>
    %138 = vector.extract_strided_slice %91 {offsets = [0, 1], sizes = [3, 128], strides = [1, 1]} : vector<3x130xf32> to vector<3x128xf32>
    %cst_112 = arith.constant dense<0.000000e+00> : vector<32x128xf32>
    %139 = tpu.matmul %137, %138, %cst_112 {dimension_numbers = #tpu.dot_dimension_numbers<[1], [0], [0], [1], [0, 0, 1, 1], [], []>} : vector<32x3xf32>, vector<3x128xf32>, vector<32x128xf32> -> vector<32x128xf32>
    %140 = arith.addf %135, %139 : vector<32x128xf32>
    %c3_113 = arith.constant 3 : index
    %c0_114 = arith.constant 0 : index
    %c0_115 = arith.constant 0 : index
    %141 = vector.load %arg2[%c3_113, %c0_114, %c0_115] : memref<5x32x3xf32, #tpu.memory_space<vmem>>, vector<1x32x3xf32>
    %142 = vector.shape_cast %141 : vector<1x32x3xf32> to vector<32x3xf32>
    %143 = vector.extract_strided_slice %93 {offsets = [0, 1], sizes = [3, 128], strides = [1, 1]} : vector<3x130xf32> to vector<3x128xf32>
    %cst_116 = arith.constant dense<0.000000e+00> : vector<32x128xf32>
    %144 = tpu.matmul %142, %143, %cst_116 {dimension_numbers = #tpu.dot_dimension_numbers<[1], [0], [0], [1], [0, 0, 1, 1], [], []>} : vector<32x3xf32>, vector<3x128xf32>, vector<32x128xf32> -> vector<32x128xf32>
    %145 = arith.addf %140, %144 : vector<32x128xf32>
    %c4_117 = arith.constant 4 : index
    %c0_118 = arith.constant 0 : index
    %c0_119 = arith.constant 0 : index
    %146 = vector.load %arg2[%c4_117, %c0_118, %c0_119] : memref<5x32x3xf32, #tpu.memory_space<vmem>>, vector<1x32x3xf32>
    %147 = vector.shape_cast %146 : vector<1x32x3xf32> to vector<32x3xf32>
    %148 = vector.extract_strided_slice %95 {offsets = [0, 1], sizes = [3, 128], strides = [1, 1]} : vector<3x130xf32> to vector<3x128xf32>
    %cst_120 = arith.constant dense<0.000000e+00> : vector<32x128xf32>
    %149 = tpu.matmul %147, %148, %cst_120 {dimension_numbers = #tpu.dot_dimension_numbers<[1], [0], [0], [1], [0, 0, 1, 1], [], []>} : vector<32x3xf32>, vector<3x128xf32>, vector<32x128xf32> -> vector<32x128xf32>
    %150 = arith.addf %145, %149 : vector<32x128xf32>
    %c0_121 = arith.constant 0 : index
    %c0_122 = arith.constant 0 : index
    %151 = vector.load %arg3[%c0_121, %c0_122] : memref<32x1xf32, #tpu.memory_space<vmem>>, vector<32x1xf32>
    %152 = vector.broadcast %151 : vector<32x1xf32> to vector<32x128xf32>
    %153 = arith.addf %150, %152 : vector<32x128xf32>
    %cst_123 = arith.constant 0.000000e+00 : f32
    %154 = vector.broadcast %cst_123 : f32 to vector<32x128xf32>
    %155 = arith.maximumf %153, %154 : vector<32x128xf32>
    %c127_i32_124 = arith.constant 127 : i32
    %156 = vector.broadcast %c127_i32_124 : i32 to vector<32x128xi32>
    %157 = arith.cmpi eq, %0, %156 : vector<32x128xi32>
    %cst_125 = arith.constant 0.000000e+00 : f32
    %158 = vector.broadcast %cst_125 : f32 to vector<32x128xf32>
    %159 = arith.select %157, %158, %155 : vector<32x128xi1>, vector<32x128xf32>
    %160 = vector.extract_strided_slice %159 {offsets = [0, 0], sizes = [32, 127], strides = [1, 1]} : vector<32x128xf32> to vector<32x127xf32>
    %161 = tpu.concatenate %1, %160 in 1 : vector<32x1xf32>, vector<32x127xf32> -> vector<32x128xf32>
    %c0_126 = arith.constant 0 : index
    %c0_127 = arith.constant 0 : index
    %c0_128 = arith.constant 0 : index
    %162 = vector.load %arg4[%c0_126, %c0_127, %c0_128] : memref<3x32x32xf32, #tpu.memory_space<vmem>>, vector<1x32x32xf32>
    %163 = vector.shape_cast %162 : vector<1x32x32xf32> to vector<32x32xf32>
    %cst_129 = arith.constant dense<0.000000e+00> : vector<32x128xf32>
    %164 = tpu.matmul %163, %161, %cst_129 {dimension_numbers = #tpu.dot_dimension_numbers<[1], [0], [0], [1], [0, 0, 1, 1], [], []>} : vector<32x32xf32>, vector<32x128xf32>, vector<32x128xf32> -> vector<32x128xf32>
    %c1_130 = arith.constant 1 : index
    %c0_131 = arith.constant 0 : index
    %c0_132 = arith.constant 0 : index
    %165 = vector.load %arg4[%c1_130, %c0_131, %c0_132] : memref<3x32x32xf32, #tpu.memory_space<vmem>>, vector<1x32x32xf32>
    %166 = vector.shape_cast %165 : vector<1x32x32xf32> to vector<32x32xf32>
    %cst_133 = arith.constant dense<0.000000e+00> : vector<32x128xf32>
    %167 = tpu.matmul %166, %126, %cst_133 {dimension_numbers = #tpu.dot_dimension_numbers<[1], [0], [0], [1], [0, 0, 1, 1], [], []>} : vector<32x32xf32>, vector<32x128xf32>, vector<32x128xf32> -> vector<32x128xf32>
    %168 = arith.addf %164, %167 : vector<32x128xf32>
    %c2_134 = arith.constant 2 : index
    %c0_135 = arith.constant 0 : index
    %c0_136 = arith.constant 0 : index
    %169 = vector.load %arg4[%c2_134, %c0_135, %c0_136] : memref<3x32x32xf32, #tpu.memory_space<vmem>>, vector<1x32x32xf32>
    %170 = vector.shape_cast %169 : vector<1x32x32xf32> to vector<32x32xf32>
    %cst_137 = arith.constant dense<0.000000e+00> : vector<32x128xf32>
    %171 = tpu.matmul %170, %159, %cst_137 {dimension_numbers = #tpu.dot_dimension_numbers<[1], [0], [0], [1], [0, 0, 1, 1], [], []>} : vector<32x32xf32>, vector<32x128xf32>, vector<32x128xf32> -> vector<32x128xf32>
    %172 = arith.addf %168, %171 : vector<32x128xf32>
    %c0_138 = arith.constant 0 : index
    %c0_139 = arith.constant 0 : index
    %173 = vector.load %arg5[%c0_138, %c0_139] : memref<32x1xf32, #tpu.memory_space<vmem>>, vector<32x1xf32>
    %174 = vector.broadcast %173 : vector<32x1xf32> to vector<32x128xf32>
    %175 = arith.addf %172, %174 : vector<32x128xf32>
    %cst_140 = arith.constant 0.000000e+00 : f32
    %176 = vector.broadcast %cst_140 : f32 to vector<32x128xf32>
    %177 = arith.maximumf %175, %176 : vector<32x128xf32>
    tpu.wait_dma2 semaphore(%arg15 : memref<!tpu.dma_semaphore, #tpu.memory_space<semaphore_mem>>) src(%arg6 : memref<4096x256xbf16, #tpu.memory_space<any>>) dst(%arg14 : memref<4096x256xbf16, #tpu.memory_space<vmem>>)
    %cst_141 = arith.constant 0.000000e+00 : f32
    %178 = vector.broadcast %cst_141 : f32 to vector<2x256xf32>
    %179 = vector.extract_strided_slice %89 {offsets = [0, 0], sizes = [1, 128], strides = [1, 1]} : vector<32x128xf32> to vector<1x128xf32>
    %180 = vector.extract_strided_slice %177 {offsets = [0, 0], sizes = [1, 128], strides = [1, 1]} : vector<32x128xf32> to vector<1x128xf32>
    %181 = tpu.concatenate %179, %180 in 0 : vector<1x128xf32>, vector<1x128xf32> -> vector<2x128xf32>
    %c0_142 = arith.constant 0 : index
    %c0_143 = arith.constant 0 : index
    %182 = vector.load %arg14[%c0_142, %c0_143] : memref<4096x256xbf16, #tpu.memory_space<vmem>>, vector<128x256xbf16>
    %183 = arith.truncf %181 : vector<2x128xf32> to vector<2x128xbf16>
    %cst_144 = arith.constant dense<0.000000e+00> : vector<2x256xf32>
    %184 = tpu.matmul %183, %182, %cst_144 {dimension_numbers = #tpu.dot_dimension_numbers<[1], [0], [0], [1], [0, 0, 1, 1], [], []>} : vector<2x128xbf16>, vector<128x256xbf16>, vector<2x256xf32> -> vector<2x256xf32>
    %185 = arith.addf %178, %184 : vector<2x256xf32>
    %186 = vector.extract_strided_slice %89 {offsets = [1, 0], sizes = [1, 128], strides = [1, 1]} : vector<32x128xf32> to vector<1x128xf32>
    %187 = vector.extract_strided_slice %177 {offsets = [1, 0], sizes = [1, 128], strides = [1, 1]} : vector<32x128xf32> to vector<1x128xf32>
    %188 = tpu.concatenate %186, %187 in 0 : vector<1x128xf32>, vector<1x128xf32> -> vector<2x128xf32>
    %c128 = arith.constant 128 : index
    %c0_145 = arith.constant 0 : index
    %189 = vector.load %arg14[%c128, %c0_145] : memref<4096x256xbf16, #tpu.memory_space<vmem>>, vector<128x256xbf16>
    %190 = arith.truncf %188 : vector<2x128xf32> to vector<2x128xbf16>
    %cst_146 = arith.constant dense<0.000000e+00> : vector<2x256xf32>
    %191 = tpu.matmul %190, %189, %cst_146 {dimension_numbers = #tpu.dot_dimension_numbers<[1], [0], [0], [1], [0, 0, 1, 1], [], []>} : vector<2x128xbf16>, vector<128x256xbf16>, vector<2x256xf32> -> vector<2x256xf32>
    %192 = arith.addf %185, %191 : vector<2x256xf32>
    %193 = vector.extract_strided_slice %89 {offsets = [2, 0], sizes = [1, 128], strides = [1, 1]} : vector<32x128xf32> to vector<1x128xf32>
    %194 = vector.extract_strided_slice %177 {offsets = [2, 0], sizes = [1, 128], strides = [1, 1]} : vector<32x128xf32> to vector<1x128xf32>
    %195 = tpu.concatenate %193, %194 in 0 : vector<1x128xf32>, vector<1x128xf32> -> vector<2x128xf32>
    %c256 = arith.constant 256 : index
    %c0_147 = arith.constant 0 : index
    %196 = vector.load %arg14[%c256, %c0_147] : memref<4096x256xbf16, #tpu.memory_space<vmem>>, vector<128x256xbf16>
    %197 = arith.truncf %195 : vector<2x128xf32> to vector<2x128xbf16>
    %cst_148 = arith.constant dense<0.000000e+00> : vector<2x256xf32>
    %198 = tpu.matmul %197, %196, %cst_148 {dimension_numbers = #tpu.dot_dimension_numbers<[1], [0], [0], [1], [0, 0, 1, 1], [], []>} : vector<2x128xbf16>, vector<128x256xbf16>, vector<2x256xf32> -> vector<2x256xf32>
    %199 = arith.addf %192, %198 : vector<2x256xf32>
    %200 = vector.extract_strided_slice %89 {offsets = [3, 0], sizes = [1, 128], strides = [1, 1]} : vector<32x128xf32> to vector<1x128xf32>
    %201 = vector.extract_strided_slice %177 {offsets = [3, 0], sizes = [1, 128], strides = [1, 1]} : vector<32x128xf32> to vector<1x128xf32>
    %202 = tpu.concatenate %200, %201 in 0 : vector<1x128xf32>, vector<1x128xf32> -> vector<2x128xf32>
    %c384 = arith.constant 384 : index
    %c0_149 = arith.constant 0 : index
    %203 = vector.load %arg14[%c384, %c0_149] : memref<4096x256xbf16, #tpu.memory_space<vmem>>, vector<128x256xbf16>
    %204 = arith.truncf %202 : vector<2x128xf32> to vector<2x128xbf16>
    %cst_150 = arith.constant dense<0.000000e+00> : vector<2x256xf32>
    %205 = tpu.matmul %204, %203, %cst_150 {dimension_numbers = #tpu.dot_dimension_numbers<[1], [0], [0], [1], [0, 0, 1, 1], [], []>} : vector<2x128xbf16>, vector<128x256xbf16>, vector<2x256xf32> -> vector<2x256xf32>
    %206 = arith.addf %199, %205 : vector<2x256xf32>
    %207 = vector.extract_strided_slice %89 {offsets = [4, 0], sizes = [1, 128], strides = [1, 1]} : vector<32x128xf32> to vector<1x128xf32>
    %208 = vector.extract_strided_slice %177 {offsets = [4, 0], sizes = [1, 128], strides = [1, 1]} : vector<32x128xf32> to vector<1x128xf32>
    %209 = tpu.concatenate %207, %208 in 0 : vector<1x128xf32>, vector<1x128xf32> -> vector<2x128xf32>
    %c512 = arith.constant 512 : index
    %c0_151 = arith.constant 0 : index
    %210 = vector.load %arg14[%c512, %c0_151] : memref<4096x256xbf16, #tpu.memory_space<vmem>>, vector<128x256xbf16>
    %211 = arith.truncf %209 : vector<2x128xf32> to vector<2x128xbf16>
    %cst_152 = arith.constant dense<0.000000e+00> : vector<2x256xf32>
    %212 = tpu.matmul %211, %210, %cst_152 {dimension_numbers = #tpu.dot_dimension_numbers<[1], [0], [0], [1], [0, 0, 1, 1], [], []>} : vector<2x128xbf16>, vector<128x256xbf16>, vector<2x256xf32> -> vector<2x256xf32>
    %213 = arith.addf %206, %212 : vector<2x256xf32>
    %214 = vector.extract_strided_slice %89 {offsets = [5, 0], sizes = [1, 128], strides = [1, 1]} : vector<32x128xf32> to vector<1x128xf32>
    %215 = vector.extract_strided_slice %177 {offsets = [5, 0], sizes = [1, 128], strides = [1, 1]} : vector<32x128xf32> to vector<1x128xf32>
    %216 = tpu.concatenate %214, %215 in 0 : vector<1x128xf32>, vector<1x128xf32> -> vector<2x128xf32>
    %c640 = arith.constant 640 : index
    %c0_153 = arith.constant 0 : index
    %217 = vector.load %arg14[%c640, %c0_153] : memref<4096x256xbf16, #tpu.memory_space<vmem>>, vector<128x256xbf16>
    %218 = arith.truncf %216 : vector<2x128xf32> to vector<2x128xbf16>
    %cst_154 = arith.constant dense<0.000000e+00> : vector<2x256xf32>
    %219 = tpu.matmul %218, %217, %cst_154 {dimension_numbers = #tpu.dot_dimension_numbers<[1], [0], [0], [1], [0, 0, 1, 1], [], []>} : vector<2x128xbf16>, vector<128x256xbf16>, vector<2x256xf32> -> vector<2x256xf32>
    %220 = arith.addf %213, %219 : vector<2x256xf32>
    %221 = vector.extract_strided_slice %89 {offsets = [6, 0], sizes = [1, 128], strides = [1, 1]} : vector<32x128xf32> to vector<1x128xf32>
    %222 = vector.extract_strided_slice %177 {offsets = [6, 0], sizes = [1, 128], strides = [1, 1]} : vector<32x128xf32> to vector<1x128xf32>
    %223 = tpu.concatenate %221, %222 in 0 : vector<1x128xf32>, vector<1x128xf32> -> vector<2x128xf32>
    %c768 = arith.constant 768 : index
    %c0_155 = arith.constant 0 : index
    %224 = vector.load %arg14[%c768, %c0_155] : memref<4096x256xbf16, #tpu.memory_space<vmem>>, vector<128x256xbf16>
    %225 = arith.truncf %223 : vector<2x128xf32> to vector<2x128xbf16>
    %cst_156 = arith.constant dense<0.000000e+00> : vector<2x256xf32>
    %226 = tpu.matmul %225, %224, %cst_156 {dimension_numbers = #tpu.dot_dimension_numbers<[1], [0], [0], [1], [0, 0, 1, 1], [], []>} : vector<2x128xbf16>, vector<128x256xbf16>, vector<2x256xf32> -> vector<2x256xf32>
    %227 = arith.addf %220, %226 : vector<2x256xf32>
    %228 = vector.extract_strided_slice %89 {offsets = [7, 0], sizes = [1, 128], strides = [1, 1]} : vector<32x128xf32> to vector<1x128xf32>
    %229 = vector.extract_strided_slice %177 {offsets = [7, 0], sizes = [1, 128], strides = [1, 1]} : vector<32x128xf32> to vector<1x128xf32>
    %230 = tpu.concatenate %228, %229 in 0 : vector<1x128xf32>, vector<1x128xf32> -> vector<2x128xf32>
    %c896 = arith.constant 896 : index
    %c0_157 = arith.constant 0 : index
    %231 = vector.load %arg14[%c896, %c0_157] : memref<4096x256xbf16, #tpu.memory_space<vmem>>, vector<128x256xbf16>
    %232 = arith.truncf %230 : vector<2x128xf32> to vector<2x128xbf16>
    %cst_158 = arith.constant dense<0.000000e+00> : vector<2x256xf32>
    %233 = tpu.matmul %232, %231, %cst_158 {dimension_numbers = #tpu.dot_dimension_numbers<[1], [0], [0], [1], [0, 0, 1, 1], [], []>} : vector<2x128xbf16>, vector<128x256xbf16>, vector<2x256xf32> -> vector<2x256xf32>
    %234 = arith.addf %227, %233 : vector<2x256xf32>
    %235 = vector.extract_strided_slice %89 {offsets = [8, 0], sizes = [1, 128], strides = [1, 1]} : vector<32x128xf32> to vector<1x128xf32>
    %236 = vector.extract_strided_slice %177 {offsets = [8, 0], sizes = [1, 128], strides = [1, 1]} : vector<32x128xf32> to vector<1x128xf32>
    %237 = tpu.concatenate %235, %236 in 0 : vector<1x128xf32>, vector<1x128xf32> -> vector<2x128xf32>
    %c1024 = arith.constant 1024 : index
    %c0_159 = arith.constant 0 : index
    %238 = vector.load %arg14[%c1024, %c0_159] : memref<4096x256xbf16, #tpu.memory_space<vmem>>, vector<128x256xbf16>
    %239 = arith.truncf %237 : vector<2x128xf32> to vector<2x128xbf16>
    %cst_160 = arith.constant dense<0.000000e+00> : vector<2x256xf32>
    %240 = tpu.matmul %239, %238, %cst_160 {dimension_numbers = #tpu.dot_dimension_numbers<[1], [0], [0], [1], [0, 0, 1, 1], [], []>} : vector<2x128xbf16>, vector<128x256xbf16>, vector<2x256xf32> -> vector<2x256xf32>
    %241 = arith.addf %234, %240 : vector<2x256xf32>
    %242 = vector.extract_strided_slice %89 {offsets = [9, 0], sizes = [1, 128], strides = [1, 1]} : vector<32x128xf32> to vector<1x128xf32>
    %243 = vector.extract_strided_slice %177 {offsets = [9, 0], sizes = [1, 128], strides = [1, 1]} : vector<32x128xf32> to vector<1x128xf32>
    %244 = tpu.concatenate %242, %243 in 0 : vector<1x128xf32>, vector<1x128xf32> -> vector<2x128xf32>
    %c1152 = arith.constant 1152 : index
    %c0_161 = arith.constant 0 : index
    %245 = vector.load %arg14[%c1152, %c0_161] : memref<4096x256xbf16, #tpu.memory_space<vmem>>, vector<128x256xbf16>
    %246 = arith.truncf %244 : vector<2x128xf32> to vector<2x128xbf16>
    %cst_162 = arith.constant dense<0.000000e+00> : vector<2x256xf32>
    %247 = tpu.matmul %246, %245, %cst_162 {dimension_numbers = #tpu.dot_dimension_numbers<[1], [0], [0], [1], [0, 0, 1, 1], [], []>} : vector<2x128xbf16>, vector<128x256xbf16>, vector<2x256xf32> -> vector<2x256xf32>
    %248 = arith.addf %241, %247 : vector<2x256xf32>
    %249 = vector.extract_strided_slice %89 {offsets = [10, 0], sizes = [1, 128], strides = [1, 1]} : vector<32x128xf32> to vector<1x128xf32>
    %250 = vector.extract_strided_slice %177 {offsets = [10, 0], sizes = [1, 128], strides = [1, 1]} : vector<32x128xf32> to vector<1x128xf32>
    %251 = tpu.concatenate %249, %250 in 0 : vector<1x128xf32>, vector<1x128xf32> -> vector<2x128xf32>
    %c1280 = arith.constant 1280 : index
    %c0_163 = arith.constant 0 : index
    %252 = vector.load %arg14[%c1280, %c0_163] : memref<4096x256xbf16, #tpu.memory_space<vmem>>, vector<128x256xbf16>
    %253 = arith.truncf %251 : vector<2x128xf32> to vector<2x128xbf16>
    %cst_164 = arith.constant dense<0.000000e+00> : vector<2x256xf32>
    %254 = tpu.matmul %253, %252, %cst_164 {dimension_numbers = #tpu.dot_dimension_numbers<[1], [0], [0], [1], [0, 0, 1, 1], [], []>} : vector<2x128xbf16>, vector<128x256xbf16>, vector<2x256xf32> -> vector<2x256xf32>
    %255 = arith.addf %248, %254 : vector<2x256xf32>
    %256 = vector.extract_strided_slice %89 {offsets = [11, 0], sizes = [1, 128], strides = [1, 1]} : vector<32x128xf32> to vector<1x128xf32>
    %257 = vector.extract_strided_slice %177 {offsets = [11, 0], sizes = [1, 128], strides = [1, 1]} : vector<32x128xf32> to vector<1x128xf32>
    %258 = tpu.concatenate %256, %257 in 0 : vector<1x128xf32>, vector<1x128xf32> -> vector<2x128xf32>
    %c1408 = arith.constant 1408 : index
    %c0_165 = arith.constant 0 : index
    %259 = vector.load %arg14[%c1408, %c0_165] : memref<4096x256xbf16, #tpu.memory_space<vmem>>, vector<128x256xbf16>
    %260 = arith.truncf %258 : vector<2x128xf32> to vector<2x128xbf16>
    %cst_166 = arith.constant dense<0.000000e+00> : vector<2x256xf32>
    %261 = tpu.matmul %260, %259, %cst_166 {dimension_numbers = #tpu.dot_dimension_numbers<[1], [0], [0], [1], [0, 0, 1, 1], [], []>} : vector<2x128xbf16>, vector<128x256xbf16>, vector<2x256xf32> -> vector<2x256xf32>
    %262 = arith.addf %255, %261 : vector<2x256xf32>
    %263 = vector.extract_strided_slice %89 {offsets = [12, 0], sizes = [1, 128], strides = [1, 1]} : vector<32x128xf32> to vector<1x128xf32>
    %264 = vector.extract_strided_slice %177 {offsets = [12, 0], sizes = [1, 128], strides = [1, 1]} : vector<32x128xf32> to vector<1x128xf32>
    %265 = tpu.concatenate %263, %264 in 0 : vector<1x128xf32>, vector<1x128xf32> -> vector<2x128xf32>
    %c1536 = arith.constant 1536 : index
    %c0_167 = arith.constant 0 : index
    %266 = vector.load %arg14[%c1536, %c0_167] : memref<4096x256xbf16, #tpu.memory_space<vmem>>, vector<128x256xbf16>
    %267 = arith.truncf %265 : vector<2x128xf32> to vector<2x128xbf16>
    %cst_168 = arith.constant dense<0.000000e+00> : vector<2x256xf32>
    %268 = tpu.matmul %267, %266, %cst_168 {dimension_numbers = #tpu.dot_dimension_numbers<[1], [0], [0], [1], [0, 0, 1, 1], [], []>} : vector<2x128xbf16>, vector<128x256xbf16>, vector<2x256xf32> -> vector<2x256xf32>
    %269 = arith.addf %262, %268 : vector<2x256xf32>
    %270 = vector.extract_strided_slice %89 {offsets = [13, 0], sizes = [1, 128], strides = [1, 1]} : vector<32x128xf32> to vector<1x128xf32>
    %271 = vector.extract_strided_slice %177 {offsets = [13, 0], sizes = [1, 128], strides = [1, 1]} : vector<32x128xf32> to vector<1x128xf32>
    %272 = tpu.concatenate %270, %271 in 0 : vector<1x128xf32>, vector<1x128xf32> -> vector<2x128xf32>
    %c1664 = arith.constant 1664 : index
    %c0_169 = arith.constant 0 : index
    %273 = vector.load %arg14[%c1664, %c0_169] : memref<4096x256xbf16, #tpu.memory_space<vmem>>, vector<128x256xbf16>
    %274 = arith.truncf %272 : vector<2x128xf32> to vector<2x128xbf16>
    %cst_170 = arith.constant dense<0.000000e+00> : vector<2x256xf32>
    %275 = tpu.matmul %274, %273, %cst_170 {dimension_numbers = #tpu.dot_dimension_numbers<[1], [0], [0], [1], [0, 0, 1, 1], [], []>} : vector<2x128xbf16>, vector<128x256xbf16>, vector<2x256xf32> -> vector<2x256xf32>
    %276 = arith.addf %269, %275 : vector<2x256xf32>
    %277 = vector.extract_strided_slice %89 {offsets = [14, 0], sizes = [1, 128], strides = [1, 1]} : vector<32x128xf32> to vector<1x128xf32>
    %278 = vector.extract_strided_slice %177 {offsets = [14, 0], sizes = [1, 128], strides = [1, 1]} : vector<32x128xf32> to vector<1x128xf32>
    %279 = tpu.concatenate %277, %278 in 0 : vector<1x128xf32>, vector<1x128xf32> -> vector<2x128xf32>
    %c1792 = arith.constant 1792 : index
    %c0_171 = arith.constant 0 : index
    %280 = vector.load %arg14[%c1792, %c0_171] : memref<4096x256xbf16, #tpu.memory_space<vmem>>, vector<128x256xbf16>
    %281 = arith.truncf %279 : vector<2x128xf32> to vector<2x128xbf16>
    %cst_172 = arith.constant dense<0.000000e+00> : vector<2x256xf32>
    %282 = tpu.matmul %281, %280, %cst_172 {dimension_numbers = #tpu.dot_dimension_numbers<[1], [0], [0], [1], [0, 0, 1, 1], [], []>} : vector<2x128xbf16>, vector<128x256xbf16>, vector<2x256xf32> -> vector<2x256xf32>
    %283 = arith.addf %276, %282 : vector<2x256xf32>
    %284 = vector.extract_strided_slice %89 {offsets = [15, 0], sizes = [1, 128], strides = [1, 1]} : vector<32x128xf32> to vector<1x128xf32>
    %285 = vector.extract_strided_slice %177 {offsets = [15, 0], sizes = [1, 128], strides = [1, 1]} : vector<32x128xf32> to vector<1x128xf32>
    %286 = tpu.concatenate %284, %285 in 0 : vector<1x128xf32>, vector<1x128xf32> -> vector<2x128xf32>
    %c1920 = arith.constant 1920 : index
    %c0_173 = arith.constant 0 : index
    %287 = vector.load %arg14[%c1920, %c0_173] : memref<4096x256xbf16, #tpu.memory_space<vmem>>, vector<128x256xbf16>
    %288 = arith.truncf %286 : vector<2x128xf32> to vector<2x128xbf16>
    %cst_174 = arith.constant dense<0.000000e+00> : vector<2x256xf32>
    %289 = tpu.matmul %288, %287, %cst_174 {dimension_numbers = #tpu.dot_dimension_numbers<[1], [0], [0], [1], [0, 0, 1, 1], [], []>} : vector<2x128xbf16>, vector<128x256xbf16>, vector<2x256xf32> -> vector<2x256xf32>
    %290 = arith.addf %283, %289 : vector<2x256xf32>
    %291 = vector.extract_strided_slice %89 {offsets = [16, 0], sizes = [1, 128], strides = [1, 1]} : vector<32x128xf32> to vector<1x128xf32>
    %292 = vector.extract_strided_slice %177 {offsets = [16, 0], sizes = [1, 128], strides = [1, 1]} : vector<32x128xf32> to vector<1x128xf32>
    %293 = tpu.concatenate %291, %292 in 0 : vector<1x128xf32>, vector<1x128xf32> -> vector<2x128xf32>
    %c2048 = arith.constant 2048 : index
    %c0_175 = arith.constant 0 : index
    %294 = vector.load %arg14[%c2048, %c0_175] : memref<4096x256xbf16, #tpu.memory_space<vmem>>, vector<128x256xbf16>
    %295 = arith.truncf %293 : vector<2x128xf32> to vector<2x128xbf16>
    %cst_176 = arith.constant dense<0.000000e+00> : vector<2x256xf32>
    %296 = tpu.matmul %295, %294, %cst_176 {dimension_numbers = #tpu.dot_dimension_numbers<[1], [0], [0], [1], [0, 0, 1, 1], [], []>} : vector<2x128xbf16>, vector<128x256xbf16>, vector<2x256xf32> -> vector<2x256xf32>
    %297 = arith.addf %290, %296 : vector<2x256xf32>
    %298 = vector.extract_strided_slice %89 {offsets = [17, 0], sizes = [1, 128], strides = [1, 1]} : vector<32x128xf32> to vector<1x128xf32>
    %299 = vector.extract_strided_slice %177 {offsets = [17, 0], sizes = [1, 128], strides = [1, 1]} : vector<32x128xf32> to vector<1x128xf32>
    %300 = tpu.concatenate %298, %299 in 0 : vector<1x128xf32>, vector<1x128xf32> -> vector<2x128xf32>
    %c2176 = arith.constant 2176 : index
    %c0_177 = arith.constant 0 : index
    %301 = vector.load %arg14[%c2176, %c0_177] : memref<4096x256xbf16, #tpu.memory_space<vmem>>, vector<128x256xbf16>
    %302 = arith.truncf %300 : vector<2x128xf32> to vector<2x128xbf16>
    %cst_178 = arith.constant dense<0.000000e+00> : vector<2x256xf32>
    %303 = tpu.matmul %302, %301, %cst_178 {dimension_numbers = #tpu.dot_dimension_numbers<[1], [0], [0], [1], [0, 0, 1, 1], [], []>} : vector<2x128xbf16>, vector<128x256xbf16>, vector<2x256xf32> -> vector<2x256xf32>
    %304 = arith.addf %297, %303 : vector<2x256xf32>
    %305 = vector.extract_strided_slice %89 {offsets = [18, 0], sizes = [1, 128], strides = [1, 1]} : vector<32x128xf32> to vector<1x128xf32>
    %306 = vector.extract_strided_slice %177 {offsets = [18, 0], sizes = [1, 128], strides = [1, 1]} : vector<32x128xf32> to vector<1x128xf32>
    %307 = tpu.concatenate %305, %306 in 0 : vector<1x128xf32>, vector<1x128xf32> -> vector<2x128xf32>
    %c2304 = arith.constant 2304 : index
    %c0_179 = arith.constant 0 : index
    %308 = vector.load %arg14[%c2304, %c0_179] : memref<4096x256xbf16, #tpu.memory_space<vmem>>, vector<128x256xbf16>
    %309 = arith.truncf %307 : vector<2x128xf32> to vector<2x128xbf16>
    %cst_180 = arith.constant dense<0.000000e+00> : vector<2x256xf32>
    %310 = tpu.matmul %309, %308, %cst_180 {dimension_numbers = #tpu.dot_dimension_numbers<[1], [0], [0], [1], [0, 0, 1, 1], [], []>} : vector<2x128xbf16>, vector<128x256xbf16>, vector<2x256xf32> -> vector<2x256xf32>
    %311 = arith.addf %304, %310 : vector<2x256xf32>
    %312 = vector.extract_strided_slice %89 {offsets = [19, 0], sizes = [1, 128], strides = [1, 1]} : vector<32x128xf32> to vector<1x128xf32>
    %313 = vector.extract_strided_slice %177 {offsets = [19, 0], sizes = [1, 128], strides = [1, 1]} : vector<32x128xf32> to vector<1x128xf32>
    %314 = tpu.concatenate %312, %313 in 0 : vector<1x128xf32>, vector<1x128xf32> -> vector<2x128xf32>
    %c2432 = arith.constant 2432 : index
    %c0_181 = arith.constant 0 : index
    %315 = vector.load %arg14[%c2432, %c0_181] : memref<4096x256xbf16, #tpu.memory_space<vmem>>, vector<128x256xbf16>
    %316 = arith.truncf %314 : vector<2x128xf32> to vector<2x128xbf16>
    %cst_182 = arith.constant dense<0.000000e+00> : vector<2x256xf32>
    %317 = tpu.matmul %316, %315, %cst_182 {dimension_numbers = #tpu.dot_dimension_numbers<[1], [0], [0], [1], [0, 0, 1, 1], [], []>} : vector<2x128xbf16>, vector<128x256xbf16>, vector<2x256xf32> -> vector<2x256xf32>
    %318 = arith.addf %311, %317 : vector<2x256xf32>
    %319 = vector.extract_strided_slice %89 {offsets = [20, 0], sizes = [1, 128], strides = [1, 1]} : vector<32x128xf32> to vector<1x128xf32>
    %320 = vector.extract_strided_slice %177 {offsets = [20, 0], sizes = [1, 128], strides = [1, 1]} : vector<32x128xf32> to vector<1x128xf32>
    %321 = tpu.concatenate %319, %320 in 0 : vector<1x128xf32>, vector<1x128xf32> -> vector<2x128xf32>
    %c2560 = arith.constant 2560 : index
    %c0_183 = arith.constant 0 : index
    %322 = vector.load %arg14[%c2560, %c0_183] : memref<4096x256xbf16, #tpu.memory_space<vmem>>, vector<128x256xbf16>
    %323 = arith.truncf %321 : vector<2x128xf32> to vector<2x128xbf16>
    %cst_184 = arith.constant dense<0.000000e+00> : vector<2x256xf32>
    %324 = tpu.matmul %323, %322, %cst_184 {dimension_numbers = #tpu.dot_dimension_numbers<[1], [0], [0], [1], [0, 0, 1, 1], [], []>} : vector<2x128xbf16>, vector<128x256xbf16>, vector<2x256xf32> -> vector<2x256xf32>
    %325 = arith.addf %318, %324 : vector<2x256xf32>
    %326 = vector.extract_strided_slice %89 {offsets = [21, 0], sizes = [1, 128], strides = [1, 1]} : vector<32x128xf32> to vector<1x128xf32>
    %327 = vector.extract_strided_slice %177 {offsets = [21, 0], sizes = [1, 128], strides = [1, 1]} : vector<32x128xf32> to vector<1x128xf32>
    %328 = tpu.concatenate %326, %327 in 0 : vector<1x128xf32>, vector<1x128xf32> -> vector<2x128xf32>
    %c2688 = arith.constant 2688 : index
    %c0_185 = arith.constant 0 : index
    %329 = vector.load %arg14[%c2688, %c0_185] : memref<4096x256xbf16, #tpu.memory_space<vmem>>, vector<128x256xbf16>
    %330 = arith.truncf %328 : vector<2x128xf32> to vector<2x128xbf16>
    %cst_186 = arith.constant dense<0.000000e+00> : vector<2x256xf32>
    %331 = tpu.matmul %330, %329, %cst_186 {dimension_numbers = #tpu.dot_dimension_numbers<[1], [0], [0], [1], [0, 0, 1, 1], [], []>} : vector<2x128xbf16>, vector<128x256xbf16>, vector<2x256xf32> -> vector<2x256xf32>
    %332 = arith.addf %325, %331 : vector<2x256xf32>
    %333 = vector.extract_strided_slice %89 {offsets = [22, 0], sizes = [1, 128], strides = [1, 1]} : vector<32x128xf32> to vector<1x128xf32>
    %334 = vector.extract_strided_slice %177 {offsets = [22, 0], sizes = [1, 128], strides = [1, 1]} : vector<32x128xf32> to vector<1x128xf32>
    %335 = tpu.concatenate %333, %334 in 0 : vector<1x128xf32>, vector<1x128xf32> -> vector<2x128xf32>
    %c2816 = arith.constant 2816 : index
    %c0_187 = arith.constant 0 : index
    %336 = vector.load %arg14[%c2816, %c0_187] : memref<4096x256xbf16, #tpu.memory_space<vmem>>, vector<128x256xbf16>
    %337 = arith.truncf %335 : vector<2x128xf32> to vector<2x128xbf16>
    %cst_188 = arith.constant dense<0.000000e+00> : vector<2x256xf32>
    %338 = tpu.matmul %337, %336, %cst_188 {dimension_numbers = #tpu.dot_dimension_numbers<[1], [0], [0], [1], [0, 0, 1, 1], [], []>} : vector<2x128xbf16>, vector<128x256xbf16>, vector<2x256xf32> -> vector<2x256xf32>
    %339 = arith.addf %332, %338 : vector<2x256xf32>
    %340 = vector.extract_strided_slice %89 {offsets = [23, 0], sizes = [1, 128], strides = [1, 1]} : vector<32x128xf32> to vector<1x128xf32>
    %341 = vector.extract_strided_slice %177 {offsets = [23, 0], sizes = [1, 128], strides = [1, 1]} : vector<32x128xf32> to vector<1x128xf32>
    %342 = tpu.concatenate %340, %341 in 0 : vector<1x128xf32>, vector<1x128xf32> -> vector<2x128xf32>
    %c2944 = arith.constant 2944 : index
    %c0_189 = arith.constant 0 : index
    %343 = vector.load %arg14[%c2944, %c0_189] : memref<4096x256xbf16, #tpu.memory_space<vmem>>, vector<128x256xbf16>
    %344 = arith.truncf %342 : vector<2x128xf32> to vector<2x128xbf16>
    %cst_190 = arith.constant dense<0.000000e+00> : vector<2x256xf32>
    %345 = tpu.matmul %344, %343, %cst_190 {dimension_numbers = #tpu.dot_dimension_numbers<[1], [0], [0], [1], [0, 0, 1, 1], [], []>} : vector<2x128xbf16>, vector<128x256xbf16>, vector<2x256xf32> -> vector<2x256xf32>
    %346 = arith.addf %339, %345 : vector<2x256xf32>
    %347 = vector.extract_strided_slice %89 {offsets = [24, 0], sizes = [1, 128], strides = [1, 1]} : vector<32x128xf32> to vector<1x128xf32>
    %348 = vector.extract_strided_slice %177 {offsets = [24, 0], sizes = [1, 128], strides = [1, 1]} : vector<32x128xf32> to vector<1x128xf32>
    %349 = tpu.concatenate %347, %348 in 0 : vector<1x128xf32>, vector<1x128xf32> -> vector<2x128xf32>
    %c3072 = arith.constant 3072 : index
    %c0_191 = arith.constant 0 : index
    %350 = vector.load %arg14[%c3072, %c0_191] : memref<4096x256xbf16, #tpu.memory_space<vmem>>, vector<128x256xbf16>
    %351 = arith.truncf %349 : vector<2x128xf32> to vector<2x128xbf16>
    %cst_192 = arith.constant dense<0.000000e+00> : vector<2x256xf32>
    %352 = tpu.matmul %351, %350, %cst_192 {dimension_numbers = #tpu.dot_dimension_numbers<[1], [0], [0], [1], [0, 0, 1, 1], [], []>} : vector<2x128xbf16>, vector<128x256xbf16>, vector<2x256xf32> -> vector<2x256xf32>
    %353 = arith.addf %346, %352 : vector<2x256xf32>
    %354 = vector.extract_strided_slice %89 {offsets = [25, 0], sizes = [1, 128], strides = [1, 1]} : vector<32x128xf32> to vector<1x128xf32>
    %355 = vector.extract_strided_slice %177 {offsets = [25, 0], sizes = [1, 128], strides = [1, 1]} : vector<32x128xf32> to vector<1x128xf32>
    %356 = tpu.concatenate %354, %355 in 0 : vector<1x128xf32>, vector<1x128xf32> -> vector<2x128xf32>
    %c3200 = arith.constant 3200 : index
    %c0_193 = arith.constant 0 : index
    %357 = vector.load %arg14[%c3200, %c0_193] : memref<4096x256xbf16, #tpu.memory_space<vmem>>, vector<128x256xbf16>
    %358 = arith.truncf %356 : vector<2x128xf32> to vector<2x128xbf16>
    %cst_194 = arith.constant dense<0.000000e+00> : vector<2x256xf32>
    %359 = tpu.matmul %358, %357, %cst_194 {dimension_numbers = #tpu.dot_dimension_numbers<[1], [0], [0], [1], [0, 0, 1, 1], [], []>} : vector<2x128xbf16>, vector<128x256xbf16>, vector<2x256xf32> -> vector<2x256xf32>
    %360 = arith.addf %353, %359 : vector<2x256xf32>
    %361 = vector.extract_strided_slice %89 {offsets = [26, 0], sizes = [1, 128], strides = [1, 1]} : vector<32x128xf32> to vector<1x128xf32>
    %362 = vector.extract_strided_slice %177 {offsets = [26, 0], sizes = [1, 128], strides = [1, 1]} : vector<32x128xf32> to vector<1x128xf32>
    %363 = tpu.concatenate %361, %362 in 0 : vector<1x128xf32>, vector<1x128xf32> -> vector<2x128xf32>
    %c3328 = arith.constant 3328 : index
    %c0_195 = arith.constant 0 : index
    %364 = vector.load %arg14[%c3328, %c0_195] : memref<4096x256xbf16, #tpu.memory_space<vmem>>, vector<128x256xbf16>
    %365 = arith.truncf %363 : vector<2x128xf32> to vector<2x128xbf16>
    %cst_196 = arith.constant dense<0.000000e+00> : vector<2x256xf32>
    %366 = tpu.matmul %365, %364, %cst_196 {dimension_numbers = #tpu.dot_dimension_numbers<[1], [0], [0], [1], [0, 0, 1, 1], [], []>} : vector<2x128xbf16>, vector<128x256xbf16>, vector<2x256xf32> -> vector<2x256xf32>
    %367 = arith.addf %360, %366 : vector<2x256xf32>
    %368 = vector.extract_strided_slice %89 {offsets = [27, 0], sizes = [1, 128], strides = [1, 1]} : vector<32x128xf32> to vector<1x128xf32>
    %369 = vector.extract_strided_slice %177 {offsets = [27, 0], sizes = [1, 128], strides = [1, 1]} : vector<32x128xf32> to vector<1x128xf32>
    %370 = tpu.concatenate %368, %369 in 0 : vector<1x128xf32>, vector<1x128xf32> -> vector<2x128xf32>
    %c3456 = arith.constant 3456 : index
    %c0_197 = arith.constant 0 : index
    %371 = vector.load %arg14[%c3456, %c0_197] : memref<4096x256xbf16, #tpu.memory_space<vmem>>, vector<128x256xbf16>
    %372 = arith.truncf %370 : vector<2x128xf32> to vector<2x128xbf16>
    %cst_198 = arith.constant dense<0.000000e+00> : vector<2x256xf32>
    %373 = tpu.matmul %372, %371, %cst_198 {dimension_numbers = #tpu.dot_dimension_numbers<[1], [0], [0], [1], [0, 0, 1, 1], [], []>} : vector<2x128xbf16>, vector<128x256xbf16>, vector<2x256xf32> -> vector<2x256xf32>
    %374 = arith.addf %367, %373 : vector<2x256xf32>
    %375 = vector.extract_strided_slice %89 {offsets = [28, 0], sizes = [1, 128], strides = [1, 1]} : vector<32x128xf32> to vector<1x128xf32>
    %376 = vector.extract_strided_slice %177 {offsets = [28, 0], sizes = [1, 128], strides = [1, 1]} : vector<32x128xf32> to vector<1x128xf32>
    %377 = tpu.concatenate %375, %376 in 0 : vector<1x128xf32>, vector<1x128xf32> -> vector<2x128xf32>
    %c3584 = arith.constant 3584 : index
    %c0_199 = arith.constant 0 : index
    %378 = vector.load %arg14[%c3584, %c0_199] : memref<4096x256xbf16, #tpu.memory_space<vmem>>, vector<128x256xbf16>
    %379 = arith.truncf %377 : vector<2x128xf32> to vector<2x128xbf16>
    %cst_200 = arith.constant dense<0.000000e+00> : vector<2x256xf32>
    %380 = tpu.matmul %379, %378, %cst_200 {dimension_numbers = #tpu.dot_dimension_numbers<[1], [0], [0], [1], [0, 0, 1, 1], [], []>} : vector<2x128xbf16>, vector<128x256xbf16>, vector<2x256xf32> -> vector<2x256xf32>
    %381 = arith.addf %374, %380 : vector<2x256xf32>
    %382 = vector.extract_strided_slice %89 {offsets = [29, 0], sizes = [1, 128], strides = [1, 1]} : vector<32x128xf32> to vector<1x128xf32>
    %383 = vector.extract_strided_slice %177 {offsets = [29, 0], sizes = [1, 128], strides = [1, 1]} : vector<32x128xf32> to vector<1x128xf32>
    %384 = tpu.concatenate %382, %383 in 0 : vector<1x128xf32>, vector<1x128xf32> -> vector<2x128xf32>
    %c3712 = arith.constant 3712 : index
    %c0_201 = arith.constant 0 : index
    %385 = vector.load %arg14[%c3712, %c0_201] : memref<4096x256xbf16, #tpu.memory_space<vmem>>, vector<128x256xbf16>
    %386 = arith.truncf %384 : vector<2x128xf32> to vector<2x128xbf16>
    %cst_202 = arith.constant dense<0.000000e+00> : vector<2x256xf32>
    %387 = tpu.matmul %386, %385, %cst_202 {dimension_numbers = #tpu.dot_dimension_numbers<[1], [0], [0], [1], [0, 0, 1, 1], [], []>} : vector<2x128xbf16>, vector<128x256xbf16>, vector<2x256xf32> -> vector<2x256xf32>
    %388 = arith.addf %381, %387 : vector<2x256xf32>
    %389 = vector.extract_strided_slice %89 {offsets = [30, 0], sizes = [1, 128], strides = [1, 1]} : vector<32x128xf32> to vector<1x128xf32>
    %390 = vector.extract_strided_slice %177 {offsets = [30, 0], sizes = [1, 128], strides = [1, 1]} : vector<32x128xf32> to vector<1x128xf32>
    %391 = tpu.concatenate %389, %390 in 0 : vector<1x128xf32>, vector<1x128xf32> -> vector<2x128xf32>
    %c3840 = arith.constant 3840 : index
    %c0_203 = arith.constant 0 : index
    %392 = vector.load %arg14[%c3840, %c0_203] : memref<4096x256xbf16, #tpu.memory_space<vmem>>, vector<128x256xbf16>
    %393 = arith.truncf %391 : vector<2x128xf32> to vector<2x128xbf16>
    %cst_204 = arith.constant dense<0.000000e+00> : vector<2x256xf32>
    %394 = tpu.matmul %393, %392, %cst_204 {dimension_numbers = #tpu.dot_dimension_numbers<[1], [0], [0], [1], [0, 0, 1, 1], [], []>} : vector<2x128xbf16>, vector<128x256xbf16>, vector<2x256xf32> -> vector<2x256xf32>
    %395 = arith.addf %388, %394 : vector<2x256xf32>
    %396 = vector.extract_strided_slice %89 {offsets = [31, 0], sizes = [1, 128], strides = [1, 1]} : vector<32x128xf32> to vector<1x128xf32>
    %397 = vector.extract_strided_slice %177 {offsets = [31, 0], sizes = [1, 128], strides = [1, 1]} : vector<32x128xf32> to vector<1x128xf32>
    %398 = tpu.concatenate %396, %397 in 0 : vector<1x128xf32>, vector<1x128xf32> -> vector<2x128xf32>
    %c3968 = arith.constant 3968 : index
    %c0_205 = arith.constant 0 : index
    %399 = vector.load %arg14[%c3968, %c0_205] : memref<4096x256xbf16, #tpu.memory_space<vmem>>, vector<128x256xbf16>
    %400 = arith.truncf %398 : vector<2x128xf32> to vector<2x128xbf16>
    %cst_206 = arith.constant dense<0.000000e+00> : vector<2x256xf32>
    %401 = tpu.matmul %400, %399, %cst_206 {dimension_numbers = #tpu.dot_dimension_numbers<[1], [0], [0], [1], [0, 0, 1, 1], [], []>} : vector<2x128xbf16>, vector<128x256xbf16>, vector<2x256xf32> -> vector<2x256xf32>
    %402 = arith.addf %395, %401 : vector<2x256xf32>
    %c0_207 = arith.constant 0 : index
    %c0_208 = arith.constant 0 : index
    %403 = vector.load %arg7[%c0_207, %c0_208] : memref<1x256xf32, #tpu.memory_space<vmem>>, vector<1x256xf32>
    %404 = vector.broadcast %403 : vector<1x256xf32> to vector<2x256xf32>
    %405 = arith.addf %402, %404 : vector<2x256xf32>
    %cst_209 = arith.constant 0.000000e+00 : f32
    %406 = vector.broadcast %cst_209 : f32 to vector<2x256xf32>
    %407 = arith.maximumf %405, %406 : vector<2x256xf32>
    %c0_210 = arith.constant 0 : index
    %c0_211 = arith.constant 0 : index
    %408 = vector.load %arg8[%c0_210, %c0_211] : memref<256x128xf32, #tpu.memory_space<vmem>>, vector<256x128xf32>
    %cst_212 = arith.constant dense<0.000000e+00> : vector<2x128xf32>
    %409 = tpu.matmul %407, %408, %cst_212 {dimension_numbers = #tpu.dot_dimension_numbers<[1], [0], [0], [1], [0, 0, 1, 1], [], []>} : vector<2x256xf32>, vector<256x128xf32>, vector<2x128xf32> -> vector<2x128xf32>
    %c0_213 = arith.constant 0 : index
    %c0_214 = arith.constant 0 : index
    %410 = vector.load %arg1[%c0_213, %c0_214] : memref<2x4xf32, #tpu.memory_space<vmem>>, vector<2x4xf32>
    %c0_215 = arith.constant 0 : index
    %c0_216 = arith.constant 0 : index
    %411 = vector.load %arg9[%c0_215, %c0_216] : memref<4x128xf32, #tpu.memory_space<vmem>>, vector<4x128xf32>
    %cst_217 = arith.constant dense<0.000000e+00> : vector<2x128xf32>
    %412 = tpu.matmul %410, %411, %cst_217 {dimension_numbers = #tpu.dot_dimension_numbers<[1], [0], [0], [1], [0, 0, 1, 1], [], []>} : vector<2x4xf32>, vector<4x128xf32>, vector<2x128xf32> -> vector<2x128xf32>
    %413 = arith.addf %409, %412 : vector<2x128xf32>
    %c0_218 = arith.constant 0 : index
    %c0_219 = arith.constant 0 : index
    %414 = vector.load %arg10[%c0_218, %c0_219] : memref<1x128xf32, #tpu.memory_space<vmem>>, vector<1x128xf32>
    %415 = vector.broadcast %414 : vector<1x128xf32> to vector<2x128xf32>
    %416 = arith.addf %413, %415 : vector<2x128xf32>
    %cst_220 = arith.constant 0.000000e+00 : f32
    %417 = vector.broadcast %cst_220 : f32 to vector<2x128xf32>
    %418 = arith.maximumf %416, %417 : vector<2x128xf32>
    %c0_221 = arith.constant 0 : index
    %c0_222 = arith.constant 0 : index
    %419 = vector.load %arg11[%c0_221, %c0_222] : memref<128x2xf32, #tpu.memory_space<vmem>>, vector<128x2xf32>
    %cst_223 = arith.constant dense<0.000000e+00> : vector<2x2xf32>
    %420 = tpu.matmul %418, %419, %cst_223 {dimension_numbers = #tpu.dot_dimension_numbers<[1], [0], [0], [1], [0, 0, 1, 1], [], []>} : vector<2x128xf32>, vector<128x2xf32>, vector<2x2xf32> -> vector<2x2xf32>
    %c0_224 = arith.constant 0 : index
    %c0_225 = arith.constant 0 : index
    %421 = vector.load %arg12[%c0_224, %c0_225] : memref<1x2xf32, #tpu.memory_space<vmem>>, vector<1x2xf32>
    %422 = vector.broadcast %421 : vector<1x2xf32> to vector<2x2xf32>
    %423 = arith.addf %420, %422 : vector<2x2xf32>
    %424 = tpu.iota {dimensions = array<i32: 1>} : vector<2x2xi32>
    %c0_i32 = arith.constant 0 : i32
    %425 = vector.broadcast %c0_i32 : i32 to vector<2x2xi32>
    %426 = arith.cmpi eq, %424, %425 : vector<2x2xi32>
    %427 = arith.negf %423 : vector<2x2xf32>
    %428 = math.exp %427 : vector<2x2xf32>
    %cst_226 = arith.constant 1.000000e+00 : f32
    %429 = vector.broadcast %cst_226 : f32 to vector<2x2xf32>
    %430 = arith.addf %429, %428 : vector<2x2xf32>
    %431 = arith.divf %429, %430 : vector<2x2xf32>
    %432 = math.tanh %423 : vector<2x2xf32>
    %433 = arith.select %426, %431, %432 : vector<2x2xi1>, vector<2x2xf32>
    %c0_227 = arith.constant 0 : index
    %c0_228 = arith.constant 0 : index
    %434 = vector.load %arg13[%c0_227, %c0_228] : memref<2x2xf32, #tpu.memory_space<vmem>>, vector<2x2xf32>
    tpu.vector_store %arg13[%c0_227, %c0_228], %433 {strides = array<i32>} : memref<2x2xf32, #tpu.memory_space<vmem>>, vector<2x2xf32>,
    return
  }
}

</mosaic_0001>

<llo_original>
// kernel: actor_net_forward.1
$region0: #{actor_net_forward.1}
  #allocation0 [shape = 'u32[]', space=smem, size = 0x4, offset = 0x4, fixed_abs, tag = 'smem constant byte address 0x4 - core index']
  #allocation1 [shape = 'u32[144,128]{1,0:T(1,128)}', space=vmem, size = 0x12000, scoped, tag = 'internal scratch']
  #allocation2 [shape = 'bf16[4096,256]{1,0:T(16,128)(2,1)}', space=vmem, size = 0x200000, scoped, tag = 'scratch operand']
  #allocation3 [shape = 's32[1]{0}', space=sflag, size = 0x4, scoped, tag = 'scratch operand']
  #allocation16 [shape = 's32[]', space=sflag, size = 0x4, offset = 0, fixed_abs, tag = 'sflag constant byte address 0x0 - dummy sync flag']
  %s0 = inlined_call_operand.vmem [shape: f32[8,3,130], index: 0, kind: input, shape index: {}]
  %s1 = inlined_call_operand.vmem [shape: f32[2,4], index: 1, kind: input, shape index: {}]
  %s2 = inlined_call_operand.vmem [shape: f32[5,32,3], index: 2, kind: input, shape index: {}]
  %s3 = inlined_call_operand.vmem [shape: f32[32,1], index: 3, kind: input, shape index: {}]
  %s4 = inlined_call_operand.hbm [shape: f32[3,32,32], index: 4, kind: input, shape index: {}]
  %s5 = inlined_call_operand.vmem [shape: f32[32,1], index: 5, kind: input, shape index: {}]
  %s6 = inlined_call_operand.hbm [shape: bf16[4096,256], index: 6, kind: input, shape index: {}]
  %s7 = inlined_call_operand.hbm [shape: f32[1,256], index: 7, kind: input, shape index: {}]
  %s8 = inlined_call_operand.hbm [shape: f32[256,128], index: 8, kind: input, shape index: {}]
  %s9 = inlined_call_operand.hbm [shape: f32[4,128], index: 9, kind: input, shape index: {}]
  %s10 = inlined_call_operand.hbm [shape: f32[1,128], index: 10, kind: input, shape index: {}]
  %s11 = inlined_call_operand.vmem [shape: f32[128,2], index: 11, kind: input, shape index: {}]
  %s12 = inlined_call_operand.hbm [shape: f32[1,2], index: 12, kind: input, shape index: {}]
  %s13 = inlined_call_operand.hbm [shape: f32[2,2], index: 13, kind: output, shape index: {}]
  %s14 = sld [smem:[#allocation0]]
  $region82: #{actor_net_forward.1} parent=0
    _
  %s16 = ssub.s32 1, %s14
  %s17 = scalar_select 0, %s16, %s14
  $region1: #{actor_net_forward.1} parent=0
    #allocation4 [shape = 'u8[49152]{0}', space=vmem, size = 0xc000, scoped, tag = 'input window, operand 4, single buffered']
    #allocation5 [shape = 's32[1]{0}', space=sflag, size = 0x4, scoped, tag = 'scoped memory for actor_net_forward.1']
    #allocation6 [shape = 's32[1]{0}', space=sflag, size = 0x4, scoped, tag = 'scoped memory for actor_net_forward.1']
    #allocation7 [shape = 'u8[1024]{0}', space=vmem, size = 0x400, scoped, tag = 'input window, operand 7, single buffered']
    #allocation8 [shape = 's32[1]{0}', space=sflag, size = 0x4, scoped, tag = 'scoped memory for actor_net_forward.1']
    #allocation9 [shape = 'u8[131072]{0}', space=vmem, size = 0x20000, scoped, tag = 'input window, operand 8, single buffered']
    #allocation10 [shape = 'u8[2048]{0}', space=vmem, size = 0x800, scoped, tag = 'input window, operand 9, single buffered']
    #allocation11 [shape = 's32[1]{0}', space=sflag, size = 0x4, scoped, tag = 'scoped memory for actor_net_forward.1']
    #allocation12 [shape = 'u8[512]{0}', space=vmem, size = 0x400, scoped, tag = 'input window, operand 10, single buffered']
    #allocation13 [shape = 'u8[512]{0}', space=vmem, size = 0x400, scoped, tag = 'input window, operand 12, single buffered']
    #allocation14 [shape = 's32[1]{0}', space=sflag, size = 0x4, scoped, tag = 'scoped memory for actor_net_forward.1']
    #allocation15 [shape = 'u8[1024]{0}', space=vmem, size = 0x400, scoped, tag = 'output window, operand 0, single buffered']
    #allocation17 [shape = 'u32[9]{0}', space=smem, size = 0x24, scoped, tag = 'DMA stride descriptor']
    %18 = vsyncpa [#allocation5], 0
    %19 = vsyncpa [#allocation8], 0
    %20 = vsyncpa [#allocation11], 0
    %21 = vsyncpa [#allocation14], 0
    %22 = vsyncpa [#allocation6], 0
    // Predicated region
    $region2: #{actor_net_forward.1} parent=1 // pred_check
      _
    $region3: #{actor_net_forward.1} parent=1 // pred_check_branch
      %24 = sbr.rel (0) target = $region5
    $region4: #{actor_net_forward.1} parent=1 // pred_region
      _
    $region5: #{actor_net_forward.1} parent=1 // pred_fallthru
      _
    // Predicated region
    $region6: #{actor_net_forward.1} parent=1 // pred_check
      _
    $region7: #{actor_net_forward.1} parent=1 // pred_check_branch
      %26 = sbr.rel (0) target = $region9
    $region8: #{actor_net_forward.1} parent=1 // pred_region
      _
    $region9: #{actor_net_forward.1} parent=1 // pred_fallthru
      _
    // Predicated region
    $region10: #{actor_net_forward.1} parent=1 // pred_check
      _
    $region11: #{actor_net_forward.1} parent=1 // pred_check_branch
      %28 = sbr.rel (0) target = $region13
    $region12: #{actor_net_forward.1} parent=1 // pred_region
      _
    $region13: #{actor_net_forward.1} parent=1 // pred_fallthru
      _
    // Predicated region
    $region14: #{actor_net_forward.1} parent=1 // pred_check
      _
    $region15: #{actor_net_forward.1} parent=1 // pred_check_branch
      %30 = sbr.rel (0) target = $region17
    $region16: #{actor_net_forward.1} parent=1 // pred_region
      _
    $region17: #{actor_net_forward.1} parent=1 // pred_fallthru
      _
    // Predicated region
    $region18: #{actor_net_forward.1} parent=1 // pred_check
      _
    $region19: #{actor_net_forward.1} parent=1 // pred_check_branch
      %32 = sbr.rel (0) target = $region21
    $region20: #{actor_net_forward.1} parent=1 // pred_region
      %s34 = ssub.s32 1536, 1536
      %35 = vsyncadd [#allocation5], %s34
      %s36 = sshll.u32 [#allocation4], 4
      %s37 = int_to_ptr.vmem [resolvable:$true] %s36
      %42 = dma.hbm_to_vmem [thread:$0]  %s4, 1536, %s37, [#allocation5], 128, 128, 8
    $region21: #{actor_net_forward.1} parent=1 // pred_fallthru
      _
    // Predicated region
    $region22: #{actor_net_forward.1} parent=1 // pred_check
      _
    $region23: #{actor_net_forward.1} parent=1 // pred_check_branch
      %44 = sbr.rel (0) target = $region25
    $region24: #{actor_net_forward.1} parent=1 // pred_region
      _
    $region25: #{actor_net_forward.1} parent=1 // pred_fallthru
      _
    // Predicated region
    $region26: #{actor_net_forward.1} parent=1 // pred_check
      _
    $region27: #{actor_net_forward.1} parent=1 // pred_check_branch
      %46 = sbr.rel (0) target = $region29
    $region28: #{actor_net_forward.1} parent=1 // pred_region
      %s48 = ssub.s32 32, 32
      %49 = vsyncadd [#allocation8], %s48
      %s51 = sshll.u32 [#allocation7], 4
      %s52 = int_to_ptr.vmem [resolvable:$true] %s51
      %54 = dma.hbm_to_vmem [thread:$0]  %s7, 32, %s52, [#allocation8]
    $region29: #{actor_net_forward.1} parent=1 // pred_fallthru
      _
    // Predicated region
    $region30: #{actor_net_forward.1} parent=1 // pred_check
      _
    $region31: #{actor_net_forward.1} parent=1 // pred_check_branch
      %56 = sbr.rel (0) target = $region33
    $region32: #{actor_net_forward.1} parent=1 // pred_region
      %s58 = ssub.s32 4096, 4096
      %59 = vsyncadd [#allocation8], %s58
      %s60 = sshll.u32 [#allocation9], 4
      %s61 = int_to_ptr.vmem [resolvable:$true] %s60
      %66 = dma.hbm_to_vmem [thread:$0]  %s8, 4096, %s61, [#allocation8], 128, 128, 8
    $region33: #{actor_net_forward.1} parent=1 // pred_fallthru
      _
    // Predicated region
    $region34: #{actor_net_forward.1} parent=1 // pred_check
      _
    $region35: #{actor_net_forward.1} parent=1 // pred_check_branch
      %68 = sbr.rel (0) target = $region37
    $region36: #{actor_net_forward.1} parent=1 // pred_region
      %s70 = ssub.s32 64, 64
      %71 = vsyncadd [#allocation11], %s70
      %s73 = sshll.u32 [#allocation10], 4
      %s74 = int_to_ptr.vmem [resolvable:$true] %s73
      %76 = dma.hbm_to_vmem [thread:$0]  %s9, 64, %s74, [#allocation11]
    $region37: #{actor_net_forward.1} parent=1 // pred_fallthru
      _
    // Predicated region
    $region38: #{actor_net_forward.1} parent=1 // pred_check
      _
    $region39: #{actor_net_forward.1} parent=1 // pred_check_branch
      %78 = sbr.rel (0) target = $region41
    $region40: #{actor_net_forward.1} parent=1 // pred_region
      %s80 = ssub.s32 16, 16
      %81 = vsyncadd [#allocation11], %s80
      %s83 = sshll.u32 [#allocation12], 4
      %s84 = int_to_ptr.vmem [resolvable:$true] %s83
      %86 = dma.hbm_to_vmem [thread:$0]  %s10, 16, %s84, [#allocation11]
    $region41: #{actor_net_forward.1} parent=1 // pred_fallthru
      _
    // Predicated region
    $region42: #{actor_net_forward.1} parent=1 // pred_check
      _
    $region43: #{actor_net_forward.1} parent=1 // pred_check_branch
      %88 = sbr.rel (0) target = $region45
    $region44: #{actor_net_forward.1} parent=1 // pred_region
      _
    $region45: #{actor_net_forward.1} parent=1 // pred_fallthru
      _
    // Predicated region
    $region46: #{actor_net_forward.1} parent=1 // pred_check
      _
    $region47: #{actor_net_forward.1} parent=1 // pred_check_branch
      %90 = sbr.rel (0) target = $region49
    $region48: #{actor_net_forward.1} parent=1 // pred_region
      %s92 = ssub.s32 16, 16
      %93 = vsyncadd [#allocation14], %s92
      %s95 = sshll.u32 [#allocation13], 4
      %s96 = int_to_ptr.vmem [resolvable:$true] %s95
      %98 = dma.hbm_to_vmem [thread:$0]  %s12, 16, %s96, [#allocation14]
    $region49: #{actor_net_forward.1} parent=1 // pred_fallthru
      _
    // Predicated region
    $region50: #{actor_net_forward.1} parent=1 // pred_check
      _
    $region51: #{actor_net_forward.1} parent=1 // pred_check_branch
      %100 = sbr.rel (0) target = $region53
    $region52: #{actor_net_forward.1} parent=1 // pred_region
      %101 = dma.done [#allocation5], 1536
    $region53: #{actor_net_forward.1} parent=1 // pred_fallthru
      _
    // Predicated region
    $region54: #{actor_net_forward.1} parent=1 // pred_check
      _
    $region55: #{actor_net_forward.1} parent=1 // pred_check_branch
      %103 = sbr.rel (0) target = $region57
    $region56: #{actor_net_forward.1} parent=1 // pred_region
      %104 = dma.done [#allocation8], 32
    $region57: #{actor_net_forward.1} parent=1 // pred_fallthru
      _
    // Predicated region
    $region58: #{actor_net_forward.1} parent=1 // pred_check
      _
    $region59: #{actor_net_forward.1} parent=1 // pred_check_branch
      %106 = sbr.rel (0) target = $region61
    $region60: #{actor_net_forward.1} parent=1 // pred_region
      %107 = dma.done [#allocation8], 4096
    $region61: #{actor_net_forward.1} parent=1 // pred_fallthru
      _
    // Predicated region
    $region62: #{actor_net_forward.1} parent=1 // pred_check
      _
    $region63: #{actor_net_forward.1} parent=1 // pred_check_branch
      %109 = sbr.rel (0) target = $region65
    $region64: #{actor_net_forward.1} parent=1 // pred_region
      %110 = dma.done [#allocation11], 64
    $region65: #{actor_net_forward.1} parent=1 // pred_fallthru
      _
    // Predicated region
    $region66: #{actor_net_forward.1} parent=1 // pred_check
      _
    $region67: #{actor_net_forward.1} parent=1 // pred_check_branch
      %112 = sbr.rel (0) target = $region69
    $region68: #{actor_net_forward.1} parent=1 // pred_region
      %113 = dma.done [#allocation11], 16
    $region69: #{actor_net_forward.1} parent=1 // pred_fallthru
      _
    // Predicated region
    $region70: #{actor_net_forward.1} parent=1 // pred_check
      _
    $region71: #{actor_net_forward.1} parent=1 // pred_check_branch
      %115 = sbr.rel (0) target = $region73
    $region72: #{actor_net_forward.1} parent=1 // pred_region
      %116 = dma.done [#allocation14], 16
    $region73: #{actor_net_forward.1} parent=1 // pred_fallthru
      _
    %s119 = sshll.u32 1, 14
    %s120 = sxor.u32 4294967295, %s119
    %s122 = sld [smem:[#allocation0]]
    %s123 = sadd.s32 2, %s122
    %s125 = sshll.u32 7, 26
    %s126 = sxor.u32 4294967295, %s125
    %s127 = sand.u32 0, %s126
    %s128 = sshll.u32 %s123, 26
    %s129 = sor.u32 %s127, %s128
    %s130 = sshll.u32 [#allocation2], 4
    %s131 = int_to_ptr.vmem [resolvable:$true] %s130
    %134 = sst [smem:[#allocation17]] 256
    %s135 = scalar_lea.smem [#allocation17], 1
    %136 = sst [smem:[%s135]] 256
    %s137 = scalar_lea.smem [#allocation17], 2
    %138 = sst [smem:[%s137]] 2
    %s139 = scalar_lea.smem [#allocation17], 3
    %140 = sst [smem:[%s139]] 64
    %s141 = scalar_lea.smem [#allocation17], 4
    %142 = sst [smem:[%s141]] 128
    %s143 = scalar_lea.smem [#allocation17], 5
    %144 = sst [smem:[%s143]] 2
    %s145 = scalar_lea.smem [#allocation17], 6
    %146 = sst [smem:[%s145]] 128
    %s147 = scalar_lea.smem [#allocation17], 7
    %148 = sst [smem:[%s147]] 64
    %s149 = scalar_lea.smem [#allocation17], 8
    %150 = sst [smem:[%s149]] 4
    %152 = dma.general %s6, 65536, %s131, [#allocation3], [#allocation16], [#allocation17], %s129, 0
    %v153 = vlaneseq
    %v154 = vand.u32 %v153, 127
    %v155 = vld [vmem:[%s0] sm:$0x77]
    %s156 = scalar_lea.vmem %s0, 16
    %v157 = vld [vmem:[%s156] sm:$0x77]
    %s158 = scalar_lea.vmem %s0, 32
    %v159 = vld [vmem:[%s158] sm:$0x77]
    %s160 = scalar_lea.vmem %s0, 48
    %v161 = vld [vmem:[%s160] sm:$0x77]
    %v162 = vld [vmem:[%s2] sm:$0xff]
    %v163 = vld [vmem:[%s2 + $0x8] sm:$0xff]
    %v164 = vld [vmem:[%s2 + $0x10] sm:$0xff]
    %v165 = vld [vmem:[%s2 + $0x18] sm:$0xff]
    %s166 = scalar_lea.vmem %s2, 32
    %v167 = vld [vmem:[%s166] sm:$0xff]
    %v168 = vld [vmem:[%s166 + $0x8] sm:$0xff]
    %v169 = vld [vmem:[%s166 + $0x10] sm:$0xff]
    %v170 = vld [vmem:[%s166 + $0x18] sm:$0xff]
    %vm171 = vcmask 23552
    %v173 = vsel %vm171, %v167, 0
    %v176 = vsel %vm171, %v168, 0
    %v179 = vsel %vm171, %v169, 0
    %v182 = vsel %vm171, %v170, 0
    %vm184 = vcmask 1042432
    %v186 = vsel %vm184, %v157, 0
    %188 = vmatprep.subr.mxu0 0.0
    %189 = vmatpush1.msra.mxu0 %v186
    %190 = vmatprep.subr.mxu0 0.0
    %191 = vmatpush1.msra.mxu0 0.0
    %192 = vmatprep.subr.mxu0 0.0
    %193 = vmatpush1.msra.mxu0 0.0
    %194 = vmatprep.subr.mxu0 0.0
    %195 = vmatpush1.msra.mxu0 0.0
    %196 = vmatprep.subr.mxu0 0.0
    %197 = vmatpush1.msra.mxu0 0.0
    %198 = vmatprep.subr.mxu0 0.0
    %199 = vmatpush1.msra.mxu0 0.0
    %200 = vmatprep.subr.mxu0 0.0
    %201 = vmatpush1.msra.mxu0 0.0
    %202 = vmatprep.subr.mxu0 0.0
    %203 = vmatpush1.msra.mxu0 0.0
    %204 = vmatprep.subr.mxu0 0.0
    %205 = vmatpush1.msra.mxu0 0.0
    %206 = vmatprep.subr.mxu0 0.0
    %207 = vmatpush1.msra.mxu0 0.0
    %208 = vmatprep.subr.mxu0 0.0
    %209 = vmatpush1.msra.mxu0 0.0
    %210 = vmatprep.subr.mxu0 0.0
    %211 = vmatpush1.msra.mxu0 0.0
    %212 = vmatprep.subr.mxu0 0.0
    %213 = vmatpush1.msra.mxu0 0.0
    %214 = vmatprep.subr.mxu0 0.0
    %215 = vmatpush1.msra.mxu0 0.0
    %216 = vmatprep.subr.mxu0 0.0
    %217 = vmatpush1.msra.mxu0 0.0
    %218 = vmatprep.subr.mxu0 0.0
    %219 = vmatpush1.msra.mxu0 0.0
    %220 = vmatprep.subr.mxu0 0.0
    %221 = vmatpush1.msra.mxu0 0.0
    %222 = vmatprep.subr.mxu0 0.0
    %223 = vmatpush1.msra.mxu0 0.0
    %224 = vmatprep.subr.mxu0 0.0
    %225 = vmatpush1.msra.mxu0 0.0
    %226 = vmatprep.subr.mxu0 0.0
    %227 = vmatpush1.msra.mxu0 0.0
    %228 = vmatprep.subr.mxu0 0.0
    %229 = vmatpush1.msra.mxu0 0.0
    %230 = vmatprep.subr.mxu0 0.0
    %231 = vmatpush1.msra.mxu0 0.0
    %232 = vmatprep.subr.mxu0 0.0
    %233 = vmatpush1.msra.mxu0 0.0
    %234 = vmatprep.subr.mxu0 0.0
    %235 = vmatpush1.msra.mxu0 0.0
    %236 = vmatprep.subr.mxu0 0.0
    %237 = vmatpush1.msra.mxu0 0.0
    %238 = vmatprep.subr.mxu0 0.0
    %239 = vmatpush1.msra.mxu0 0.0
    %240 = vmatprep.subr.mxu0 0.0
    %241 = vmatpush1.msra.mxu0 0.0
    %242 = vmatprep.subr.mxu0 0.0
    %243 = vmatpush1.msra.mxu0 0.0
    %244 = vmatprep.subr.mxu0 0.0
    %245 = vmatpush1.msra.mxu0 0.0
    %246 = vmatprep.subr.mxu0 0.0
    %247 = vmatpush1.msra.mxu0 0.0
    %248 = vmatprep.subr.mxu0 0.0
    %249 = vmatpush1.msra.mxu0 0.0
    %250 = vmatprep.subr.mxu0 0.0
    %251 = vmatpush1.msra.mxu0 0.0
    %252 = vmatprep.mubr.f32.mxu0 0.0
    %253 = vmatmul.mubr.f32.gmra.mrb[0].mxu0 %v173
    %v254 = vpop.f32.mrb[0].mxu0
    %v255 = vadd.f32 0.0, %v254
    %v256 = vpop.f32.mrb[0].mxu0
    %257 = vmatprep.mubr.f32.mxu0 0.0
    %258 = vmatmul.mubr.f32.gmra.mrb[0].mxu0 %v176
    %v259 = vpop.f32.mrb[0].mxu0
    %v260 = vadd.f32 0.0, %v259
    %v261 = vpop.f32.mrb[0].mxu0
    %262 = vmatprep.mubr.f32.mxu0 0.0
    %263 = vmatmul.mubr.f32.gmra.mrb[0].mxu0 %v179
    %v264 = vpop.f32.mrb[0].mxu0
    %v265 = vadd.f32 0.0, %v264
    %v266 = vpop.f32.mrb[0].mxu0
    %267 = vmatprep.mubr.f32.mxu0 0.0
    %268 = vmatmul.mubr.f32.gmra.mrb[0].mxu0 %v182
    %v269 = vpop.f32.mrb[0].mxu0
    %v270 = vadd.f32 0.0, %v269
    %v271 = vpop.f32.mrb[0].mxu0
    %272 = vdwg.mxu0
    %v274 = vsel %vm171, %v162, 0
    %v277 = vsel %vm171, %v163, 0
    %v280 = vsel %vm171, %v164, 0
    %v283 = vsel %vm171, %v165, 0
    %v286 = vsel %vm184, %v155, 0
    %288 = vmatprep.subr.mxu0 0.0
    %289 = vmatpush1.msra.mxu0 %v286
    %290 = vmatprep.subr.mxu0 0.0
    %291 = vmatpush1.msra.mxu0 0.0
    %292 = vmatprep.subr.mxu0 0.0
    %293 = vmatpush1.msra.mxu0 0.0
    %294 = vmatprep.subr.mxu0 0.0
    %295 = vmatpush1.msra.mxu0 0.0
    %296 = vmatprep.subr.mxu0 0.0
    %297 = vmatpush1.msra.mxu0 0.0
    %298 = vmatprep.subr.mxu0 0.0
    %299 = vmatpush1.msra.mxu0 0.0
    %300 = vmatprep.subr.mxu0 0.0
    %301 = vmatpush1.msra.mxu0 0.0
    %302 = vmatprep.subr.mxu0 0.0
    %303 = vmatpush1.msra.mxu0 0.0
    %304 = vmatprep.subr.mxu0 0.0
    %305 = vmatpush1.msra.mxu0 0.0
    %306 = vmatprep.subr.mxu0 0.0
    %307 = vmatpush1.msra.mxu0 0.0
    %308 = vmatprep.subr.mxu0 0.0
    %309 = vmatpush1.msra.mxu0 0.0
    %310 = vmatprep.subr.mxu0 0.0
    %311 = vmatpush1.msra.mxu0 0.0
    %312 = vmatprep.subr.mxu0 0.0
    %313 = vmatpush1.msra.mxu0 0.0
    %314 = vmatprep.subr.mxu0 0.0
    %315 = vmatpush1.msra.mxu0 0.0
    %316 = vmatprep.subr.mxu0 0.0
    %317 = vmatpush1.msra.mxu0 0.0
    %318 = vmatprep.subr.mxu0 0.0
    %319 = vmatpush1.msra.mxu0 0.0
    %320 = vmatprep.subr.mxu0 0.0
    %321 = vmatpush1.msra.mxu0 0.0
    %322 = vmatprep.subr.mxu0 0.0
    %323 = vmatpush1.msra.mxu0 0.0
    %324 = vmatprep.subr.mxu0 0.0
    %325 = vmatpush1.msra.mxu0 0.0
    %326 = vmatprep.subr.mxu0 0.0
    %327 = vmatpush1.msra.mxu0 0.0
    %328 = vmatprep.subr.mxu0 0.0
    %329 = vmatpush1.msra.mxu0 0.0
    %330 = vmatprep.subr.mxu0 0.0
    %331 = vmatpush1.msra.mxu0 0.0
    %332 = vmatprep.subr.mxu0 0.0
    %333 = vmatpush1.msra.mxu0 0.0
    %334 = vmatprep.subr.mxu0 0.0
    %335 = vmatpush1.msra.mxu0 0.0
    %336 = vmatprep.subr.mxu0 0.0
    %337 = vmatpush1.msra.mxu0 0.0
    %338 = vmatprep.subr.mxu0 0.0
    %339 = vmatpush1.msra.mxu0 0.0
    %340 = vmatprep.subr.mxu0 0.0
    %341 = vmatpush1.msra.mxu0 0.0
    %342 = vmatprep.subr.mxu0 0.0
    %343 = vmatpush1.msra.mxu0 0.0
    %344 = vmatprep.subr.mxu0 0.0
    %345 = vmatpush1.msra.mxu0 0.0
    %346 = vmatprep.subr.mxu0 0.0
    %347 = vmatpush1.msra.mxu0 0.0
    %348 = vmatprep.subr.mxu0 0.0
    %349 = vmatpush1.msra.mxu0 0.0
    %350 = vmatprep.subr.mxu0 0.0
    %351 = vmatpush1.msra.mxu0 0.0
    %352 = vmatprep.mubr.f32.mxu0 0.0
    %353 = vmatmul.mubr.f32.gmra.mrb[0].mxu0 %v274
    %v354 = vpop.f32.mrb[0].mxu0
    %v355 = vadd.f32 %v255, %v354
    %v356 = vpop.f32.mrb[0].mxu0
    %357 = vmatprep.mubr.f32.mxu0 0.0
    %358 = vmatmul.mubr.f32.gmra.mrb[0].mxu0 %v277
    %v359 = vpop.f32.mrb[0].mxu0
    %v360 = vadd.f32 %v260, %v359
    %v361 = vpop.f32.mrb[0].mxu0
    %362 = vmatprep.mubr.f32.mxu0 0.0
    %363 = vmatmul.mubr.f32.gmra.mrb[0].mxu0 %v280
    %v364 = vpop.f32.mrb[0].mxu0
    %v365 = vadd.f32 %v265, %v364
    %v366 = vpop.f32.mrb[0].mxu0
    %367 = vmatprep.mubr.f32.mxu0 0.0
    %368 = vmatmul.mubr.f32.gmra.mrb[0].mxu0 %v283
    %v369 = vpop.f32.mrb[0].mxu0
    %v370 = vadd.f32 %v270, %v369
    %v371 = vpop.f32.mrb[0].mxu0
    %372 = vdwg.mxu0
    %s373 = scalar_lea.vmem %s2, 64
    %v374 = vld [vmem:[%s373] sm:$0xff]
    %v375 = vld [vmem:[%s373 + $0x8] sm:$0xff]
    %v376 = vld [vmem:[%s373 + $0x10] sm:$0xff]
    %v377 = vld [vmem:[%s373 + $0x18] sm:$0xff]
    %v379 = vsel %vm171, %v374, 0
    %v382 = vsel %vm171, %v375, 0
    %v385 = vsel %vm171, %v376, 0
    %v388 = vsel %vm171, %v377, 0
    %v391 = vsel %vm184, %v159, 0
    %393 = vmatprep.subr.mxu0 0.0
    %394 = vmatpush1.msra.mxu0 %v391
    %395 = vmatprep.subr.mxu0 0.0
    %396 = vmatpush1.msra.mxu0 0.0
    %397 = vmatprep.subr.mxu0 0.0
    %398 = vmatpush1.msra.mxu0 0.0
    %399 = vmatprep.subr.mxu0 0.0
    %400 = vmatpush1.msra.mxu0 0.0
    %401 = vmatprep.subr.mxu0 0.0
    %402 = vmatpush1.msra.mxu0 0.0
    %403 = vmatprep.subr.mxu0 0.0
    %404 = vmatpush1.msra.mxu0 0.0
    %405 = vmatprep.subr.mxu0 0.0
    %406 = vmatpush1.msra.mxu0 0.0
    %407 = vmatprep.subr.mxu0 0.0
    %408 = vmatpush1.msra.mxu0 0.0
    %409 = vmatprep.subr.mxu0 0.0
    %410 = vmatpush1.msra.mxu0 0.0
    %411 = vmatprep.subr.mxu0 0.0
    %412 = vmatpush1.msra.mxu0 0.0
    %413 = vmatprep.subr.mxu0 0.0
    %414 = vmatpush1.msra.mxu0 0.0
    %415 = vmatprep.subr.mxu0 0.0
    %416 = vmatpush1.msra.mxu0 0.0
    %417 = vmatprep.subr.mxu0 0.0
    %418 = vmatpush1.msra.mxu0 0.0
    %419 = vmatprep.subr.mxu0 0.0
    %420 = vmatpush1.msra.mxu0 0.0
    %421 = vmatprep.subr.mxu0 0.0
    %422 = vmatpush1.msra.mxu0 0.0
    %423 = vmatprep.subr.mxu0 0.0
    %424 = vmatpush1.msra.mxu0 0.0
    %425 = vmatprep.subr.mxu0 0.0
    %426 = vmatpush1.msra.mxu0 0.0
    %427 = vmatprep.subr.mxu0 0.0
    %428 = vmatpush1.msra.mxu0 0.0
    %429 = vmatprep.subr.mxu0 0.0
    %430 = vmatpush1.msra.mxu0 0.0
    %431 = vmatprep.subr.mxu0 0.0
    %432 = vmatpush1.msra.mxu0 0.0
    %433 = vmatprep.subr.mxu0 0.0
    %434 = vmatpush1.msra.mxu0 0.0
    %435 = vmatprep.subr.mxu0 0.0
    %436 = vmatpush1.msra.mxu0 0.0
    %437 = vmatprep.subr.mxu0 0.0
    %438 = vmatpush1.msra.mxu0 0.0
    %439 = vmatprep.subr.mxu0 0.0
    %440 = vmatpush1.msra.mxu0 0.0
    %441 = vmatprep.subr.mxu0 0.0
    %442 = vmatpush1.msra.mxu0 0.0
    %443 = vmatprep.subr.mxu0 0.0
    %444 = vmatpush1.msra.mxu0 0.0
    %445 = vmatprep.subr.mxu0 0.0
    %446 = vmatpush1.msra.mxu0 0.0
    %447 = vmatprep.subr.mxu0 0.0
    %448 = vmatpush1.msra.mxu0 0.0
    %449 = vmatprep.subr.mxu0 0.0
    %450 = vmatpush1.msra.mxu0 0.0
    %451 = vmatprep.subr.mxu0 0.0
    %452 = vmatpush1.msra.mxu0 0.0
    %453 = vmatprep.subr.mxu0 0.0
    %454 = vmatpush1.msra.mxu0 0.0
    %455 = vmatprep.subr.mxu0 0.0
    %456 = vmatpush1.msra.mxu0 0.0
    %457 = vmatprep.mubr.f32.mxu0 0.0
    %458 = vmatmul.mubr.f32.gmra.mrb[0].mxu0 %v379
    %v459 = vpop.f32.mrb[0].mxu0
    %v460 = vadd.f32 0.0, %v459
    %v461 = vpop.f32.mrb[0].mxu0
    %462 = vmatprep.mubr.f32.mxu0 0.0
    %463 = vmatmul.mubr.f32.gmra.mrb[0].mxu0 %v382
    %v464 = vpop.f32.mrb[0].mxu0
    %v465 = vadd.f32 0.0, %v464
    %v466 = vpop.f32.mrb[0].mxu0
    %467 = vmatprep.mubr.f32.mxu0 0.0
    %468 = vmatmul.mubr.f32.gmra.mrb[0].mxu0 %v385
    %v469 = vpop.f32.mrb[0].mxu0
    %v470 = vadd.f32 0.0, %v469
    %v471 = vpop.f32.mrb[0].mxu0
    %472 = vmatprep.mubr.f32.mxu0 0.0
    %473 = vmatmul.mubr.f32.gmra.mrb[0].mxu0 %v388
    %v474 = vpop.f32.mrb[0].mxu0
    %v475 = vadd.f32 0.0, %v474
    %v476 = vpop.f32.mrb[0].mxu0
    %477 = vdwg.mxu0
    %v478 = vadd.f32 %v355, %v460
    %v479 = vadd.f32 %v360, %v465
    %v480 = vadd.f32 %v365, %v470
    %v481 = vadd.f32 %v370, %v475
    %s482 = scalar_lea.vmem %s2, 96
    %v483 = vld [vmem:[%s482] sm:$0xff]
    %v484 = vld [vmem:[%s482 + $0x8] sm:$0xff]
    %v485 = vld [vmem:[%s482 + $0x10] sm:$0xff]
    %v486 = vld [vmem:[%s482 + $0x18] sm:$0xff]
    %v488 = vsel %vm171, %v483, 0
    %v491 = vsel %vm171, %v484, 0
    %v494 = vsel %vm171, %v485, 0
    %v497 = vsel %vm171, %v486, 0
    %v500 = vsel %vm184, %v161, 0
    %502 = vmatprep.subr.mxu0 0.0
    %503 = vmatpush1.msra.mxu0 %v500
    %504 = vmatprep.subr.mxu0 0.0
    %505 = vmatpush1.msra.mxu0 0.0
    %506 = vmatprep.subr.mxu0 0.0
    %507 = vmatpush1.msra.mxu0 0.0
    %508 = vmatprep.subr.mxu0 0.0
    %509 = vmatpush1.msra.mxu0 0.0
    %510 = vmatprep.subr.mxu0 0.0
    %511 = vmatpush1.msra.mxu0 0.0
    %512 = vmatprep.subr.mxu0 0.0
    %513 = vmatpush1.msra.mxu0 0.0
    %514 = vmatprep.subr.mxu0 0.0
    %515 = vmatpush1.msra.mxu0 0.0
    %516 = vmatprep.subr.mxu0 0.0
    %517 = vmatpush1.msra.mxu0 0.0
    %518 = vmatprep.subr.mxu0 0.0
    %519 = vmatpush1.msra.mxu0 0.0
    %520 = vmatprep.subr.mxu0 0.0
    %521 = vmatpush1.msra.mxu0 0.0
    %522 = vmatprep.subr.mxu0 0.0
    %523 = vmatpush1.msra.mxu0 0.0
    %524 = vmatprep.subr.mxu0 0.0
    %525 = vmatpush1.msra.mxu0 0.0
    %526 = vmatprep.subr.mxu0 0.0
    %527 = vmatpush1.msra.mxu0 0.0
    %528 = vmatprep.subr.mxu0 0.0
    %529 = vmatpush1.msra.mxu0 0.0
    %530 = vmatprep.subr.mxu0 0.0
    %531 = vmatpush1.msra.mxu0 0.0
    %532 = vmatprep.subr.mxu0 0.0
    %533 = vmatpush1.msra.mxu0 0.0
    %534 = vmatprep.subr.mxu0 0.0
    %535 = vmatpush1.msra.mxu0 0.0
    %536 = vmatprep.subr.mxu0 0.0
    %537 = vmatpush1.msra.mxu0 0.0
    %538 = vmatprep.subr.mxu0 0.0
    %539 = vmatpush1.msra.mxu0 0.0
    %540 = vmatprep.subr.mxu0 0.0
    %541 = vmatpush1.msra.mxu0 0.0
    %542 = vmatprep.subr.mxu0 0.0
    %543 = vmatpush1.msra.mxu0 0.0
    %544 = vmatprep.subr.mxu0 0.0
    %545 = vmatpush1.msra.mxu0 0.0
    %546 = vmatprep.subr.mxu0 0.0
    %547 = vmatpush1.msra.mxu0 0.0
    %548 = vmatprep.subr.mxu0 0.0
    %549 = vmatpush1.msra.mxu0 0.0
    %550 = vmatprep.subr.mxu0 0.0
    %551 = vmatpush1.msra.mxu0 0.0
    %552 = vmatprep.subr.mxu0 0.0
    %553 = vmatpush1.msra.mxu0 0.0
    %554 = vmatprep.subr.mxu0 0.0
    %555 = vmatpush1.msra.mxu0 0.0
    %556 = vmatprep.subr.mxu0 0.0
    %557 = vmatpush1.msra.mxu0 0.0
    %558 = vmatprep.subr.mxu0 0.0
    %559 = vmatpush1.msra.mxu0 0.0
    %560 = vmatprep.subr.mxu0 0.0
    %561 = vmatpush1.msra.mxu0 0.0
    %562 = vmatprep.subr.mxu0 0.0
    %563 = vmatpush1.msra.mxu0 0.0
    %564 = vmatprep.subr.mxu0 0.0
    %565 = vmatpush1.msra.mxu0 0.0
    %566 = vmatprep.mubr.f32.mxu0 0.0
    %567 = vmatmul.mubr.f32.gmra.mrb[0].mxu0 %v488
    %v568 = vpop.f32.mrb[0].mxu0
    %v569 = vadd.f32 0.0, %v568
    %v570 = vpop.f32.mrb[0].mxu0
    %571 = vmatprep.mubr.f32.mxu0 0.0
    %572 = vmatmul.mubr.f32.gmra.mrb[0].mxu0 %v491
    %v573 = vpop.f32.mrb[0].mxu0
    %v574 = vadd.f32 0.0, %v573
    %v575 = vpop.f32.mrb[0].mxu0
    %576 = vmatprep.mubr.f32.mxu0 0.0
    %577 = vmatmul.mubr.f32.gmra.mrb[0].mxu0 %v494
    %v578 = vpop.f32.mrb[0].mxu0
    %v579 = vadd.f32 0.0, %v578
    %v580 = vpop.f32.mrb[0].mxu0
    %581 = vmatprep.mubr.f32.mxu0 0.0
    %582 = vmatmul.mubr.f32.gmra.mrb[0].mxu0 %v497
    %v583 = vpop.f32.mrb[0].mxu0
    %v584 = vadd.f32 0.0, %v583
    %v585 = vpop.f32.mrb[0].mxu0
    %586 = vdwg.mxu0
    %v587 = vadd.f32 %v478, %v569
    %v588 = vadd.f32 %v479, %v574
    %v589 = vadd.f32 %v480, %v579
    %v590 = vadd.f32 %v481, %v584
    %s591 = scalar_lea.vmem %s2, 128
    %v592 = vld [vmem:[%s591] sm:$0xff]
    %v593 = vld [vmem:[%s591 + $0x8] sm:$0xff]
    %v594 = vld [vmem:[%s591 + $0x10] sm:$0xff]
    %v595 = vld [vmem:[%s591 + $0x18] sm:$0xff]
    %v596 = vcombine.high %v155, %v155
    %597 = vrot.lane.b32.xlu0 %v155, 127
    %v598 = vpop.permute.xlu0 %597
    %599 = vrot.lane.b32.xlu0 %v596, 127
    %v600 = vpop.permute.xlu0 %599
    %vm601 = vcmask 1039360
    %v602 = vsel %vm601, %v598, %v600
    %v604 = vsel %vm171, %v592, 0
    %v607 = vsel %vm171, %v593, 0
    %v610 = vsel %vm171, %v594, 0
    %v613 = vsel %vm171, %v595, 0
    %v615 = vsel %vm184, %v602, 0
    %617 = vmatprep.subr.mxu0 0.0
    %618 = vmatpush1.msra.mxu0 %v615
    %619 = vmatprep.subr.mxu0 0.0
    %620 = vmatpush1.msra.mxu0 0.0
    %621 = vmatprep.subr.mxu0 0.0
    %622 = vmatpush1.msra.mxu0 0.0
    %623 = vmatprep.subr.mxu0 0.0
    %624 = vmatpush1.msra.mxu0 0.0
    %625 = vmatprep.subr.mxu0 0.0
    %626 = vmatpush1.msra.mxu0 0.0
    %627 = vmatprep.subr.mxu0 0.0
    %628 = vmatpush1.msra.mxu0 0.0
    %629 = vmatprep.subr.mxu0 0.0
    %630 = vmatpush1.msra.mxu0 0.0
    %631 = vmatprep.subr.mxu0 0.0
    %632 = vmatpush1.msra.mxu0 0.0
    %633 = vmatprep.subr.mxu0 0.0
    %634 = vmatpush1.msra.mxu0 0.0
    %635 = vmatprep.subr.mxu0 0.0
    %636 = vmatpush1.msra.mxu0 0.0
    %637 = vmatprep.subr.mxu0 0.0
    %638 = vmatpush1.msra.mxu0 0.0
    %639 = vmatprep.subr.mxu0 0.0
    %640 = vmatpush1.msra.mxu0 0.0
    %641 = vmatprep.subr.mxu0 0.0
    %642 = vmatpush1.msra.mxu0 0.0
    %643 = vmatprep.subr.mxu0 0.0
    %644 = vmatpush1.msra.mxu0 0.0
    %645 = vmatprep.subr.mxu0 0.0
    %646 = vmatpush1.msra.mxu0 0.0
    %647 = vmatprep.subr.mxu0 0.0
    %648 = vmatpush1.msra.mxu0 0.0
    %649 = vmatprep.subr.mxu0 0.0
    %650 = vmatpush1.msra.mxu0 0.0
    %651 = vmatprep.subr.mxu0 0.0
    %652 = vmatpush1.msra.mxu0 0.0
    %653 = vmatprep.subr.mxu0 0.0
    %654 = vmatpush1.msra.mxu0 0.0
    %655 = vmatprep.subr.mxu0 0.0
    %656 = vmatpush1.msra.mxu0 0.0
    %657 = vmatprep.subr.mxu0 0.0
    %658 = vmatpush1.msra.mxu0 0.0
    %659 = vmatprep.subr.mxu0 0.0
    %660 = vmatpush1.msra.mxu0 0.0
    %661 = vmatprep.subr.mxu0 0.0
    %662 = vmatpush1.msra.mxu0 0.0
    %663 = vmatprep.subr.mxu0 0.0
    %664 = vmatpush1.msra.mxu0 0.0
    %665 = vmatprep.subr.mxu0 0.0
    %666 = vmatpush1.msra.mxu0 0.0
    %667 = vmatprep.subr.mxu0 0.0
    %668 = vmatpush1.msra.mxu0 0.0
    %669 = vmatprep.subr.mxu0 0.0
    %670 = vmatpush1.msra.mxu0 0.0
    %671 = vmatprep.subr.mxu0 0.0
    %672 = vmatpush1.msra.mxu0 0.0
    %673 = vmatprep.subr.mxu0 0.0
    %674 = vmatpush1.msra.mxu0 0.0
    %675 = vmatprep.subr.mxu0 0.0
    %676 = vmatpush1.msra.mxu0 0.0
    %677 = vmatprep.subr.mxu0 0.0
    %678 = vmatpush1.msra.mxu0 0.0
    %679 = vmatprep.subr.mxu0 0.0
    %680 = vmatpush1.msra.mxu0 0.0
    %681 = vmatprep.mubr.f32.mxu0 0.0
    %682 = vmatmul.mubr.f32.gmra.mrb[0].mxu0 %v604
    %v683 = vpop.f32.mrb[0].mxu0
    %v684 = vadd.f32 0.0, %v683
    %v685 = vpop.f32.mrb[0].mxu0
    %686 = vmatprep.mubr.f32.mxu0 0.0
    %687 = vmatmul.mubr.f32.gmra.mrb[0].mxu0 %v607
    %v688 = vpop.f32.mrb[0].mxu0
    %v689 = vadd.f32 0.0, %v688
    %v690 = vpop.f32.mrb[0].mxu0
    %691 = vmatprep.mubr.f32.mxu0 0.0
    %692 = vmatmul.mubr.f32.gmra.mrb[0].mxu0 %v610
    %v693 = vpop.f32.mrb[0].mxu0
    %v694 = vadd.f32 0.0, %v693
    %v695 = vpop.f32.mrb[0].mxu0
    %696 = vmatprep.mubr.f32.mxu0 0.0
    %697 = vmatmul.mubr.f32.gmra.mrb[0].mxu0 %v613
    %v698 = vpop.f32.mrb[0].mxu0
    %v699 = vadd.f32 0.0, %v698
    %v700 = vpop.f32.mrb[0].mxu0
    %701 = vdwg.mxu0
    %v702 = vadd.f32 %v587, %v684
    %v703 = vadd.f32 %v588, %v689
    %v704 = vadd.f32 %v589, %v694
    %v705 = vadd.f32 %v590, %v699
    %v706 = vld [vmem:[%s3] sm:$0xff]
    %v707 = vld [vmem:[%s3 + $0x8] sm:$0xff]
    %v708 = vld [vmem:[%s3 + $0x10] sm:$0xff]
    %v709 = vld [vmem:[%s3 + $0x18] sm:$0xff]
    %711 = vset.pattern.permute.xlu0 0
    %712 = vperm.xlu0 %711, %v706
    %v713 = vpop.permute.xlu0 %712
    %716 = vset.pattern.permute.xlu0 0
    %717 = vperm.xlu0 %716, %v707
    %v718 = vpop.permute.xlu0 %717
    %721 = vset.pattern.permute.xlu0 0
    %722 = vperm.xlu0 %721, %v708
    %v723 = vpop.permute.xlu0 %722
    %726 = vset.pattern.permute.xlu0 0
    %727 = vperm.xlu0 %726, %v709
    %v728 = vpop.permute.xlu0 %727
    %v730 = vadd.f32 %v702, %v713
    %v731 = vadd.f32 %v703, %v718
    %v732 = vadd.f32 %v704, %v723
    %v733 = vadd.f32 %v705, %v728
    %v734 = vmax.f32 %v730, 0.0
    %v735 = vmax.f32 %v731, 0.0
    %v736 = vmax.f32 %v732, 0.0
    %v737 = vmax.f32 %v733, 0.0
    %738 = vmatprep.subr.mxu0 0.0
    %739 = vmatpush1.msra.mxu0 %v500
    %740 = vmatprep.subr.mxu0 0.0
    %741 = vmatpush1.msra.mxu0 0.0
    %742 = vmatprep.subr.mxu0 0.0
    %743 = vmatpush1.msra.mxu0 0.0
    %744 = vmatprep.subr.mxu0 0.0
    %745 = vmatpush1.msra.mxu0 0.0
    %746 = vmatprep.subr.mxu0 0.0
    %747 = vmatpush1.msra.mxu0 0.0
    %748 = vmatprep.subr.mxu0 0.0
    %749 = vmatpush1.msra.mxu0 0.0
    %750 = vmatprep.subr.mxu0 0.0
    %751 = vmatpush1.msra.mxu0 0.0
    %752 = vmatprep.subr.mxu0 0.0
    %753 = vmatpush1.msra.mxu0 0.0
    %754 = vmatprep.subr.mxu0 0.0
    %755 = vmatpush1.msra.mxu0 0.0
    %756 = vmatprep.subr.mxu0 0.0
    %757 = vmatpush1.msra.mxu0 0.0
    %758 = vmatprep.subr.mxu0 0.0
    %759 = vmatpush1.msra.mxu0 0.0
    %760 = vmatprep.subr.mxu0 0.0
    %761 = vmatpush1.msra.mxu0 0.0
    %762 = vmatprep.subr.mxu0 0.0
    %763 = vmatpush1.msra.mxu0 0.0
    %764 = vmatprep.subr.mxu0 0.0
    %765 = vmatpush1.msra.mxu0 0.0
    %766 = vmatprep.subr.mxu0 0.0
    %767 = vmatpush1.msra.mxu0 0.0
    %768 = vmatprep.subr.mxu0 0.0
    %769 = vmatpush1.msra.mxu0 0.0
    %770 = vmatprep.subr.mxu0 0.0
    %771 = vmatpush1.msra.mxu0 0.0
    %772 = vmatprep.subr.mxu0 0.0
    %773 = vmatpush1.msra.mxu0 0.0
    %774 = vmatprep.subr.mxu0 0.0
    %775 = vmatpush1.msra.mxu0 0.0
    %776 = vmatprep.subr.mxu0 0.0
    %777 = vmatpush1.msra.mxu0 0.0
    %778 = vmatprep.subr.mxu0 0.0
    %779 = vmatpush1.msra.mxu0 0.0
    %780 = vmatprep.subr.mxu0 0.0
    %781 = vmatpush1.msra.mxu0 0.0
    %782 = vmatprep.subr.mxu0 0.0
    %783 = vmatpush1.msra.mxu0 0.0
    %784 = vmatprep.subr.mxu0 0.0
    %785 = vmatpush1.msra.mxu0 0.0
    %786 = vmatprep.subr.mxu0 0.0
    %787 = vmatpush1.msra.mxu0 0.0
    %788 = vmatprep.subr.mxu0 0.0
    %789 = vmatpush1.msra.mxu0 0.0
    %790 = vmatprep.subr.mxu0 0.0
    %791 = vmatpush1.msra.mxu0 0.0
    %792 = vmatprep.subr.mxu0 0.0
    %793 = vmatpush1.msra.mxu0 0.0
    %794 = vmatprep.subr.mxu0 0.0
    %795 = vmatpush1.msra.mxu0 0.0
    %796 = vmatprep.subr.mxu0 0.0
    %797 = vmatpush1.msra.mxu0 0.0
    %798 = vmatprep.subr.mxu0 0.0
    %799 = vmatpush1.msra.mxu0 0.0
    %800 = vmatprep.subr.mxu0 0.0
    %801 = vmatpush1.msra.mxu0 0.0
    %802 = vmatprep.mubr.f32.mxu0 0.0
    %803 = vmatmul.mubr.f32.gmra.mrb[0].mxu0 %v173
    %v804 = vpop.f32.mrb[0].mxu0
    %v805 = vadd.f32 0.0, %v804
    %v806 = vpop.f32.mrb[0].mxu0
    %807 = vmatprep.mubr.f32.mxu0 0.0
    %808 = vmatmul.mubr.f32.gmra.mrb[0].mxu0 %v176
    %v809 = vpop.f32.mrb[0].mxu0
    %v810 = vadd.f32 0.0, %v809
    %v811 = vpop.f32.mrb[0].mxu0
    %812 = vmatprep.mubr.f32.mxu0 0.0
    %813 = vmatmul.mubr.f32.gmra.mrb[0].mxu0 %v179
    %v814 = vpop.f32.mrb[0].mxu0
    %v815 = vadd.f32 0.0, %v814
    %v816 = vpop.f32.mrb[0].mxu0
    %817 = vmatprep.mubr.f32.mxu0 0.0
    %818 = vmatmul.mubr.f32.gmra.mrb[0].mxu0 %v182
    %v819 = vpop.f32.mrb[0].mxu0
    %v820 = vadd.f32 0.0, %v819
    %v821 = vpop.f32.mrb[0].mxu0
    %822 = vdwg.mxu0
    %823 = vmatprep.subr.mxu0 0.0
    %824 = vmatpush1.msra.mxu0 %v391
    %825 = vmatprep.subr.mxu0 0.0
    %826 = vmatpush1.msra.mxu0 0.0
    %827 = vmatprep.subr.mxu0 0.0
    %828 = vmatpush1.msra.mxu0 0.0
    %829 = vmatprep.subr.mxu0 0.0
    %830 = vmatpush1.msra.mxu0 0.0
    %831 = vmatprep.subr.mxu0 0.0
    %832 = vmatpush1.msra.mxu0 0.0
    %833 = vmatprep.subr.mxu0 0.0
    %834 = vmatpush1.msra.mxu0 0.0
    %835 = vmatprep.subr.mxu0 0.0
    %836 = vmatpush1.msra.mxu0 0.0
    %837 = vmatprep.subr.mxu0 0.0
    %838 = vmatpush1.msra.mxu0 0.0
    %839 = vmatprep.subr.mxu0 0.0
    %840 = vmatpush1.msra.mxu0 0.0
    %841 = vmatprep.subr.mxu0 0.0
    %842 = vmatpush1.msra.mxu0 0.0
    %843 = vmatprep.subr.mxu0 0.0
    %844 = vmatpush1.msra.mxu0 0.0
    %845 = vmatprep.subr.mxu0 0.0
    %846 = vmatpush1.msra.mxu0 0.0
    %847 = vmatprep.subr.mxu0 0.0
    %848 = vmatpush1.msra.mxu0 0.0
    %849 = vmatprep.subr.mxu0 0.0
    %850 = vmatpush1.msra.mxu0 0.0
    %851 = vmatprep.subr.mxu0 0.0
    %852 = vmatpush1.msra.mxu0 0.0
    %853 = vmatprep.subr.mxu0 0.0
    %854 = vmatpush1.msra.mxu0 0.0
    %855 = vmatprep.subr.mxu0 0.0
    %856 = vmatpush1.msra.mxu0 0.0
    %857 = vmatprep.subr.mxu0 0.0
    %858 = vmatpush1.msra.mxu0 0.0
    %859 = vmatprep.subr.mxu0 0.0
    %860 = vmatpush1.msra.mxu0 0.0
    %861 = vmatprep.subr.mxu0 0.0
    %862 = vmatpush1.msra.mxu0 0.0
    %863 = vmatprep.subr.mxu0 0.0
    %864 = vmatpush1.msra.mxu0 0.0
    %865 = vmatprep.subr.mxu0 0.0
    %866 = vmatpush1.msra.mxu0 0.0
    %867 = vmatprep.subr.mxu0 0.0
    %868 = vmatpush1.msra.mxu0 0.0
    %869 = vmatprep.subr.mxu0 0.0
    %870 = vmatpush1.msra.mxu0 0.0
    %871 = vmatprep.subr.mxu0 0.0
    %872 = vmatpush1.msra.mxu0 0.0
    %873 = vmatprep.subr.mxu0 0.0
    %874 = vmatpush1.msra.mxu0 0.0
    %875 = vmatprep.subr.mxu0 0.0
    %876 = vmatpush1.msra.mxu0 0.0
    %877 = vmatprep.subr.mxu0 0.0
    %878 = vmatpush1.msra.mxu0 0.0
    %879 = vmatprep.subr.mxu0 0.0
    %880 = vmatpush1.msra.mxu0 0.0
    %881 = vmatprep.subr.mxu0 0.0
    %882 = vmatpush1.msra.mxu0 0.0
    %883 = vmatprep.subr.mxu0 0.0
    %884 = vmatpush1.msra.mxu0 0.0
    %885 = vmatprep.subr.mxu0 0.0
    %886 = vmatpush1.msra.mxu0 0.0
    %887 = vmatprep.mubr.f32.mxu0 0.0
    %888 = vmatmul.mubr.f32.gmra.mrb[0].mxu0 %v274
    %v889 = vpop.f32.mrb[0].mxu0
    %v890 = vadd.f32 %v805, %v889
    %v891 = vpop.f32.mrb[0].mxu0
    %892 = vmatprep.mubr.f32.mxu0 0.0
    %893 = vmatmul.mubr.f32.gmra.mrb[0].mxu0 %v277
    %v894 = vpop.f32.mrb[0].mxu0
    %v895 = vadd.f32 %v810, %v894
    %v896 = vpop.f32.mrb[0].mxu0
    %897 = vmatprep.mubr.f32.mxu0 0.0
    %898 = vmatmul.mubr.f32.gmra.mrb[0].mxu0 %v280
    %v899 = vpop.f32.mrb[0].mxu0
    %v900 = vadd.f32 %v815, %v899
    %v901 = vpop.f32.mrb[0].mxu0
    %902 = vmatprep.mubr.f32.mxu0 0.0
    %903 = vmatmul.mubr.f32.gmra.mrb[0].mxu0 %v283
    %v904 = vpop.f32.mrb[0].mxu0
    %v905 = vadd.f32 %v820, %v904
    %v906 = vpop.f32.mrb[0].mxu0
    %907 = vdwg.mxu0
    %908 = vmatprep.subr.mxu0 0.0
    %909 = vmatpush1.msra.mxu0 %v615
    %910 = vmatprep.subr.mxu0 0.0
    %911 = vmatpush1.msra.mxu0 0.0
    %912 = vmatprep.subr.mxu0 0.0
    %913 = vmatpush1.msra.mxu0 0.0
    %914 = vmatprep.subr.mxu0 0.0
    %915 = vmatpush1.msra.mxu0 0.0
    %916 = vmatprep.subr.mxu0 0.0
    %917 = vmatpush1.msra.mxu0 0.0
    %918 = vmatprep.subr.mxu0 0.0
    %919 = vmatpush1.msra.mxu0 0.0
    %920 = vmatprep.subr.mxu0 0.0
    %921 = vmatpush1.msra.mxu0 0.0
    %922 = vmatprep.subr.mxu0 0.0
    %923 = vmatpush1.msra.mxu0 0.0
    %924 = vmatprep.subr.mxu0 0.0
    %925 = vmatpush1.msra.mxu0 0.0
    %926 = vmatprep.subr.mxu0 0.0
    %927 = vmatpush1.msra.mxu0 0.0
    %928 = vmatprep.subr.mxu0 0.0
    %929 = vmatpush1.msra.mxu0 0.0
    %930 = vmatprep.subr.mxu0 0.0
    %931 = vmatpush1.msra.mxu0 0.0
    %932 = vmatprep.subr.mxu0 0.0
    %933 = vmatpush1.msra.mxu0 0.0
    %934 = vmatprep.subr.mxu0 0.0
    %935 = vmatpush1.msra.mxu0 0.0
    %936 = vmatprep.subr.mxu0 0.0
    %937 = vmatpush1.msra.mxu0 0.0
    %938 = vmatprep.subr.mxu0 0.0
    %939 = vmatpush1.msra.mxu0 0.0
    %940 = vmatprep.subr.mxu0 0.0
    %941 = vmatpush1.msra.mxu0 0.0
    %942 = vmatprep.subr.mxu0 0.0
    %943 = vmatpush1.msra.mxu0 0.0
    %944 = vmatprep.subr.mxu0 0.0
    %945 = vmatpush1.msra.mxu0 0.0
    %946 = vmatprep.subr.mxu0 0.0
    %947 = vmatpush1.msra.mxu0 0.0
    %948 = vmatprep.subr.mxu0 0.0
    %949 = vmatpush1.msra.mxu0 0.0
    %950 = vmatprep.subr.mxu0 0.0
    %951 = vmatpush1.msra.mxu0 0.0
    %952 = vmatprep.subr.mxu0 0.0
    %953 = vmatpush1.msra.mxu0 0.0
    %954 = vmatprep.subr.mxu0 0.0
    %955 = vmatpush1.msra.mxu0 0.0
    %956 = vmatprep.subr.mxu0 0.0
    %957 = vmatpush1.msra.mxu0 0.0
    %958 = vmatprep.subr.mxu0 0.0
    %959 = vmatpush1.msra.mxu0 0.0
    %960 = vmatprep.subr.mxu0 0.0
    %961 = vmatpush1.msra.mxu0 0.0
    %962 = vmatprep.subr.mxu0 0.0
    %963 = vmatpush1.msra.mxu0 0.0
    %964 = vmatprep.subr.mxu0 0.0
    %965 = vmatpush1.msra.mxu0 0.0
    %966 = vmatprep.subr.mxu0 0.0
    %967 = vmatpush1.msra.mxu0 0.0
    %968 = vmatprep.subr.mxu0 0.0
    %969 = vmatpush1.msra.mxu0 0.0
    %970 = vmatprep.subr.mxu0 0.0
    %971 = vmatpush1.msra.mxu0 0.0
    %972 = vmatprep.mubr.f32.mxu0 0.0
    %973 = vmatmul.mubr.f32.gmra.mrb[0].mxu0 %v379
    %v974 = vpop.f32.mrb[0].mxu0
    %v975 = vadd.f32 0.0, %v974
    %v976 = vpop.f32.mrb[0].mxu0
    %977 = vmatprep.mubr.f32.mxu0 0.0
    %978 = vmatmul.mubr.f32.gmra.mrb[0].mxu0 %v382
    %v979 = vpop.f32.mrb[0].mxu0
    %v980 = vadd.f32 0.0, %v979
    %v981 = vpop.f32.mrb[0].mxu0
    %982 = vmatprep.mubr.f32.mxu0 0.0
    %983 = vmatmul.mubr.f32.gmra.mrb[0].mxu0 %v385
    %v984 = vpop.f32.mrb[0].mxu0
    %v985 = vadd.f32 0.0, %v984
    %v986 = vpop.f32.mrb[0].mxu0
    %987 = vmatprep.mubr.f32.mxu0 0.0
    %988 = vmatmul.mubr.f32.gmra.mrb[0].mxu0 %v388
    %v989 = vpop.f32.mrb[0].mxu0
    %v990 = vadd.f32 0.0, %v989
    %v991 = vpop.f32.mrb[0].mxu0
    %992 = vdwg.mxu0
    %v993 = vadd.f32 %v890, %v975
    %v994 = vadd.f32 %v895, %v980
    %v995 = vadd.f32 %v900, %v985
    %v996 = vadd.f32 %v905, %v990
    %v997 = vcombine.high %v157, %v157
    %998 = vrot.lane.b32.xlu0 %v157, 127
    %v999 = vpop.permute.xlu0 %998
    %1000 = vrot.lane.b32.xlu0 %v997, 127
    %v1001 = vpop.permute.xlu0 %1000
    %v1002 = vsel %vm601, %v999, %v1001
    %v1003 = vsel %vm184, %v1002, 0
    %1005 = vmatprep.subr.mxu0 0.0
    %1006 = vmatpush1.msra.mxu0 %v1003
    %1007 = vmatprep.subr.mxu0 0.0
    %1008 = vmatpush1.msra.mxu0 0.0
    %1009 = vmatprep.subr.mxu0 0.0
    %1010 = vmatpush1.msra.mxu0 0.0
    %1011 = vmatprep.subr.mxu0 0.0
    %1012 = vmatpush1.msra.mxu0 0.0
    %1013 = vmatprep.subr.mxu0 0.0
    %1014 = vmatpush1.msra.mxu0 0.0
    %1015 = vmatprep.subr.mxu0 0.0
    %1016 = vmatpush1.msra.mxu0 0.0
    %1017 = vmatprep.subr.mxu0 0.0
    %1018 = vmatpush1.msra.mxu0 0.0
    %1019 = vmatprep.subr.mxu0 0.0
    %1020 = vmatpush1.msra.mxu0 0.0
    %1021 = vmatprep.subr.mxu0 0.0
    %1022 = vmatpush1.msra.mxu0 0.0
    %1023 = vmatprep.subr.mxu0 0.0
    %1024 = vmatpush1.msra.mxu0 0.0
    %1025 = vmatprep.subr.mxu0 0.0
    %1026 = vmatpush1.msra.mxu0 0.0
    %1027 = vmatprep.subr.mxu0 0.0
    %1028 = vmatpush1.msra.mxu0 0.0
    %1029 = vmatprep.subr.mxu0 0.0
    %1030 = vmatpush1.msra.mxu0 0.0
    %1031 = vmatprep.subr.mxu0 0.0
    %1032 = vmatpush1.msra.mxu0 0.0
    %1033 = vmatprep.subr.mxu0 0.0
    %1034 = vmatpush1.msra.mxu0 0.0
    %1035 = vmatprep.subr.mxu0 0.0
    %1036 = vmatpush1.msra.mxu0 0.0
    %1037 = vmatprep.subr.mxu0 0.0
    %1038 = vmatpush1.msra.mxu0 0.0
    %1039 = vmatprep.subr.mxu0 0.0
    %1040 = vmatpush1.msra.mxu0 0.0
    %1041 = vmatprep.subr.mxu0 0.0
    %1042 = vmatpush1.msra.mxu0 0.0
    %1043 = vmatprep.subr.mxu0 0.0
    %1044 = vmatpush1.msra.mxu0 0.0
    %1045 = vmatprep.subr.mxu0 0.0
    %1046 = vmatpush1.msra.mxu0 0.0
    %1047 = vmatprep.subr.mxu0 0.0
    %1048 = vmatpush1.msra.mxu0 0.0
    %1049 = vmatprep.subr.mxu0 0.0
    %1050 = vmatpush1.msra.mxu0 0.0
    %1051 = vmatprep.subr.mxu0 0.0
    %1052 = vmatpush1.msra.mxu0 0.0
    %1053 = vmatprep.subr.mxu0 0.0
    %1054 = vmatpush1.msra.mxu0 0.0
    %1055 = vmatprep.subr.mxu0 0.0
    %1056 = vmatpush1.msra.mxu0 0.0
    %1057 = vmatprep.subr.mxu0 0.0
    %1058 = vmatpush1.msra.mxu0 0.0
    %1059 = vmatprep.subr.mxu0 0.0
    %1060 = vmatpush1.msra.mxu0 0.0
    %1061 = vmatprep.subr.mxu0 0.0
    %1062 = vmatpush1.msra.mxu0 0.0
    %1063 = vmatprep.subr.mxu0 0.0
    %1064 = vmatpush1.msra.mxu0 0.0
    %1065 = vmatprep.subr.mxu0 0.0
    %1066 = vmatpush1.msra.mxu0 0.0
    %1067 = vmatprep.subr.mxu0 0.0
    %1068 = vmatpush1.msra.mxu0 0.0
    %1069 = vmatprep.mubr.f32.mxu0 0.0
    %1070 = vmatmul.mubr.f32.gmra.mrb[0].mxu0 %v488
    %v1071 = vpop.f32.mrb[0].mxu0
    %v1072 = vadd.f32 0.0, %v1071
    %v1073 = vpop.f32.mrb[0].mxu0
    %1074 = vmatprep.mubr.f32.mxu0 0.0
    %1075 = vmatmul.mubr.f32.gmra.mrb[0].mxu0 %v491
    %v1076 = vpop.f32.mrb[0].mxu0
    %v1077 = vadd.f32 0.0, %v1076
    %v1078 = vpop.f32.mrb[0].mxu0
    %1079 = vmatprep.mubr.f32.mxu0 0.0
    %1080 = vmatmul.mubr.f32.gmra.mrb[0].mxu0 %v494
    %v1081 = vpop.f32.mrb[0].mxu0
    %v1082 = vadd.f32 0.0, %v1081
    %v1083 = vpop.f32.mrb[0].mxu0
    %1084 = vmatprep.mubr.f32.mxu0 0.0
    %1085 = vmatmul.mubr.f32.gmra.mrb[0].mxu0 %v497
    %v1086 = vpop.f32.mrb[0].mxu0
    %v1087 = vadd.f32 0.0, %v1086
    %v1088 = vpop.f32.mrb[0].mxu0
    %1089 = vdwg.mxu0
    %v1090 = vadd.f32 %v993, %v1072
    %v1091 = vadd.f32 %v994, %v1077
    %v1092 = vadd.f32 %v995, %v1082
    %v1093 = vadd.f32 %v996, %v1087
    %v1094 = vcombine.high %v159, %v159
    %1095 = vrot.lane.b32.xlu0 %v159, 127
    %v1096 = vpop.permute.xlu0 %1095
    %1097 = vrot.lane.b32.xlu0 %v1094, 127
    %v1098 = vpop.permute.xlu0 %1097
    %v1099 = vsel %vm601, %v1096, %v1098
    %v1100 = vsel %vm184, %v1099, 0
    %1102 = vmatprep.subr.mxu0 0.0
    %1103 = vmatpush1.msra.mxu0 %v1100
    %1104 = vmatprep.subr.mxu0 0.0
    %1105 = vmatpush1.msra.mxu0 0.0
    %1106 = vmatprep.subr.mxu0 0.0
    %1107 = vmatpush1.msra.mxu0 0.0
    %1108 = vmatprep.subr.mxu0 0.0
    %1109 = vmatpush1.msra.mxu0 0.0
    %1110 = vmatprep.subr.mxu0 0.0
    %1111 = vmatpush1.msra.mxu0 0.0
    %1112 = vmatprep.subr.mxu0 0.0
    %1113 = vmatpush1.msra.mxu0 0.0
    %1114 = vmatprep.subr.mxu0 0.0
    %1115 = vmatpush1.msra.mxu0 0.0
    %1116 = vmatprep.subr.mxu0 0.0
    %1117 = vmatpush1.msra.mxu0 0.0
    %1118 = vmatprep.subr.mxu0 0.0
    %1119 = vmatpush1.msra.mxu0 0.0
    %1120 = vmatprep.subr.mxu0 0.0
    %1121 = vmatpush1.msra.mxu0 0.0
    %1122 = vmatprep.subr.mxu0 0.0
    %1123 = vmatpush1.msra.mxu0 0.0
    %1124 = vmatprep.subr.mxu0 0.0
    %1125 = vmatpush1.msra.mxu0 0.0
    %1126 = vmatprep.subr.mxu0 0.0
    %1127 = vmatpush1.msra.mxu0 0.0
    %1128 = vmatprep.subr.mxu0 0.0
    %1129 = vmatpush1.msra.mxu0 0.0
    %1130 = vmatprep.subr.mxu0 0.0
    %1131 = vmatpush1.msra.mxu0 0.0
    %1132 = vmatprep.subr.mxu0 0.0
    %1133 = vmatpush1.msra.mxu0 0.0
    %1134 = vmatprep.subr.mxu0 0.0
    %1135 = vmatpush1.msra.mxu0 0.0
    %1136 = vmatprep.subr.mxu0 0.0
    %1137 = vmatpush1.msra.mxu0 0.0
    %1138 = vmatprep.subr.mxu0 0.0
    %1139 = vmatpush1.msra.mxu0 0.0
    %1140 = vmatprep.subr.mxu0 0.0
    %1141 = vmatpush1.msra.mxu0 0.0
    %1142 = vmatprep.subr.mxu0 0.0
    %1143 = vmatpush1.msra.mxu0 0.0
    %1144 = vmatprep.subr.mxu0 0.0
    %1145 = vmatpush1.msra.mxu0 0.0
    %1146 = vmatprep.subr.mxu0 0.0
    %1147 = vmatpush1.msra.mxu0 0.0
    %1148 = vmatprep.subr.mxu0 0.0
    %1149 = vmatpush1.msra.mxu0 0.0
    %1150 = vmatprep.subr.mxu0 0.0
    %1151 = vmatpush1.msra.mxu0 0.0
    %1152 = vmatprep.subr.mxu0 0.0
    %1153 = vmatpush1.msra.mxu0 0.0
    %1154 = vmatprep.subr.mxu0 0.0
    %1155 = vmatpush1.msra.mxu0 0.0
    %1156 = vmatprep.subr.mxu0 0.0
    %1157 = vmatpush1.msra.mxu0 0.0
    %1158 = vmatprep.subr.mxu0 0.0
    %1159 = vmatpush1.msra.mxu0 0.0
    %1160 = vmatprep.subr.mxu0 0.0
    %1161 = vmatpush1.msra.mxu0 0.0
    %1162 = vmatprep.subr.mxu0 0.0
    %1163 = vmatpush1.msra.mxu0 0.0
    %1164 = vmatprep.subr.mxu0 0.0
    %1165 = vmatpush1.msra.mxu0 0.0
    %1166 = vmatprep.mubr.f32.mxu0 0.0
    %1167 = vmatmul.mubr.f32.gmra.mrb[0].mxu0 %v604
    %v1168 = vpop.f32.mrb[0].mxu0
    %v1169 = vadd.f32 0.0, %v1168
    %v1170 = vpop.f32.mrb[0].mxu0
    %1171 = vmatprep.mubr.f32.mxu0 0.0
    %1172 = vmatmul.mubr.f32.gmra.mrb[0].mxu0 %v607
    %v1173 = vpop.f32.mrb[0].mxu0
    %v1174 = vadd.f32 0.0, %v1173
    %v1175 = vpop.f32.mrb[0].mxu0
    %1176 = vmatprep.mubr.f32.mxu0 0.0
    %1177 = vmatmul.mubr.f32.gmra.mrb[0].mxu0 %v610
    %v1178 = vpop.f32.mrb[0].mxu0
    %v1179 = vadd.f32 0.0, %v1178
    %v1180 = vpop.f32.mrb[0].mxu0
    %1181 = vmatprep.mubr.f32.mxu0 0.0
    %1182 = vmatmul.mubr.f32.gmra.mrb[0].mxu0 %v613
    %v1183 = vpop.f32.mrb[0].mxu0
    %v1184 = vadd.f32 0.0, %v1183
    %v1185 = vpop.f32.mrb[0].mxu0
    %1186 = vdwg.mxu0
    %v1187 = vadd.f32 %v1090, %v1169
    %v1188 = vadd.f32 %v1091, %v1174
    %v1189 = vadd.f32 %v1092, %v1179
    %v1190 = vadd.f32 %v1093, %v1184
    %v1191 = vadd.f32 %v1187, %v713
    %v1192 = vadd.f32 %v1188, %v718
    %v1193 = vadd.f32 %v1189, %v723
    %v1194 = vadd.f32 %v1190, %v728
    %v1195 = vmax.f32 %v1191, 0.0
    %v1196 = vmax.f32 %v1192, 0.0
    %v1197 = vmax.f32 %v1193, 0.0
    %v1198 = vmax.f32 %v1194, 0.0
    %vm1199 = vcmp.eq.s32.totalorder %v154, 127
    %v1200 = vsel %vm1199, 0.0, %v1195
    %v1201 = vsel %vm1199, 0.0, %v1196
    %v1202 = vsel %vm1199, 0.0, %v1197
    %v1203 = vsel %vm1199, 0.0, %v1198
    %1208 = vrot.lane.b32.xlu0 %v1200, 1
    %v1209 = vpop.permute.xlu0 %1208
    %1210 = vrot.lane.b32.xlu0 %v1201, 1
    %v1211 = vpop.permute.xlu0 %1210
    %1212 = vrot.lane.b32.xlu0 %v1202, 1
    %v1213 = vpop.permute.xlu0 %1212
    %1214 = vrot.lane.b32.xlu0 %v1203, 1
    %v1215 = vpop.permute.xlu0 %1214
    %vm1220 = vcmask 7168
    %v1221 = vsel %vm1220, 0.0, %v1209
    %v1222 = vsel %vm1220, 0.0, %v1211
    %v1223 = vsel %vm1220, 0.0, %v1213
    %v1224 = vsel %vm1220, 0.0, %v1215
    %v1225 = vld [vmem:[#allocation4] sm:$0xff]
    %v1226 = vld [vmem:[#allocation4 + $0x8] sm:$0xff]
    %v1227 = vld [vmem:[#allocation4 + $0x10] sm:$0xff]
    %v1228 = vld [vmem:[#allocation4 + $0x18] sm:$0xff]
    %s1229 = scalar_lea.vmem [#allocation4], 32
    %v1230 = vld [vmem:[%s1229] sm:$0xff]
    %v1231 = vld [vmem:[%s1229 + $0x8] sm:$0xff]
    %v1232 = vld [vmem:[%s1229 + $0x10] sm:$0xff]
    %v1233 = vld [vmem:[%s1229 + $0x18] sm:$0xff]
    %vm1234 = vcmask 261120
    %v1236 = vsel %vm1234, %v1230, 0
    %v1239 = vsel %vm1234, %v1231, 0
    %v1242 = vsel %vm1234, %v1232, 0
    %v1245 = vsel %vm1234, %v1233, 0
    %1247 = vmatprep.subr.mxu0 0.0
    %1248 = vmatpush1.msra.mxu0 %v734
    %1249 = vmatprep.subr.mxu0 0.0
    %1250 = vmatpush1.msra.mxu0 %v735
    %1251 = vmatprep.subr.mxu0 0.0
    %1252 = vmatpush1.msra.mxu0 %v736
    %1253 = vmatprep.subr.mxu0 0.0
    %1254 = vmatpush1.msra.mxu0 %v737
    %1255 = vmatprep.subr.mxu0 0.0
    %1256 = vmatpush1.msra.mxu0 0.0
    %1257 = vmatprep.subr.mxu0 0.0
    %1258 = vmatpush1.msra.mxu0 0.0
    %1259 = vmatprep.subr.mxu0 0.0
    %1260 = vmatpush1.msra.mxu0 0.0
    %1261 = vmatprep.subr.mxu0 0.0
    %1262 = vmatpush1.msra.mxu0 0.0
    %1263 = vmatprep.subr.mxu0 0.0
    %1264 = vmatpush1.msra.mxu0 0.0
    %1265 = vmatprep.subr.mxu0 0.0
    %1266 = vmatpush1.msra.mxu0 0.0
    %1267 = vmatprep.subr.mxu0 0.0
    %1268 = vmatpush1.msra.mxu0 0.0
    %1269 = vmatprep.subr.mxu0 0.0
    %1270 = vmatpush1.msra.mxu0 0.0
    %1271 = vmatprep.subr.mxu0 0.0
    %1272 = vmatpush1.msra.mxu0 0.0
    %1273 = vmatprep.subr.mxu0 0.0
    %1274 = vmatpush1.msra.mxu0 0.0
    %1275 = vmatprep.subr.mxu0 0.0
    %1276 = vmatpush1.msra.mxu0 0.0
    %1277 = vmatprep.subr.mxu0 0.0
    %1278 = vmatpush1.msra.mxu0 0.0
    %1279 = vmatprep.subr.mxu0 0.0
    %1280 = vmatpush1.msra.mxu0 0.0
    %1281 = vmatprep.subr.mxu0 0.0
    %1282 = vmatpush1.msra.mxu0 0.0
    %1283 = vmatprep.subr.mxu0 0.0
    %1284 = vmatpush1.msra.mxu0 0.0
    %1285 = vmatprep.subr.mxu0 0.0
    %1286 = vmatpush1.msra.mxu0 0.0
    %1287 = vmatprep.subr.mxu0 0.0
    %1288 = vmatpush1.msra.mxu0 0.0
    %1289 = vmatprep.subr.mxu0 0.0
    %1290 = vmatpush1.msra.mxu0 0.0
    %1291 = vmatprep.subr.mxu0 0.0
    %1292 = vmatpush1.msra.mxu0 0.0
    %1293 = vmatprep.subr.mxu0 0.0
    %1294 = vmatpush1.msra.mxu0 0.0
    %1295 = vmatprep.subr.mxu0 0.0
    %1296 = vmatpush1.msra.mxu0 0.0
    %1297 = vmatprep.subr.mxu0 0.0
    %1298 = vmatpush1.msra.mxu0 0.0
    %1299 = vmatprep.subr.mxu0 0.0
    %1300 = vmatpush1.msra.mxu0 0.0
    %1301 = vmatprep.subr.mxu0 0.0
    %1302 = vmatpush1.msra.mxu0 0.0
    %1303 = vmatprep.subr.mxu0 0.0
    %1304 = vmatpush1.msra.mxu0 0.0
    %1305 = vmatprep.subr.mxu0 0.0
    %1306 = vmatpush1.msra.mxu0 0.0
    %1307 = vmatprep.subr.mxu0 0.0
    %1308 = vmatpush1.msra.mxu0 0.0
    %1309 = vmatprep.subr.mxu0 0.0
    %1310 = vmatpush1.msra.mxu0 0.0
    %1311 = vmatprep.mubr.f32.mxu0 0.0
    %1312 = vmatmul.mubr.f32.gmra.mrb[0].mxu0 %v1236
    %v1313 = vpop.f32.mrb[0].mxu0
    %v1314 = vadd.f32 0.0, %v1313
    %v1315 = vpop.f32.mrb[0].mxu0
    %1316 = vmatprep.mubr.f32.mxu0 0.0
    %1317 = vmatmul.mubr.f32.gmra.mrb[0].mxu0 %v1239
    %v1318 = vpop.f32.mrb[0].mxu0
    %v1319 = vadd.f32 0.0, %v1318
    %v1320 = vpop.f32.mrb[0].mxu0
    %1321 = vmatprep.mubr.f32.mxu0 0.0
    %1322 = vmatmul.mubr.f32.gmra.mrb[0].mxu0 %v1242
    %v1323 = vpop.f32.mrb[0].mxu0
    %v1324 = vadd.f32 0.0, %v1323
    %v1325 = vpop.f32.mrb[0].mxu0
    %1326 = vmatprep.mubr.f32.mxu0 0.0
    %1327 = vmatmul.mubr.f32.gmra.mrb[0].mxu0 %v1245
    %v1328 = vpop.f32.mrb[0].mxu0
    %v1329 = vadd.f32 0.0, %v1328
    %v1330 = vpop.f32.mrb[0].mxu0
    %1331 = vdwg.mxu0
    %v1333 = vsel %vm1234, %v1225, 0
    %v1336 = vsel %vm1234, %v1226, 0
    %v1339 = vsel %vm1234, %v1227, 0
    %v1342 = vsel %vm1234, %v1228, 0
    %1344 = vmatprep.subr.mxu0 0.0
    %1345 = vmatpush1.msra.mxu0 %v1221
    %1346 = vmatprep.subr.mxu0 0.0
    %1347 = vmatpush1.msra.mxu0 %v1222
    %1348 = vmatprep.subr.mxu0 0.0
    %1349 = vmatpush1.msra.mxu0 %v1223
    %1350 = vmatprep.subr.mxu0 0.0
    %1351 = vmatpush1.msra.mxu0 %v1224
    %1352 = vmatprep.subr.mxu0 0.0
    %1353 = vmatpush1.msra.mxu0 0.0
    %1354 = vmatprep.subr.mxu0 0.0
    %1355 = vmatpush1.msra.mxu0 0.0
    %1356 = vmatprep.subr.mxu0 0.0
    %1357 = vmatpush1.msra.mxu0 0.0
    %1358 = vmatprep.subr.mxu0 0.0
    %1359 = vmatpush1.msra.mxu0 0.0
    %1360 = vmatprep.subr.mxu0 0.0
    %1361 = vmatpush1.msra.mxu0 0.0
    %1362 = vmatprep.subr.mxu0 0.0
    %1363 = vmatpush1.msra.mxu0 0.0
    %1364 = vmatprep.subr.mxu0 0.0
    %1365 = vmatpush1.msra.mxu0 0.0
    %1366 = vmatprep.subr.mxu0 0.0
    %1367 = vmatpush1.msra.mxu0 0.0
    %1368 = vmatprep.subr.mxu0 0.0
    %1369 = vmatpush1.msra.mxu0 0.0
    %1370 = vmatprep.subr.mxu0 0.0
    %1371 = vmatpush1.msra.mxu0 0.0
    %1372 = vmatprep.subr.mxu0 0.0
    %1373 = vmatpush1.msra.mxu0 0.0
    %1374 = vmatprep.subr.mxu0 0.0
    %1375 = vmatpush1.msra.mxu0 0.0
    %1376 = vmatprep.subr.mxu0 0.0
    %1377 = vmatpush1.msra.mxu0 0.0
    %1378 = vmatprep.subr.mxu0 0.0
    %1379 = vmatpush1.msra.mxu0 0.0
    %1380 = vmatprep.subr.mxu0 0.0
    %1381 = vmatpush1.msra.mxu0 0.0
    %1382 = vmatprep.subr.mxu0 0.0
    %1383 = vmatpush1.msra.mxu0 0.0
    %1384 = vmatprep.subr.mxu0 0.0
    %1385 = vmatpush1.msra.mxu0 0.0
    %1386 = vmatprep.subr.mxu0 0.0
    %1387 = vmatpush1.msra.mxu0 0.0
    %1388 = vmatprep.subr.mxu0 0.0
    %1389 = vmatpush1.msra.mxu0 0.0
    %1390 = vmatprep.subr.mxu0 0.0
    %1391 = vmatpush1.msra.mxu0 0.0
    %1392 = vmatprep.subr.mxu0 0.0
    %1393 = vmatpush1.msra.mxu0 0.0
    %1394 = vmatprep.subr.mxu0 0.0
    %1395 = vmatpush1.msra.mxu0 0.0
    %1396 = vmatprep.subr.mxu0 0.0
    %1397 = vmatpush1.msra.mxu0 0.0
    %1398 = vmatprep.subr.mxu0 0.0
    %1399 = vmatpush1.msra.mxu0 0.0
    %1400 = vmatprep.subr.mxu0 0.0
    %1401 = vmatpush1.msra.mxu0 0.0
    %1402 = vmatprep.subr.mxu0 0.0
    %1403 = vmatpush1.msra.mxu0 0.0
    %1404 = vmatprep.subr.mxu0 0.0
    %1405 = vmatpush1.msra.mxu0 0.0
    %1406 = vmatprep.subr.mxu0 0.0
    %1407 = vmatpush1.msra.mxu0 0.0
    %1408 = vmatprep.mubr.f32.mxu0 0.0
    %1409 = vmatmul.mubr.f32.gmra.mrb[0].mxu0 %v1333
    %v1410 = vpop.f32.mrb[0].mxu0
    %v1411 = vadd.f32 %v1314, %v1410
    %v1412 = vpop.f32.mrb[0].mxu0
    %1413 = vmatprep.mubr.f32.mxu0 0.0
    %1414 = vmatmul.mubr.f32.gmra.mrb[0].mxu0 %v1336
    %v1415 = vpop.f32.mrb[0].mxu0
    %v1416 = vadd.f32 %v1319, %v1415
    %v1417 = vpop.f32.mrb[0].mxu0
    %1418 = vmatprep.mubr.f32.mxu0 0.0
    %1419 = vmatmul.mubr.f32.gmra.mrb[0].mxu0 %v1339
    %v1420 = vpop.f32.mrb[0].mxu0
    %v1421 = vadd.f32 %v1324, %v1420
    %v1422 = vpop.f32.mrb[0].mxu0
    %1423 = vmatprep.mubr.f32.mxu0 0.0
    %1424 = vmatmul.mubr.f32.gmra.mrb[0].mxu0 %v1342
    %v1425 = vpop.f32.mrb[0].mxu0
    %v1426 = vadd.f32 %v1329, %v1425
    %v1427 = vpop.f32.mrb[0].mxu0
    %1428 = vdwg.mxu0
    %s1429 = scalar_lea.vmem [#allocation4], 64
    %v1430 = vld [vmem:[%s1429] sm:$0xff]
    %v1431 = vld [vmem:[%s1429 + $0x8] sm:$0xff]
    %v1432 = vld [vmem:[%s1429 + $0x10] sm:$0xff]
    %v1433 = vld [vmem:[%s1429 + $0x18] sm:$0xff]
    %v1435 = vsel %vm1234, %v1430, 0
    %v1438 = vsel %vm1234, %v1431, 0
    %v1441 = vsel %vm1234, %v1432, 0
    %v1444 = vsel %vm1234, %v1433, 0
    %1446 = vmatprep.subr.mxu0 0.0
    %1447 = vmatpush1.msra.mxu0 %v1200
    %1448 = vmatprep.subr.mxu0 0.0
    %1449 = vmatpush1.msra.mxu0 %v1201
    %1450 = vmatprep.subr.mxu0 0.0
    %1451 = vmatpush1.msra.mxu0 %v1202
    %1452 = vmatprep.subr.mxu0 0.0
    %1453 = vmatpush1.msra.mxu0 %v1203
    %1454 = vmatprep.subr.mxu0 0.0
    %1455 = vmatpush1.msra.mxu0 0.0
    %1456 = vmatprep.subr.mxu0 0.0
    %1457 = vmatpush1.msra.mxu0 0.0
    %1458 = vmatprep.subr.mxu0 0.0
    %1459 = vmatpush1.msra.mxu0 0.0
    %1460 = vmatprep.subr.mxu0 0.0
    %1461 = vmatpush1.msra.mxu0 0.0
    %1462 = vmatprep.subr.mxu0 0.0
    %1463 = vmatpush1.msra.mxu0 0.0
    %1464 = vmatprep.subr.mxu0 0.0
    %1465 = vmatpush1.msra.mxu0 0.0
    %1466 = vmatprep.subr.mxu0 0.0
    %1467 = vmatpush1.msra.mxu0 0.0
    %1468 = vmatprep.subr.mxu0 0.0
    %1469 = vmatpush1.msra.mxu0 0.0
    %1470 = vmatprep.subr.mxu0 0.0
    %1471 = vmatpush1.msra.mxu0 0.0
    %1472 = vmatprep.subr.mxu0 0.0
    %1473 = vmatpush1.msra.mxu0 0.0
    %1474 = vmatprep.subr.mxu0 0.0
    %1475 = vmatpush1.msra.mxu0 0.0
    %1476 = vmatprep.subr.mxu0 0.0
    %1477 = vmatpush1.msra.mxu0 0.0
    %1478 = vmatprep.subr.mxu0 0.0
    %1479 = vmatpush1.msra.mxu0 0.0
    %1480 = vmatprep.subr.mxu0 0.0
    %1481 = vmatpush1.msra.mxu0 0.0
    %1482 = vmatprep.subr.mxu0 0.0
    %1483 = vmatpush1.msra.mxu0 0.0
    %1484 = vmatprep.subr.mxu0 0.0
    %1485 = vmatpush1.msra.mxu0 0.0
    %1486 = vmatprep.subr.mxu0 0.0
    %1487 = vmatpush1.msra.mxu0 0.0
    %1488 = vmatprep.subr.mxu0 0.0
    %1489 = vmatpush1.msra.mxu0 0.0
    %1490 = vmatprep.subr.mxu0 0.0
    %1491 = vmatpush1.msra.mxu0 0.0
    %1492 = vmatprep.subr.mxu0 0.0
    %1493 = vmatpush1.msra.mxu0 0.0
    %1494 = vmatprep.subr.mxu0 0.0
    %1495 = vmatpush1.msra.mxu0 0.0
    %1496 = vmatprep.subr.mxu0 0.0
    %1497 = vmatpush1.msra.mxu0 0.0
    %1498 = vmatprep.subr.mxu0 0.0
    %1499 = vmatpush1.msra.mxu0 0.0
    %1500 = vmatprep.subr.mxu0 0.0
    %1501 = vmatpush1.msra.mxu0 0.0
    %1502 = vmatprep.subr.mxu0 0.0
    %1503 = vmatpush1.msra.mxu0 0.0
    %1504 = vmatprep.subr.mxu0 0.0
    %1505 = vmatpush1.msra.mxu0 0.0
    %1506 = vmatprep.subr.mxu0 0.0
    %1507 = vmatpush1.msra.mxu0 0.0
    %1508 = vmatprep.subr.mxu0 0.0
    %1509 = vmatpush1.msra.mxu0 0.0
    %1510 = vmatprep.mubr.f32.mxu0 0.0
    %1511 = vmatmul.mubr.f32.gmra.mrb[0].mxu0 %v1435
    %v1512 = vpop.f32.mrb[0].mxu0
    %v1513 = vadd.f32 0.0, %v1512
    %v1514 = vpop.f32.mrb[0].mxu0
    %1515 = vmatprep.mubr.f32.mxu0 0.0
    %1516 = vmatmul.mubr.f32.gmra.mrb[0].mxu0 %v1438
    %v1517 = vpop.f32.mrb[0].mxu0
    %v1518 = vadd.f32 0.0, %v1517
    %v1519 = vpop.f32.mrb[0].mxu0
    %1520 = vmatprep.mubr.f32.mxu0 0.0
    %1521 = vmatmul.mubr.f32.gmra.mrb[0].mxu0 %v1441
    %v1522 = vpop.f32.mrb[0].mxu0
    %v1523 = vadd.f32 0.0, %v1522
    %v1524 = vpop.f32.mrb[0].mxu0
    %1525 = vmatprep.mubr.f32.mxu0 0.0
    %1526 = vmatmul.mubr.f32.gmra.mrb[0].mxu0 %v1444
    %v1527 = vpop.f32.mrb[0].mxu0
    %v1528 = vadd.f32 0.0, %v1527
    %v1529 = vpop.f32.mrb[0].mxu0
    %1530 = vdwg.mxu0
    %v1531 = vadd.f32 %v1411, %v1513
    %v1532 = vadd.f32 %v1416, %v1518
    %v1533 = vadd.f32 %v1421, %v1523
    %v1534 = vadd.f32 %v1426, %v1528
    %v1535 = vld [vmem:[%s5] sm:$0xff]
    %v1536 = vld [vmem:[%s5 + $0x8] sm:$0xff]
    %v1537 = vld [vmem:[%s5 + $0x10] sm:$0xff]
    %v1538 = vld [vmem:[%s5 + $0x18] sm:$0xff]
    %1540 = vset.pattern.permute.xlu0 0
    %1541 = vperm.xlu0 %1540, %v1535
    %v1542 = vpop.permute.xlu0 %1541
    %1545 = vset.pattern.permute.xlu0 0
    %1546 = vperm.xlu0 %1545, %v1536
    %v1547 = vpop.permute.xlu0 %1546
    %1550 = vset.pattern.permute.xlu0 0
    %1551 = vperm.xlu0 %1550, %v1537
    %v1552 = vpop.permute.xlu0 %1551
    %1555 = vset.pattern.permute.xlu0 0
    %1556 = vperm.xlu0 %1555, %v1538
    %v1557 = vpop.permute.xlu0 %1556
    %v1559 = vadd.f32 %v1531, %v1542
    %v1560 = vadd.f32 %v1532, %v1547
    %v1561 = vadd.f32 %v1533, %v1552
    %v1562 = vadd.f32 %v1534, %v1557
    %v1563 = vmax.f32 %v1559, 0.0
    %v1564 = vmax.f32 %v1560, 0.0
    %v1565 = vmax.f32 %v1561, 0.0
    %v1566 = vmax.f32 %v1562, 0.0
    %s1567 = scalar_lea.vmem %s0, 8
    %v1568 = vld [vmem:[%s1567] sm:$0x77]
    %s1569 = scalar_lea.vmem %s0, 24
    %v1570 = vld [vmem:[%s1569] sm:$0x77]
    %s1571 = scalar_lea.vmem %s0, 40
    %v1572 = vld [vmem:[%s1571] sm:$0x77]
    %s1573 = scalar_lea.vmem %s0, 56
    %v1574 = vld [vmem:[%s1573] sm:$0x77]
    %v1576 = vsel %vm184, %v1570, 0
    %1578 = vmatprep.subr.mxu0 0.0
    %1579 = vmatpush1.msra.mxu0 %v1576
    %1580 = vmatprep.subr.mxu0 0.0
    %1581 = vmatpush1.msra.mxu0 0.0
    %1582 = vmatprep.subr.mxu0 0.0
    %1583 = vmatpush1.msra.mxu0 0.0
    %1584 = vmatprep.subr.mxu0 0.0
    %1585 = vmatpush1.msra.mxu0 0.0
    %1586 = vmatprep.subr.mxu0 0.0
    %1587 = vmatpush1.msra.mxu0 0.0
    %1588 = vmatprep.subr.mxu0 0.0
    %1589 = vmatpush1.msra.mxu0 0.0
    %1590 = vmatprep.subr.mxu0 0.0
    %1591 = vmatpush1.msra.mxu0 0.0
    %1592 = vmatprep.subr.mxu0 0.0
    %1593 = vmatpush1.msra.mxu0 0.0
    %1594 = vmatprep.subr.mxu0 0.0
    %1595 = vmatpush1.msra.mxu0 0.0
    %1596 = vmatprep.subr.mxu0 0.0
    %1597 = vmatpush1.msra.mxu0 0.0
    %1598 = vmatprep.subr.mxu0 0.0
    %1599 = vmatpush1.msra.mxu0 0.0
    %1600 = vmatprep.subr.mxu0 0.0
    %1601 = vmatpush1.msra.mxu0 0.0
    %1602 = vmatprep.subr.mxu0 0.0
    %1603 = vmatpush1.msra.mxu0 0.0
    %1604 = vmatprep.subr.mxu0 0.0
    %1605 = vmatpush1.msra.mxu0 0.0
    %1606 = vmatprep.subr.mxu0 0.0
    %1607 = vmatpush1.msra.mxu0 0.0
    %1608 = vmatprep.subr.mxu0 0.0
    %1609 = vmatpush1.msra.mxu0 0.0
    %1610 = vmatprep.subr.mxu0 0.0
    %1611 = vmatpush1.msra.mxu0 0.0
    %1612 = vmatprep.subr.mxu0 0.0
    %1613 = vmatpush1.msra.mxu0 0.0
    %1614 = vmatprep.subr.mxu0 0.0
    %1615 = vmatpush1.msra.mxu0 0.0
    %1616 = vmatprep.subr.mxu0 0.0
    %1617 = vmatpush1.msra.mxu0 0.0
    %1618 = vmatprep.subr.mxu0 0.0
    %1619 = vmatpush1.msra.mxu0 0.0
    %1620 = vmatprep.subr.mxu0 0.0
    %1621 = vmatpush1.msra.mxu0 0.0
    %1622 = vmatprep.subr.mxu0 0.0
    %1623 = vmatpush1.msra.mxu0 0.0
    %1624 = vmatprep.subr.mxu0 0.0
    %1625 = vmatpush1.msra.mxu0 0.0
    %1626 = vmatprep.subr.mxu0 0.0
    %1627 = vmatpush1.msra.mxu0 0.0
    %1628 = vmatprep.subr.mxu0 0.0
    %1629 = vmatpush1.msra.mxu0 0.0
    %1630 = vmatprep.subr.mxu0 0.0
    %1631 = vmatpush1.msra.mxu0 0.0
    %1632 = vmatprep.subr.mxu0 0.0
    %1633 = vmatpush1.msra.mxu0 0.0
    %1634 = vmatprep.subr.mxu0 0.0
    %1635 = vmatpush1.msra.mxu0 0.0
    %1636 = vmatprep.subr.mxu0 0.0
    %1637 = vmatpush1.msra.mxu0 0.0
    %1638 = vmatprep.subr.mxu0 0.0
    %1639 = vmatpush1.msra.mxu0 0.0
    %1640 = vmatprep.subr.mxu0 0.0
    %1641 = vmatpush1.msra.mxu0 0.0
    %1642 = vmatprep.mubr.f32.mxu0 0.0
    %1643 = vmatmul.mubr.f32.gmra.mrb[0].mxu0 %v173
    %v1644 = vpop.f32.mrb[0].mxu0
    %v1645 = vadd.f32 0.0, %v1644
    %v1646 = vpop.f32.mrb[0].mxu0
    %1647 = vmatprep.mubr.f32.mxu0 0.0
    %1648 = vmatmul.mubr.f32.gmra.mrb[0].mxu0 %v176
    %v1649 = vpop.f32.mrb[0].mxu0
    %v1650 = vadd.f32 0.0, %v1649
    %v1651 = vpop.f32.mrb[0].mxu0
    %1652 = vmatprep.mubr.f32.mxu0 0.0
    %1653 = vmatmul.mubr.f32.gmra.mrb[0].mxu0 %v179
    %v1654 = vpop.f32.mrb[0].mxu0
    %v1655 = vadd.f32 0.0, %v1654
    %v1656 = vpop.f32.mrb[0].mxu0
    %1657 = vmatprep.mubr.f32.mxu0 0.0
    %1658 = vmatmul.mubr.f32.gmra.mrb[0].mxu0 %v182
    %v1659 = vpop.f32.mrb[0].mxu0
    %v1660 = vadd.f32 0.0, %v1659
    %v1661 = vpop.f32.mrb[0].mxu0
    %1662 = vdwg.mxu0
    %v1664 = vsel %vm184, %v1568, 0
    %1666 = vmatprep.subr.mxu0 0.0
    %1667 = vmatpush1.msra.mxu0 %v1664
    %1668 = vmatprep.subr.mxu0 0.0
    %1669 = vmatpush1.msra.mxu0 0.0
    %1670 = vmatprep.subr.mxu0 0.0
    %1671 = vmatpush1.msra.mxu0 0.0
    %1672 = vmatprep.subr.mxu0 0.0
    %1673 = vmatpush1.msra.mxu0 0.0
    %1674 = vmatprep.subr.mxu0 0.0
    %1675 = vmatpush1.msra.mxu0 0.0
    %1676 = vmatprep.subr.mxu0 0.0
    %1677 = vmatpush1.msra.mxu0 0.0
    %1678 = vmatprep.subr.mxu0 0.0
    %1679 = vmatpush1.msra.mxu0 0.0
    %1680 = vmatprep.subr.mxu0 0.0
    %1681 = vmatpush1.msra.mxu0 0.0
    %1682 = vmatprep.subr.mxu0 0.0
    %1683 = vmatpush1.msra.mxu0 0.0
    %1684 = vmatprep.subr.mxu0 0.0
    %1685 = vmatpush1.msra.mxu0 0.0
    %1686 = vmatprep.subr.mxu0 0.0
    %1687 = vmatpush1.msra.mxu0 0.0
    %1688 = vmatprep.subr.mxu0 0.0
    %1689 = vmatpush1.msra.mxu0 0.0
    %1690 = vmatprep.subr.mxu0 0.0
    %1691 = vmatpush1.msra.mxu0 0.0
    %1692 = vmatprep.subr.mxu0 0.0
    %1693 = vmatpush1.msra.mxu0 0.0
    %1694 = vmatprep.subr.mxu0 0.0
    %1695 = vmatpush1.msra.mxu0 0.0
    %1696 = vmatprep.subr.mxu0 0.0
    %1697 = vmatpush1.msra.mxu0 0.0
    %1698 = vmatprep.subr.mxu0 0.0
    %1699 = vmatpush1.msra.mxu0 0.0
    %1700 = vmatprep.subr.mxu0 0.0
    %1701 = vmatpush1.msra.mxu0 0.0
    %1702 = vmatprep.subr.mxu0 0.0
    %1703 = vmatpush1.msra.mxu0 0.0
    %1704 = vmatprep.subr.mxu0 0.0
    %1705 = vmatpush1.msra.mxu0 0.0
    %1706 = vmatprep.subr.mxu0 0.0
    %1707 = vmatpush1.msra.mxu0 0.0
    %1708 = vmatprep.subr.mxu0 0.0
    %1709 = vmatpush1.msra.mxu0 0.0
    %1710 = vmatprep.subr.mxu0 0.0
    %1711 = vmatpush1.msra.mxu0 0.0
    %1712 = vmatprep.subr.mxu0 0.0
    %1713 = vmatpush1.msra.mxu0 0.0
    %1714 = vmatprep.subr.mxu0 0.0
    %1715 = vmatpush1.msra.mxu0 0.0
    %1716 = vmatprep.subr.mxu0 0.0
    %1717 = vmatpush1.msra.mxu0 0.0
    %1718 = vmatprep.subr.mxu0 0.0
    %1719 = vmatpush1.msra.mxu0 0.0
    %1720 = vmatprep.subr.mxu0 0.0
    %1721 = vmatpush1.msra.mxu0 0.0
    %1722 = vmatprep.subr.mxu0 0.0
    %1723 = vmatpush1.msra.mxu0 0.0
    %1724 = vmatprep.subr.mxu0 0.0
    %1725 = vmatpush1.msra.mxu0 0.0
    %1726 = vmatprep.subr.mxu0 0.0
    %1727 = vmatpush1.msra.mxu0 0.0
    %1728 = vmatprep.subr.mxu0 0.0
    %1729 = vmatpush1.msra.mxu0 0.0
    %1730 = vmatprep.mubr.f32.mxu0 0.0
    %1731 = vmatmul.mubr.f32.gmra.mrb[0].mxu0 %v274
    %v1732 = vpop.f32.mrb[0].mxu0
    %v1733 = vadd.f32 %v1645, %v1732
    %v1734 = vpop.f32.mrb[0].mxu0
    %1735 = vmatprep.mubr.f32.mxu0 0.0
    %1736 = vmatmul.mubr.f32.gmra.mrb[0].mxu0 %v277
    %v1737 = vpop.f32.mrb[0].mxu0
    %v1738 = vadd.f32 %v1650, %v1737
    %v1739 = vpop.f32.mrb[0].mxu0
    %1740 = vmatprep.mubr.f32.mxu0 0.0
    %1741 = vmatmul.mubr.f32.gmra.mrb[0].mxu0 %v280
    %v1742 = vpop.f32.mrb[0].mxu0
    %v1743 = vadd.f32 %v1655, %v1742
    %v1744 = vpop.f32.mrb[0].mxu0
    %1745 = vmatprep.mubr.f32.mxu0 0.0
    %1746 = vmatmul.mubr.f32.gmra.mrb[0].mxu0 %v283
    %v1747 = vpop.f32.mrb[0].mxu0
    %v1748 = vadd.f32 %v1660, %v1747
    %v1749 = vpop.f32.mrb[0].mxu0
    %1750 = vdwg.mxu0
    %v1752 = vsel %vm184, %v1572, 0
    %1754 = vmatprep.subr.mxu0 0.0
    %1755 = vmatpush1.msra.mxu0 %v1752
    %1756 = vmatprep.subr.mxu0 0.0
    %1757 = vmatpush1.msra.mxu0 0.0
    %1758 = vmatprep.subr.mxu0 0.0
    %1759 = vmatpush1.msra.mxu0 0.0
    %1760 = vmatprep.subr.mxu0 0.0
    %1761 = vmatpush1.msra.mxu0 0.0
    %1762 = vmatprep.subr.mxu0 0.0
    %1763 = vmatpush1.msra.mxu0 0.0
    %1764 = vmatprep.subr.mxu0 0.0
    %1765 = vmatpush1.msra.mxu0 0.0
    %1766 = vmatprep.subr.mxu0 0.0
    %1767 = vmatpush1.msra.mxu0 0.0
    %1768 = vmatprep.subr.mxu0 0.0
    %1769 = vmatpush1.msra.mxu0 0.0
    %1770 = vmatprep.subr.mxu0 0.0
    %1771 = vmatpush1.msra.mxu0 0.0
    %1772 = vmatprep.subr.mxu0 0.0
    %1773 = vmatpush1.msra.mxu0 0.0
    %1774 = vmatprep.subr.mxu0 0.0
    %1775 = vmatpush1.msra.mxu0 0.0
    %1776 = vmatprep.subr.mxu0 0.0
    %1777 = vmatpush1.msra.mxu0 0.0
    %1778 = vmatprep.subr.mxu0 0.0
    %1779 = vmatpush1.msra.mxu0 0.0
    %1780 = vmatprep.subr.mxu0 0.0
    %1781 = vmatpush1.msra.mxu0 0.0
    %1782 = vmatprep.subr.mxu0 0.0
    %1783 = vmatpush1.msra.mxu0 0.0
    %1784 = vmatprep.subr.mxu0 0.0
    %1785 = vmatpush1.msra.mxu0 0.0
    %1786 = vmatprep.subr.mxu0 0.0
    %1787 = vmatpush1.msra.mxu0 0.0
    %1788 = vmatprep.subr.mxu0 0.0
    %1789 = vmatpush1.msra.mxu0 0.0
    %1790 = vmatprep.subr.mxu0 0.0
    %1791 = vmatpush1.msra.mxu0 0.0
    %1792 = vmatprep.subr.mxu0 0.0
    %1793 = vmatpush1.msra.mxu0 0.0
    %1794 = vmatprep.subr.mxu0 0.0
    %1795 = vmatpush1.msra.mxu0 0.0
    %1796 = vmatprep.subr.mxu0 0.0
    %1797 = vmatpush1.msra.mxu0 0.0
    %1798 = vmatprep.subr.mxu0 0.0
    %1799 = vmatpush1.msra.mxu0 0.0
    %1800 = vmatprep.subr.mxu0 0.0
    %1801 = vmatpush1.msra.mxu0 0.0
    %1802 = vmatprep.subr.mxu0 0.0
    %1803 = vmatpush1.msra.mxu0 0.0
    %1804 = vmatprep.subr.mxu0 0.0
    %1805 = vmatpush1.msra.mxu0 0.0
    %1806 = vmatprep.subr.mxu0 0.0
    %1807 = vmatpush1.msra.mxu0 0.0
    %1808 = vmatprep.subr.mxu0 0.0
    %1809 = vmatpush1.msra.mxu0 0.0
    %1810 = vmatprep.subr.mxu0 0.0
    %1811 = vmatpush1.msra.mxu0 0.0
    %1812 = vmatprep.subr.mxu0 0.0
    %1813 = vmatpush1.msra.mxu0 0.0
    %1814 = vmatprep.subr.mxu0 0.0
    %1815 = vmatpush1.msra.mxu0 0.0
    %1816 = vmatprep.subr.mxu0 0.0
    %1817 = vmatpush1.msra.mxu0 0.0
    %1818 = vmatprep.mubr.f32.mxu0 0.0
    %1819 = vmatmul.mubr.f32.gmra.mrb[0].mxu0 %v379
    %v1820 = vpop.f32.mrb[0].mxu0
    %v1821 = vadd.f32 0.0, %v1820
    %v1822 = vpop.f32.mrb[0].mxu0
    %1823 = vmatprep.mubr.f32.mxu0 0.0
    %1824 = vmatmul.mubr.f32.gmra.mrb[0].mxu0 %v382
    %v1825 = vpop.f32.mrb[0].mxu0
    %v1826 = vadd.f32 0.0, %v1825
    %v1827 = vpop.f32.mrb[0].mxu0
    %1828 = vmatprep.mubr.f32.mxu0 0.0
    %1829 = vmatmul.mubr.f32.gmra.mrb[0].mxu0 %v385
    %v1830 = vpop.f32.mrb[0].mxu0
    %v1831 = vadd.f32 0.0, %v1830
    %v1832 = vpop.f32.mrb[0].mxu0
    %1833 = vmatprep.mubr.f32.mxu0 0.0
    %1834 = vmatmul.mubr.f32.gmra.mrb[0].mxu0 %v388
    %v1835 = vpop.f32.mrb[0].mxu0
    %v1836 = vadd.f32 0.0, %v1835
    %v1837 = vpop.f32.mrb[0].mxu0
    %1838 = vdwg.mxu0
    %v1839 = vadd.f32 %v1733, %v1821
    %v1840 = vadd.f32 %v1738, %v1826
    %v1841 = vadd.f32 %v1743, %v1831
    %v1842 = vadd.f32 %v1748, %v1836
    %v1844 = vsel %vm184, %v1574, 0
    %1846 = vmatprep.subr.mxu0 0.0
    %1847 = vmatpush1.msra.mxu0 %v1844
    %1848 = vmatprep.subr.mxu0 0.0
    %1849 = vmatpush1.msra.mxu0 0.0
    %1850 = vmatprep.subr.mxu0 0.0
    %1851 = vmatpush1.msra.mxu0 0.0
    %1852 = vmatprep.subr.mxu0 0.0
    %1853 = vmatpush1.msra.mxu0 0.0
    %1854 = vmatprep.subr.mxu0 0.0
    %1855 = vmatpush1.msra.mxu0 0.0
    %1856 = vmatprep.subr.mxu0 0.0
    %1857 = vmatpush1.msra.mxu0 0.0
    %1858 = vmatprep.subr.mxu0 0.0
    %1859 = vmatpush1.msra.mxu0 0.0
    %1860 = vmatprep.subr.mxu0 0.0
    %1861 = vmatpush1.msra.mxu0 0.0
    %1862 = vmatprep.subr.mxu0 0.0
    %1863 = vmatpush1.msra.mxu0 0.0
    %1864 = vmatprep.subr.mxu0 0.0
    %1865 = vmatpush1.msra.mxu0 0.0
    %1866 = vmatprep.subr.mxu0 0.0
    %1867 = vmatpush1.msra.mxu0 0.0
    %1868 = vmatprep.subr.mxu0 0.0
    %1869 = vmatpush1.msra.mxu0 0.0
    %1870 = vmatprep.subr.mxu0 0.0
    %1871 = vmatpush1.msra.mxu0 0.0
    %1872 = vmatprep.subr.mxu0 0.0
    %1873 = vmatpush1.msra.mxu0 0.0
    %1874 = vmatprep.subr.mxu0 0.0
    %1875 = vmatpush1.msra.mxu0 0.0
    %1876 = vmatprep.subr.mxu0 0.0
    %1877 = vmatpush1.msra.mxu0 0.0
    %1878 = vmatprep.subr.mxu0 0.0
    %1879 = vmatpush1.msra.mxu0 0.0
    %1880 = vmatprep.subr.mxu0 0.0
    %1881 = vmatpush1.msra.mxu0 0.0
    %1882 = vmatprep.subr.mxu0 0.0
    %1883 = vmatpush1.msra.mxu0 0.0
    %1884 = vmatprep.subr.mxu0 0.0
    %1885 = vmatpush1.msra.mxu0 0.0
    %1886 = vmatprep.subr.mxu0 0.0
    %1887 = vmatpush1.msra.mxu0 0.0
    %1888 = vmatprep.subr.mxu0 0.0
    %1889 = vmatpush1.msra.mxu0 0.0
    %1890 = vmatprep.subr.mxu0 0.0
    %1891 = vmatpush1.msra.mxu0 0.0
    %1892 = vmatprep.subr.mxu0 0.0
    %1893 = vmatpush1.msra.mxu0 0.0
    %1894 = vmatprep.subr.mxu0 0.0
    %1895 = vmatpush1.msra.mxu0 0.0
    %1896 = vmatprep.subr.mxu0 0.0
    %1897 = vmatpush1.msra.mxu0 0.0
    %1898 = vmatprep.subr.mxu0 0.0
    %1899 = vmatpush1.msra.mxu0 0.0
    %1900 = vmatprep.subr.mxu0 0.0
    %1901 = vmatpush1.msra.mxu0 0.0
    %1902 = vmatprep.subr.mxu0 0.0
    %1903 = vmatpush1.msra.mxu0 0.0
    %1904 = vmatprep.subr.mxu0 0.0
    %1905 = vmatpush1.msra.mxu0 0.0
    %1906 = vmatprep.subr.mxu0 0.0
    %1907 = vmatpush1.msra.mxu0 0.0
    %1908 = vmatprep.subr.mxu0 0.0
    %1909 = vmatpush1.msra.mxu0 0.0
    %1910 = vmatprep.mubr.f32.mxu0 0.0
    %1911 = vmatmul.mubr.f32.gmra.mrb[0].mxu0 %v488
    %v1912 = vpop.f32.mrb[0].mxu0
    %v1913 = vadd.f32 0.0, %v1912
    %v1914 = vpop.f32.mrb[0].mxu0
    %1915 = vmatprep.mubr.f32.mxu0 0.0
    %1916 = vmatmul.mubr.f32.gmra.mrb[0].mxu0 %v491
    %v1917 = vpop.f32.mrb[0].mxu0
    %v1918 = vadd.f32 0.0, %v1917
    %v1919 = vpop.f32.mrb[0].mxu0
    %1920 = vmatprep.mubr.f32.mxu0 0.0
    %1921 = vmatmul.mubr.f32.gmra.mrb[0].mxu0 %v494
    %v1922 = vpop.f32.mrb[0].mxu0
    %v1923 = vadd.f32 0.0, %v1922
    %v1924 = vpop.f32.mrb[0].mxu0
    %1925 = vmatprep.mubr.f32.mxu0 0.0
    %1926 = vmatmul.mubr.f32.gmra.mrb[0].mxu0 %v497
    %v1927 = vpop.f32.mrb[0].mxu0
    %v1928 = vadd.f32 0.0, %v1927
    %v1929 = vpop.f32.mrb[0].mxu0
    %1930 = vdwg.mxu0
    %v1931 = vadd.f32 %v1839, %v1913
    %v1932 = vadd.f32 %v1840, %v1918
    %v1933 = vadd.f32 %v1841, %v1923
    %v1934 = vadd.f32 %v1842, %v1928
    %v1935 = vcombine.high %v1568, %v1568
    %1936 = vrot.lane.b32.xlu0 %v1568, 127
    %v1937 = vpop.permute.xlu0 %1936
    %1938 = vrot.lane.b32.xlu0 %v1935, 127
    %v1939 = vpop.permute.xlu0 %1938
    %v1940 = vsel %vm601, %v1937, %v1939
    %v1941 = vsel %vm184, %v1940, 0
    %1943 = vmatprep.subr.mxu0 0.0
    %1944 = vmatpush1.msra.mxu0 %v1941
    %1945 = vmatprep.subr.mxu0 0.0
    %1946 = vmatpush1.msra.mxu0 0.0
    %1947 = vmatprep.subr.mxu0 0.0
    %1948 = vmatpush1.msra.mxu0 0.0
    %1949 = vmatprep.subr.mxu0 0.0
    %1950 = vmatpush1.msra.mxu0 0.0
    %1951 = vmatprep.subr.mxu0 0.0
    %1952 = vmatpush1.msra.mxu0 0.0
    %1953 = vmatprep.subr.mxu0 0.0
    %1954 = vmatpush1.msra.mxu0 0.0
    %1955 = vmatprep.subr.mxu0 0.0
    %1956 = vmatpush1.msra.mxu0 0.0
    %1957 = vmatprep.subr.mxu0 0.0
    %1958 = vmatpush1.msra.mxu0 0.0
    %1959 = vmatprep.subr.mxu0 0.0
    %1960 = vmatpush1.msra.mxu0 0.0
    %1961 = vmatprep.subr.mxu0 0.0
    %1962 = vmatpush1.msra.mxu0 0.0
    %1963 = vmatprep.subr.mxu0 0.0
    %1964 = vmatpush1.msra.mxu0 0.0
    %1965 = vmatprep.subr.mxu0 0.0
    %1966 = vmatpush1.msra.mxu0 0.0
    %1967 = vmatprep.subr.mxu0 0.0
    %1968 = vmatpush1.msra.mxu0 0.0
    %1969 = vmatprep.subr.mxu0 0.0
    %1970 = vmatpush1.msra.mxu0 0.0
    %1971 = vmatprep.subr.mxu0 0.0
    %1972 = vmatpush1.msra.mxu0 0.0
    %1973 = vmatprep.subr.mxu0 0.0
    %1974 = vmatpush1.msra.mxu0 0.0
    %1975 = vmatprep.subr.mxu0 0.0
    %1976 = vmatpush1.msra.mxu0 0.0
    %1977 = vmatprep.subr.mxu0 0.0
    %1978 = vmatpush1.msra.mxu0 0.0
    %1979 = vmatprep.subr.mxu0 0.0
    %1980 = vmatpush1.msra.mxu0 0.0
    %1981 = vmatprep.subr.mxu0 0.0
    %1982 = vmatpush1.msra.mxu0 0.0
    %1983 = vmatprep.subr.mxu0 0.0
    %1984 = vmatpush1.msra.mxu0 0.0
    %1985 = vmatprep.subr.mxu0 0.0
    %1986 = vmatpush1.msra.mxu0 0.0
    %1987 = vmatprep.subr.mxu0 0.0
    %1988 = vmatpush1.msra.mxu0 0.0
    %1989 = vmatprep.subr.mxu0 0.0
    %1990 = vmatpush1.msra.mxu0 0.0
    %1991 = vmatprep.subr.mxu0 0.0
    %1992 = vmatpush1.msra.mxu0 0.0
    %1993 = vmatprep.subr.mxu0 0.0
    %1994 = vmatpush1.msra.mxu0 0.0
    %1995 = vmatprep.subr.mxu0 0.0
    %1996 = vmatpush1.msra.mxu0 0.0
    %1997 = vmatprep.subr.mxu0 0.0
    %1998 = vmatpush1.msra.mxu0 0.0
    %1999 = vmatprep.subr.mxu0 0.0
    %2000 = vmatpush1.msra.mxu0 0.0
    %2001 = vmatprep.subr.mxu0 0.0
    %2002 = vmatpush1.msra.mxu0 0.0
    %2003 = vmatprep.subr.mxu0 0.0
    %2004 = vmatpush1.msra.mxu0 0.0
    %2005 = vmatprep.subr.mxu0 0.0
    %2006 = vmatpush1.msra.mxu0 0.0
    %2007 = vmatprep.mubr.f32.mxu0 0.0
    %2008 = vmatmul.mubr.f32.gmra.mrb[0].mxu0 %v604
    %v2009 = vpop.f32.mrb[0].mxu0
    %v2010 = vadd.f32 0.0, %v2009
    %v2011 = vpop.f32.mrb[0].mxu0
    %2012 = vmatprep.mubr.f32.mxu0 0.0
    %2013 = vmatmul.mubr.f32.gmra.mrb[0].mxu0 %v607
    %v2014 = vpop.f32.mrb[0].mxu0
    %v2015 = vadd.f32 0.0, %v2014
    %v2016 = vpop.f32.mrb[0].mxu0
    %2017 = vmatprep.mubr.f32.mxu0 0.0
    %2018 = vmatmul.mubr.f32.gmra.mrb[0].mxu0 %v610
    %v2019 = vpop.f32.mrb[0].mxu0
    %v2020 = vadd.f32 0.0, %v2019
    %v2021 = vpop.f32.mrb[0].mxu0
    %2022 = vmatprep.mubr.f32.mxu0 0.0
    %2023 = vmatmul.mubr.f32.gmra.mrb[0].mxu0 %v613
    %v2024 = vpop.f32.mrb[0].mxu0
    %v2025 = vadd.f32 0.0, %v2024
    %v2026 = vpop.f32.mrb[0].mxu0
    %2027 = vdwg.mxu0
    %v2028 = vadd.f32 %v1931, %v2010
    %v2029 = vadd.f32 %v1932, %v2015
    %v2030 = vadd.f32 %v1933, %v2020
    %v2031 = vadd.f32 %v1934, %v2025
    %v2032 = vadd.f32 %v2028, %v713
    %v2033 = vadd.f32 %v2029, %v718
    %v2034 = vadd.f32 %v2030, %v723
    %v2035 = vadd.f32 %v2031, %v728
    %v2036 = vmax.f32 %v2032, 0.0
    %v2037 = vmax.f32 %v2033, 0.0
    %v2038 = vmax.f32 %v2034, 0.0
    %v2039 = vmax.f32 %v2035, 0.0
    %2040 = vmatprep.subr.mxu0 0.0
    %2041 = vmatpush1.msra.mxu0 %v1844
    %2042 = vmatprep.subr.mxu0 0.0
    %2043 = vmatpush1.msra.mxu0 0.0
    %2044 = vmatprep.subr.mxu0 0.0
    %2045 = vmatpush1.msra.mxu0 0.0
    %2046 = vmatprep.subr.mxu0 0.0
    %2047 = vmatpush1.msra.mxu0 0.0
    %2048 = vmatprep.subr.mxu0 0.0
    %2049 = vmatpush1.msra.mxu0 0.0
    %2050 = vmatprep.subr.mxu0 0.0
    %2051 = vmatpush1.msra.mxu0 0.0
    %2052 = vmatprep.subr.mxu0 0.0
    %2053 = vmatpush1.msra.mxu0 0.0
    %2054 = vmatprep.subr.mxu0 0.0
    %2055 = vmatpush1.msra.mxu0 0.0
    %2056 = vmatprep.subr.mxu0 0.0
    %2057 = vmatpush1.msra.mxu0 0.0
    %2058 = vmatprep.subr.mxu0 0.0
    %2059 = vmatpush1.msra.mxu0 0.0
    %2060 = vmatprep.subr.mxu0 0.0
    %2061 = vmatpush1.msra.mxu0 0.0
    %2062 = vmatprep.subr.mxu0 0.0
    %2063 = vmatpush1.msra.mxu0 0.0
    %2064 = vmatprep.subr.mxu0 0.0
    %2065 = vmatpush1.msra.mxu0 0.0
    %2066 = vmatprep.subr.mxu0 0.0
    %2067 = vmatpush1.msra.mxu0 0.0
    %2068 = vmatprep.subr.mxu0 0.0
    %2069 = vmatpush1.msra.mxu0 0.0
    %2070 = vmatprep.subr.mxu0 0.0
    %2071 = vmatpush1.msra.mxu0 0.0
    %2072 = vmatprep.subr.mxu0 0.0
    %2073 = vmatpush1.msra.mxu0 0.0
    %2074 = vmatprep.subr.mxu0 0.0
    %2075 = vmatpush1.msra.mxu0 0.0
    %2076 = vmatprep.subr.mxu0 0.0
    %2077 = vmatpush1.msra.mxu0 0.0
    %2078 = vmatprep.subr.mxu0 0.0
    %2079 = vmatpush1.msra.mxu0 0.0
    %2080 = vmatprep.subr.mxu0 0.0
    %2081 = vmatpush1.msra.mxu0 0.0
    %2082 = vmatprep.subr.mxu0 0.0
    %2083 = vmatpush1.msra.mxu0 0.0
    %2084 = vmatprep.subr.mxu0 0.0
    %2085 = vmatpush1.msra.mxu0 0.0
    %2086 = vmatprep.subr.mxu0 0.0
    %2087 = vmatpush1.msra.mxu0 0.0
    %2088 = vmatprep.subr.mxu0 0.0
    %2089 = vmatpush1.msra.mxu0 0.0
    %2090 = vmatprep.subr.mxu0 0.0
    %2091 = vmatpush1.msra.mxu0 0.0
    %2092 = vmatprep.subr.mxu0 0.0
    %2093 = vmatpush1.msra.mxu0 0.0
    %2094 = vmatprep.subr.mxu0 0.0
    %2095 = vmatpush1.msra.mxu0 0.0
    %2096 = vmatprep.subr.mxu0 0.0
    %2097 = vmatpush1.msra.mxu0 0.0
    %2098 = vmatprep.subr.mxu0 0.0
    %2099 = vmatpush1.msra.mxu0 0.0
    %2100 = vmatprep.subr.mxu0 0.0
    %2101 = vmatpush1.msra.mxu0 0.0
    %2102 = vmatprep.subr.mxu0 0.0
    %2103 = vmatpush1.msra.mxu0 0.0
    %2104 = vmatprep.mubr.f32.mxu0 0.0
    %2105 = vmatmul.mubr.f32.gmra.mrb[0].mxu0 %v173
    %v2106 = vpop.f32.mrb[0].mxu0
    %v2107 = vadd.f32 0.0, %v2106
    %v2108 = vpop.f32.mrb[0].mxu0
    %2109 = vmatprep.mubr.f32.mxu0 0.0
    %2110 = vmatmul.mubr.f32.gmra.mrb[0].mxu0 %v176
    %v2111 = vpop.f32.mrb[0].mxu0
    %v2112 = vadd.f32 0.0, %v2111
    %v2113 = vpop.f32.mrb[0].mxu0
    %2114 = vmatprep.mubr.f32.mxu0 0.0
    %2115 = vmatmul.mubr.f32.gmra.mrb[0].mxu0 %v179
    %v2116 = vpop.f32.mrb[0].mxu0
    %v2117 = vadd.f32 0.0, %v2116
    %v2118 = vpop.f32.mrb[0].mxu0
    %2119 = vmatprep.mubr.f32.mxu0 0.0
    %2120 = vmatmul.mubr.f32.gmra.mrb[0].mxu0 %v182
    %v2121 = vpop.f32.mrb[0].mxu0
    %v2122 = vadd.f32 0.0, %v2121
    %v2123 = vpop.f32.mrb[0].mxu0
    %2124 = vdwg.mxu0
    %2125 = vmatprep.subr.mxu0 0.0
    %2126 = vmatpush1.msra.mxu0 %v1752
    %2127 = vmatprep.subr.mxu0 0.0
    %2128 = vmatpush1.msra.mxu0 0.0
    %2129 = vmatprep.subr.mxu0 0.0
    %2130 = vmatpush1.msra.mxu0 0.0
    %2131 = vmatprep.subr.mxu0 0.0
    %2132 = vmatpush1.msra.mxu0 0.0
    %2133 = vmatprep.subr.mxu0 0.0
    %2134 = vmatpush1.msra.mxu0 0.0
    %2135 = vmatprep.subr.mxu0 0.0
    %2136 = vmatpush1.msra.mxu0 0.0
    %2137 = vmatprep.subr.mxu0 0.0
    %2138 = vmatpush1.msra.mxu0 0.0
    %2139 = vmatprep.subr.mxu0 0.0
    %2140 = vmatpush1.msra.mxu0 0.0
    %2141 = vmatprep.subr.mxu0 0.0
    %2142 = vmatpush1.msra.mxu0 0.0
    %2143 = vmatprep.subr.mxu0 0.0
    %2144 = vmatpush1.msra.mxu0 0.0
    %2145 = vmatprep.subr.mxu0 0.0
    %2146 = vmatpush1.msra.mxu0 0.0
    %2147 = vmatprep.subr.mxu0 0.0
    %2148 = vmatpush1.msra.mxu0 0.0
    %2149 = vmatprep.subr.mxu0 0.0
    %2150 = vmatpush1.msra.mxu0 0.0
    %2151 = vmatprep.subr.mxu0 0.0
    %2152 = vmatpush1.msra.mxu0 0.0
    %2153 = vmatprep.subr.mxu0 0.0
    %2154 = vmatpush1.msra.mxu0 0.0
    %2155 = vmatprep.subr.mxu0 0.0
    %2156 = vmatpush1.msra.mxu0 0.0
    %2157 = vmatprep.subr.mxu0 0.0
    %2158 = vmatpush1.msra.mxu0 0.0
    %2159 = vmatprep.subr.mxu0 0.0
    %2160 = vmatpush1.msra.mxu0 0.0
    %2161 = vmatprep.subr.mxu0 0.0
    %2162 = vmatpush1.msra.mxu0 0.0
    %2163 = vmatprep.subr.mxu0 0.0
    %2164 = vmatpush1.msra.mxu0 0.0
    %2165 = vmatprep.subr.mxu0 0.0
    %2166 = vmatpush1.msra.mxu0 0.0
    %2167 = vmatprep.subr.mxu0 0.0
    %2168 = vmatpush1.msra.mxu0 0.0
    %2169 = vmatprep.subr.mxu0 0.0
    %2170 = vmatpush1.msra.mxu0 0.0
    %2171 = vmatprep.subr.mxu0 0.0
    %2172 = vmatpush1.msra.mxu0 0.0
    %2173 = vmatprep.subr.mxu0 0.0
    %2174 = vmatpush1.msra.mxu0 0.0
    %2175 = vmatprep.subr.mxu0 0.0
    %2176 = vmatpush1.msra.mxu0 0.0
    %2177 = vmatprep.subr.mxu0 0.0
    %2178 = vmatpush1.msra.mxu0 0.0
    %2179 = vmatprep.subr.mxu0 0.0
    %2180 = vmatpush1.msra.mxu0 0.0
    %2181 = vmatprep.subr.mxu0 0.0
    %2182 = vmatpush1.msra.mxu0 0.0
    %2183 = vmatprep.subr.mxu0 0.0
    %2184 = vmatpush1.msra.mxu0 0.0
    %2185 = vmatprep.subr.mxu0 0.0
    %2186 = vmatpush1.msra.mxu0 0.0
    %2187 = vmatprep.subr.mxu0 0.0
    %2188 = vmatpush1.msra.mxu0 0.0
    %2189 = vmatprep.mubr.f32.mxu0 0.0
    %2190 = vmatmul.mubr.f32.gmra.mrb[0].mxu0 %v274
    %v2191 = vpop.f32.mrb[0].mxu0
    %v2192 = vadd.f32 %v2107, %v2191
    %v2193 = vpop.f32.mrb[0].mxu0
    %2194 = vmatprep.mubr.f32.mxu0 0.0
    %2195 = vmatmul.mubr.f32.gmra.mrb[0].mxu0 %v277
    %v2196 = vpop.f32.mrb[0].mxu0
    %v2197 = vadd.f32 %v2112, %v2196
    %v2198 = vpop.f32.mrb[0].mxu0
    %2199 = vmatprep.mubr.f32.mxu0 0.0
    %2200 = vmatmul.mubr.f32.gmra.mrb[0].mxu0 %v280
    %v2201 = vpop.f32.mrb[0].mxu0
    %v2202 = vadd.f32 %v2117, %v2201
    %v2203 = vpop.f32.mrb[0].mxu0
    %2204 = vmatprep.mubr.f32.mxu0 0.0
    %2205 = vmatmul.mubr.f32.gmra.mrb[0].mxu0 %v283
    %v2206 = vpop.f32.mrb[0].mxu0
    %v2207 = vadd.f32 %v2122, %v2206
    %v2208 = vpop.f32.mrb[0].mxu0
    %2209 = vdwg.mxu0
    %2210 = vmatprep.subr.mxu0 0.0
    %2211 = vmatpush1.msra.mxu0 %v1941
    %2212 = vmatprep.subr.mxu0 0.0
    %2213 = vmatpush1.msra.mxu0 0.0
    %2214 = vmatprep.subr.mxu0 0.0
    %2215 = vmatpush1.msra.mxu0 0.0
    %2216 = vmatprep.subr.mxu0 0.0
    %2217 = vmatpush1.msra.mxu0 0.0
    %2218 = vmatprep.subr.mxu0 0.0
    %2219 = vmatpush1.msra.mxu0 0.0
    %2220 = vmatprep.subr.mxu0 0.0
    %2221 = vmatpush1.msra.mxu0 0.0
    %2222 = vmatprep.subr.mxu0 0.0
    %2223 = vmatpush1.msra.mxu0 0.0
    %2224 = vmatprep.subr.mxu0 0.0
    %2225 = vmatpush1.msra.mxu0 0.0
    %2226 = vmatprep.subr.mxu0 0.0
    %2227 = vmatpush1.msra.mxu0 0.0
    %2228 = vmatprep.subr.mxu0 0.0
    %2229 = vmatpush1.msra.mxu0 0.0
    %2230 = vmatprep.subr.mxu0 0.0
    %2231 = vmatpush1.msra.mxu0 0.0
    %2232 = vmatprep.subr.mxu0 0.0
    %2233 = vmatpush1.msra.mxu0 0.0
    %2234 = vmatprep.subr.mxu0 0.0
    %2235 = vmatpush1.msra.mxu0 0.0
    %2236 = vmatprep.subr.mxu0 0.0
    %2237 = vmatpush1.msra.mxu0 0.0
    %2238 = vmatprep.subr.mxu0 0.0
    %2239 = vmatpush1.msra.mxu0 0.0
    %2240 = vmatprep.subr.mxu0 0.0
    %2241 = vmatpush1.msra.mxu0 0.0
    %2242 = vmatprep.subr.mxu0 0.0
    %2243 = vmatpush1.msra.mxu0 0.0
    %2244 = vmatprep.subr.mxu0 0.0
    %2245 = vmatpush1.msra.mxu0 0.0
    %2246 = vmatprep.subr.mxu0 0.0
    %2247 = vmatpush1.msra.mxu0 0.0
    %2248 = vmatprep.subr.mxu0 0.0
    %2249 = vmatpush1.msra.mxu0 0.0
    %2250 = vmatprep.subr.mxu0 0.0
    %2251 = vmatpush1.msra.mxu0 0.0
    %2252 = vmatprep.subr.mxu0 0.0
    %2253 = vmatpush1.msra.mxu0 0.0
    %2254 = vmatprep.subr.mxu0 0.0
    %2255 = vmatpush1.msra.mxu0 0.0
    %2256 = vmatprep.subr.mxu0 0.0
    %2257 = vmatpush1.msra.mxu0 0.0
    %2258 = vmatprep.subr.mxu0 0.0
    %2259 = vmatpush1.msra.mxu0 0.0
    %2260 = vmatprep.subr.mxu0 0.0
    %2261 = vmatpush1.msra.mxu0 0.0
    %2262 = vmatprep.subr.mxu0 0.0
    %2263 = vmatpush1.msra.mxu0 0.0
    %2264 = vmatprep.subr.mxu0 0.0
    %2265 = vmatpush1.msra.mxu0 0.0
    %2266 = vmatprep.subr.mxu0 0.0
    %2267 = vmatpush1.msra.mxu0 0.0
    %2268 = vmatprep.subr.mxu0 0.0
    %2269 = vmatpush1.msra.mxu0 0.0
    %2270 = vmatprep.subr.mxu0 0.0
    %2271 = vmatpush1.msra.mxu0 0.0
    %2272 = vmatprep.subr.mxu0 0.0
    %2273 = vmatpush1.msra.mxu0 0.0
    %2274 = vmatprep.mubr.f32.mxu0 0.0
    %2275 = vmatmul.mubr.f32.gmra.mrb[0].mxu0 %v379
    %v2276 = vpop.f32.mrb[0].mxu0
    %v2277 = vadd.f32 0.0, %v2276
    %v2278 = vpop.f32.mrb[0].mxu0
    %2279 = vmatprep.mubr.f32.mxu0 0.0
    %2280 = vmatmul.mubr.f32.gmra.mrb[0].mxu0 %v382
    %v2281 = vpop.f32.mrb[0].mxu0
    %v2282 = vadd.f32 0.0, %v2281
    %v2283 = vpop.f32.mrb[0].mxu0
    %2284 = vmatprep.mubr.f32.mxu0 0.0
    %2285 = vmatmul.mubr.f32.gmra.mrb[0].mxu0 %v385
    %v2286 = vpop.f32.mrb[0].mxu0
    %v2287 = vadd.f32 0.0, %v2286
    %v2288 = vpop.f32.mrb[0].mxu0
    %2289 = vmatprep.mubr.f32.mxu0 0.0
    %2290 = vmatmul.mubr.f32.gmra.mrb[0].mxu0 %v388
    %v2291 = vpop.f32.mrb[0].mxu0
    %v2292 = vadd.f32 0.0, %v2291
    %v2293 = vpop.f32.mrb[0].mxu0
    %2294 = vdwg.mxu0
    %v2295 = vadd.f32 %v2192, %v2277
    %v2296 = vadd.f32 %v2197, %v2282
    %v2297 = vadd.f32 %v2202, %v2287
    %v2298 = vadd.f32 %v2207, %v2292
    %v2299 = vcombine.high %v1570, %v1570
    %2300 = vrot.lane.b32.xlu0 %v1570, 127
    %v2301 = vpop.permute.xlu0 %2300
    %2302 = vrot.lane.b32.xlu0 %v2299, 127
    %v2303 = vpop.permute.xlu0 %2302
    %v2304 = vsel %vm601, %v2301, %v2303
    %v2305 = vsel %vm184, %v2304, 0
    %2307 = vmatprep.subr.mxu0 0.0
    %2308 = vmatpush1.msra.mxu0 %v2305
    %2309 = vmatprep.subr.mxu0 0.0
    %2310 = vmatpush1.msra.mxu0 0.0
    %2311 = vmatprep.subr.mxu0 0.0
    %2312 = vmatpush1.msra.mxu0 0.0
    %2313 = vmatprep.subr.mxu0 0.0
    %2314 = vmatpush1.msra.mxu0 0.0
    %2315 = vmatprep.subr.mxu0 0.0
    %2316 = vmatpush1.msra.mxu0 0.0
    %2317 = vmatprep.subr.mxu0 0.0
    %2318 = vmatpush1.msra.mxu0 0.0
    %2319 = vmatprep.subr.mxu0 0.0
    %2320 = vmatpush1.msra.mxu0 0.0
    %2321 = vmatprep.subr.mxu0 0.0
    %2322 = vmatpush1.msra.mxu0 0.0
    %2323 = vmatprep.subr.mxu0 0.0
    %2324 = vmatpush1.msra.mxu0 0.0
    %2325 = vmatprep.subr.mxu0 0.0
    %2326 = vmatpush1.msra.mxu0 0.0
    %2327 = vmatprep.subr.mxu0 0.0
    %2328 = vmatpush1.msra.mxu0 0.0
    %2329 = vmatprep.subr.mxu0 0.0
    %2330 = vmatpush1.msra.mxu0 0.0
    %2331 = vmatprep.subr.mxu0 0.0
    %2332 = vmatpush1.msra.mxu0 0.0
    %2333 = vmatprep.subr.mxu0 0.0
    %2334 = vmatpush1.msra.mxu0 0.0
    %2335 = vmatprep.subr.mxu0 0.0
    %2336 = vmatpush1.msra.mxu0 0.0
    %2337 = vmatprep.subr.mxu0 0.0
    %2338 = vmatpush1.msra.mxu0 0.0
    %2339 = vmatprep.subr.mxu0 0.0
    %2340 = vmatpush1.msra.mxu0 0.0
    %2341 = vmatprep.subr.mxu0 0.0
    %2342 = vmatpush1.msra.mxu0 0.0
    %2343 = vmatprep.subr.mxu0 0.0
    %2344 = vmatpush1.msra.mxu0 0.0
    %2345 = vmatprep.subr.mxu0 0.0
    %2346 = vmatpush1.msra.mxu0 0.0
    %2347 = vmatprep.subr.mxu0 0.0
    %2348 = vmatpush1.msra.mxu0 0.0
    %2349 = vmatprep.subr.mxu0 0.0
    %2350 = vmatpush1.msra.mxu0 0.0
    %2351 = vmatprep.subr.mxu0 0.0
    %2352 = vmatpush1.msra.mxu0 0.0
    %2353 = vmatprep.subr.mxu0 0.0
    %2354 = vmatpush1.msra.mxu0 0.0
    %2355 = vmatprep.subr.mxu0 0.0
    %2356 = vmatpush1.msra.mxu0 0.0
    %2357 = vmatprep.subr.mxu0 0.0
    %2358 = vmatpush1.msra.mxu0 0.0
    %2359 = vmatprep.subr.mxu0 0.0
    %2360 = vmatpush1.msra.mxu0 0.0
    %2361 = vmatprep.subr.mxu0 0.0
    %2362 = vmatpush1.msra.mxu0 0.0
    %2363 = vmatprep.subr.mxu0 0.0
    %2364 = vmatpush1.msra.mxu0 0.0
    %2365 = vmatprep.subr.mxu0 0.0
    %2366 = vmatpush1.msra.mxu0 0.0
    %2367 = vmatprep.subr.mxu0 0.0
    %2368 = vmatpush1.msra.mxu0 0.0
    %2369 = vmatprep.subr.mxu0 0.0
    %2370 = vmatpush1.msra.mxu0 0.0
    %2371 = vmatprep.mubr.f32.mxu0 0.0
    %2372 = vmatmul.mubr.f32.gmra.mrb[0].mxu0 %v488
    %v2373 = vpop.f32.mrb[0].mxu0
    %v2374 = vadd.f32 0.0, %v2373
    %v2375 = vpop.f32.mrb[0].mxu0
    %2376 = vmatprep.mubr.f32.mxu0 0.0
    %2377 = vmatmul.mubr.f32.gmra.mrb[0].mxu0 %v491
    %v2378 = vpop.f32.mrb[0].mxu0
    %v2379 = vadd.f32 0.0, %v2378
    %v2380 = vpop.f32.mrb[0].mxu0
    %2381 = vmatprep.mubr.f32.mxu0 0.0
    %2382 = vmatmul.mubr.f32.gmra.mrb[0].mxu0 %v494
    %v2383 = vpop.f32.mrb[0].mxu0
    %v2384 = vadd.f32 0.0, %v2383
    %v2385 = vpop.f32.mrb[0].mxu0
    %2386 = vmatprep.mubr.f32.mxu0 0.0
    %2387 = vmatmul.mubr.f32.gmra.mrb[0].mxu0 %v497
    %v2388 = vpop.f32.mrb[0].mxu0
    %v2389 = vadd.f32 0.0, %v2388
    %v2390 = vpop.f32.mrb[0].mxu0
    %2391 = vdwg.mxu0
    %v2392 = vadd.f32 %v2295, %v2374
    %v2393 = vadd.f32 %v2296, %v2379
    %v2394 = vadd.f32 %v2297, %v2384
    %v2395 = vadd.f32 %v2298, %v2389
    %v2396 = vcombine.high %v1572, %v1572
    %2397 = vrot.lane.b32.xlu0 %v1572, 127
    %v2398 = vpop.permute.xlu0 %2397
    %2399 = vrot.lane.b32.xlu0 %v2396, 127
    %v2400 = vpop.permute.xlu0 %2399
    %v2401 = vsel %vm601, %v2398, %v2400
    %v2402 = vsel %vm184, %v2401, 0
    %2404 = vmatprep.subr.mxu0 0.0
    %2405 = vmatpush1.msra.mxu0 %v2402
    %2406 = vmatprep.subr.mxu0 0.0
    %2407 = vmatpush1.msra.mxu0 0.0
    %2408 = vmatprep.subr.mxu0 0.0
    %2409 = vmatpush1.msra.mxu0 0.0
    %2410 = vmatprep.subr.mxu0 0.0
    %2411 = vmatpush1.msra.mxu0 0.0
    %2412 = vmatprep.subr.mxu0 0.0
    %2413 = vmatpush1.msra.mxu0 0.0
    %2414 = vmatprep.subr.mxu0 0.0
    %2415 = vmatpush1.msra.mxu0 0.0
    %2416 = vmatprep.subr.mxu0 0.0
    %2417 = vmatpush1.msra.mxu0 0.0
    %2418 = vmatprep.subr.mxu0 0.0
    %2419 = vmatpush1.msra.mxu0 0.0
    %2420 = vmatprep.subr.mxu0 0.0
    %2421 = vmatpush1.msra.mxu0 0.0
    %2422 = vmatprep.subr.mxu0 0.0
    %2423 = vmatpush1.msra.mxu0 0.0
    %2424 = vmatprep.subr.mxu0 0.0
    %2425 = vmatpush1.msra.mxu0 0.0
    %2426 = vmatprep.subr.mxu0 0.0
    %2427 = vmatpush1.msra.mxu0 0.0
    %2428 = vmatprep.subr.mxu0 0.0
    %2429 = vmatpush1.msra.mxu0 0.0
    %2430 = vmatprep.subr.mxu0 0.0
    %2431 = vmatpush1.msra.mxu0 0.0
    %2432 = vmatprep.subr.mxu0 0.0
    %2433 = vmatpush1.msra.mxu0 0.0
    %2434 = vmatprep.subr.mxu0 0.0
    %2435 = vmatpush1.msra.mxu0 0.0
    %2436 = vmatprep.subr.mxu0 0.0
    %2437 = vmatpush1.msra.mxu0 0.0
    %2438 = vmatprep.subr.mxu0 0.0
    %2439 = vmatpush1.msra.mxu0 0.0
    %2440 = vmatprep.subr.mxu0 0.0
    %2441 = vmatpush1.msra.mxu0 0.0
    %2442 = vmatprep.subr.mxu0 0.0
    %2443 = vmatpush1.msra.mxu0 0.0
    %2444 = vmatprep.subr.mxu0 0.0
    %2445 = vmatpush1.msra.mxu0 0.0
    %2446 = vmatprep.subr.mxu0 0.0
    %2447 = vmatpush1.msra.mxu0 0.0
    %2448 = vmatprep.subr.mxu0 0.0
    %2449 = vmatpush1.msra.mxu0 0.0
    %2450 = vmatprep.subr.mxu0 0.0
    %2451 = vmatpush1.msra.mxu0 0.0
    %2452 = vmatprep.subr.mxu0 0.0
    %2453 = vmatpush1.msra.mxu0 0.0
    %2454 = vmatprep.subr.mxu0 0.0
    %2455 = vmatpush1.msra.mxu0 0.0
    %2456 = vmatprep.subr.mxu0 0.0
    %2457 = vmatpush1.msra.mxu0 0.0
    %2458 = vmatprep.subr.mxu0 0.0
    %2459 = vmatpush1.msra.mxu0 0.0
    %2460 = vmatprep.subr.mxu0 0.0
    %2461 = vmatpush1.msra.mxu0 0.0
    %2462 = vmatprep.subr.mxu0 0.0
    %2463 = vmatpush1.msra.mxu0 0.0
    %2464 = vmatprep.subr.mxu0 0.0
    %2465 = vmatpush1.msra.mxu0 0.0
    %2466 = vmatprep.subr.mxu0 0.0
    %2467 = vmatpush1.msra.mxu0 0.0
    %2468 = vmatprep.mubr.f32.mxu0 0.0
    %2469 = vmatmul.mubr.f32.gmra.mrb[0].mxu0 %v604
    %v2470 = vpop.f32.mrb[0].mxu0
    %v2471 = vadd.f32 0.0, %v2470
    %v2472 = vpop.f32.mrb[0].mxu0
    %2473 = vmatprep.mubr.f32.mxu0 0.0
    %2474 = vmatmul.mubr.f32.gmra.mrb[0].mxu0 %v607
    %v2475 = vpop.f32.mrb[0].mxu0
    %v2476 = vadd.f32 0.0, %v2475
    %v2477 = vpop.f32.mrb[0].mxu0
    %2478 = vmatprep.mubr.f32.mxu0 0.0
    %2479 = vmatmul.mubr.f32.gmra.mrb[0].mxu0 %v610
    %v2480 = vpop.f32.mrb[0].mxu0
    %v2481 = vadd.f32 0.0, %v2480
    %v2482 = vpop.f32.mrb[0].mxu0
    %2483 = vmatprep.mubr.f32.mxu0 0.0
    %2484 = vmatmul.mubr.f32.gmra.mrb[0].mxu0 %v613
    %v2485 = vpop.f32.mrb[0].mxu0
    %v2486 = vadd.f32 0.0, %v2485
    %v2487 = vpop.f32.mrb[0].mxu0
    %2488 = vdwg.mxu0
    %v2489 = vadd.f32 %v2392, %v2471
    %v2490 = vadd.f32 %v2393, %v2476
    %v2491 = vadd.f32 %v2394, %v2481
    %v2492 = vadd.f32 %v2395, %v2486
    %v2493 = vadd.f32 %v2489, %v713
    %v2494 = vadd.f32 %v2490, %v718
    %v2495 = vadd.f32 %v2491, %v723
    %v2496 = vadd.f32 %v2492, %v728
    %v2497 = vmax.f32 %v2493, 0.0
    %v2498 = vmax.f32 %v2494, 0.0
    %v2499 = vmax.f32 %v2495, 0.0
    %v2500 = vmax.f32 %v2496, 0.0
    %v2501 = vsel %vm1199, 0.0, %v2497
    %v2502 = vsel %vm1199, 0.0, %v2498
    %v2503 = vsel %vm1199, 0.0, %v2499
    %v2504 = vsel %vm1199, 0.0, %v2500
    %2509 = vrot.lane.b32.xlu0 %v2501, 1
    %v2510 = vpop.permute.xlu0 %2509
    %2511 = vrot.lane.b32.xlu0 %v2502, 1
    %v2512 = vpop.permute.xlu0 %2511
    %2513 = vrot.lane.b32.xlu0 %v2503, 1
    %v2514 = vpop.permute.xlu0 %2513
    %2515 = vrot.lane.b32.xlu0 %v2504, 1
    %v2516 = vpop.permute.xlu0 %2515
    %v2521 = vsel %vm1220, 0.0, %v2510
    %v2522 = vsel %vm1220, 0.0, %v2512
    %v2523 = vsel %vm1220, 0.0, %v2514
    %v2524 = vsel %vm1220, 0.0, %v2516
    %2525 = vmatprep.subr.mxu0 0.0
    %2526 = vmatpush1.msra.mxu0 %v2036
    %2527 = vmatprep.subr.mxu0 0.0
    %2528 = vmatpush1.msra.mxu0 %v2037
    %2529 = vmatprep.subr.mxu0 0.0
    %2530 = vmatpush1.msra.mxu0 %v2038
    %2531 = vmatprep.subr.mxu0 0.0
    %2532 = vmatpush1.msra.mxu0 %v2039
    %2533 = vmatprep.subr.mxu0 0.0
    %2534 = vmatpush1.msra.mxu0 0.0
    %2535 = vmatprep.subr.mxu0 0.0
    %2536 = vmatpush1.msra.mxu0 0.0
    %2537 = vmatprep.subr.mxu0 0.0
    %2538 = vmatpush1.msra.mxu0 0.0
    %2539 = vmatprep.subr.mxu0 0.0
    %2540 = vmatpush1.msra.mxu0 0.0
    %2541 = vmatprep.subr.mxu0 0.0
    %2542 = vmatpush1.msra.mxu0 0.0
    %2543 = vmatprep.subr.mxu0 0.0
    %2544 = vmatpush1.msra.mxu0 0.0
    %2545 = vmatprep.subr.mxu0 0.0
    %2546 = vmatpush1.msra.mxu0 0.0
    %2547 = vmatprep.subr.mxu0 0.0
    %2548 = vmatpush1.msra.mxu0 0.0
    %2549 = vmatprep.subr.mxu0 0.0
    %2550 = vmatpush1.msra.mxu0 0.0
    %2551 = vmatprep.subr.mxu0 0.0
    %2552 = vmatpush1.msra.mxu0 0.0
    %2553 = vmatprep.subr.mxu0 0.0
    %2554 = vmatpush1.msra.mxu0 0.0
    %2555 = vmatprep.subr.mxu0 0.0
    %2556 = vmatpush1.msra.mxu0 0.0
    %2557 = vmatprep.subr.mxu0 0.0
    %2558 = vmatpush1.msra.mxu0 0.0
    %2559 = vmatprep.subr.mxu0 0.0
    %2560 = vmatpush1.msra.mxu0 0.0
    %2561 = vmatprep.subr.mxu0 0.0
    %2562 = vmatpush1.msra.mxu0 0.0
    %2563 = vmatprep.subr.mxu0 0.0
    %2564 = vmatpush1.msra.mxu0 0.0
    %2565 = vmatprep.subr.mxu0 0.0
    %2566 = vmatpush1.msra.mxu0 0.0
    %2567 = vmatprep.subr.mxu0 0.0
    %2568 = vmatpush1.msra.mxu0 0.0
    %2569 = vmatprep.subr.mxu0 0.0
    %2570 = vmatpush1.msra.mxu0 0.0
    %2571 = vmatprep.subr.mxu0 0.0
    %2572 = vmatpush1.msra.mxu0 0.0
    %2573 = vmatprep.subr.mxu0 0.0
    %2574 = vmatpush1.msra.mxu0 0.0
    %2575 = vmatprep.subr.mxu0 0.0
    %2576 = vmatpush1.msra.mxu0 0.0
    %2577 = vmatprep.subr.mxu0 0.0
    %2578 = vmatpush1.msra.mxu0 0.0
    %2579 = vmatprep.subr.mxu0 0.0
    %2580 = vmatpush1.msra.mxu0 0.0
    %2581 = vmatprep.subr.mxu0 0.0
    %2582 = vmatpush1.msra.mxu0 0.0
    %2583 = vmatprep.subr.mxu0 0.0
    %2584 = vmatpush1.msra.mxu0 0.0
    %2585 = vmatprep.subr.mxu0 0.0
    %2586 = vmatpush1.msra.mxu0 0.0
    %2587 = vmatprep.subr.mxu0 0.0
    %2588 = vmatpush1.msra.mxu0 0.0
    %2589 = vmatprep.mubr.f32.mxu0 0.0
    %2590 = vmatmul.mubr.f32.gmra.mrb[0].mxu0 %v1236
    %v2591 = vpop.f32.mrb[0].mxu0
    %v2592 = vadd.f32 0.0, %v2591
    %v2593 = vpop.f32.mrb[0].mxu0
    %2594 = vmatprep.mubr.f32.mxu0 0.0
    %2595 = vmatmul.mubr.f32.gmra.mrb[0].mxu0 %v1239
    %v2596 = vpop.f32.mrb[0].mxu0
    %v2597 = vadd.f32 0.0, %v2596
    %v2598 = vpop.f32.mrb[0].mxu0
    %2599 = vmatprep.mubr.f32.mxu0 0.0
    %2600 = vmatmul.mubr.f32.gmra.mrb[0].mxu0 %v1242
    %v2601 = vpop.f32.mrb[0].mxu0
    %v2602 = vadd.f32 0.0, %v2601
    %v2603 = vpop.f32.mrb[0].mxu0
    %2604 = vmatprep.mubr.f32.mxu0 0.0
    %2605 = vmatmul.mubr.f32.gmra.mrb[0].mxu0 %v1245
    %v2606 = vpop.f32.mrb[0].mxu0
    %v2607 = vadd.f32 0.0, %v2606
    %v2608 = vpop.f32.mrb[0].mxu0
    %2609 = vdwg.mxu0
    %2610 = vmatprep.subr.mxu0 0.0
    %2611 = vmatpush1.msra.mxu0 %v2521
    %2612 = vmatprep.subr.mxu0 0.0
    %2613 = vmatpush1.msra.mxu0 %v2522
    %2614 = vmatprep.subr.mxu0 0.0
    %2615 = vmatpush1.msra.mxu0 %v2523
    %2616 = vmatprep.subr.mxu0 0.0
    %2617 = vmatpush1.msra.mxu0 %v2524
    %2618 = vmatprep.subr.mxu0 0.0
    %2619 = vmatpush1.msra.mxu0 0.0
    %2620 = vmatprep.subr.mxu0 0.0
    %2621 = vmatpush1.msra.mxu0 0.0
    %2622 = vmatprep.subr.mxu0 0.0
    %2623 = vmatpush1.msra.mxu0 0.0
    %2624 = vmatprep.subr.mxu0 0.0
    %2625 = vmatpush1.msra.mxu0 0.0
    %2626 = vmatprep.subr.mxu0 0.0
    %2627 = vmatpush1.msra.mxu0 0.0
    %2628 = vmatprep.subr.mxu0 0.0
    %2629 = vmatpush1.msra.mxu0 0.0
    %2630 = vmatprep.subr.mxu0 0.0
    %2631 = vmatpush1.msra.mxu0 0.0
    %2632 = vmatprep.subr.mxu0 0.0
    %2633 = vmatpush1.msra.mxu0 0.0
    %2634 = vmatprep.subr.mxu0 0.0
    %2635 = vmatpush1.msra.mxu0 0.0
    %2636 = vmatprep.subr.mxu0 0.0
    %2637 = vmatpush1.msra.mxu0 0.0
    %2638 = vmatprep.subr.mxu0 0.0
    %2639 = vmatpush1.msra.mxu0 0.0
    %2640 = vmatprep.subr.mxu0 0.0
    %2641 = vmatpush1.msra.mxu0 0.0
    %2642 = vmatprep.subr.mxu0 0.0
    %2643 = vmatpush1.msra.mxu0 0.0
    %2644 = vmatprep.subr.mxu0 0.0
    %2645 = vmatpush1.msra.mxu0 0.0
    %2646 = vmatprep.subr.mxu0 0.0
    %2647 = vmatpush1.msra.mxu0 0.0
    %2648 = vmatprep.subr.mxu0 0.0
    %2649 = vmatpush1.msra.mxu0 0.0
    %2650 = vmatprep.subr.mxu0 0.0
    %2651 = vmatpush1.msra.mxu0 0.0
    %2652 = vmatprep.subr.mxu0 0.0
    %2653 = vmatpush1.msra.mxu0 0.0
    %2654 = vmatprep.subr.mxu0 0.0
    %2655 = vmatpush1.msra.mxu0 0.0
    %2656 = vmatprep.subr.mxu0 0.0
    %2657 = vmatpush1.msra.mxu0 0.0
    %2658 = vmatprep.subr.mxu0 0.0
    %2659 = vmatpush1.msra.mxu0 0.0
    %2660 = vmatprep.subr.mxu0 0.0
    %2661 = vmatpush1.msra.mxu0 0.0
    %2662 = vmatprep.subr.mxu0 0.0
    %2663 = vmatpush1.msra.mxu0 0.0
    %2664 = vmatprep.subr.mxu0 0.0
    %2665 = vmatpush1.msra.mxu0 0.0
    %2666 = vmatprep.subr.mxu0 0.0
    %2667 = vmatpush1.msra.mxu0 0.0
    %2668 = vmatprep.subr.mxu0 0.0
    %2669 = vmatpush1.msra.mxu0 0.0
    %2670 = vmatprep.subr.mxu0 0.0
    %2671 = vmatpush1.msra.mxu0 0.0
    %2672 = vmatprep.subr.mxu0 0.0
    %2673 = vmatpush1.msra.mxu0 0.0
    %2674 = vmatprep.mubr.f32.mxu0 0.0
    %2675 = vmatmul.mubr.f32.gmra.mrb[0].mxu0 %v1333
    %v2676 = vpop.f32.mrb[0].mxu0
    %v2677 = vadd.f32 %v2592, %v2676
    %v2678 = vpop.f32.mrb[0].mxu0
    %2679 = vmatprep.mubr.f32.mxu0 0.0
    %2680 = vmatmul.mubr.f32.gmra.mrb[0].mxu0 %v1336
    %v2681 = vpop.f32.mrb[0].mxu0
    %v2682 = vadd.f32 %v2597, %v2681
    %v2683 = vpop.f32.mrb[0].mxu0
    %2684 = vmatprep.mubr.f32.mxu0 0.0
    %2685 = vmatmul.mubr.f32.gmra.mrb[0].mxu0 %v1339
    %v2686 = vpop.f32.mrb[0].mxu0
    %v2687 = vadd.f32 %v2602, %v2686
    %v2688 = vpop.f32.mrb[0].mxu0
    %2689 = vmatprep.mubr.f32.mxu0 0.0
    %2690 = vmatmul.mubr.f32.gmra.mrb[0].mxu0 %v1342
    %v2691 = vpop.f32.mrb[0].mxu0
    %v2692 = vadd.f32 %v2607, %v2691
    %v2693 = vpop.f32.mrb[0].mxu0
    %2694 = vdwg.mxu0
    %2695 = vmatprep.subr.mxu0 0.0
    %2696 = vmatpush1.msra.mxu0 %v2501
    %2697 = vmatprep.subr.mxu0 0.0
    %2698 = vmatpush1.msra.mxu0 %v2502
    %2699 = vmatprep.subr.mxu0 0.0
    %2700 = vmatpush1.msra.mxu0 %v2503
    %2701 = vmatprep.subr.mxu0 0.0
    %2702 = vmatpush1.msra.mxu0 %v2504
    %2703 = vmatprep.subr.mxu0 0.0
    %2704 = vmatpush1.msra.mxu0 0.0
    %2705 = vmatprep.subr.mxu0 0.0
    %2706 = vmatpush1.msra.mxu0 0.0
    %2707 = vmatprep.subr.mxu0 0.0
    %2708 = vmatpush1.msra.mxu0 0.0
    %2709 = vmatprep.subr.mxu0 0.0
    %2710 = vmatpush1.msra.mxu0 0.0
    %2711 = vmatprep.subr.mxu0 0.0
    %2712 = vmatpush1.msra.mxu0 0.0
    %2713 = vmatprep.subr.mxu0 0.0
    %2714 = vmatpush1.msra.mxu0 0.0
    %2715 = vmatprep.subr.mxu0 0.0
    %2716 = vmatpush1.msra.mxu0 0.0
    %2717 = vmatprep.subr.mxu0 0.0
    %2718 = vmatpush1.msra.mxu0 0.0
    %2719 = vmatprep.subr.mxu0 0.0
    %2720 = vmatpush1.msra.mxu0 0.0
    %2721 = vmatprep.subr.mxu0 0.0
    %2722 = vmatpush1.msra.mxu0 0.0
    %2723 = vmatprep.subr.mxu0 0.0
    %2724 = vmatpush1.msra.mxu0 0.0
    %2725 = vmatprep.subr.mxu0 0.0
    %2726 = vmatpush1.msra.mxu0 0.0
    %2727 = vmatprep.subr.mxu0 0.0
    %2728 = vmatpush1.msra.mxu0 0.0
    %2729 = vmatprep.subr.mxu0 0.0
    %2730 = vmatpush1.msra.mxu0 0.0
    %2731 = vmatprep.subr.mxu0 0.0
    %2732 = vmatpush1.msra.mxu0 0.0
    %2733 = vmatprep.subr.mxu0 0.0
    %2734 = vmatpush1.msra.mxu0 0.0
    %2735 = vmatprep.subr.mxu0 0.0
    %2736 = vmatpush1.msra.mxu0 0.0
    %2737 = vmatprep.subr.mxu0 0.0
    %2738 = vmatpush1.msra.mxu0 0.0
    %2739 = vmatprep.subr.mxu0 0.0
    %2740 = vmatpush1.msra.mxu0 0.0
    %2741 = vmatprep.subr.mxu0 0.0
    %2742 = vmatpush1.msra.mxu0 0.0
    %2743 = vmatprep.subr.mxu0 0.0
    %2744 = vmatpush1.msra.mxu0 0.0
    %2745 = vmatprep.subr.mxu0 0.0
    %2746 = vmatpush1.msra.mxu0 0.0
    %2747 = vmatprep.subr.mxu0 0.0
    %2748 = vmatpush1.msra.mxu0 0.0
    %2749 = vmatprep.subr.mxu0 0.0
    %2750 = vmatpush1.msra.mxu0 0.0
    %2751 = vmatprep.subr.mxu0 0.0
    %2752 = vmatpush1.msra.mxu0 0.0
    %2753 = vmatprep.subr.mxu0 0.0
    %2754 = vmatpush1.msra.mxu0 0.0
    %2755 = vmatprep.subr.mxu0 0.0
    %2756 = vmatpush1.msra.mxu0 0.0
    %2757 = vmatprep.subr.mxu0 0.0
    %2758 = vmatpush1.msra.mxu0 0.0
    %2759 = vmatprep.mubr.f32.mxu0 0.0
    %2760 = vmatmul.mubr.f32.gmra.mrb[0].mxu0 %v1435
    %v2761 = vpop.f32.mrb[0].mxu0
    %v2762 = vadd.f32 0.0, %v2761
    %v2763 = vpop.f32.mrb[0].mxu0
    %2764 = vmatprep.mubr.f32.mxu0 0.0
    %2765 = vmatmul.mubr.f32.gmra.mrb[0].mxu0 %v1438
    %v2766 = vpop.f32.mrb[0].mxu0
    %v2767 = vadd.f32 0.0, %v2766
    %v2768 = vpop.f32.mrb[0].mxu0
    %2769 = vmatprep.mubr.f32.mxu0 0.0
    %2770 = vmatmul.mubr.f32.gmra.mrb[0].mxu0 %v1441
    %v2771 = vpop.f32.mrb[0].mxu0
    %v2772 = vadd.f32 0.0, %v2771
    %v2773 = vpop.f32.mrb[0].mxu0
    %2774 = vmatprep.mubr.f32.mxu0 0.0
    %2775 = vmatmul.mubr.f32.gmra.mrb[0].mxu0 %v1444
    %v2776 = vpop.f32.mrb[0].mxu0
    %v2777 = vadd.f32 0.0, %v2776
    %v2778 = vpop.f32.mrb[0].mxu0
    %2779 = vdwg.mxu0
    %v2780 = vadd.f32 %v2677, %v2762
    %v2781 = vadd.f32 %v2682, %v2767
    %v2782 = vadd.f32 %v2687, %v2772
    %v2783 = vadd.f32 %v2692, %v2777
    %v2784 = vadd.f32 %v2780, %v1542
    %v2785 = vadd.f32 %v2781, %v1547
    %v2786 = vadd.f32 %v2782, %v1552
    %v2787 = vadd.f32 %v2783, %v1557
    %v2788 = vmax.f32 %v2784, 0.0
    %v2789 = vmax.f32 %v2785, 0.0
    %v2790 = vmax.f32 %v2786, 0.0
    %v2791 = vmax.f32 %v2787, 0.0
    %s2792 = smul.u32 4, 512
    %s2793 = smul.u32 %s2792, 2
    %s2794 = sshll.u32 %s2793, 4
    %2795 = dma.done [#allocation3], %s2794
    %v2797 = vrot.slane %v2788, 7
    %vm2799 = vcmask 1040384
    %v2800 = vsel %vm2799, %v1563, %v2797
    %v2801 = vld [vmem:[#allocation2] sm:$0xff]
    %v2802 = vld [vmem:[#allocation2 + $0x8] sm:$0xff]
    %v2803 = vld [vmem:[#allocation2 + $0x10] sm:$0xff]
    %v2804 = vld [vmem:[#allocation2 + $0x18] sm:$0xff]
    %v2805 = vld [vmem:[#allocation2 + $0x20] sm:$0xff]
    %v2806 = vld [vmem:[#allocation2 + $0x28] sm:$0xff]
    %v2807 = vld [vmem:[#allocation2 + $0x30] sm:$0xff]
    %v2808 = vld [vmem:[#allocation2 + $0x38] sm:$0xff]
    %v2809 = vld [vmem:[#allocation2 + $0x40] sm:$0xff]
    %v2810 = vld [vmem:[#allocation2 + $0x48] sm:$0xff]
    %v2811 = vld [vmem:[#allocation2 + $0x50] sm:$0xff]
    %v2812 = vld [vmem:[#allocation2 + $0x58] sm:$0xff]
    %v2813 = vld [vmem:[#allocation2 + $0x60] sm:$0xff]
    %v2814 = vld [vmem:[#allocation2 + $0x68] sm:$0xff]
    %v2815 = vld [vmem:[#allocation2 + $0x70] sm:$0xff]
    %v2816 = vld [vmem:[#allocation2 + $0x78] sm:$0xff]
    %v2817 = vpack.c.bf16 %v2800, %v2800
    %v2819 = vrot.slane %v1563, 1
    %v2821 = vsel %vm2799, %v2819, %v2788
    %v2822 = vld [vmem:[#allocation2 + $0x80] sm:$0xff]
    %v2823 = vld [vmem:[#allocation2 + $0x88] sm:$0xff]
    %v2824 = vld [vmem:[#allocation2 + $0x90] sm:$0xff]
    %v2825 = vld [vmem:[#allocation2 + $0x98] sm:$0xff]
    %v2826 = vld [vmem:[#allocation2 + $0xa0] sm:$0xff]
    %v2827 = vld [vmem:[#allocation2 + $0xa8] sm:$0xff]
    %v2828 = vld [vmem:[#allocation2 + $0xb0] sm:$0xff]
    %v2829 = vld [vmem:[#allocation2 + $0xb8] sm:$0xff]
    %v2830 = vld [vmem:[#allocation2 + $0xc0] sm:$0xff]
    %v2831 = vld [vmem:[#allocation2 + $0xc8] sm:$0xff]
    %v2832 = vld [vmem:[#allocation2 + $0xd0] sm:$0xff]
    %v2833 = vld [vmem:[#allocation2 + $0xd8] sm:$0xff]
    %v2834 = vld [vmem:[#allocation2 + $0xe0] sm:$0xff]
    %v2835 = vld [vmem:[#allocation2 + $0xe8] sm:$0xff]
    %v2836 = vld [vmem:[#allocation2 + $0xf0] sm:$0xff]
    %v2837 = vld [vmem:[#allocation2 + $0xf8] sm:$0xff]
    %v2838 = vpack.c.bf16 %v2821, %v2821
    %2839 = vmatprep.subr.bf16.mxu0 %v2823
    %2840 = vmatpush1.bf16.msra.mxu0 %v2822
    %2841 = vmatprep.subr.bf16.mxu0 %v2825
    %2842 = vmatpush1.bf16.msra.mxu0 %v2824
    %2843 = vmatprep.subr.bf16.mxu0 %v2827
    %2844 = vmatpush1.bf16.msra.mxu0 %v2826
    %2845 = vmatprep.subr.bf16.mxu0 %v2829
    %2846 = vmatpush1.bf16.msra.mxu0 %v2828
    %2847 = vmatprep.subr.bf16.mxu0 %v2831
    %2848 = vmatpush1.bf16.msra.mxu0 %v2830
    %2849 = vmatprep.subr.bf16.mxu0 %v2833
    %2850 = vmatpush1.bf16.msra.mxu0 %v2832
    %2851 = vmatprep.subr.bf16.mxu0 %v2835
    %2852 = vmatpush1.bf16.msra.mxu0 %v2834
    %2853 = vmatprep.subr.bf16.mxu0 %v2837
    %2854 = vmatpush1.bf16.msra.mxu0 %v2836
    %2855 = vmatprep.subr.bf16.mxu0 0
    %2856 = vmatpush1.bf16.msra.mxu0 0
    %2857 = vmatprep.subr.bf16.mxu0 0
    %2858 = vmatpush1.bf16.msra.mxu0 0
    %2859 = vmatprep.subr.bf16.mxu0 0
    %2860 = vmatpush1.bf16.msra.mxu0 0
    %2861 = vmatprep.subr.bf16.mxu0 0
    %2862 = vmatpush1.bf16.msra.mxu0 0
    %2863 = vmatprep.subr.bf16.mxu0 0
    %2864 = vmatpush1.bf16.msra.mxu0 0
    %2865 = vmatprep.subr.bf16.mxu0 0
    %2866 = vmatpush1.bf16.msra.mxu0 0
    %2867 = vmatprep.subr.bf16.mxu0 0
    %2868 = vmatpush1.bf16.msra.mxu0 0
    %2869 = vmatprep.subr.bf16.mxu0 0
    %2870 = vmatpush1.bf16.msra.mxu0 0
    %2871 = vmatprep.mubr.bf16.mxu0 0
    %2872 = vmatmul.mubr.bf16.gmra.mrb[0].mxu0 %v2838
    %v2873 = vpop.f32.mrb[0].mxu0
    %v2874 = vadd.f32 0.0, %v2873
    %v2875 = vpop.f32.mrb[0].mxu0
    %v2876 = vadd.f32 0.0, %v2875
    %v2877 = vpop.f32.mrb[0].mxu0
    %v2878 = vpop.f32.mrb[0].mxu0
    %2879 = vdwg.mxu0
    %2880 = vmatprep.subr.bf16.mxu0 %v2802
    %2881 = vmatpush1.bf16.msra.mxu0 %v2801
    %2882 = vmatprep.subr.bf16.mxu0 %v2804
    %2883 = vmatpush1.bf16.msra.mxu0 %v2803
    %2884 = vmatprep.subr.bf16.mxu0 %v2806
    %2885 = vmatpush1.bf16.msra.mxu0 %v2805
    %2886 = vmatprep.subr.bf16.mxu0 %v2808
    %2887 = vmatpush1.bf16.msra.mxu0 %v2807
    %2888 = vmatprep.subr.bf16.mxu0 %v2810
    %2889 = vmatpush1.bf16.msra.mxu0 %v2809
    %2890 = vmatprep.subr.bf16.mxu0 %v2812
    %2891 = vmatpush1.bf16.msra.mxu0 %v2811
    %2892 = vmatprep.subr.bf16.mxu0 %v2814
    %2893 = vmatpush1.bf16.msra.mxu0 %v2813
    %2894 = vmatprep.subr.bf16.mxu0 %v2816
    %2895 = vmatpush1.bf16.msra.mxu0 %v2815
    %2896 = vmatprep.subr.bf16.mxu0 0
    %2897 = vmatpush1.bf16.msra.mxu0 0
    %2898 = vmatprep.subr.bf16.mxu0 0
    %2899 = vmatpush1.bf16.msra.mxu0 0
    %2900 = vmatprep.subr.bf16.mxu0 0
    %2901 = vmatpush1.bf16.msra.mxu0 0
    %2902 = vmatprep.subr.bf16.mxu0 0
    %2903 = vmatpush1.bf16.msra.mxu0 0
    %2904 = vmatprep.subr.bf16.mxu0 0
    %2905 = vmatpush1.bf16.msra.mxu0 0
    %2906 = vmatprep.subr.bf16.mxu0 0
    %2907 = vmatpush1.bf16.msra.mxu0 0
    %2908 = vmatprep.subr.bf16.mxu0 0
    %2909 = vmatpush1.bf16.msra.mxu0 0
    %2910 = vmatprep.subr.bf16.mxu0 0
    %2911 = vmatpush1.bf16.msra.mxu0 0
    %2912 = vmatprep.mubr.bf16.mxu0 0
    %2913 = vmatmul.mubr.bf16.gmra.mrb[0].mxu0 %v2817
    %v2914 = vpop.f32.mrb[0].mxu0
    %v2915 = vadd.f32 %v2874, %v2914
    %v2916 = vpop.f32.mrb[0].mxu0
    %v2917 = vadd.f32 %v2876, %v2916
    %v2918 = vpop.f32.mrb[0].mxu0
    %v2919 = vpop.f32.mrb[0].mxu0
    %2920 = vdwg.mxu0
    %v2921 = vrot.slane %v1563, 2
    %v2923 = vrot.slane %v2788, 1
    %v2925 = vsel %vm2799, %v2921, %v2923
    %v2926 = vld [vmem:[#allocation2 + $0x100] sm:$0xff]
    %v2927 = vld [vmem:[#allocation2 + $0x108] sm:$0xff]
    %v2928 = vld [vmem:[#allocation2 + $0x110] sm:$0xff]
    %v2929 = vld [vmem:[#allocation2 + $0x118] sm:$0xff]
    %v2930 = vld [vmem:[#allocation2 + $0x120] sm:$0xff]
    %v2931 = vld [vmem:[#allocation2 + $0x128] sm:$0xff]
    %v2932 = vld [vmem:[#allocation2 + $0x130] sm:$0xff]
    %v2933 = vld [vmem:[#allocation2 + $0x138] sm:$0xff]
    %v2934 = vld [vmem:[#allocation2 + $0x140] sm:$0xff]
    %v2935 = vld [vmem:[#allocation2 + $0x148] sm:$0xff]
    %v2936 = vld [vmem:[#allocation2 + $0x150] sm:$0xff]
    %v2937 = vld [vmem:[#allocation2 + $0x158] sm:$0xff]
    %v2938 = vld [vmem:[#allocation2 + $0x160] sm:$0xff]
    %v2939 = vld [vmem:[#allocation2 + $0x168] sm:$0xff]
    %v2940 = vld [vmem:[#allocation2 + $0x170] sm:$0xff]
    %v2941 = vld [vmem:[#allocation2 + $0x178] sm:$0xff]
    %v2942 = vpack.c.bf16 %v2925, %v2925
    %2943 = vmatprep.subr.bf16.mxu0 %v2927
    %2944 = vmatpush1.bf16.msra.mxu0 %v2926
    %2945 = vmatprep.subr.bf16.mxu0 %v2929
    %2946 = vmatpush1.bf16.msra.mxu0 %v2928
    %2947 = vmatprep.subr.bf16.mxu0 %v2931
    %2948 = vmatpush1.bf16.msra.mxu0 %v2930
    %2949 = vmatprep.subr.bf16.mxu0 %v2933
    %2950 = vmatpush1.bf16.msra.mxu0 %v2932
    %2951 = vmatprep.subr.bf16.mxu0 %v2935
    %2952 = vmatpush1.bf16.msra.mxu0 %v2934
    %2953 = vmatprep.subr.bf16.mxu0 %v2937
    %2954 = vmatpush1.bf16.msra.mxu0 %v2936
    %2955 = vmatprep.subr.bf16.mxu0 %v2939
    %2956 = vmatpush1.bf16.msra.mxu0 %v2938
    %2957 = vmatprep.subr.bf16.mxu0 %v2941
    %2958 = vmatpush1.bf16.msra.mxu0 %v2940
    %2959 = vmatprep.subr.bf16.mxu0 0
    %2960 = vmatpush1.bf16.msra.mxu0 0
    %2961 = vmatprep.subr.bf16.mxu0 0
    %2962 = vmatpush1.bf16.msra.mxu0 0
    %2963 = vmatprep.subr.bf16.mxu0 0
    %2964 = vmatpush1.bf16.msra.mxu0 0
    %2965 = vmatprep.subr.bf16.mxu0 0
    %2966 = vmatpush1.bf16.msra.mxu0 0
    %2967 = vmatprep.subr.bf16.mxu0 0
    %2968 = vmatpush1.bf16.msra.mxu0 0
    %2969 = vmatprep.subr.bf16.mxu0 0
    %2970 = vmatpush1.bf16.msra.mxu0 0
    %2971 = vmatprep.subr.bf16.mxu0 0
    %2972 = vmatpush1.bf16.msra.mxu0 0
    %2973 = vmatprep.subr.bf16.mxu0 0
    %2974 = vmatpush1.bf16.msra.mxu0 0
    %2975 = vmatprep.mubr.bf16.mxu0 0
    %2976 = vmatmul.mubr.bf16.gmra.mrb[0].mxu0 %v2942
    %v2977 = vpop.f32.mrb[0].mxu0
    %v2978 = vadd.f32 0.0, %v2977
    %v2979 = vpop.f32.mrb[0].mxu0
    %v2980 = vadd.f32 0.0, %v2979
    %v2981 = vpop.f32.mrb[0].mxu0
    %v2982 = vpop.f32.mrb[0].mxu0
    %2983 = vdwg.mxu0
    %v2984 = vadd.f32 %v2915, %v2978
    %v2985 = vadd.f32 %v2917, %v2980
    %v2986 = vrot.slane %v1563, 3
    %v2988 = vrot.slane %v2788, 2
    %v2990 = vsel %vm2799, %v2986, %v2988
    %v2991 = vld [vmem:[#allocation2 + $0x180] sm:$0xff]
    %v2992 = vld [vmem:[#allocation2 + $0x188] sm:$0xff]
    %v2993 = vld [vmem:[#allocation2 + $0x190] sm:$0xff]
    %v2994 = vld [vmem:[#allocation2 + $0x198] sm:$0xff]
    %v2995 = vld [vmem:[#allocation2 + $0x1a0] sm:$0xff]
    %v2996 = vld [vmem:[#allocation2 + $0x1a8] sm:$0xff]
    %v2997 = vld [vmem:[#allocation2 + $0x1b0] sm:$0xff]
    %v2998 = vld [vmem:[#allocation2 + $0x1b8] sm:$0xff]
    %v2999 = vld [vmem:[#allocation2 + $0x1c0] sm:$0xff]
    %v3000 = vld [vmem:[#allocation2 + $0x1c8] sm:$0xff]
    %v3001 = vld [vmem:[#allocation2 + $0x1d0] sm:$0xff]
    %v3002 = vld [vmem:[#allocation2 + $0x1d8] sm:$0xff]
    %v3003 = vld [vmem:[#allocation2 + $0x1e0] sm:$0xff]
    %v3004 = vld [vmem:[#allocation2 + $0x1e8] sm:$0xff]
    %v3005 = vld [vmem:[#allocation2 + $0x1f0] sm:$0xff]
    %v3006 = vld [vmem:[#allocation2 + $0x1f8] sm:$0xff]
    %v3007 = vpack.c.bf16 %v2990, %v2990
    %3008 = vmatprep.subr.bf16.mxu0 %v2992
    %3009 = vmatpush1.bf16.msra.mxu0 %v2991
    %3010 = vmatprep.subr.bf16.mxu0 %v2994
    %3011 = vmatpush1.bf16.msra.mxu0 %v2993
    %3012 = vmatprep.subr.bf16.mxu0 %v2996
    %3013 = vmatpush1.bf16.msra.mxu0 %v2995
    %3014 = vmatprep.subr.bf16.mxu0 %v2998
    %3015 = vmatpush1.bf16.msra.mxu0 %v2997
    %3016 = vmatprep.subr.bf16.mxu0 %v3000
    %3017 = vmatpush1.bf16.msra.mxu0 %v2999
    %3018 = vmatprep.subr.bf16.mxu0 %v3002
    %3019 = vmatpush1.bf16.msra.mxu0 %v3001
    %3020 = vmatprep.subr.bf16.mxu0 %v3004
    %3021 = vmatpush1.bf16.msra.mxu0 %v3003
    %3022 = vmatprep.subr.bf16.mxu0 %v3006
    %3023 = vmatpush1.bf16.msra.mxu0 %v3005
    %3024 = vmatprep.subr.bf16.mxu0 0
    %3025 = vmatpush1.bf16.msra.mxu0 0
    %3026 = vmatprep.subr.bf16.mxu0 0
    %3027 = vmatpush1.bf16.msra.mxu0 0
    %3028 = vmatprep.subr.bf16.mxu0 0
    %3029 = vmatpush1.bf16.msra.mxu0 0
    %3030 = vmatprep.subr.bf16.mxu0 0
    %3031 = vmatpush1.bf16.msra.mxu0 0
    %3032 = vmatprep.subr.bf16.mxu0 0
    %3033 = vmatpush1.bf16.msra.mxu0 0
    %3034 = vmatprep.subr.bf16.mxu0 0
    %3035 = vmatpush1.bf16.msra.mxu0 0
    %3036 = vmatprep.subr.bf16.mxu0 0
    %3037 = vmatpush1.bf16.msra.mxu0 0
    %3038 = vmatprep.subr.bf16.mxu0 0
    %3039 = vmatpush1.bf16.msra.mxu0 0
    %3040 = vmatprep.mubr.bf16.mxu0 0
    %3041 = vmatmul.mubr.bf16.gmra.mrb[0].mxu0 %v3007
    %v3042 = vpop.f32.mrb[0].mxu0
    %v3043 = vadd.f32 0.0, %v3042
    %v3044 = vpop.f32.mrb[0].mxu0
    %v3045 = vadd.f32 0.0, %v3044
    %v3046 = vpop.f32.mrb[0].mxu0
    %v3047 = vpop.f32.mrb[0].mxu0
    %3048 = vdwg.mxu0
    %v3049 = vadd.f32 %v2984, %v3043
    %v3050 = vadd.f32 %v2985, %v3045
    %v3051 = vrot.slane %v1563, 4
    %v3053 = vrot.slane %v2788, 3
    %v3055 = vsel %vm2799, %v3051, %v3053
    %v3056 = vld [vmem:[#allocation2 + $0x200] sm:$0xff]
    %v3057 = vld [vmem:[#allocation2 + $0x208] sm:$0xff]
    %v3058 = vld [vmem:[#allocation2 + $0x210] sm:$0xff]
    %v3059 = vld [vmem:[#allocation2 + $0x218] sm:$0xff]
    %v3060 = vld [vmem:[#allocation2 + $0x220] sm:$0xff]
    %v3061 = vld [vmem:[#allocation2 + $0x228] sm:$0xff]
    %v3062 = vld [vmem:[#allocation2 + $0x230] sm:$0xff]
    %v3063 = vld [vmem:[#allocation2 + $0x238] sm:$0xff]
    %v3064 = vld [vmem:[#allocation2 + $0x240] sm:$0xff]
    %v3065 = vld [vmem:[#allocation2 + $0x248] sm:$0xff]
    %v3066 = vld [vmem:[#allocation2 + $0x250] sm:$0xff]
    %v3067 = vld [vmem:[#allocation2 + $0x258] sm:$0xff]
    %v3068 = vld [vmem:[#allocation2 + $0x260] sm:$0xff]
    %v3069 = vld [vmem:[#allocation2 + $0x268] sm:$0xff]
    %v3070 = vld [vmem:[#allocation2 + $0x270] sm:$0xff]
    %v3071 = vld [vmem:[#allocation2 + $0x278] sm:$0xff]
    %v3072 = vpack.c.bf16 %v3055, %v3055
    %3073 = vmatprep.subr.bf16.mxu0 %v3057
    %3074 = vmatpush1.bf16.msra.mxu0 %v3056
    %3075 = vmatprep.subr.bf16.mxu0 %v3059
    %3076 = vmatpush1.bf16.msra.mxu0 %v3058
    %3077 = vmatprep.subr.bf16.mxu0 %v3061
    %3078 = vmatpush1.bf16.msra.mxu0 %v3060
    %3079 = vmatprep.subr.bf16.mxu0 %v3063
    %3080 = vmatpush1.bf16.msra.mxu0 %v3062
    %3081 = vmatprep.subr.bf16.mxu0 %v3065
    %3082 = vmatpush1.bf16.msra.mxu0 %v3064
    %3083 = vmatprep.subr.bf16.mxu0 %v3067
    %3084 = vmatpush1.bf16.msra.mxu0 %v3066
    %3085 = vmatprep.subr.bf16.mxu0 %v3069
    %3086 = vmatpush1.bf16.msra.mxu0 %v3068
    %3087 = vmatprep.subr.bf16.mxu0 %v3071
    %3088 = vmatpush1.bf16.msra.mxu0 %v3070
    %3089 = vmatprep.subr.bf16.mxu0 0
    %3090 = vmatpush1.bf16.msra.mxu0 0
    %3091 = vmatprep.subr.bf16.mxu0 0
    %3092 = vmatpush1.bf16.msra.mxu0 0
    %3093 = vmatprep.subr.bf16.mxu0 0
    %3094 = vmatpush1.bf16.msra.mxu0 0
    %3095 = vmatprep.subr.bf16.mxu0 0
    %3096 = vmatpush1.bf16.msra.mxu0 0
    %3097 = vmatprep.subr.bf16.mxu0 0
    %3098 = vmatpush1.bf16.msra.mxu0 0
    %3099 = vmatprep.subr.bf16.mxu0 0
    %3100 = vmatpush1.bf16.msra.mxu0 0
    %3101 = vmatprep.subr.bf16.mxu0 0
    %3102 = vmatpush1.bf16.msra.mxu0 0
    %3103 = vmatprep.subr.bf16.mxu0 0
    %3104 = vmatpush1.bf16.msra.mxu0 0
    %3105 = vmatprep.mubr.bf16.mxu0 0
    %3106 = vmatmul.mubr.bf16.gmra.mrb[0].mxu0 %v3072
    %v3107 = vpop.f32.mrb[0].mxu0
    %v3108 = vadd.f32 0.0, %v3107
    %v3109 = vpop.f32.mrb[0].mxu0
    %v3110 = vadd.f32 0.0, %v3109
    %v3111 = vpop.f32.mrb[0].mxu0
    %v3112 = vpop.f32.mrb[0].mxu0
    %3113 = vdwg.mxu0
    %v3114 = vadd.f32 %v3049, %v3108
    %v3115 = vadd.f32 %v3050, %v3110
    %v3116 = vrot.slane %v1563, 5
    %v3118 = vrot.slane %v2788, 4
    %v3120 = vsel %vm2799, %v3116, %v3118
    %v3121 = vld [vmem:[#allocation2 + $0x280] sm:$0xff]
    %v3122 = vld [vmem:[#allocation2 + $0x288] sm:$0xff]
    %v3123 = vld [vmem:[#allocation2 + $0x290] sm:$0xff]
    %v3124 = vld [vmem:[#allocation2 + $0x298] sm:$0xff]
    %v3125 = vld [vmem:[#allocation2 + $0x2a0] sm:$0xff]
    %v3126 = vld [vmem:[#allocation2 + $0x2a8] sm:$0xff]
    %v3127 = vld [vmem:[#allocation2 + $0x2b0] sm:$0xff]
    %v3128 = vld [vmem:[#allocation2 + $0x2b8] sm:$0xff]
    %v3129 = vld [vmem:[#allocation2 + $0x2c0] sm:$0xff]
    %v3130 = vld [vmem:[#allocation2 + $0x2c8] sm:$0xff]
    %v3131 = vld [vmem:[#allocation2 + $0x2d0] sm:$0xff]
    %v3132 = vld [vmem:[#allocation2 + $0x2d8] sm:$0xff]
    %v3133 = vld [vmem:[#allocation2 + $0x2e0] sm:$0xff]
    %v3134 = vld [vmem:[#allocation2 + $0x2e8] sm:$0xff]
    %v3135 = vld [vmem:[#allocation2 + $0x2f0] sm:$0xff]
    %v3136 = vld [vmem:[#allocation2 + $0x2f8] sm:$0xff]
    %v3137 = vpack.c.bf16 %v3120, %v3120
    %3138 = vmatprep.subr.bf16.mxu0 %v3122
    %3139 = vmatpush1.bf16.msra.mxu0 %v3121
    %3140 = vmatprep.subr.bf16.mxu0 %v3124
    %3141 = vmatpush1.bf16.msra.mxu0 %v3123
    %3142 = vmatprep.subr.bf16.mxu0 %v3126
    %3143 = vmatpush1.bf16.msra.mxu0 %v3125
    %3144 = vmatprep.subr.bf16.mxu0 %v3128
    %3145 = vmatpush1.bf16.msra.mxu0 %v3127
    %3146 = vmatprep.subr.bf16.mxu0 %v3130
    %3147 = vmatpush1.bf16.msra.mxu0 %v3129
    %3148 = vmatprep.subr.bf16.mxu0 %v3132
    %3149 = vmatpush1.bf16.msra.mxu0 %v3131
    %3150 = vmatprep.subr.bf16.mxu0 %v3134
    %3151 = vmatpush1.bf16.msra.mxu0 %v3133
    %3152 = vmatprep.subr.bf16.mxu0 %v3136
    %3153 = vmatpush1.bf16.msra.mxu0 %v3135
    %3154 = vmatprep.subr.bf16.mxu0 0
    %3155 = vmatpush1.bf16.msra.mxu0 0
    %3156 = vmatprep.subr.bf16.mxu0 0
    %3157 = vmatpush1.bf16.msra.mxu0 0
    %3158 = vmatprep.subr.bf16.mxu0 0
    %3159 = vmatpush1.bf16.msra.mxu0 0
    %3160 = vmatprep.subr.bf16.mxu0 0
    %3161 = vmatpush1.bf16.msra.mxu0 0
    %3162 = vmatprep.subr.bf16.mxu0 0
    %3163 = vmatpush1.bf16.msra.mxu0 0
    %3164 = vmatprep.subr.bf16.mxu0 0
    %3165 = vmatpush1.bf16.msra.mxu0 0
    %3166 = vmatprep.subr.bf16.mxu0 0
    %3167 = vmatpush1.bf16.msra.mxu0 0
    %3168 = vmatprep.subr.bf16.mxu0 0
    %3169 = vmatpush1.bf16.msra.mxu0 0
    %3170 = vmatprep.mubr.bf16.mxu0 0
    %3171 = vmatmul.mubr.bf16.gmra.mrb[0].mxu0 %v3137
    %v3172 = vpop.f32.mrb[0].mxu0
    %v3173 = vadd.f32 0.0, %v3172
    %v3174 = vpop.f32.mrb[0].mxu0
    %v3175 = vadd.f32 0.0, %v3174
    %v3176 = vpop.f32.mrb[0].mxu0
    %v3177 = vpop.f32.mrb[0].mxu0
    %3178 = vdwg.mxu0
    %v3179 = vadd.f32 %v3114, %v3173
    %v3180 = vadd.f32 %v3115, %v3175
    %v3181 = vrot.slane %v1563, 6
    %v3183 = vrot.slane %v2788, 5
    %v3185 = vsel %vm2799, %v3181, %v3183
    %v3186 = vld [vmem:[#allocation2 + $0x300] sm:$0xff]
    %v3187 = vld [vmem:[#allocation2 + $0x308] sm:$0xff]
    %v3188 = vld [vmem:[#allocation2 + $0x310] sm:$0xff]
    %v3189 = vld [vmem:[#allocation2 + $0x318] sm:$0xff]
    %v3190 = vld [vmem:[#allocation2 + $0x320] sm:$0xff]
    %v3191 = vld [vmem:[#allocation2 + $0x328] sm:$0xff]
    %v3192 = vld [vmem:[#allocation2 + $0x330] sm:$0xff]
    %v3193 = vld [vmem:[#allocation2 + $0x338] sm:$0xff]
    %v3194 = vld [vmem:[#allocation2 + $0x340] sm:$0xff]
    %v3195 = vld [vmem:[#allocation2 + $0x348] sm:$0xff]
    %v3196 = vld [vmem:[#allocation2 + $0x350] sm:$0xff]
    %v3197 = vld [vmem:[#allocation2 + $0x358] sm:$0xff]
    %v3198 = vld [vmem:[#allocation2 + $0x360] sm:$0xff]
    %v3199 = vld [vmem:[#allocation2 + $0x368] sm:$0xff]
    %v3200 = vld [vmem:[#allocation2 + $0x370] sm:$0xff]
    %v3201 = vld [vmem:[#allocation2 + $0x378] sm:$0xff]
    %v3202 = vpack.c.bf16 %v3185, %v3185
    %3203 = vmatprep.subr.bf16.mxu0 %v3187
    %3204 = vmatpush1.bf16.msra.mxu0 %v3186
    %3205 = vmatprep.subr.bf16.mxu0 %v3189
    %3206 = vmatpush1.bf16.msra.mxu0 %v3188
    %3207 = vmatprep.subr.bf16.mxu0 %v3191
    %3208 = vmatpush1.bf16.msra.mxu0 %v3190
    %3209 = vmatprep.subr.bf16.mxu0 %v3193
    %3210 = vmatpush1.bf16.msra.mxu0 %v3192
    %3211 = vmatprep.subr.bf16.mxu0 %v3195
    %3212 = vmatpush1.bf16.msra.mxu0 %v3194
    %3213 = vmatprep.subr.bf16.mxu0 %v3197
    %3214 = vmatpush1.bf16.msra.mxu0 %v3196
    %3215 = vmatprep.subr.bf16.mxu0 %v3199
    %3216 = vmatpush1.bf16.msra.mxu0 %v3198
    %3217 = vmatprep.subr.bf16.mxu0 %v3201
    %3218 = vmatpush1.bf16.msra.mxu0 %v3200
    %3219 = vmatprep.subr.bf16.mxu0 0
    %3220 = vmatpush1.bf16.msra.mxu0 0
    %3221 = vmatprep.subr.bf16.mxu0 0
    %3222 = vmatpush1.bf16.msra.mxu0 0
    %3223 = vmatprep.subr.bf16.mxu0 0
    %3224 = vmatpush1.bf16.msra.mxu0 0
    %3225 = vmatprep.subr.bf16.mxu0 0
    %3226 = vmatpush1.bf16.msra.mxu0 0
    %3227 = vmatprep.subr.bf16.mxu0 0
    %3228 = vmatpush1.bf16.msra.mxu0 0
    %3229 = vmatprep.subr.bf16.mxu0 0
    %3230 = vmatpush1.bf16.msra.mxu0 0
    %3231 = vmatprep.subr.bf16.mxu0 0
    %3232 = vmatpush1.bf16.msra.mxu0 0
    %3233 = vmatprep.subr.bf16.mxu0 0
    %3234 = vmatpush1.bf16.msra.mxu0 0
    %3235 = vmatprep.mubr.bf16.mxu0 0
    %3236 = vmatmul.mubr.bf16.gmra.mrb[0].mxu0 %v3202
    %v3237 = vpop.f32.mrb[0].mxu0
    %v3238 = vadd.f32 0.0, %v3237
    %v3239 = vpop.f32.mrb[0].mxu0
    %v3240 = vadd.f32 0.0, %v3239
    %v3241 = vpop.f32.mrb[0].mxu0
    %v3242 = vpop.f32.mrb[0].mxu0
    %3243 = vdwg.mxu0
    %v3244 = vadd.f32 %v3179, %v3238
    %v3245 = vadd.f32 %v3180, %v3240
    %v3246 = vrot.slane %v1563, 7
    %v3248 = vrot.slane %v2788, 6
    %v3250 = vsel %vm2799, %v3246, %v3248
    %v3251 = vld [vmem:[#allocation2 + $0x380] sm:$0xff]
    %v3252 = vld [vmem:[#allocation2 + $0x388] sm:$0xff]
    %v3253 = vld [vmem:[#allocation2 + $0x390] sm:$0xff]
    %v3254 = vld [vmem:[#allocation2 + $0x398] sm:$0xff]
    %v3255 = vld [vmem:[#allocation2 + $0x3a0] sm:$0xff]
    %v3256 = vld [vmem:[#allocation2 + $0x3a8] sm:$0xff]
    %v3257 = vld [vmem:[#allocation2 + $0x3b0] sm:$0xff]
    %v3258 = vld [vmem:[#allocation2 + $0x3b8] sm:$0xff]
    %v3259 = vld [vmem:[#allocation2 + $0x3c0] sm:$0xff]
    %v3260 = vld [vmem:[#allocation2 + $0x3c8] sm:$0xff]
    %v3261 = vld [vmem:[#allocation2 + $0x3d0] sm:$0xff]
    %v3262 = vld [vmem:[#allocation2 + $0x3d8] sm:$0xff]
    %v3263 = vld [vmem:[#allocation2 + $0x3e0] sm:$0xff]
    %v3264 = vld [vmem:[#allocation2 + $0x3e8] sm:$0xff]
    %v3265 = vld [vmem:[#allocation2 + $0x3f0] sm:$0xff]
    %v3266 = vld [vmem:[#allocation2 + $0x3f8] sm:$0xff]
    %v3267 = vpack.c.bf16 %v3250, %v3250
    %3268 = vmatprep.subr.bf16.mxu0 %v3252
    %3269 = vmatpush1.bf16.msra.mxu0 %v3251
    %3270 = vmatprep.subr.bf16.mxu0 %v3254
    %3271 = vmatpush1.bf16.msra.mxu0 %v3253
    %3272 = vmatprep.subr.bf16.mxu0 %v3256
    %3273 = vmatpush1.bf16.msra.mxu0 %v3255
    %3274 = vmatprep.subr.bf16.mxu0 %v3258
    %3275 = vmatpush1.bf16.msra.mxu0 %v3257
    %3276 = vmatprep.subr.bf16.mxu0 %v3260
    %3277 = vmatpush1.bf16.msra.mxu0 %v3259
    %3278 = vmatprep.subr.bf16.mxu0 %v3262
    %3279 = vmatpush1.bf16.msra.mxu0 %v3261
    %3280 = vmatprep.subr.bf16.mxu0 %v3264
    %3281 = vmatpush1.bf16.msra.mxu0 %v3263
    %3282 = vmatprep.subr.bf16.mxu0 %v3266
    %3283 = vmatpush1.bf16.msra.mxu0 %v3265
    %3284 = vmatprep.subr.bf16.mxu0 0
    %3285 = vmatpush1.bf16.msra.mxu0 0
    %3286 = vmatprep.subr.bf16.mxu0 0
    %3287 = vmatpush1.bf16.msra.mxu0 0
    %3288 = vmatprep.subr.bf16.mxu0 0
    %3289 = vmatpush1.bf16.msra.mxu0 0
    %3290 = vmatprep.subr.bf16.mxu0 0
    %3291 = vmatpush1.bf16.msra.mxu0 0
    %3292 = vmatprep.subr.bf16.mxu0 0
    %3293 = vmatpush1.bf16.msra.mxu0 0
    %3294 = vmatprep.subr.bf16.mxu0 0
    %3295 = vmatpush1.bf16.msra.mxu0 0
    %3296 = vmatprep.subr.bf16.mxu0 0
    %3297 = vmatpush1.bf16.msra.mxu0 0
    %3298 = vmatprep.subr.bf16.mxu0 0
    %3299 = vmatpush1.bf16.msra.mxu0 0
    %3300 = vmatprep.mubr.bf16.mxu0 0
    %3301 = vmatmul.mubr.bf16.gmra.mrb[0].mxu0 %v3267
    %v3302 = vpop.f32.mrb[0].mxu0
    %v3303 = vadd.f32 0.0, %v3302
    %v3304 = vpop.f32.mrb[0].mxu0
    %v3305 = vadd.f32 0.0, %v3304
    %v3306 = vpop.f32.mrb[0].mxu0
    %v3307 = vpop.f32.mrb[0].mxu0
    %3308 = vdwg.mxu0
    %v3309 = vadd.f32 %v3244, %v3303
    %v3310 = vadd.f32 %v3245, %v3305
    %v3312 = vrot.slane %v2789, 7
    %v3314 = vsel %vm2799, %v1564, %v3312
    %v3315 = vld [vmem:[#allocation2 + $0x400] sm:$0xff]
    %v3316 = vld [vmem:[#allocation2 + $0x408] sm:$0xff]
    %v3317 = vld [vmem:[#allocation2 + $0x410] sm:$0xff]
    %v3318 = vld [vmem:[#allocation2 + $0x418] sm:$0xff]
    %v3319 = vld [vmem:[#allocation2 + $0x420] sm:$0xff]
    %v3320 = vld [vmem:[#allocation2 + $0x428] sm:$0xff]
    %v3321 = vld [vmem:[#allocation2 + $0x430] sm:$0xff]
    %v3322 = vld [vmem:[#allocation2 + $0x438] sm:$0xff]
    %v3323 = vld [vmem:[#allocation2 + $0x440] sm:$0xff]
    %v3324 = vld [vmem:[#allocation2 + $0x448] sm:$0xff]
    %v3325 = vld [vmem:[#allocation2 + $0x450] sm:$0xff]
    %v3326 = vld [vmem:[#allocation2 + $0x458] sm:$0xff]
    %v3327 = vld [vmem:[#allocation2 + $0x460] sm:$0xff]
    %v3328 = vld [vmem:[#allocation2 + $0x468] sm:$0xff]
    %v3329 = vld [vmem:[#allocation2 + $0x470] sm:$0xff]
    %v3330 = vld [vmem:[#allocation2 + $0x478] sm:$0xff]
    %v3331 = vpack.c.bf16 %v3314, %v3314
    %3332 = vmatprep.subr.bf16.mxu0 %v3316
    %3333 = vmatpush1.bf16.msra.mxu0 %v3315
    %3334 = vmatprep.subr.bf16.mxu0 %v3318
    %3335 = vmatpush1.bf16.msra.mxu0 %v3317
    %3336 = vmatprep.subr.bf16.mxu0 %v3320
    %3337 = vmatpush1.bf16.msra.mxu0 %v3319
    %3338 = vmatprep.subr.bf16.mxu0 %v3322
    %3339 = vmatpush1.bf16.msra.mxu0 %v3321
    %3340 = vmatprep.subr.bf16.mxu0 %v3324
    %3341 = vmatpush1.bf16.msra.mxu0 %v3323
    %3342 = vmatprep.subr.bf16.mxu0 %v3326
    %3343 = vmatpush1.bf16.msra.mxu0 %v3325
    %3344 = vmatprep.subr.bf16.mxu0 %v3328
    %3345 = vmatpush1.bf16.msra.mxu0 %v3327
    %3346 = vmatprep.subr.bf16.mxu0 %v3330
    %3347 = vmatpush1.bf16.msra.mxu0 %v3329
    %3348 = vmatprep.subr.bf16.mxu0 0
    %3349 = vmatpush1.bf16.msra.mxu0 0
    %3350 = vmatprep.subr.bf16.mxu0 0
    %3351 = vmatpush1.bf16.msra.mxu0 0
    %3352 = vmatprep.subr.bf16.mxu0 0
    %3353 = vmatpush1.bf16.msra.mxu0 0
    %3354 = vmatprep.subr.bf16.mxu0 0
    %3355 = vmatpush1.bf16.msra.mxu0 0
    %3356 = vmatprep.subr.bf16.mxu0 0
    %3357 = vmatpush1.bf16.msra.mxu0 0
    %3358 = vmatprep.subr.bf16.mxu0 0
    %3359 = vmatpush1.bf16.msra.mxu0 0
    %3360 = vmatprep.subr.bf16.mxu0 0
    %3361 = vmatpush1.bf16.msra.mxu0 0
    %3362 = vmatprep.subr.bf16.mxu0 0
    %3363 = vmatpush1.bf16.msra.mxu0 0
    %3364 = vmatprep.mubr.bf16.mxu0 0
    %3365 = vmatmul.mubr.bf16.gmra.mrb[0].mxu0 %v3331
    %v3366 = vpop.f32.mrb[0].mxu0
    %v3367 = vadd.f32 0.0, %v3366
    %v3368 = vpop.f32.mrb[0].mxu0
    %v3369 = vadd.f32 0.0, %v3368
    %v3370 = vpop.f32.mrb[0].mxu0
    %v3371 = vpop.f32.mrb[0].mxu0
    %3372 = vdwg.mxu0
    %v3373 = vadd.f32 %v3309, %v3367
    %v3374 = vadd.f32 %v3310, %v3369
    %v3376 = vrot.slane %v1564, 1
    %v3378 = vsel %vm2799, %v3376, %v2789
    %v3379 = vld [vmem:[#allocation2 + $0x480] sm:$0xff]
    %v3380 = vld [vmem:[#allocation2 + $0x488] sm:$0xff]
    %v3381 = vld [vmem:[#allocation2 + $0x490] sm:$0xff]
    %v3382 = vld [vmem:[#allocation2 + $0x498] sm:$0xff]
    %v3383 = vld [vmem:[#allocation2 + $0x4a0] sm:$0xff]
    %v3384 = vld [vmem:[#allocation2 + $0x4a8] sm:$0xff]
    %v3385 = vld [vmem:[#allocation2 + $0x4b0] sm:$0xff]
    %v3386 = vld [vmem:[#allocation2 + $0x4b8] sm:$0xff]
    %v3387 = vld [vmem:[#allocation2 + $0x4c0] sm:$0xff]
    %v3388 = vld [vmem:[#allocation2 + $0x4c8] sm:$0xff]
    %v3389 = vld [vmem:[#allocation2 + $0x4d0] sm:$0xff]
    %v3390 = vld [vmem:[#allocation2 + $0x4d8] sm:$0xff]
    %v3391 = vld [vmem:[#allocation2 + $0x4e0] sm:$0xff]
    %v3392 = vld [vmem:[#allocation2 + $0x4e8] sm:$0xff]
    %v3393 = vld [vmem:[#allocation2 + $0x4f0] sm:$0xff]
    %v3394 = vld [vmem:[#allocation2 + $0x4f8] sm:$0xff]
    %v3395 = vpack.c.bf16 %v3378, %v3378
    %3396 = vmatprep.subr.bf16.mxu0 %v3380
    %3397 = vmatpush1.bf16.msra.mxu0 %v3379
    %3398 = vmatprep.subr.bf16.mxu0 %v3382
    %3399 = vmatpush1.bf16.msra.mxu0 %v3381
    %3400 = vmatprep.subr.bf16.mxu0 %v3384
    %3401 = vmatpush1.bf16.msra.mxu0 %v3383
    %3402 = vmatprep.subr.bf16.mxu0 %v3386
    %3403 = vmatpush1.bf16.msra.mxu0 %v3385
    %3404 = vmatprep.subr.bf16.mxu0 %v3388
    %3405 = vmatpush1.bf16.msra.mxu0 %v3387
    %3406 = vmatprep.subr.bf16.mxu0 %v3390
    %3407 = vmatpush1.bf16.msra.mxu0 %v3389
    %3408 = vmatprep.subr.bf16.mxu0 %v3392
    %3409 = vmatpush1.bf16.msra.mxu0 %v3391
    %3410 = vmatprep.subr.bf16.mxu0 %v3394
    %3411 = vmatpush1.bf16.msra.mxu0 %v3393
    %3412 = vmatprep.subr.bf16.mxu0 0
    %3413 = vmatpush1.bf16.msra.mxu0 0
    %3414 = vmatprep.subr.bf16.mxu0 0
    %3415 = vmatpush1.bf16.msra.mxu0 0
    %3416 = vmatprep.subr.bf16.mxu0 0
    %3417 = vmatpush1.bf16.msra.mxu0 0
    %3418 = vmatprep.subr.bf16.mxu0 0
    %3419 = vmatpush1.bf16.msra.mxu0 0
    %3420 = vmatprep.subr.bf16.mxu0 0
    %3421 = vmatpush1.bf16.msra.mxu0 0
    %3422 = vmatprep.subr.bf16.mxu0 0
    %3423 = vmatpush1.bf16.msra.mxu0 0
    %3424 = vmatprep.subr.bf16.mxu0 0
    %3425 = vmatpush1.bf16.msra.mxu0 0
    %3426 = vmatprep.subr.bf16.mxu0 0
    %3427 = vmatpush1.bf16.msra.mxu0 0
    %3428 = vmatprep.mubr.bf16.mxu0 0
    %3429 = vmatmul.mubr.bf16.gmra.mrb[0].mxu0 %v3395
    %v3430 = vpop.f32.mrb[0].mxu0
    %v3431 = vadd.f32 0.0, %v3430
    %v3432 = vpop.f32.mrb[0].mxu0
    %v3433 = vadd.f32 0.0, %v3432
    %v3434 = vpop.f32.mrb[0].mxu0
    %v3435 = vpop.f32.mrb[0].mxu0
    %3436 = vdwg.mxu0
    %v3437 = vadd.f32 %v3373, %v3431
    %v3438 = vadd.f32 %v3374, %v3433
    %v3439 = vrot.slane %v1564, 2
    %v3441 = vrot.slane %v2789, 1
    %v3443 = vsel %vm2799, %v3439, %v3441
    %v3444 = vld [vmem:[#allocation2 + $0x500] sm:$0xff]
    %v3445 = vld [vmem:[#allocation2 + $0x508] sm:$0xff]
    %v3446 = vld [vmem:[#allocation2 + $0x510] sm:$0xff]
    %v3447 = vld [vmem:[#allocation2 + $0x518] sm:$0xff]
    %v3448 = vld [vmem:[#allocation2 + $0x520] sm:$0xff]
    %v3449 = vld [vmem:[#allocation2 + $0x528] sm:$0xff]
    %v3450 = vld [vmem:[#allocation2 + $0x530] sm:$0xff]
    %v3451 = vld [vmem:[#allocation2 + $0x538] sm:$0xff]
    %v3452 = vld [vmem:[#allocation2 + $0x540] sm:$0xff]
    %v3453 = vld [vmem:[#allocation2 + $0x548] sm:$0xff]
    %v3454 = vld [vmem:[#allocation2 + $0x550] sm:$0xff]
    %v3455 = vld [vmem:[#allocation2 + $0x558] sm:$0xff]
    %v3456 = vld [vmem:[#allocation2 + $0x560] sm:$0xff]
    %v3457 = vld [vmem:[#allocation2 + $0x568] sm:$0xff]
    %v3458 = vld [vmem:[#allocation2 + $0x570] sm:$0xff]
    %v3459 = vld [vmem:[#allocation2 + $0x578] sm:$0xff]
    %v3460 = vpack.c.bf16 %v3443, %v3443
    %3461 = vmatprep.subr.bf16.mxu0 %v3445
    %3462 = vmatpush1.bf16.msra.mxu0 %v3444
    %3463 = vmatprep.subr.bf16.mxu0 %v3447
    %3464 = vmatpush1.bf16.msra.mxu0 %v3446
    %3465 = vmatprep.subr.bf16.mxu0 %v3449
    %3466 = vmatpush1.bf16.msra.mxu0 %v3448
    %3467 = vmatprep.subr.bf16.mxu0 %v3451
    %3468 = vmatpush1.bf16.msra.mxu0 %v3450
    %3469 = vmatprep.subr.bf16.mxu0 %v3453
    %3470 = vmatpush1.bf16.msra.mxu0 %v3452
    %3471 = vmatprep.subr.bf16.mxu0 %v3455
    %3472 = vmatpush1.bf16.msra.mxu0 %v3454
    %3473 = vmatprep.subr.bf16.mxu0 %v3457
    %3474 = vmatpush1.bf16.msra.mxu0 %v3456
    %3475 = vmatprep.subr.bf16.mxu0 %v3459
    %3476 = vmatpush1.bf16.msra.mxu0 %v3458
    %3477 = vmatprep.subr.bf16.mxu0 0
    %3478 = vmatpush1.bf16.msra.mxu0 0
    %3479 = vmatprep.subr.bf16.mxu0 0
    %3480 = vmatpush1.bf16.msra.mxu0 0
    %3481 = vmatprep.subr.bf16.mxu0 0
    %3482 = vmatpush1.bf16.msra.mxu0 0
    %3483 = vmatprep.subr.bf16.mxu0 0
    %3484 = vmatpush1.bf16.msra.mxu0 0
    %3485 = vmatprep.subr.bf16.mxu0 0
    %3486 = vmatpush1.bf16.msra.mxu0 0
    %3487 = vmatprep.subr.bf16.mxu0 0
    %3488 = vmatpush1.bf16.msra.mxu0 0
    %3489 = vmatprep.subr.bf16.mxu0 0
    %3490 = vmatpush1.bf16.msra.mxu0 0
    %3491 = vmatprep.subr.bf16.mxu0 0
    %3492 = vmatpush1.bf16.msra.mxu0 0
    %3493 = vmatprep.mubr.bf16.mxu0 0
    %3494 = vmatmul.mubr.bf16.gmra.mrb[0].mxu0 %v3460
    %v3495 = vpop.f32.mrb[0].mxu0
    %v3496 = vadd.f32 0.0, %v3495
    %v3497 = vpop.f32.mrb[0].mxu0
    %v3498 = vadd.f32 0.0, %v3497
    %v3499 = vpop.f32.mrb[0].mxu0
    %v3500 = vpop.f32.mrb[0].mxu0
    %3501 = vdwg.mxu0
    %v3502 = vadd.f32 %v3437, %v3496
    %v3503 = vadd.f32 %v3438, %v3498
    %v3504 = vrot.slane %v1564, 3
    %v3506 = vrot.slane %v2789, 2
    %v3508 = vsel %vm2799, %v3504, %v3506
    %v3509 = vld [vmem:[#allocation2 + $0x580] sm:$0xff]
    %v3510 = vld [vmem:[#allocation2 + $0x588] sm:$0xff]
    %v3511 = vld [vmem:[#allocation2 + $0x590] sm:$0xff]
    %v3512 = vld [vmem:[#allocation2 + $0x598] sm:$0xff]
    %v3513 = vld [vmem:[#allocation2 + $0x5a0] sm:$0xff]
    %v3514 = vld [vmem:[#allocation2 + $0x5a8] sm:$0xff]
    %v3515 = vld [vmem:[#allocation2 + $0x5b0] sm:$0xff]
    %v3516 = vld [vmem:[#allocation2 + $0x5b8] sm:$0xff]
    %v3517 = vld [vmem:[#allocation2 + $0x5c0] sm:$0xff]
    %v3518 = vld [vmem:[#allocation2 + $0x5c8] sm:$0xff]
    %v3519 = vld [vmem:[#allocation2 + $0x5d0] sm:$0xff]
    %v3520 = vld [vmem:[#allocation2 + $0x5d8] sm:$0xff]
    %v3521 = vld [vmem:[#allocation2 + $0x5e0] sm:$0xff]
    %v3522 = vld [vmem:[#allocation2 + $0x5e8] sm:$0xff]
    %v3523 = vld [vmem:[#allocation2 + $0x5f0] sm:$0xff]
    %v3524 = vld [vmem:[#allocation2 + $0x5f8] sm:$0xff]
    %v3525 = vpack.c.bf16 %v3508, %v3508
    %3526 = vmatprep.subr.bf16.mxu0 %v3510
    %3527 = vmatpush1.bf16.msra.mxu0 %v3509
    %3528 = vmatprep.subr.bf16.mxu0 %v3512
    %3529 = vmatpush1.bf16.msra.mxu0 %v3511
    %3530 = vmatprep.subr.bf16.mxu0 %v3514
    %3531 = vmatpush1.bf16.msra.mxu0 %v3513
    %3532 = vmatprep.subr.bf16.mxu0 %v3516
    %3533 = vmatpush1.bf16.msra.mxu0 %v3515
    %3534 = vmatprep.subr.bf16.mxu0 %v3518
    %3535 = vmatpush1.bf16.msra.mxu0 %v3517
    %3536 = vmatprep.subr.bf16.mxu0 %v3520
    %3537 = vmatpush1.bf16.msra.mxu0 %v3519
    %3538 = vmatprep.subr.bf16.mxu0 %v3522
    %3539 = vmatpush1.bf16.msra.mxu0 %v3521
    %3540 = vmatprep.subr.bf16.mxu0 %v3524
    %3541 = vmatpush1.bf16.msra.mxu0 %v3523
    %3542 = vmatprep.subr.bf16.mxu0 0
    %3543 = vmatpush1.bf16.msra.mxu0 0
    %3544 = vmatprep.subr.bf16.mxu0 0
    %3545 = vmatpush1.bf16.msra.mxu0 0
    %3546 = vmatprep.subr.bf16.mxu0 0
    %3547 = vmatpush1.bf16.msra.mxu0 0
    %3548 = vmatprep.subr.bf16.mxu0 0
    %3549 = vmatpush1.bf16.msra.mxu0 0
    %3550 = vmatprep.subr.bf16.mxu0 0
    %3551 = vmatpush1.bf16.msra.mxu0 0
    %3552 = vmatprep.subr.bf16.mxu0 0
    %3553 = vmatpush1.bf16.msra.mxu0 0
    %3554 = vmatprep.subr.bf16.mxu0 0
    %3555 = vmatpush1.bf16.msra.mxu0 0
    %3556 = vmatprep.subr.bf16.mxu0 0
    %3557 = vmatpush1.bf16.msra.mxu0 0
    %3558 = vmatprep.mubr.bf16.mxu0 0
    %3559 = vmatmul.mubr.bf16.gmra.mrb[0].mxu0 %v3525
    %v3560 = vpop.f32.mrb[0].mxu0
    %v3561 = vadd.f32 0.0, %v3560
    %v3562 = vpop.f32.mrb[0].mxu0
    %v3563 = vadd.f32 0.0, %v3562
    %v3564 = vpop.f32.mrb[0].mxu0
    %v3565 = vpop.f32.mrb[0].mxu0
    %3566 = vdwg.mxu0
    %v3567 = vadd.f32 %v3502, %v3561
    %v3568 = vadd.f32 %v3503, %v3563
    %v3569 = vrot.slane %v1564, 4
    %v3571 = vrot.slane %v2789, 3
    %v3573 = vsel %vm2799, %v3569, %v3571
    %v3574 = vld [vmem:[#allocation2 + $0x600] sm:$0xff]
    %v3575 = vld [vmem:[#allocation2 + $0x608] sm:$0xff]
    %v3576 = vld [vmem:[#allocation2 + $0x610] sm:$0xff]
    %v3577 = vld [vmem:[#allocation2 + $0x618] sm:$0xff]
    %v3578 = vld [vmem:[#allocation2 + $0x620] sm:$0xff]
    %v3579 = vld [vmem:[#allocation2 + $0x628] sm:$0xff]
    %v3580 = vld [vmem:[#allocation2 + $0x630] sm:$0xff]
    %v3581 = vld [vmem:[#allocation2 + $0x638] sm:$0xff]
    %v3582 = vld [vmem:[#allocation2 + $0x640] sm:$0xff]
    %v3583 = vld [vmem:[#allocation2 + $0x648] sm:$0xff]
    %v3584 = vld [vmem:[#allocation2 + $0x650] sm:$0xff]
    %v3585 = vld [vmem:[#allocation2 + $0x658] sm:$0xff]
    %v3586 = vld [vmem:[#allocation2 + $0x660] sm:$0xff]
    %v3587 = vld [vmem:[#allocation2 + $0x668] sm:$0xff]
    %v3588 = vld [vmem:[#allocation2 + $0x670] sm:$0xff]
    %v3589 = vld [vmem:[#allocation2 + $0x678] sm:$0xff]
    %v3590 = vpack.c.bf16 %v3573, %v3573
    %3591 = vmatprep.subr.bf16.mxu0 %v3575
    %3592 = vmatpush1.bf16.msra.mxu0 %v3574
    %3593 = vmatprep.subr.bf16.mxu0 %v3577
    %3594 = vmatpush1.bf16.msra.mxu0 %v3576
    %3595 = vmatprep.subr.bf16.mxu0 %v3579
    %3596 = vmatpush1.bf16.msra.mxu0 %v3578
    %3597 = vmatprep.subr.bf16.mxu0 %v3581
    %3598 = vmatpush1.bf16.msra.mxu0 %v3580
    %3599 = vmatprep.subr.bf16.mxu0 %v3583
    %3600 = vmatpush1.bf16.msra.mxu0 %v3582
    %3601 = vmatprep.subr.bf16.mxu0 %v3585
    %3602 = vmatpush1.bf16.msra.mxu0 %v3584
    %3603 = vmatprep.subr.bf16.mxu0 %v3587
    %3604 = vmatpush1.bf16.msra.mxu0 %v3586
    %3605 = vmatprep.subr.bf16.mxu0 %v3589
    %3606 = vmatpush1.bf16.msra.mxu0 %v3588
    %3607 = vmatprep.subr.bf16.mxu0 0
    %3608 = vmatpush1.bf16.msra.mxu0 0
    %3609 = vmatprep.subr.bf16.mxu0 0
    %3610 = vmatpush1.bf16.msra.mxu0 0
    %3611 = vmatprep.subr.bf16.mxu0 0
    %3612 = vmatpush1.bf16.msra.mxu0 0
    %3613 = vmatprep.subr.bf16.mxu0 0
    %3614 = vmatpush1.bf16.msra.mxu0 0
    %3615 = vmatprep.subr.bf16.mxu0 0
    %3616 = vmatpush1.bf16.msra.mxu0 0
    %3617 = vmatprep.subr.bf16.mxu0 0
    %3618 = vmatpush1.bf16.msra.mxu0 0
    %3619 = vmatprep.subr.bf16.mxu0 0
    %3620 = vmatpush1.bf16.msra.mxu0 0
    %3621 = vmatprep.subr.bf16.mxu0 0
    %3622 = vmatpush1.bf16.msra.mxu0 0
    %3623 = vmatprep.mubr.bf16.mxu0 0
    %3624 = vmatmul.mubr.bf16.gmra.mrb[0].mxu0 %v3590
    %v3625 = vpop.f32.mrb[0].mxu0
    %v3626 = vadd.f32 0.0, %v3625
    %v3627 = vpop.f32.mrb[0].mxu0
    %v3628 = vadd.f32 0.0, %v3627
    %v3629 = vpop.f32.mrb[0].mxu0
    %v3630 = vpop.f32.mrb[0].mxu0
    %3631 = vdwg.mxu0
    %v3632 = vadd.f32 %v3567, %v3626
    %v3633 = vadd.f32 %v3568, %v3628
    %v3634 = vrot.slane %v1564, 5
    %v3636 = vrot.slane %v2789, 4
    %v3638 = vsel %vm2799, %v3634, %v3636
    %v3639 = vld [vmem:[#allocation2 + $0x680] sm:$0xff]
    %v3640 = vld [vmem:[#allocation2 + $0x688] sm:$0xff]
    %v3641 = vld [vmem:[#allocation2 + $0x690] sm:$0xff]
    %v3642 = vld [vmem:[#allocation2 + $0x698] sm:$0xff]
    %v3643 = vld [vmem:[#allocation2 + $0x6a0] sm:$0xff]
    %v3644 = vld [vmem:[#allocation2 + $0x6a8] sm:$0xff]
    %v3645 = vld [vmem:[#allocation2 + $0x6b0] sm:$0xff]
    %v3646 = vld [vmem:[#allocation2 + $0x6b8] sm:$0xff]
    %v3647 = vld [vmem:[#allocation2 + $0x6c0] sm:$0xff]
    %v3648 = vld [vmem:[#allocation2 + $0x6c8] sm:$0xff]
    %v3649 = vld [vmem:[#allocation2 + $0x6d0] sm:$0xff]
    %v3650 = vld [vmem:[#allocation2 + $0x6d8] sm:$0xff]
    %v3651 = vld [vmem:[#allocation2 + $0x6e0] sm:$0xff]
    %v3652 = vld [vmem:[#allocation2 + $0x6e8] sm:$0xff]
    %v3653 = vld [vmem:[#allocation2 + $0x6f0] sm:$0xff]
    %v3654 = vld [vmem:[#allocation2 + $0x6f8] sm:$0xff]
    %v3655 = vpack.c.bf16 %v3638, %v3638
    %3656 = vmatprep.subr.bf16.mxu0 %v3640
    %3657 = vmatpush1.bf16.msra.mxu0 %v3639
    %3658 = vmatprep.subr.bf16.mxu0 %v3642
    %3659 = vmatpush1.bf16.msra.mxu0 %v3641
    %3660 = vmatprep.subr.bf16.mxu0 %v3644
    %3661 = vmatpush1.bf16.msra.mxu0 %v3643
    %3662 = vmatprep.subr.bf16.mxu0 %v3646
    %3663 = vmatpush1.bf16.msra.mxu0 %v3645
    %3664 = vmatprep.subr.bf16.mxu0 %v3648
    %3665 = vmatpush1.bf16.msra.mxu0 %v3647
    %3666 = vmatprep.subr.bf16.mxu0 %v3650
    %3667 = vmatpush1.bf16.msra.mxu0 %v3649
    %3668 = vmatprep.subr.bf16.mxu0 %v3652
    %3669 = vmatpush1.bf16.msra.mxu0 %v3651
    %3670 = vmatprep.subr.bf16.mxu0 %v3654
    %3671 = vmatpush1.bf16.msra.mxu0 %v3653
    %3672 = vmatprep.subr.bf16.mxu0 0
    %3673 = vmatpush1.bf16.msra.mxu0 0
    %3674 = vmatprep.subr.bf16.mxu0 0
    %3675 = vmatpush1.bf16.msra.mxu0 0
    %3676 = vmatprep.subr.bf16.mxu0 0
    %3677 = vmatpush1.bf16.msra.mxu0 0
    %3678 = vmatprep.subr.bf16.mxu0 0
    %3679 = vmatpush1.bf16.msra.mxu0 0
    %3680 = vmatprep.subr.bf16.mxu0 0
    %3681 = vmatpush1.bf16.msra.mxu0 0
    %3682 = vmatprep.subr.bf16.mxu0 0
    %3683 = vmatpush1.bf16.msra.mxu0 0
    %3684 = vmatprep.subr.bf16.mxu0 0
    %3685 = vmatpush1.bf16.msra.mxu0 0
    %3686 = vmatprep.subr.bf16.mxu0 0
    %3687 = vmatpush1.bf16.msra.mxu0 0
    %3688 = vmatprep.mubr.bf16.mxu0 0
    %3689 = vmatmul.mubr.bf16.gmra.mrb[0].mxu0 %v3655
    %v3690 = vpop.f32.mrb[0].mxu0
    %v3691 = vadd.f32 0.0, %v3690
    %v3692 = vpop.f32.mrb[0].mxu0
    %v3693 = vadd.f32 0.0, %v3692
    %v3694 = vpop.f32.mrb[0].mxu0
    %v3695 = vpop.f32.mrb[0].mxu0
    %3696 = vdwg.mxu0
    %v3697 = vadd.f32 %v3632, %v3691
    %v3698 = vadd.f32 %v3633, %v3693
    %v3699 = vrot.slane %v1564, 6
    %v3701 = vrot.slane %v2789, 5
    %v3703 = vsel %vm2799, %v3699, %v3701
    %v3704 = vld [vmem:[#allocation2 + $0x700] sm:$0xff]
    %v3705 = vld [vmem:[#allocation2 + $0x708] sm:$0xff]
    %v3706 = vld [vmem:[#allocation2 + $0x710] sm:$0xff]
    %v3707 = vld [vmem:[#allocation2 + $0x718] sm:$0xff]
    %v3708 = vld [vmem:[#allocation2 + $0x720] sm:$0xff]
    %v3709 = vld [vmem:[#allocation2 + $0x728] sm:$0xff]
    %v3710 = vld [vmem:[#allocation2 + $0x730] sm:$0xff]
    %v3711 = vld [vmem:[#allocation2 + $0x738] sm:$0xff]
    %v3712 = vld [vmem:[#allocation2 + $0x740] sm:$0xff]
    %v3713 = vld [vmem:[#allocation2 + $0x748] sm:$0xff]
    %v3714 = vld [vmem:[#allocation2 + $0x750] sm:$0xff]
    %v3715 = vld [vmem:[#allocation2 + $0x758] sm:$0xff]
    %v3716 = vld [vmem:[#allocation2 + $0x760] sm:$0xff]
    %v3717 = vld [vmem:[#allocation2 + $0x768] sm:$0xff]
    %v3718 = vld [vmem:[#allocation2 + $0x770] sm:$0xff]
    %v3719 = vld [vmem:[#allocation2 + $0x778] sm:$0xff]
    %v3720 = vpack.c.bf16 %v3703, %v3703
    %3721 = vmatprep.subr.bf16.mxu0 %v3705
    %3722 = vmatpush1.bf16.msra.mxu0 %v3704
    %3723 = vmatprep.subr.bf16.mxu0 %v3707
    %3724 = vmatpush1.bf16.msra.mxu0 %v3706
    %3725 = vmatprep.subr.bf16.mxu0 %v3709
    %3726 = vmatpush1.bf16.msra.mxu0 %v3708
    %3727 = vmatprep.subr.bf16.mxu0 %v3711
    %3728 = vmatpush1.bf16.msra.mxu0 %v3710
    %3729 = vmatprep.subr.bf16.mxu0 %v3713
    %3730 = vmatpush1.bf16.msra.mxu0 %v3712
    %3731 = vmatprep.subr.bf16.mxu0 %v3715
    %3732 = vmatpush1.bf16.msra.mxu0 %v3714
    %3733 = vmatprep.subr.bf16.mxu0 %v3717
    %3734 = vmatpush1.bf16.msra.mxu0 %v3716
    %3735 = vmatprep.subr.bf16.mxu0 %v3719
    %3736 = vmatpush1.bf16.msra.mxu0 %v3718
    %3737 = vmatprep.subr.bf16.mxu0 0
    %3738 = vmatpush1.bf16.msra.mxu0 0
    %3739 = vmatprep.subr.bf16.mxu0 0
    %3740 = vmatpush1.bf16.msra.mxu0 0
    %3741 = vmatprep.subr.bf16.mxu0 0
    %3742 = vmatpush1.bf16.msra.mxu0 0
    %3743 = vmatprep.subr.bf16.mxu0 0
    %3744 = vmatpush1.bf16.msra.mxu0 0
    %3745 = vmatprep.subr.bf16.mxu0 0
    %3746 = vmatpush1.bf16.msra.mxu0 0
    %3747 = vmatprep.subr.bf16.mxu0 0
    %3748 = vmatpush1.bf16.msra.mxu0 0
    %3749 = vmatprep.subr.bf16.mxu0 0
    %3750 = vmatpush1.bf16.msra.mxu0 0
    %3751 = vmatprep.subr.bf16.mxu0 0
    %3752 = vmatpush1.bf16.msra.mxu0 0
    %3753 = vmatprep.mubr.bf16.mxu0 0
    %3754 = vmatmul.mubr.bf16.gmra.mrb[0].mxu0 %v3720
    %v3755 = vpop.f32.mrb[0].mxu0
    %v3756 = vadd.f32 0.0, %v3755
    %v3757 = vpop.f32.mrb[0].mxu0
    %v3758 = vadd.f32 0.0, %v3757
    %v3759 = vpop.f32.mrb[0].mxu0
    %v3760 = vpop.f32.mrb[0].mxu0
    %3761 = vdwg.mxu0
    %v3762 = vadd.f32 %v3697, %v3756
    %v3763 = vadd.f32 %v3698, %v3758
    %v3764 = vrot.slane %v1564, 7
    %v3766 = vrot.slane %v2789, 6
    %v3768 = vsel %vm2799, %v3764, %v3766
    %v3769 = vld [vmem:[#allocation2 + $0x780] sm:$0xff]
    %v3770 = vld [vmem:[#allocation2 + $0x788] sm:$0xff]
    %v3771 = vld [vmem:[#allocation2 + $0x790] sm:$0xff]
    %v3772 = vld [vmem:[#allocation2 + $0x798] sm:$0xff]
    %v3773 = vld [vmem:[#allocation2 + $0x7a0] sm:$0xff]
    %v3774 = vld [vmem:[#allocation2 + $0x7a8] sm:$0xff]
    %v3775 = vld [vmem:[#allocation2 + $0x7b0] sm:$0xff]
    %v3776 = vld [vmem:[#allocation2 + $0x7b8] sm:$0xff]
    %v3777 = vld [vmem:[#allocation2 + $0x7c0] sm:$0xff]
    %v3778 = vld [vmem:[#allocation2 + $0x7c8] sm:$0xff]
    %v3779 = vld [vmem:[#allocation2 + $0x7d0] sm:$0xff]
    %v3780 = vld [vmem:[#allocation2 + $0x7d8] sm:$0xff]
    %v3781 = vld [vmem:[#allocation2 + $0x7e0] sm:$0xff]
    %v3782 = vld [vmem:[#allocation2 + $0x7e8] sm:$0xff]
    %v3783 = vld [vmem:[#allocation2 + $0x7f0] sm:$0xff]
    %v3784 = vld [vmem:[#allocation2 + $0x7f8] sm:$0xff]
    %v3785 = vpack.c.bf16 %v3768, %v3768
    %3786 = vmatprep.subr.bf16.mxu0 %v3770
    %3787 = vmatpush1.bf16.msra.mxu0 %v3769
    %3788 = vmatprep.subr.bf16.mxu0 %v3772
    %3789 = vmatpush1.bf16.msra.mxu0 %v3771
    %3790 = vmatprep.subr.bf16.mxu0 %v3774
    %3791 = vmatpush1.bf16.msra.mxu0 %v3773
    %3792 = vmatprep.subr.bf16.mxu0 %v3776
    %3793 = vmatpush1.bf16.msra.mxu0 %v3775
    %3794 = vmatprep.subr.bf16.mxu0 %v3778
    %3795 = vmatpush1.bf16.msra.mxu0 %v3777
    %3796 = vmatprep.subr.bf16.mxu0 %v3780
    %3797 = vmatpush1.bf16.msra.mxu0 %v3779
    %3798 = vmatprep.subr.bf16.mxu0 %v3782
    %3799 = vmatpush1.bf16.msra.mxu0 %v3781
    %3800 = vmatprep.subr.bf16.mxu0 %v3784
    %3801 = vmatpush1.bf16.msra.mxu0 %v3783
    %3802 = vmatprep.subr.bf16.mxu0 0
    %3803 = vmatpush1.bf16.msra.mxu0 0
    %3804 = vmatprep.subr.bf16.mxu0 0
    %3805 = vmatpush1.bf16.msra.mxu0 0
    %3806 = vmatprep.subr.bf16.mxu0 0
    %3807 = vmatpush1.bf16.msra.mxu0 0
    %3808 = vmatprep.subr.bf16.mxu0 0
    %3809 = vmatpush1.bf16.msra.mxu0 0
    %3810 = vmatprep.subr.bf16.mxu0 0
    %3811 = vmatpush1.bf16.msra.mxu0 0
    %3812 = vmatprep.subr.bf16.mxu0 0
    %3813 = vmatpush1.bf16.msra.mxu0 0
    %3814 = vmatprep.subr.bf16.mxu0 0
    %3815 = vmatpush1.bf16.msra.mxu0 0
    %3816 = vmatprep.subr.bf16.mxu0 0
    %3817 = vmatpush1.bf16.msra.mxu0 0
    %3818 = vmatprep.mubr.bf16.mxu0 0
    %3819 = vmatmul.mubr.bf16.gmra.mrb[0].mxu0 %v3785
    %v3820 = vpop.f32.mrb[0].mxu0
    %v3821 = vadd.f32 0.0, %v3820
    %v3822 = vpop.f32.mrb[0].mxu0
    %v3823 = vadd.f32 0.0, %v3822
    %v3824 = vpop.f32.mrb[0].mxu0
    %v3825 = vpop.f32.mrb[0].mxu0
    %3826 = vdwg.mxu0
    %v3827 = vadd.f32 %v3762, %v3821
    %v3828 = vadd.f32 %v3763, %v3823
    %v3830 = vrot.slane %v2790, 7
    %v3832 = vsel %vm2799, %v1565, %v3830
    %v3833 = vld [vmem:[#allocation2 + $0x800] sm:$0xff]
    %v3834 = vld [vmem:[#allocation2 + $0x808] sm:$0xff]
    %v3835 = vld [vmem:[#allocation2 + $0x810] sm:$0xff]
    %v3836 = vld [vmem:[#allocation2 + $0x818] sm:$0xff]
    %v3837 = vld [vmem:[#allocation2 + $0x820] sm:$0xff]
    %v3838 = vld [vmem:[#allocation2 + $0x828] sm:$0xff]
    %v3839 = vld [vmem:[#allocation2 + $0x830] sm:$0xff]
    %v3840 = vld [vmem:[#allocation2 + $0x838] sm:$0xff]
    %v3841 = vld [vmem:[#allocation2 + $0x840] sm:$0xff]
    %v3842 = vld [vmem:[#allocation2 + $0x848] sm:$0xff]
    %v3843 = vld [vmem:[#allocation2 + $0x850] sm:$0xff]
    %v3844 = vld [vmem:[#allocation2 + $0x858] sm:$0xff]
    %v3845 = vld [vmem:[#allocation2 + $0x860] sm:$0xff]
    %v3846 = vld [vmem:[#allocation2 + $0x868] sm:$0xff]
    %v3847 = vld [vmem:[#allocation2 + $0x870] sm:$0xff]
    %v3848 = vld [vmem:[#allocation2 + $0x878] sm:$0xff]
    %v3849 = vpack.c.bf16 %v3832, %v3832
    %3850 = vmatprep.subr.bf16.mxu0 %v3834
    %3851 = vmatpush1.bf16.msra.mxu0 %v3833
    %3852 = vmatprep.subr.bf16.mxu0 %v3836
    %3853 = vmatpush1.bf16.msra.mxu0 %v3835
    %3854 = vmatprep.subr.bf16.mxu0 %v3838
    %3855 = vmatpush1.bf16.msra.mxu0 %v3837
    %3856 = vmatprep.subr.bf16.mxu0 %v3840
    %3857 = vmatpush1.bf16.msra.mxu0 %v3839
    %3858 = vmatprep.subr.bf16.mxu0 %v3842
    %3859 = vmatpush1.bf16.msra.mxu0 %v3841
    %3860 = vmatprep.subr.bf16.mxu0 %v3844
    %3861 = vmatpush1.bf16.msra.mxu0 %v3843
    %3862 = vmatprep.subr.bf16.mxu0 %v3846
    %3863 = vmatpush1.bf16.msra.mxu0 %v3845
    %3864 = vmatprep.subr.bf16.mxu0 %v3848
    %3865 = vmatpush1.bf16.msra.mxu0 %v3847
    %3866 = vmatprep.subr.bf16.mxu0 0
    %3867 = vmatpush1.bf16.msra.mxu0 0
    %3868 = vmatprep.subr.bf16.mxu0 0
    %3869 = vmatpush1.bf16.msra.mxu0 0
    %3870 = vmatprep.subr.bf16.mxu0 0
    %3871 = vmatpush1.bf16.msra.mxu0 0
    %3872 = vmatprep.subr.bf16.mxu0 0
    %3873 = vmatpush1.bf16.msra.mxu0 0
    %3874 = vmatprep.subr.bf16.mxu0 0
    %3875 = vmatpush1.bf16.msra.mxu0 0
    %3876 = vmatprep.subr.bf16.mxu0 0
    %3877 = vmatpush1.bf16.msra.mxu0 0
    %3878 = vmatprep.subr.bf16.mxu0 0
    %3879 = vmatpush1.bf16.msra.mxu0 0
    %3880 = vmatprep.subr.bf16.mxu0 0
    %3881 = vmatpush1.bf16.msra.mxu0 0
    %3882 = vmatprep.mubr.bf16.mxu0 0
    %3883 = vmatmul.mubr.bf16.gmra.mrb[0].mxu0 %v3849
    %v3884 = vpop.f32.mrb[0].mxu0
    %v3885 = vadd.f32 0.0, %v3884
    %v3886 = vpop.f32.mrb[0].mxu0
    %v3887 = vadd.f32 0.0, %v3886
    %v3888 = vpop.f32.mrb[0].mxu0
    %v3889 = vpop.f32.mrb[0].mxu0
    %3890 = vdwg.mxu0
    %v3891 = vadd.f32 %v3827, %v3885
    %v3892 = vadd.f32 %v3828, %v3887
    %v3894 = vrot.slane %v1565, 1
    %v3896 = vsel %vm2799, %v3894, %v2790
    %v3897 = vld [vmem:[#allocation2 + $0x880] sm:$0xff]
    %v3898 = vld [vmem:[#allocation2 + $0x888] sm:$0xff]
    %v3899 = vld [vmem:[#allocation2 + $0x890] sm:$0xff]
    %v3900 = vld [vmem:[#allocation2 + $0x898] sm:$0xff]
    %v3901 = vld [vmem:[#allocation2 + $0x8a0] sm:$0xff]
    %v3902 = vld [vmem:[#allocation2 + $0x8a8] sm:$0xff]
    %v3903 = vld [vmem:[#allocation2 + $0x8b0] sm:$0xff]
    %v3904 = vld [vmem:[#allocation2 + $0x8b8] sm:$0xff]
    %v3905 = vld [vmem:[#allocation2 + $0x8c0] sm:$0xff]
    %v3906 = vld [vmem:[#allocation2 + $0x8c8] sm:$0xff]
    %v3907 = vld [vmem:[#allocation2 + $0x8d0] sm:$0xff]
    %v3908 = vld [vmem:[#allocation2 + $0x8d8] sm:$0xff]
    %v3909 = vld [vmem:[#allocation2 + $0x8e0] sm:$0xff]
    %v3910 = vld [vmem:[#allocation2 + $0x8e8] sm:$0xff]
    %v3911 = vld [vmem:[#allocation2 + $0x8f0] sm:$0xff]
    %v3912 = vld [vmem:[#allocation2 + $0x8f8] sm:$0xff]
    %v3913 = vpack.c.bf16 %v3896, %v3896
    %3914 = vmatprep.subr.bf16.mxu0 %v3898
    %3915 = vmatpush1.bf16.msra.mxu0 %v3897
    %3916 = vmatprep.subr.bf16.mxu0 %v3900
    %3917 = vmatpush1.bf16.msra.mxu0 %v3899
    %3918 = vmatprep.subr.bf16.mxu0 %v3902
    %3919 = vmatpush1.bf16.msra.mxu0 %v3901
    %3920 = vmatprep.subr.bf16.mxu0 %v3904
    %3921 = vmatpush1.bf16.msra.mxu0 %v3903
    %3922 = vmatprep.subr.bf16.mxu0 %v3906
    %3923 = vmatpush1.bf16.msra.mxu0 %v3905
    %3924 = vmatprep.subr.bf16.mxu0 %v3908
    %3925 = vmatpush1.bf16.msra.mxu0 %v3907
    %3926 = vmatprep.subr.bf16.mxu0 %v3910
    %3927 = vmatpush1.bf16.msra.mxu0 %v3909
    %3928 = vmatprep.subr.bf16.mxu0 %v3912
    %3929 = vmatpush1.bf16.msra.mxu0 %v3911
    %3930 = vmatprep.subr.bf16.mxu0 0
    %3931 = vmatpush1.bf16.msra.mxu0 0
    %3932 = vmatprep.subr.bf16.mxu0 0
    %3933 = vmatpush1.bf16.msra.mxu0 0
    %3934 = vmatprep.subr.bf16.mxu0 0
    %3935 = vmatpush1.bf16.msra.mxu0 0
    %3936 = vmatprep.subr.bf16.mxu0 0
    %3937 = vmatpush1.bf16.msra.mxu0 0
    %3938 = vmatprep.subr.bf16.mxu0 0
    %3939 = vmatpush1.bf16.msra.mxu0 0
    %3940 = vmatprep.subr.bf16.mxu0 0
    %3941 = vmatpush1.bf16.msra.mxu0 0
    %3942 = vmatprep.subr.bf16.mxu0 0
    %3943 = vmatpush1.bf16.msra.mxu0 0
    %3944 = vmatprep.subr.bf16.mxu0 0
    %3945 = vmatpush1.bf16.msra.mxu0 0
    %3946 = vmatprep.mubr.bf16.mxu0 0
    %3947 = vmatmul.mubr.bf16.gmra.mrb[0].mxu0 %v3913
    %v3948 = vpop.f32.mrb[0].mxu0
    %v3949 = vadd.f32 0.0, %v3948
    %v3950 = vpop.f32.mrb[0].mxu0
    %v3951 = vadd.f32 0.0, %v3950
    %v3952 = vpop.f32.mrb[0].mxu0
    %v3953 = vpop.f32.mrb[0].mxu0
    %3954 = vdwg.mxu0
    %v3955 = vadd.f32 %v3891, %v3949
    %v3956 = vadd.f32 %v3892, %v3951
    %v3957 = vrot.slane %v1565, 2
    %v3959 = vrot.slane %v2790, 1
    %v3961 = vsel %vm2799, %v3957, %v3959
    %v3962 = vld [vmem:[#allocation2 + $0x900] sm:$0xff]
    %v3963 = vld [vmem:[#allocation2 + $0x908] sm:$0xff]
    %v3964 = vld [vmem:[#allocation2 + $0x910] sm:$0xff]
    %v3965 = vld [vmem:[#allocation2 + $0x918] sm:$0xff]
    %v3966 = vld [vmem:[#allocation2 + $0x920] sm:$0xff]
    %v3967 = vld [vmem:[#allocation2 + $0x928] sm:$0xff]
    %v3968 = vld [vmem:[#allocation2 + $0x930] sm:$0xff]
    %v3969 = vld [vmem:[#allocation2 + $0x938] sm:$0xff]
    %v3970 = vld [vmem:[#allocation2 + $0x940] sm:$0xff]
    %v3971 = vld [vmem:[#allocation2 + $0x948] sm:$0xff]
    %v3972 = vld [vmem:[#allocation2 + $0x950] sm:$0xff]
    %v3973 = vld [vmem:[#allocation2 + $0x958] sm:$0xff]
    %v3974 = vld [vmem:[#allocation2 + $0x960] sm:$0xff]
    %v3975 = vld [vmem:[#allocation2 + $0x968] sm:$0xff]
    %v3976 = vld [vmem:[#allocation2 + $0x970] sm:$0xff]
    %v3977 = vld [vmem:[#allocation2 + $0x978] sm:$0xff]
    %v3978 = vpack.c.bf16 %v3961, %v3961
    %3979 = vmatprep.subr.bf16.mxu0 %v3963
    %3980 = vmatpush1.bf16.msra.mxu0 %v3962
    %3981 = vmatprep.subr.bf16.mxu0 %v3965
    %3982 = vmatpush1.bf16.msra.mxu0 %v3964
    %3983 = vmatprep.subr.bf16.mxu0 %v3967
    %3984 = vmatpush1.bf16.msra.mxu0 %v3966
    %3985 = vmatprep.subr.bf16.mxu0 %v3969
    %3986 = vmatpush1.bf16.msra.mxu0 %v3968
    %3987 = vmatprep.subr.bf16.mxu0 %v3971
    %3988 = vmatpush1.bf16.msra.mxu0 %v3970
    %3989 = vmatprep.subr.bf16.mxu0 %v3973
    %3990 = vmatpush1.bf16.msra.mxu0 %v3972
    %3991 = vmatprep.subr.bf16.mxu0 %v3975
    %3992 = vmatpush1.bf16.msra.mxu0 %v3974
    %3993 = vmatprep.subr.bf16.mxu0 %v3977
    %3994 = vmatpush1.bf16.msra.mxu0 %v3976
    %3995 = vmatprep.subr.bf16.mxu0 0
    %3996 = vmatpush1.bf16.msra.mxu0 0
    %3997 = vmatprep.subr.bf16.mxu0 0
    %3998 = vmatpush1.bf16.msra.mxu0 0
    %3999 = vmatprep.subr.bf16.mxu0 0
    %4000 = vmatpush1.bf16.msra.mxu0 0
    %4001 = vmatprep.subr.bf16.mxu0 0
    %4002 = vmatpush1.bf16.msra.mxu0 0
    %4003 = vmatprep.subr.bf16.mxu0 0
    %4004 = vmatpush1.bf16.msra.mxu0 0
    %4005 = vmatprep.subr.bf16.mxu0 0
    %4006 = vmatpush1.bf16.msra.mxu0 0
    %4007 = vmatprep.subr.bf16.mxu0 0
    %4008 = vmatpush1.bf16.msra.mxu0 0
    %4009 = vmatprep.subr.bf16.mxu0 0
    %4010 = vmatpush1.bf16.msra.mxu0 0
    %4011 = vmatprep.mubr.bf16.mxu0 0
    %4012 = vmatmul.mubr.bf16.gmra.mrb[0].mxu0 %v3978
    %v4013 = vpop.f32.mrb[0].mxu0
    %v4014 = vadd.f32 0.0, %v4013
    %v4015 = vpop.f32.mrb[0].mxu0
    %v4016 = vadd.f32 0.0, %v4015
    %v4017 = vpop.f32.mrb[0].mxu0
    %v4018 = vpop.f32.mrb[0].mxu0
    %4019 = vdwg.mxu0
    %v4020 = vadd.f32 %v3955, %v4014
    %v4021 = vadd.f32 %v3956, %v4016
    %v4022 = vrot.slane %v1565, 3
    %v4024 = vrot.slane %v2790, 2
    %v4026 = vsel %vm2799, %v4022, %v4024
    %v4027 = vld [vmem:[#allocation2 + $0x980] sm:$0xff]
    %v4028 = vld [vmem:[#allocation2 + $0x988] sm:$0xff]
    %v4029 = vld [vmem:[#allocation2 + $0x990] sm:$0xff]
    %v4030 = vld [vmem:[#allocation2 + $0x998] sm:$0xff]
    %v4031 = vld [vmem:[#allocation2 + $0x9a0] sm:$0xff]
    %v4032 = vld [vmem:[#allocation2 + $0x9a8] sm:$0xff]
    %v4033 = vld [vmem:[#allocation2 + $0x9b0] sm:$0xff]
    %v4034 = vld [vmem:[#allocation2 + $0x9b8] sm:$0xff]
    %v4035 = vld [vmem:[#allocation2 + $0x9c0] sm:$0xff]
    %v4036 = vld [vmem:[#allocation2 + $0x9c8] sm:$0xff]
    %v4037 = vld [vmem:[#allocation2 + $0x9d0] sm:$0xff]
    %v4038 = vld [vmem:[#allocation2 + $0x9d8] sm:$0xff]
    %v4039 = vld [vmem:[#allocation2 + $0x9e0] sm:$0xff]
    %v4040 = vld [vmem:[#allocation2 + $0x9e8] sm:$0xff]
    %v4041 = vld [vmem:[#allocation2 + $0x9f0] sm:$0xff]
    %v4042 = vld [vmem:[#allocation2 + $0x9f8] sm:$0xff]
    %v4043 = vpack.c.bf16 %v4026, %v4026
    %4044 = vmatprep.subr.bf16.mxu0 %v4028
    %4045 = vmatpush1.bf16.msra.mxu0 %v4027
    %4046 = vmatprep.subr.bf16.mxu0 %v4030
    %4047 = vmatpush1.bf16.msra.mxu0 %v4029
    %4048 = vmatprep.subr.bf16.mxu0 %v4032
    %4049 = vmatpush1.bf16.msra.mxu0 %v4031
    %4050 = vmatprep.subr.bf16.mxu0 %v4034
    %4051 = vmatpush1.bf16.msra.mxu0 %v4033
    %4052 = vmatprep.subr.bf16.mxu0 %v4036
    %4053 = vmatpush1.bf16.msra.mxu0 %v4035
    %4054 = vmatprep.subr.bf16.mxu0 %v4038
    %4055 = vmatpush1.bf16.msra.mxu0 %v4037
    %4056 = vmatprep.subr.bf16.mxu0 %v4040
    %4057 = vmatpush1.bf16.msra.mxu0 %v4039
    %4058 = vmatprep.subr.bf16.mxu0 %v4042
    %4059 = vmatpush1.bf16.msra.mxu0 %v4041
    %4060 = vmatprep.subr.bf16.mxu0 0
    %4061 = vmatpush1.bf16.msra.mxu0 0
    %4062 = vmatprep.subr.bf16.mxu0 0
    %4063 = vmatpush1.bf16.msra.mxu0 0
    %4064 = vmatprep.subr.bf16.mxu0 0
    %4065 = vmatpush1.bf16.msra.mxu0 0
    %4066 = vmatprep.subr.bf16.mxu0 0
    %4067 = vmatpush1.bf16.msra.mxu0 0
    %4068 = vmatprep.subr.bf16.mxu0 0
    %4069 = vmatpush1.bf16.msra.mxu0 0
    %4070 = vmatprep.subr.bf16.mxu0 0
    %4071 = vmatpush1.bf16.msra.mxu0 0
    %4072 = vmatprep.subr.bf16.mxu0 0
    %4073 = vmatpush1.bf16.msra.mxu0 0
    %4074 = vmatprep.subr.bf16.mxu0 0
    %4075 = vmatpush1.bf16.msra.mxu0 0
    %4076 = vmatprep.mubr.bf16.mxu0 0
    %4077 = vmatmul.mubr.bf16.gmra.mrb[0].mxu0 %v4043
    %v4078 = vpop.f32.mrb[0].mxu0
    %v4079 = vadd.f32 0.0, %v4078
    %v4080 = vpop.f32.mrb[0].mxu0
    %v4081 = vadd.f32 0.0, %v4080
    %v4082 = vpop.f32.mrb[0].mxu0
    %v4083 = vpop.f32.mrb[0].mxu0
    %4084 = vdwg.mxu0
    %v4085 = vadd.f32 %v4020, %v4079
    %v4086 = vadd.f32 %v4021, %v4081
    %v4087 = vrot.slane %v1565, 4
    %v4089 = vrot.slane %v2790, 3
    %v4091 = vsel %vm2799, %v4087, %v4089
    %v4092 = vld [vmem:[#allocation2 + $0xa00] sm:$0xff]
    %v4093 = vld [vmem:[#allocation2 + $0xa08] sm:$0xff]
    %v4094 = vld [vmem:[#allocation2 + $0xa10] sm:$0xff]
    %v4095 = vld [vmem:[#allocation2 + $0xa18] sm:$0xff]
    %v4096 = vld [vmem:[#allocation2 + $0xa20] sm:$0xff]
    %v4097 = vld [vmem:[#allocation2 + $0xa28] sm:$0xff]
    %v4098 = vld [vmem:[#allocation2 + $0xa30] sm:$0xff]
    %v4099 = vld [vmem:[#allocation2 + $0xa38] sm:$0xff]
    %v4100 = vld [vmem:[#allocation2 + $0xa40] sm:$0xff]
    %v4101 = vld [vmem:[#allocation2 + $0xa48] sm:$0xff]
    %v4102 = vld [vmem:[#allocation2 + $0xa50] sm:$0xff]
    %v4103 = vld [vmem:[#allocation2 + $0xa58] sm:$0xff]
    %v4104 = vld [vmem:[#allocation2 + $0xa60] sm:$0xff]
    %v4105 = vld [vmem:[#allocation2 + $0xa68] sm:$0xff]
    %v4106 = vld [vmem:[#allocation2 + $0xa70] sm:$0xff]
    %v4107 = vld [vmem:[#allocation2 + $0xa78] sm:$0xff]
    %v4108 = vpack.c.bf16 %v4091, %v4091
    %4109 = vmatprep.subr.bf16.mxu0 %v4093
    %4110 = vmatpush1.bf16.msra.mxu0 %v4092
    %4111 = vmatprep.subr.bf16.mxu0 %v4095
    %4112 = vmatpush1.bf16.msra.mxu0 %v4094
    %4113 = vmatprep.subr.bf16.mxu0 %v4097
    %4114 = vmatpush1.bf16.msra.mxu0 %v4096
    %4115 = vmatprep.subr.bf16.mxu0 %v4099
    %4116 = vmatpush1.bf16.msra.mxu0 %v4098
    %4117 = vmatprep.subr.bf16.mxu0 %v4101
    %4118 = vmatpush1.bf16.msra.mxu0 %v4100
    %4119 = vmatprep.subr.bf16.mxu0 %v4103
    %4120 = vmatpush1.bf16.msra.mxu0 %v4102
    %4121 = vmatprep.subr.bf16.mxu0 %v4105
    %4122 = vmatpush1.bf16.msra.mxu0 %v4104
    %4123 = vmatprep.subr.bf16.mxu0 %v4107
    %4124 = vmatpush1.bf16.msra.mxu0 %v4106
    %4125 = vmatprep.subr.bf16.mxu0 0
    %4126 = vmatpush1.bf16.msra.mxu0 0
    %4127 = vmatprep.subr.bf16.mxu0 0
    %4128 = vmatpush1.bf16.msra.mxu0 0
    %4129 = vmatprep.subr.bf16.mxu0 0
    %4130 = vmatpush1.bf16.msra.mxu0 0
    %4131 = vmatprep.subr.bf16.mxu0 0
    %4132 = vmatpush1.bf16.msra.mxu0 0
    %4133 = vmatprep.subr.bf16.mxu0 0
    %4134 = vmatpush1.bf16.msra.mxu0 0
    %4135 = vmatprep.subr.bf16.mxu0 0
    %4136 = vmatpush1.bf16.msra.mxu0 0
    %4137 = vmatprep.subr.bf16.mxu0 0
    %4138 = vmatpush1.bf16.msra.mxu0 0
    %4139 = vmatprep.subr.bf16.mxu0 0
    %4140 = vmatpush1.bf16.msra.mxu0 0
    %4141 = vmatprep.mubr.bf16.mxu0 0
    %4142 = vmatmul.mubr.bf16.gmra.mrb[0].mxu0 %v4108
    %v4143 = vpop.f32.mrb[0].mxu0
    %v4144 = vadd.f32 0.0, %v4143
    %v4145 = vpop.f32.mrb[0].mxu0
    %v4146 = vadd.f32 0.0, %v4145
    %v4147 = vpop.f32.mrb[0].mxu0
    %v4148 = vpop.f32.mrb[0].mxu0
    %4149 = vdwg.mxu0
    %v4150 = vadd.f32 %v4085, %v4144
    %v4151 = vadd.f32 %v4086, %v4146
    %v4152 = vrot.slane %v1565, 5
    %v4154 = vrot.slane %v2790, 4
    %v4156 = vsel %vm2799, %v4152, %v4154
    %v4157 = vld [vmem:[#allocation2 + $0xa80] sm:$0xff]
    %v4158 = vld [vmem:[#allocation2 + $0xa88] sm:$0xff]
    %v4159 = vld [vmem:[#allocation2 + $0xa90] sm:$0xff]
    %v4160 = vld [vmem:[#allocation2 + $0xa98] sm:$0xff]
    %v4161 = vld [vmem:[#allocation2 + $0xaa0] sm:$0xff]
    %v4162 = vld [vmem:[#allocation2 + $0xaa8] sm:$0xff]
    %v4163 = vld [vmem:[#allocation2 + $0xab0] sm:$0xff]
    %v4164 = vld [vmem:[#allocation2 + $0xab8] sm:$0xff]
    %v4165 = vld [vmem:[#allocation2 + $0xac0] sm:$0xff]
    %v4166 = vld [vmem:[#allocation2 + $0xac8] sm:$0xff]
    %v4167 = vld [vmem:[#allocation2 + $0xad0] sm:$0xff]
    %v4168 = vld [vmem:[#allocation2 + $0xad8] sm:$0xff]
    %v4169 = vld [vmem:[#allocation2 + $0xae0] sm:$0xff]
    %v4170 = vld [vmem:[#allocation2 + $0xae8] sm:$0xff]
    %v4171 = vld [vmem:[#allocation2 + $0xaf0] sm:$0xff]
    %v4172 = vld [vmem:[#allocation2 + $0xaf8] sm:$0xff]
    %v4173 = vpack.c.bf16 %v4156, %v4156
    %4174 = vmatprep.subr.bf16.mxu0 %v4158
    %4175 = vmatpush1.bf16.msra.mxu0 %v4157
    %4176 = vmatprep.subr.bf16.mxu0 %v4160
    %4177 = vmatpush1.bf16.msra.mxu0 %v4159
    %4178 = vmatprep.subr.bf16.mxu0 %v4162
    %4179 = vmatpush1.bf16.msra.mxu0 %v4161
    %4180 = vmatprep.subr.bf16.mxu0 %v4164
    %4181 = vmatpush1.bf16.msra.mxu0 %v4163
    %4182 = vmatprep.subr.bf16.mxu0 %v4166
    %4183 = vmatpush1.bf16.msra.mxu0 %v4165
    %4184 = vmatprep.subr.bf16.mxu0 %v4168
    %4185 = vmatpush1.bf16.msra.mxu0 %v4167
    %4186 = vmatprep.subr.bf16.mxu0 %v4170
    %4187 = vmatpush1.bf16.msra.mxu0 %v4169
    %4188 = vmatprep.subr.bf16.mxu0 %v4172
    %4189 = vmatpush1.bf16.msra.mxu0 %v4171
    %4190 = vmatprep.subr.bf16.mxu0 0
    %4191 = vmatpush1.bf16.msra.mxu0 0
    %4192 = vmatprep.subr.bf16.mxu0 0
    %4193 = vmatpush1.bf16.msra.mxu0 0
    %4194 = vmatprep.subr.bf16.mxu0 0
    %4195 = vmatpush1.bf16.msra.mxu0 0
    %4196 = vmatprep.subr.bf16.mxu0 0
    %4197 = vmatpush1.bf16.msra.mxu0 0
    %4198 = vmatprep.subr.bf16.mxu0 0
    %4199 = vmatpush1.bf16.msra.mxu0 0
    %4200 = vmatprep.subr.bf16.mxu0 0
    %4201 = vmatpush1.bf16.msra.mxu0 0
    %4202 = vmatprep.subr.bf16.mxu0 0
    %4203 = vmatpush1.bf16.msra.mxu0 0
    %4204 = vmatprep.subr.bf16.mxu0 0
    %4205 = vmatpush1.bf16.msra.mxu0 0
    %4206 = vmatprep.mubr.bf16.mxu0 0
    %4207 = vmatmul.mubr.bf16.gmra.mrb[0].mxu0 %v4173
    %v4208 = vpop.f32.mrb[0].mxu0
    %v4209 = vadd.f32 0.0, %v4208
    %v4210 = vpop.f32.mrb[0].mxu0
    %v4211 = vadd.f32 0.0, %v4210
    %v4212 = vpop.f32.mrb[0].mxu0
    %v4213 = vpop.f32.mrb[0].mxu0
    %4214 = vdwg.mxu0
    %v4215 = vadd.f32 %v4150, %v4209
    %v4216 = vadd.f32 %v4151, %v4211
    %v4217 = vrot.slane %v1565, 6
    %v4219 = vrot.slane %v2790, 5
    %v4221 = vsel %vm2799, %v4217, %v4219
    %v4222 = vld [vmem:[#allocation2 + $0xb00] sm:$0xff]
    %v4223 = vld [vmem:[#allocation2 + $0xb08] sm:$0xff]
    %v4224 = vld [vmem:[#allocation2 + $0xb10] sm:$0xff]
    %v4225 = vld [vmem:[#allocation2 + $0xb18] sm:$0xff]
    %v4226 = vld [vmem:[#allocation2 + $0xb20] sm:$0xff]
    %v4227 = vld [vmem:[#allocation2 + $0xb28] sm:$0xff]
    %v4228 = vld [vmem:[#allocation2 + $0xb30] sm:$0xff]
    %v4229 = vld [vmem:[#allocation2 + $0xb38] sm:$0xff]
    %v4230 = vld [vmem:[#allocation2 + $0xb40] sm:$0xff]
    %v4231 = vld [vmem:[#allocation2 + $0xb48] sm:$0xff]
    %v4232 = vld [vmem:[#allocation2 + $0xb50] sm:$0xff]
    %v4233 = vld [vmem:[#allocation2 + $0xb58] sm:$0xff]
    %v4234 = vld [vmem:[#allocation2 + $0xb60] sm:$0xff]
    %v4235 = vld [vmem:[#allocation2 + $0xb68] sm:$0xff]
    %v4236 = vld [vmem:[#allocation2 + $0xb70] sm:$0xff]
    %v4237 = vld [vmem:[#allocation2 + $0xb78] sm:$0xff]
    %v4238 = vpack.c.bf16 %v4221, %v4221
    %4239 = vmatprep.subr.bf16.mxu0 %v4223
    %4240 = vmatpush1.bf16.msra.mxu0 %v4222
    %4241 = vmatprep.subr.bf16.mxu0 %v4225
    %4242 = vmatpush1.bf16.msra.mxu0 %v4224
    %4243 = vmatprep.subr.bf16.mxu0 %v4227
    %4244 = vmatpush1.bf16.msra.mxu0 %v4226
    %4245 = vmatprep.subr.bf16.mxu0 %v4229
    %4246 = vmatpush1.bf16.msra.mxu0 %v4228
    %4247 = vmatprep.subr.bf16.mxu0 %v4231
    %4248 = vmatpush1.bf16.msra.mxu0 %v4230
    %4249 = vmatprep.subr.bf16.mxu0 %v4233
    %4250 = vmatpush1.bf16.msra.mxu0 %v4232
    %4251 = vmatprep.subr.bf16.mxu0 %v4235
    %4252 = vmatpush1.bf16.msra.mxu0 %v4234
    %4253 = vmatprep.subr.bf16.mxu0 %v4237
    %4254 = vmatpush1.bf16.msra.mxu0 %v4236
    %4255 = vmatprep.subr.bf16.mxu0 0
    %4256 = vmatpush1.bf16.msra.mxu0 0
    %4257 = vmatprep.subr.bf16.mxu0 0
    %4258 = vmatpush1.bf16.msra.mxu0 0
    %4259 = vmatprep.subr.bf16.mxu0 0
    %4260 = vmatpush1.bf16.msra.mxu0 0
    %4261 = vmatprep.subr.bf16.mxu0 0
    %4262 = vmatpush1.bf16.msra.mxu0 0
    %4263 = vmatprep.subr.bf16.mxu0 0
    %4264 = vmatpush1.bf16.msra.mxu0 0
    %4265 = vmatprep.subr.bf16.mxu0 0
    %4266 = vmatpush1.bf16.msra.mxu0 0
    %4267 = vmatprep.subr.bf16.mxu0 0
    %4268 = vmatpush1.bf16.msra.mxu0 0
    %4269 = vmatprep.subr.bf16.mxu0 0
    %4270 = vmatpush1.bf16.msra.mxu0 0
    %4271 = vmatprep.mubr.bf16.mxu0 0
    %4272 = vmatmul.mubr.bf16.gmra.mrb[0].mxu0 %v4238
    %v4273 = vpop.f32.mrb[0].mxu0
    %v4274 = vadd.f32 0.0, %v4273
    %v4275 = vpop.f32.mrb[0].mxu0
    %v4276 = vadd.f32 0.0, %v4275
    %v4277 = vpop.f32.mrb[0].mxu0
    %v4278 = vpop.f32.mrb[0].mxu0
    %4279 = vdwg.mxu0
    %v4280 = vadd.f32 %v4215, %v4274
    %v4281 = vadd.f32 %v4216, %v4276
    %v4282 = vrot.slane %v1565, 7
    %v4284 = vrot.slane %v2790, 6
    %v4286 = vsel %vm2799, %v4282, %v4284
    %v4287 = vld [vmem:[#allocation2 + $0xb80] sm:$0xff]
    %v4288 = vld [vmem:[#allocation2 + $0xb88] sm:$0xff]
    %v4289 = vld [vmem:[#allocation2 + $0xb90] sm:$0xff]
    %v4290 = vld [vmem:[#allocation2 + $0xb98] sm:$0xff]
    %v4291 = vld [vmem:[#allocation2 + $0xba0] sm:$0xff]
    %v4292 = vld [vmem:[#allocation2 + $0xba8] sm:$0xff]
    %v4293 = vld [vmem:[#allocation2 + $0xbb0] sm:$0xff]
    %v4294 = vld [vmem:[#allocation2 + $0xbb8] sm:$0xff]
    %v4295 = vld [vmem:[#allocation2 + $0xbc0] sm:$0xff]
    %v4296 = vld [vmem:[#allocation2 + $0xbc8] sm:$0xff]
    %v4297 = vld [vmem:[#allocation2 + $0xbd0] sm:$0xff]
    %v4298 = vld [vmem:[#allocation2 + $0xbd8] sm:$0xff]
    %v4299 = vld [vmem:[#allocation2 + $0xbe0] sm:$0xff]
    %v4300 = vld [vmem:[#allocation2 + $0xbe8] sm:$0xff]
    %v4301 = vld [vmem:[#allocation2 + $0xbf0] sm:$0xff]
    %v4302 = vld [vmem:[#allocation2 + $0xbf8] sm:$0xff]
    %v4303 = vpack.c.bf16 %v4286, %v4286
    %4304 = vmatprep.subr.bf16.mxu0 %v4288
    %4305 = vmatpush1.bf16.msra.mxu0 %v4287
    %4306 = vmatprep.subr.bf16.mxu0 %v4290
    %4307 = vmatpush1.bf16.msra.mxu0 %v4289
    %4308 = vmatprep.subr.bf16.mxu0 %v4292
    %4309 = vmatpush1.bf16.msra.mxu0 %v4291
    %4310 = vmatprep.subr.bf16.mxu0 %v4294
    %4311 = vmatpush1.bf16.msra.mxu0 %v4293
    %4312 = vmatprep.subr.bf16.mxu0 %v4296
    %4313 = vmatpush1.bf16.msra.mxu0 %v4295
    %4314 = vmatprep.subr.bf16.mxu0 %v4298
    %4315 = vmatpush1.bf16.msra.mxu0 %v4297
    %4316 = vmatprep.subr.bf16.mxu0 %v4300
    %4317 = vmatpush1.bf16.msra.mxu0 %v4299
    %4318 = vmatprep.subr.bf16.mxu0 %v4302
    %4319 = vmatpush1.bf16.msra.mxu0 %v4301
    %4320 = vmatprep.subr.bf16.mxu0 0
    %4321 = vmatpush1.bf16.msra.mxu0 0
    %4322 = vmatprep.subr.bf16.mxu0 0
    %4323 = vmatpush1.bf16.msra.mxu0 0
    %4324 = vmatprep.subr.bf16.mxu0 0
    %4325 = vmatpush1.bf16.msra.mxu0 0
    %4326 = vmatprep.subr.bf16.mxu0 0
    %4327 = vmatpush1.bf16.msra.mxu0 0
    %4328 = vmatprep.subr.bf16.mxu0 0
    %4329 = vmatpush1.bf16.msra.mxu0 0
    %4330 = vmatprep.subr.bf16.mxu0 0
    %4331 = vmatpush1.bf16.msra.mxu0 0
    %4332 = vmatprep.subr.bf16.mxu0 0
    %4333 = vmatpush1.bf16.msra.mxu0 0
    %4334 = vmatprep.subr.bf16.mxu0 0
    %4335 = vmatpush1.bf16.msra.mxu0 0
    %4336 = vmatprep.mubr.bf16.mxu0 0
    %4337 = vmatmul.mubr.bf16.gmra.mrb[0].mxu0 %v4303
    %v4338 = vpop.f32.mrb[0].mxu0
    %v4339 = vadd.f32 0.0, %v4338
    %v4340 = vpop.f32.mrb[0].mxu0
    %v4341 = vadd.f32 0.0, %v4340
    %v4342 = vpop.f32.mrb[0].mxu0
    %v4343 = vpop.f32.mrb[0].mxu0
    %4344 = vdwg.mxu0
    %v4345 = vadd.f32 %v4280, %v4339
    %v4346 = vadd.f32 %v4281, %v4341
    %v4348 = vrot.slane %v2791, 7
    %v4350 = vsel %vm2799, %v1566, %v4348
    %v4351 = vld [vmem:[#allocation2 + $0xc00] sm:$0xff]
    %v4352 = vld [vmem:[#allocation2 + $0xc08] sm:$0xff]
    %v4353 = vld [vmem:[#allocation2 + $0xc10] sm:$0xff]
    %v4354 = vld [vmem:[#allocation2 + $0xc18] sm:$0xff]
    %v4355 = vld [vmem:[#allocation2 + $0xc20] sm:$0xff]
    %v4356 = vld [vmem:[#allocation2 + $0xc28] sm:$0xff]
    %v4357 = vld [vmem:[#allocation2 + $0xc30] sm:$0xff]
    %v4358 = vld [vmem:[#allocation2 + $0xc38] sm:$0xff]
    %v4359 = vld [vmem:[#allocation2 + $0xc40] sm:$0xff]
    %v4360 = vld [vmem:[#allocation2 + $0xc48] sm:$0xff]
    %v4361 = vld [vmem:[#allocation2 + $0xc50] sm:$0xff]
    %v4362 = vld [vmem:[#allocation2 + $0xc58] sm:$0xff]
    %v4363 = vld [vmem:[#allocation2 + $0xc60] sm:$0xff]
    %v4364 = vld [vmem:[#allocation2 + $0xc68] sm:$0xff]
    %v4365 = vld [vmem:[#allocation2 + $0xc70] sm:$0xff]
    %v4366 = vld [vmem:[#allocation2 + $0xc78] sm:$0xff]
    %v4367 = vpack.c.bf16 %v4350, %v4350
    %4368 = vmatprep.subr.bf16.mxu0 %v4352
    %4369 = vmatpush1.bf16.msra.mxu0 %v4351
    %4370 = vmatprep.subr.bf16.mxu0 %v4354
    %4371 = vmatpush1.bf16.msra.mxu0 %v4353
    %4372 = vmatprep.subr.bf16.mxu0 %v4356
    %4373 = vmatpush1.bf16.msra.mxu0 %v4355
    %4374 = vmatprep.subr.bf16.mxu0 %v4358
    %4375 = vmatpush1.bf16.msra.mxu0 %v4357
    %4376 = vmatprep.subr.bf16.mxu0 %v4360
    %4377 = vmatpush1.bf16.msra.mxu0 %v4359
    %4378 = vmatprep.subr.bf16.mxu0 %v4362
    %4379 = vmatpush1.bf16.msra.mxu0 %v4361
    %4380 = vmatprep.subr.bf16.mxu0 %v4364
    %4381 = vmatpush1.bf16.msra.mxu0 %v4363
    %4382 = vmatprep.subr.bf16.mxu0 %v4366
    %4383 = vmatpush1.bf16.msra.mxu0 %v4365
    %4384 = vmatprep.subr.bf16.mxu0 0
    %4385 = vmatpush1.bf16.msra.mxu0 0
    %4386 = vmatprep.subr.bf16.mxu0 0
    %4387 = vmatpush1.bf16.msra.mxu0 0
    %4388 = vmatprep.subr.bf16.mxu0 0
    %4389 = vmatpush1.bf16.msra.mxu0 0
    %4390 = vmatprep.subr.bf16.mxu0 0
    %4391 = vmatpush1.bf16.msra.mxu0 0
    %4392 = vmatprep.subr.bf16.mxu0 0
    %4393 = vmatpush1.bf16.msra.mxu0 0
    %4394 = vmatprep.subr.bf16.mxu0 0
    %4395 = vmatpush1.bf16.msra.mxu0 0
    %4396 = vmatprep.subr.bf16.mxu0 0
    %4397 = vmatpush1.bf16.msra.mxu0 0
    %4398 = vmatprep.subr.bf16.mxu0 0
    %4399 = vmatpush1.bf16.msra.mxu0 0
    %4400 = vmatprep.mubr.bf16.mxu0 0
    %4401 = vmatmul.mubr.bf16.gmra.mrb[0].mxu0 %v4367
    %v4402 = vpop.f32.mrb[0].mxu0
    %v4403 = vadd.f32 0.0, %v4402
    %v4404 = vpop.f32.mrb[0].mxu0
    %v4405 = vadd.f32 0.0, %v4404
    %v4406 = vpop.f32.mrb[0].mxu0
    %v4407 = vpop.f32.mrb[0].mxu0
    %4408 = vdwg.mxu0
    %v4409 = vadd.f32 %v4345, %v4403
    %v4410 = vadd.f32 %v4346, %v4405
    %v4412 = vrot.slane %v1566, 1
    %v4414 = vsel %vm2799, %v4412, %v2791
    %v4415 = vld [vmem:[#allocation2 + $0xc80] sm:$0xff]
    %v4416 = vld [vmem:[#allocation2 + $0xc88] sm:$0xff]
    %v4417 = vld [vmem:[#allocation2 + $0xc90] sm:$0xff]
    %v4418 = vld [vmem:[#allocation2 + $0xc98] sm:$0xff]
    %v4419 = vld [vmem:[#allocation2 + $0xca0] sm:$0xff]
    %v4420 = vld [vmem:[#allocation2 + $0xca8] sm:$0xff]
    %v4421 = vld [vmem:[#allocation2 + $0xcb0] sm:$0xff]
    %v4422 = vld [vmem:[#allocation2 + $0xcb8] sm:$0xff]
    %v4423 = vld [vmem:[#allocation2 + $0xcc0] sm:$0xff]
    %v4424 = vld [vmem:[#allocation2 + $0xcc8] sm:$0xff]
    %v4425 = vld [vmem:[#allocation2 + $0xcd0] sm:$0xff]
    %v4426 = vld [vmem:[#allocation2 + $0xcd8] sm:$0xff]
    %v4427 = vld [vmem:[#allocation2 + $0xce0] sm:$0xff]
    %v4428 = vld [vmem:[#allocation2 + $0xce8] sm:$0xff]
    %v4429 = vld [vmem:[#allocation2 + $0xcf0] sm:$0xff]
    %v4430 = vld [vmem:[#allocation2 + $0xcf8] sm:$0xff]
    %v4431 = vpack.c.bf16 %v4414, %v4414
    %4432 = vmatprep.subr.bf16.mxu0 %v4416
    %4433 = vmatpush1.bf16.msra.mxu0 %v4415
    %4434 = vmatprep.subr.bf16.mxu0 %v4418
    %4435 = vmatpush1.bf16.msra.mxu0 %v4417
    %4436 = vmatprep.subr.bf16.mxu0 %v4420
    %4437 = vmatpush1.bf16.msra.mxu0 %v4419
    %4438 = vmatprep.subr.bf16.mxu0 %v4422
    %4439 = vmatpush1.bf16.msra.mxu0 %v4421
    %4440 = vmatprep.subr.bf16.mxu0 %v4424
    %4441 = vmatpush1.bf16.msra.mxu0 %v4423
    %4442 = vmatprep.subr.bf16.mxu0 %v4426
    %4443 = vmatpush1.bf16.msra.mxu0 %v4425
    %4444 = vmatprep.subr.bf16.mxu0 %v4428
    %4445 = vmatpush1.bf16.msra.mxu0 %v4427
    %4446 = vmatprep.subr.bf16.mxu0 %v4430
    %4447 = vmatpush1.bf16.msra.mxu0 %v4429
    %4448 = vmatprep.subr.bf16.mxu0 0
    %4449 = vmatpush1.bf16.msra.mxu0 0
    %4450 = vmatprep.subr.bf16.mxu0 0
    %4451 = vmatpush1.bf16.msra.mxu0 0
    %4452 = vmatprep.subr.bf16.mxu0 0
    %4453 = vmatpush1.bf16.msra.mxu0 0
    %4454 = vmatprep.subr.bf16.mxu0 0
    %4455 = vmatpush1.bf16.msra.mxu0 0
    %4456 = vmatprep.subr.bf16.mxu0 0
    %4457 = vmatpush1.bf16.msra.mxu0 0
    %4458 = vmatprep.subr.bf16.mxu0 0
    %4459 = vmatpush1.bf16.msra.mxu0 0
    %4460 = vmatprep.subr.bf16.mxu0 0
    %4461 = vmatpush1.bf16.msra.mxu0 0
    %4462 = vmatprep.subr.bf16.mxu0 0
    %4463 = vmatpush1.bf16.msra.mxu0 0
    %4464 = vmatprep.mubr.bf16.mxu0 0
    %4465 = vmatmul.mubr.bf16.gmra.mrb[0].mxu0 %v4431
    %v4466 = vpop.f32.mrb[0].mxu0
    %v4467 = vadd.f32 0.0, %v4466
    %v4468 = vpop.f32.mrb[0].mxu0
    %v4469 = vadd.f32 0.0, %v4468
    %v4470 = vpop.f32.mrb[0].mxu0
    %v4471 = vpop.f32.mrb[0].mxu0
    %4472 = vdwg.mxu0
    %v4473 = vadd.f32 %v4409, %v4467
    %v4474 = vadd.f32 %v4410, %v4469
    %v4475 = vrot.slane %v1566, 2
    %v4477 = vrot.slane %v2791, 1
    %v4479 = vsel %vm2799, %v4475, %v4477
    %v4480 = vld [vmem:[#allocation2 + $0xd00] sm:$0xff]
    %v4481 = vld [vmem:[#allocation2 + $0xd08] sm:$0xff]
    %v4482 = vld [vmem:[#allocation2 + $0xd10] sm:$0xff]
    %v4483 = vld [vmem:[#allocation2 + $0xd18] sm:$0xff]
    %v4484 = vld [vmem:[#allocation2 + $0xd20] sm:$0xff]
    %v4485 = vld [vmem:[#allocation2 + $0xd28] sm:$0xff]
    %v4486 = vld [vmem:[#allocation2 + $0xd30] sm:$0xff]
    %v4487 = vld [vmem:[#allocation2 + $0xd38] sm:$0xff]
    %v4488 = vld [vmem:[#allocation2 + $0xd40] sm:$0xff]
    %v4489 = vld [vmem:[#allocation2 + $0xd48] sm:$0xff]
    %v4490 = vld [vmem:[#allocation2 + $0xd50] sm:$0xff]
    %v4491 = vld [vmem:[#allocation2 + $0xd58] sm:$0xff]
    %v4492 = vld [vmem:[#allocation2 + $0xd60] sm:$0xff]
    %v4493 = vld [vmem:[#allocation2 + $0xd68] sm:$0xff]
    %v4494 = vld [vmem:[#allocation2 + $0xd70] sm:$0xff]
    %v4495 = vld [vmem:[#allocation2 + $0xd78] sm:$0xff]
    %v4496 = vpack.c.bf16 %v4479, %v4479
    %4497 = vmatprep.subr.bf16.mxu0 %v4481
    %4498 = vmatpush1.bf16.msra.mxu0 %v4480
    %4499 = vmatprep.subr.bf16.mxu0 %v4483
    %4500 = vmatpush1.bf16.msra.mxu0 %v4482
    %4501 = vmatprep.subr.bf16.mxu0 %v4485
    %4502 = vmatpush1.bf16.msra.mxu0 %v4484
    %4503 = vmatprep.subr.bf16.mxu0 %v4487
    %4504 = vmatpush1.bf16.msra.mxu0 %v4486
    %4505 = vmatprep.subr.bf16.mxu0 %v4489
    %4506 = vmatpush1.bf16.msra.mxu0 %v4488
    %4507 = vmatprep.subr.bf16.mxu0 %v4491
    %4508 = vmatpush1.bf16.msra.mxu0 %v4490
    %4509 = vmatprep.subr.bf16.mxu0 %v4493
    %4510 = vmatpush1.bf16.msra.mxu0 %v4492
    %4511 = vmatprep.subr.bf16.mxu0 %v4495
    %4512 = vmatpush1.bf16.msra.mxu0 %v4494
    %4513 = vmatprep.subr.bf16.mxu0 0
    %4514 = vmatpush1.bf16.msra.mxu0 0
    %4515 = vmatprep.subr.bf16.mxu0 0
    %4516 = vmatpush1.bf16.msra.mxu0 0
    %4517 = vmatprep.subr.bf16.mxu0 0
    %4518 = vmatpush1.bf16.msra.mxu0 0
    %4519 = vmatprep.subr.bf16.mxu0 0
    %4520 = vmatpush1.bf16.msra.mxu0 0
    %4521 = vmatprep.subr.bf16.mxu0 0
    %4522 = vmatpush1.bf16.msra.mxu0 0
    %4523 = vmatprep.subr.bf16.mxu0 0
    %4524 = vmatpush1.bf16.msra.mxu0 0
    %4525 = vmatprep.subr.bf16.mxu0 0
    %4526 = vmatpush1.bf16.msra.mxu0 0
    %4527 = vmatprep.subr.bf16.mxu0 0
    %4528 = vmatpush1.bf16.msra.mxu0 0
    %4529 = vmatprep.mubr.bf16.mxu0 0
    %4530 = vmatmul.mubr.bf16.gmra.mrb[0].mxu0 %v4496
    %v4531 = vpop.f32.mrb[0].mxu0
    %v4532 = vadd.f32 0.0, %v4531
    %v4533 = vpop.f32.mrb[0].mxu0
    %v4534 = vadd.f32 0.0, %v4533
    %v4535 = vpop.f32.mrb[0].mxu0
    %v4536 = vpop.f32.mrb[0].mxu0
    %4537 = vdwg.mxu0
    %v4538 = vadd.f32 %v4473, %v4532
    %v4539 = vadd.f32 %v4474, %v4534
    %v4540 = vrot.slane %v1566, 3
    %v4542 = vrot.slane %v2791, 2
    %v4544 = vsel %vm2799, %v4540, %v4542
    %v4545 = vld [vmem:[#allocation2 + $0xd80] sm:$0xff]
    %v4546 = vld [vmem:[#allocation2 + $0xd88] sm:$0xff]
    %v4547 = vld [vmem:[#allocation2 + $0xd90] sm:$0xff]
    %v4548 = vld [vmem:[#allocation2 + $0xd98] sm:$0xff]
    %v4549 = vld [vmem:[#allocation2 + $0xda0] sm:$0xff]
    %v4550 = vld [vmem:[#allocation2 + $0xda8] sm:$0xff]
    %v4551 = vld [vmem:[#allocation2 + $0xdb0] sm:$0xff]
    %v4552 = vld [vmem:[#allocation2 + $0xdb8] sm:$0xff]
    %v4553 = vld [vmem:[#allocation2 + $0xdc0] sm:$0xff]
    %v4554 = vld [vmem:[#allocation2 + $0xdc8] sm:$0xff]
    %v4555 = vld [vmem:[#allocation2 + $0xdd0] sm:$0xff]
    %v4556 = vld [vmem:[#allocation2 + $0xdd8] sm:$0xff]
    %v4557 = vld [vmem:[#allocation2 + $0xde0] sm:$0xff]
    %v4558 = vld [vmem:[#allocation2 + $0xde8] sm:$0xff]
    %v4559 = vld [vmem:[#allocation2 + $0xdf0] sm:$0xff]
    %v4560 = vld [vmem:[#allocation2 + $0xdf8] sm:$0xff]
    %v4561 = vpack.c.bf16 %v4544, %v4544
    %4562 = vmatprep.subr.bf16.mxu0 %v4546
    %4563 = vmatpush1.bf16.msra.mxu0 %v4545
    %4564 = vmatprep.subr.bf16.mxu0 %v4548
    %4565 = vmatpush1.bf16.msra.mxu0 %v4547
    %4566 = vmatprep.subr.bf16.mxu0 %v4550
    %4567 = vmatpush1.bf16.msra.mxu0 %v4549
    %4568 = vmatprep.subr.bf16.mxu0 %v4552
    %4569 = vmatpush1.bf16.msra.mxu0 %v4551
    %4570 = vmatprep.subr.bf16.mxu0 %v4554
    %4571 = vmatpush1.bf16.msra.mxu0 %v4553
    %4572 = vmatprep.subr.bf16.mxu0 %v4556
    %4573 = vmatpush1.bf16.msra.mxu0 %v4555
    %4574 = vmatprep.subr.bf16.mxu0 %v4558
    %4575 = vmatpush1.bf16.msra.mxu0 %v4557
    %4576 = vmatprep.subr.bf16.mxu0 %v4560
    %4577 = vmatpush1.bf16.msra.mxu0 %v4559
    %4578 = vmatprep.subr.bf16.mxu0 0
    %4579 = vmatpush1.bf16.msra.mxu0 0
    %4580 = vmatprep.subr.bf16.mxu0 0
    %4581 = vmatpush1.bf16.msra.mxu0 0
    %4582 = vmatprep.subr.bf16.mxu0 0
    %4583 = vmatpush1.bf16.msra.mxu0 0
    %4584 = vmatprep.subr.bf16.mxu0 0
    %4585 = vmatpush1.bf16.msra.mxu0 0
    %4586 = vmatprep.subr.bf16.mxu0 0
    %4587 = vmatpush1.bf16.msra.mxu0 0
    %4588 = vmatprep.subr.bf16.mxu0 0
    %4589 = vmatpush1.bf16.msra.mxu0 0
    %4590 = vmatprep.subr.bf16.mxu0 0
    %4591 = vmatpush1.bf16.msra.mxu0 0
    %4592 = vmatprep.subr.bf16.mxu0 0
    %4593 = vmatpush1.bf16.msra.mxu0 0
    %4594 = vmatprep.mubr.bf16.mxu0 0
    %4595 = vmatmul.mubr.bf16.gmra.mrb[0].mxu0 %v4561
    %v4596 = vpop.f32.mrb[0].mxu0
    %v4597 = vadd.f32 0.0, %v4596
    %v4598 = vpop.f32.mrb[0].mxu0
    %v4599 = vadd.f32 0.0, %v4598
    %v4600 = vpop.f32.mrb[0].mxu0
    %v4601 = vpop.f32.mrb[0].mxu0
    %4602 = vdwg.mxu0
    %v4603 = vadd.f32 %v4538, %v4597
    %v4604 = vadd.f32 %v4539, %v4599
    %v4605 = vrot.slane %v1566, 4
    %v4607 = vrot.slane %v2791, 3
    %v4609 = vsel %vm2799, %v4605, %v4607
    %v4610 = vld [vmem:[#allocation2 + $0xe00] sm:$0xff]
    %v4611 = vld [vmem:[#allocation2 + $0xe08] sm:$0xff]
    %v4612 = vld [vmem:[#allocation2 + $0xe10] sm:$0xff]
    %v4613 = vld [vmem:[#allocation2 + $0xe18] sm:$0xff]
    %v4614 = vld [vmem:[#allocation2 + $0xe20] sm:$0xff]
    %v4615 = vld [vmem:[#allocation2 + $0xe28] sm:$0xff]
    %v4616 = vld [vmem:[#allocation2 + $0xe30] sm:$0xff]
    %v4617 = vld [vmem:[#allocation2 + $0xe38] sm:$0xff]
    %v4618 = vld [vmem:[#allocation2 + $0xe40] sm:$0xff]
    %v4619 = vld [vmem:[#allocation2 + $0xe48] sm:$0xff]
    %v4620 = vld [vmem:[#allocation2 + $0xe50] sm:$0xff]
    %v4621 = vld [vmem:[#allocation2 + $0xe58] sm:$0xff]
    %v4622 = vld [vmem:[#allocation2 + $0xe60] sm:$0xff]
    %v4623 = vld [vmem:[#allocation2 + $0xe68] sm:$0xff]
    %v4624 = vld [vmem:[#allocation2 + $0xe70] sm:$0xff]
    %v4625 = vld [vmem:[#allocation2 + $0xe78] sm:$0xff]
    %v4626 = vpack.c.bf16 %v4609, %v4609
    %4627 = vmatprep.subr.bf16.mxu0 %v4611
    %4628 = vmatpush1.bf16.msra.mxu0 %v4610
    %4629 = vmatprep.subr.bf16.mxu0 %v4613
    %4630 = vmatpush1.bf16.msra.mxu0 %v4612
    %4631 = vmatprep.subr.bf16.mxu0 %v4615
    %4632 = vmatpush1.bf16.msra.mxu0 %v4614
    %4633 = vmatprep.subr.bf16.mxu0 %v4617
    %4634 = vmatpush1.bf16.msra.mxu0 %v4616
    %4635 = vmatprep.subr.bf16.mxu0 %v4619
    %4636 = vmatpush1.bf16.msra.mxu0 %v4618
    %4637 = vmatprep.subr.bf16.mxu0 %v4621
    %4638 = vmatpush1.bf16.msra.mxu0 %v4620
    %4639 = vmatprep.subr.bf16.mxu0 %v4623
    %4640 = vmatpush1.bf16.msra.mxu0 %v4622
    %4641 = vmatprep.subr.bf16.mxu0 %v4625
    %4642 = vmatpush1.bf16.msra.mxu0 %v4624
    %4643 = vmatprep.subr.bf16.mxu0 0
    %4644 = vmatpush1.bf16.msra.mxu0 0
    %4645 = vmatprep.subr.bf16.mxu0 0
    %4646 = vmatpush1.bf16.msra.mxu0 0
    %4647 = vmatprep.subr.bf16.mxu0 0
    %4648 = vmatpush1.bf16.msra.mxu0 0
    %4649 = vmatprep.subr.bf16.mxu0 0
    %4650 = vmatpush1.bf16.msra.mxu0 0
    %4651 = vmatprep.subr.bf16.mxu0 0
    %4652 = vmatpush1.bf16.msra.mxu0 0
    %4653 = vmatprep.subr.bf16.mxu0 0
    %4654 = vmatpush1.bf16.msra.mxu0 0
    %4655 = vmatprep.subr.bf16.mxu0 0
    %4656 = vmatpush1.bf16.msra.mxu0 0
    %4657 = vmatprep.subr.bf16.mxu0 0
    %4658 = vmatpush1.bf16.msra.mxu0 0
    %4659 = vmatprep.mubr.bf16.mxu0 0
    %4660 = vmatmul.mubr.bf16.gmra.mrb[0].mxu0 %v4626
    %v4661 = vpop.f32.mrb[0].mxu0
    %v4662 = vadd.f32 0.0, %v4661
    %v4663 = vpop.f32.mrb[0].mxu0
    %v4664 = vadd.f32 0.0, %v4663
    %v4665 = vpop.f32.mrb[0].mxu0
    %v4666 = vpop.f32.mrb[0].mxu0
    %4667 = vdwg.mxu0
    %v4668 = vadd.f32 %v4603, %v4662
    %v4669 = vadd.f32 %v4604, %v4664
    %v4670 = vrot.slane %v1566, 5
    %v4672 = vrot.slane %v2791, 4
    %v4674 = vsel %vm2799, %v4670, %v4672
    %v4675 = vld [vmem:[#allocation2 + $0xe80] sm:$0xff]
    %v4676 = vld [vmem:[#allocation2 + $0xe88] sm:$0xff]
    %v4677 = vld [vmem:[#allocation2 + $0xe90] sm:$0xff]
    %v4678 = vld [vmem:[#allocation2 + $0xe98] sm:$0xff]
    %v4679 = vld [vmem:[#allocation2 + $0xea0] sm:$0xff]
    %v4680 = vld [vmem:[#allocation2 + $0xea8] sm:$0xff]
    %v4681 = vld [vmem:[#allocation2 + $0xeb0] sm:$0xff]
    %v4682 = vld [vmem:[#allocation2 + $0xeb8] sm:$0xff]
    %v4683 = vld [vmem:[#allocation2 + $0xec0] sm:$0xff]
    %v4684 = vld [vmem:[#allocation2 + $0xec8] sm:$0xff]
    %v4685 = vld [vmem:[#allocation2 + $0xed0] sm:$0xff]
    %v4686 = vld [vmem:[#allocation2 + $0xed8] sm:$0xff]
    %v4687 = vld [vmem:[#allocation2 + $0xee0] sm:$0xff]
    %v4688 = vld [vmem:[#allocation2 + $0xee8] sm:$0xff]
    %v4689 = vld [vmem:[#allocation2 + $0xef0] sm:$0xff]
    %v4690 = vld [vmem:[#allocation2 + $0xef8] sm:$0xff]
    %v4691 = vpack.c.bf16 %v4674, %v4674
    %4692 = vmatprep.subr.bf16.mxu0 %v4676
    %4693 = vmatpush1.bf16.msra.mxu0 %v4675
    %4694 = vmatprep.subr.bf16.mxu0 %v4678
    %4695 = vmatpush1.bf16.msra.mxu0 %v4677
    %4696 = vmatprep.subr.bf16.mxu0 %v4680
    %4697 = vmatpush1.bf16.msra.mxu0 %v4679
    %4698 = vmatprep.subr.bf16.mxu0 %v4682
    %4699 = vmatpush1.bf16.msra.mxu0 %v4681
    %4700 = vmatprep.subr.bf16.mxu0 %v4684
    %4701 = vmatpush1.bf16.msra.mxu0 %v4683
    %4702 = vmatprep.subr.bf16.mxu0 %v4686
    %4703 = vmatpush1.bf16.msra.mxu0 %v4685
    %4704 = vmatprep.subr.bf16.mxu0 %v4688
    %4705 = vmatpush1.bf16.msra.mxu0 %v4687
    %4706 = vmatprep.subr.bf16.mxu0 %v4690
    %4707 = vmatpush1.bf16.msra.mxu0 %v4689
    %4708 = vmatprep.subr.bf16.mxu0 0
    %4709 = vmatpush1.bf16.msra.mxu0 0
    %4710 = vmatprep.subr.bf16.mxu0 0
    %4711 = vmatpush1.bf16.msra.mxu0 0
    %4712 = vmatprep.subr.bf16.mxu0 0
    %4713 = vmatpush1.bf16.msra.mxu0 0
    %4714 = vmatprep.subr.bf16.mxu0 0
    %4715 = vmatpush1.bf16.msra.mxu0 0
    %4716 = vmatprep.subr.bf16.mxu0 0
    %4717 = vmatpush1.bf16.msra.mxu0 0
    %4718 = vmatprep.subr.bf16.mxu0 0
    %4719 = vmatpush1.bf16.msra.mxu0 0
    %4720 = vmatprep.subr.bf16.mxu0 0
    %4721 = vmatpush1.bf16.msra.mxu0 0
    %4722 = vmatprep.subr.bf16.mxu0 0
    %4723 = vmatpush1.bf16.msra.mxu0 0
    %4724 = vmatprep.mubr.bf16.mxu0 0
    %4725 = vmatmul.mubr.bf16.gmra.mrb[0].mxu0 %v4691
    %v4726 = vpop.f32.mrb[0].mxu0
    %v4727 = vadd.f32 0.0, %v4726
    %v4728 = vpop.f32.mrb[0].mxu0
    %v4729 = vadd.f32 0.0, %v4728
    %v4730 = vpop.f32.mrb[0].mxu0
    %v4731 = vpop.f32.mrb[0].mxu0
    %4732 = vdwg.mxu0
    %v4733 = vadd.f32 %v4668, %v4727
    %v4734 = vadd.f32 %v4669, %v4729
    %v4735 = vrot.slane %v1566, 6
    %v4737 = vrot.slane %v2791, 5
    %v4739 = vsel %vm2799, %v4735, %v4737
    %v4740 = vld [vmem:[#allocation2 + $0xf00] sm:$0xff]
    %v4741 = vld [vmem:[#allocation2 + $0xf08] sm:$0xff]
    %v4742 = vld [vmem:[#allocation2 + $0xf10] sm:$0xff]
    %v4743 = vld [vmem:[#allocation2 + $0xf18] sm:$0xff]
    %v4744 = vld [vmem:[#allocation2 + $0xf20] sm:$0xff]
    %v4745 = vld [vmem:[#allocation2 + $0xf28] sm:$0xff]
    %v4746 = vld [vmem:[#allocation2 + $0xf30] sm:$0xff]
    %v4747 = vld [vmem:[#allocation2 + $0xf38] sm:$0xff]
    %v4748 = vld [vmem:[#allocation2 + $0xf40] sm:$0xff]
    %v4749 = vld [vmem:[#allocation2 + $0xf48] sm:$0xff]
    %v4750 = vld [vmem:[#allocation2 + $0xf50] sm:$0xff]
    %v4751 = vld [vmem:[#allocation2 + $0xf58] sm:$0xff]
    %v4752 = vld [vmem:[#allocation2 + $0xf60] sm:$0xff]
    %v4753 = vld [vmem:[#allocation2 + $0xf68] sm:$0xff]
    %v4754 = vld [vmem:[#allocation2 + $0xf70] sm:$0xff]
    %v4755 = vld [vmem:[#allocation2 + $0xf78] sm:$0xff]
    %v4756 = vpack.c.bf16 %v4739, %v4739
    %4757 = vmatprep.subr.bf16.mxu0 %v4741
    %4758 = vmatpush1.bf16.msra.mxu0 %v4740
    %4759 = vmatprep.subr.bf16.mxu0 %v4743
    %4760 = vmatpush1.bf16.msra.mxu0 %v4742
    %4761 = vmatprep.subr.bf16.mxu0 %v4745
    %4762 = vmatpush1.bf16.msra.mxu0 %v4744
    %4763 = vmatprep.subr.bf16.mxu0 %v4747
    %4764 = vmatpush1.bf16.msra.mxu0 %v4746
    %4765 = vmatprep.subr.bf16.mxu0 %v4749
    %4766 = vmatpush1.bf16.msra.mxu0 %v4748
    %4767 = vmatprep.subr.bf16.mxu0 %v4751
    %4768 = vmatpush1.bf16.msra.mxu0 %v4750
    %4769 = vmatprep.subr.bf16.mxu0 %v4753
    %4770 = vmatpush1.bf16.msra.mxu0 %v4752
    %4771 = vmatprep.subr.bf16.mxu0 %v4755
    %4772 = vmatpush1.bf16.msra.mxu0 %v4754
    %4773 = vmatprep.subr.bf16.mxu0 0
    %4774 = vmatpush1.bf16.msra.mxu0 0
    %4775 = vmatprep.subr.bf16.mxu0 0
    %4776 = vmatpush1.bf16.msra.mxu0 0
    %4777 = vmatprep.subr.bf16.mxu0 0
    %4778 = vmatpush1.bf16.msra.mxu0 0
    %4779 = vmatprep.subr.bf16.mxu0 0
    %4780 = vmatpush1.bf16.msra.mxu0 0
    %4781 = vmatprep.subr.bf16.mxu0 0
    %4782 = vmatpush1.bf16.msra.mxu0 0
    %4783 = vmatprep.subr.bf16.mxu0 0
    %4784 = vmatpush1.bf16.msra.mxu0 0
    %4785 = vmatprep.subr.bf16.mxu0 0
    %4786 = vmatpush1.bf16.msra.mxu0 0
    %4787 = vmatprep.subr.bf16.mxu0 0
    %4788 = vmatpush1.bf16.msra.mxu0 0
    %4789 = vmatprep.mubr.bf16.mxu0 0
    %4790 = vmatmul.mubr.bf16.gmra.mrb[0].mxu0 %v4756
    %v4791 = vpop.f32.mrb[0].mxu0
    %v4792 = vadd.f32 0.0, %v4791
    %v4793 = vpop.f32.mrb[0].mxu0
    %v4794 = vadd.f32 0.0, %v4793
    %v4795 = vpop.f32.mrb[0].mxu0
    %v4796 = vpop.f32.mrb[0].mxu0
    %4797 = vdwg.mxu0
    %v4798 = vadd.f32 %v4733, %v4792
    %v4799 = vadd.f32 %v4734, %v4794
    %v4800 = vrot.slane %v1566, 7
    %v4802 = vrot.slane %v2791, 6
    %v4804 = vsel %vm2799, %v4800, %v4802
    %v4805 = vld [vmem:[#allocation2 + $0xf80] sm:$0xff]
    %v4806 = vld [vmem:[#allocation2 + $0xf88] sm:$0xff]
    %v4807 = vld [vmem:[#allocation2 + $0xf90] sm:$0xff]
    %v4808 = vld [vmem:[#allocation2 + $0xf98] sm:$0xff]
    %v4809 = vld [vmem:[#allocation2 + $0xfa0] sm:$0xff]
    %v4810 = vld [vmem:[#allocation2 + $0xfa8] sm:$0xff]
    %v4811 = vld [vmem:[#allocation2 + $0xfb0] sm:$0xff]
    %v4812 = vld [vmem:[#allocation2 + $0xfb8] sm:$0xff]
    %v4813 = vld [vmem:[#allocation2 + $0xfc0] sm:$0xff]
    %v4814 = vld [vmem:[#allocation2 + $0xfc8] sm:$0xff]
    %v4815 = vld [vmem:[#allocation2 + $0xfd0] sm:$0xff]
    %v4816 = vld [vmem:[#allocation2 + $0xfd8] sm:$0xff]
    %v4817 = vld [vmem:[#allocation2 + $0xfe0] sm:$0xff]
    %v4818 = vld [vmem:[#allocation2 + $0xfe8] sm:$0xff]
    %v4819 = vld [vmem:[#allocation2 + $0xff0] sm:$0xff]
    %v4820 = vld [vmem:[#allocation2 + $0xff8] sm:$0xff]
    %v4821 = vpack.c.bf16 %v4804, %v4804
    %4822 = vmatprep.subr.bf16.mxu0 %v4806
    %4823 = vmatpush1.bf16.msra.mxu0 %v4805
    %4824 = vmatprep.subr.bf16.mxu0 %v4808
    %4825 = vmatpush1.bf16.msra.mxu0 %v4807
    %4826 = vmatprep.subr.bf16.mxu0 %v4810
    %4827 = vmatpush1.bf16.msra.mxu0 %v4809
    %4828 = vmatprep.subr.bf16.mxu0 %v4812
    %4829 = vmatpush1.bf16.msra.mxu0 %v4811
    %4830 = vmatprep.subr.bf16.mxu0 %v4814
    %4831 = vmatpush1.bf16.msra.mxu0 %v4813
    %4832 = vmatprep.subr.bf16.mxu0 %v4816
    %4833 = vmatpush1.bf16.msra.mxu0 %v4815
    %4834 = vmatprep.subr.bf16.mxu0 %v4818
    %4835 = vmatpush1.bf16.msra.mxu0 %v4817
    %4836 = vmatprep.subr.bf16.mxu0 %v4820
    %4837 = vmatpush1.bf16.msra.mxu0 %v4819
    %4838 = vmatprep.subr.bf16.mxu0 0
    %4839 = vmatpush1.bf16.msra.mxu0 0
    %4840 = vmatprep.subr.bf16.mxu0 0
    %4841 = vmatpush1.bf16.msra.mxu0 0
    %4842 = vmatprep.subr.bf16.mxu0 0
    %4843 = vmatpush1.bf16.msra.mxu0 0
    %4844 = vmatprep.subr.bf16.mxu0 0
    %4845 = vmatpush1.bf16.msra.mxu0 0
    %4846 = vmatprep.subr.bf16.mxu0 0
    %4847 = vmatpush1.bf16.msra.mxu0 0
    %4848 = vmatprep.subr.bf16.mxu0 0
    %4849 = vmatpush1.bf16.msra.mxu0 0
    %4850 = vmatprep.subr.bf16.mxu0 0
    %4851 = vmatpush1.bf16.msra.mxu0 0
    %4852 = vmatprep.subr.bf16.mxu0 0
    %4853 = vmatpush1.bf16.msra.mxu0 0
    %4854 = vmatprep.mubr.bf16.mxu0 0
    %4855 = vmatmul.mubr.bf16.gmra.mrb[0].mxu0 %v4821
    %v4856 = vpop.f32.mrb[0].mxu0
    %v4857 = vadd.f32 0.0, %v4856
    %v4858 = vpop.f32.mrb[0].mxu0
    %v4859 = vadd.f32 0.0, %v4858
    %v4860 = vpop.f32.mrb[0].mxu0
    %v4861 = vpop.f32.mrb[0].mxu0
    %4862 = vdwg.mxu0
    %v4863 = vadd.f32 %v4798, %v4857
    %v4864 = vadd.f32 %v4799, %v4859
    %v4865 = vld [vmem:[#allocation7] sm:$0x3]
    %v4867 = vlaneseq
    %v4868 = vshrl.u32 %v4867, 7
    %v4869 = vsub.s32 0, %v4868
    %v4870 = vrot.slane %v4865, %v4869
    %v4871 = vlaneseq
    %v4872 = vshrl.u32 %v4871, 7
    %v4873 = vsub.s32 1, %v4872
    %v4874 = vrot.slane %v4865, %v4873
    %v4877 = vadd.f32 %v4863, %v4870
    %v4878 = vadd.f32 %v4864, %v4874
    %v4879 = vmax.f32 %v4877, 0.0
    %v4880 = vmax.f32 %v4878, 0.0
    %v4881 = vld [vmem:[#allocation9] sm:$0xff]
    %v4882 = vld [vmem:[#allocation9 + $0x8] sm:$0xff]
    %v4883 = vld [vmem:[#allocation9 + $0x10] sm:$0xff]
    %v4884 = vld [vmem:[#allocation9 + $0x18] sm:$0xff]
    %v4885 = vld [vmem:[#allocation9 + $0x20] sm:$0xff]
    %v4886 = vld [vmem:[#allocation9 + $0x28] sm:$0xff]
    %v4887 = vld [vmem:[#allocation9 + $0x30] sm:$0xff]
    %v4888 = vld [vmem:[#allocation9 + $0x38] sm:$0xff]
    %v4889 = vld [vmem:[#allocation9 + $0x40] sm:$0xff]
    %v4890 = vld [vmem:[#allocation9 + $0x48] sm:$0xff]
    %v4891 = vld [vmem:[#allocation9 + $0x50] sm:$0xff]
    %v4892 = vld [vmem:[#allocation9 + $0x58] sm:$0xff]
    %v4893 = vld [vmem:[#allocation9 + $0x60] sm:$0xff]
    %v4894 = vld [vmem:[#allocation9 + $0x68] sm:$0xff]
    %v4895 = vld [vmem:[#allocation9 + $0x70] sm:$0xff]
    %v4896 = vld [vmem:[#allocation9 + $0x78] sm:$0xff]
    %v4897 = vld [vmem:[#allocation9 + $0x80] sm:$0xff]
    %v4898 = vld [vmem:[#allocation9 + $0x88] sm:$0xff]
    %v4899 = vld [vmem:[#allocation9 + $0x90] sm:$0xff]
    %v4900 = vld [vmem:[#allocation9 + $0x98] sm:$0xff]
    %v4901 = vld [vmem:[#allocation9 + $0xa0] sm:$0xff]
    %v4902 = vld [vmem:[#allocation9 + $0xa8] sm:$0xff]
    %v4903 = vld [vmem:[#allocation9 + $0xb0] sm:$0xff]
    %v4904 = vld [vmem:[#allocation9 + $0xb8] sm:$0xff]
    %v4905 = vld [vmem:[#allocation9 + $0xc0] sm:$0xff]
    %v4906 = vld [vmem:[#allocation9 + $0xc8] sm:$0xff]
    %v4907 = vld [vmem:[#allocation9 + $0xd0] sm:$0xff]
    %v4908 = vld [vmem:[#allocation9 + $0xd8] sm:$0xff]
    %v4909 = vld [vmem:[#allocation9 + $0xe0] sm:$0xff]
    %v4910 = vld [vmem:[#allocation9 + $0xe8] sm:$0xff]
    %v4911 = vld [vmem:[#allocation9 + $0xf0] sm:$0xff]
    %v4912 = vld [vmem:[#allocation9 + $0xf8] sm:$0xff]
    %v4913 = vld [vmem:[%s1] sm:$0x3]
    %v4914 = vld [vmem:[#allocation10] sm:$0xf]
    %vm4915 = vcmask 31744
    %v4917 = vsel %vm4915, %v4913, 0
    %vm4919 = vcmask 1043456
    %v4921 = vsel %vm4919, %v4914, 0
    %4923 = vmatprep.subr.mxu0 0.0
    %4924 = vmatpush1.msra.mxu0 %v4921
    %4925 = vmatprep.subr.mxu0 0.0
    %4926 = vmatpush1.msra.mxu0 0.0
    %4927 = vmatprep.subr.mxu0 0.0
    %4928 = vmatpush1.msra.mxu0 0.0
    %4929 = vmatprep.subr.mxu0 0.0
    %4930 = vmatpush1.msra.mxu0 0.0
    %4931 = vmatprep.subr.mxu0 0.0
    %4932 = vmatpush1.msra.mxu0 0.0
    %4933 = vmatprep.subr.mxu0 0.0
    %4934 = vmatpush1.msra.mxu0 0.0
    %4935 = vmatprep.subr.mxu0 0.0
    %4936 = vmatpush1.msra.mxu0 0.0
    %4937 = vmatprep.subr.mxu0 0.0
    %4938 = vmatpush1.msra.mxu0 0.0
    %4939 = vmatprep.subr.mxu0 0.0
    %4940 = vmatpush1.msra.mxu0 0.0
    %4941 = vmatprep.subr.mxu0 0.0
    %4942 = vmatpush1.msra.mxu0 0.0
    %4943 = vmatprep.subr.mxu0 0.0
    %4944 = vmatpush1.msra.mxu0 0.0
    %4945 = vmatprep.subr.mxu0 0.0
    %4946 = vmatpush1.msra.mxu0 0.0
    %4947 = vmatprep.subr.mxu0 0.0
    %4948 = vmatpush1.msra.mxu0 0.0
    %4949 = vmatprep.subr.mxu0 0.0
    %4950 = vmatpush1.msra.mxu0 0.0
    %4951 = vmatprep.subr.mxu0 0.0
    %4952 = vmatpush1.msra.mxu0 0.0
    %4953 = vmatprep.subr.mxu0 0.0
    %4954 = vmatpush1.msra.mxu0 0.0
    %4955 = vmatprep.subr.mxu0 0.0
    %4956 = vmatpush1.msra.mxu0 0.0
    %4957 = vmatprep.subr.mxu0 0.0
    %4958 = vmatpush1.msra.mxu0 0.0
    %4959 = vmatprep.subr.mxu0 0.0
    %4960 = vmatpush1.msra.mxu0 0.0
    %4961 = vmatprep.subr.mxu0 0.0
    %4962 = vmatpush1.msra.mxu0 0.0
    %4963 = vmatprep.subr.mxu0 0.0
    %4964 = vmatpush1.msra.mxu0 0.0
    %4965 = vmatprep.subr.mxu0 0.0
    %4966 = vmatpush1.msra.mxu0 0.0
    %4967 = vmatprep.subr.mxu0 0.0
    %4968 = vmatpush1.msra.mxu0 0.0
    %4969 = vmatprep.subr.mxu0 0.0
    %4970 = vmatpush1.msra.mxu0 0.0
    %4971 = vmatprep.subr.mxu0 0.0
    %4972 = vmatpush1.msra.mxu0 0.0
    %4973 = vmatprep.subr.mxu0 0.0
    %4974 = vmatpush1.msra.mxu0 0.0
    %4975 = vmatprep.subr.mxu0 0.0
    %4976 = vmatpush1.msra.mxu0 0.0
    %4977 = vmatprep.subr.mxu0 0.0
    %4978 = vmatpush1.msra.mxu0 0.0
    %4979 = vmatprep.subr.mxu0 0.0
    %4980 = vmatpush1.msra.mxu0 0.0
    %4981 = vmatprep.subr.mxu0 0.0
    %4982 = vmatpush1.msra.mxu0 0.0
    %4983 = vmatprep.subr.mxu0 0.0
    %4984 = vmatpush1.msra.mxu0 0.0
    %4985 = vmatprep.subr.mxu0 0.0
    %4986 = vmatpush1.msra.mxu0 0.0
    %4987 = vmatprep.mubr.f32.mxu0 0.0
    %4988 = vmatmul.mubr.f32.gmra.mrb[0].mxu0 %v4917
    %v4989 = vpop.f32.mrb[0].mxu0
    %v4990 = vadd.f32 0.0, %v4989
    %v4991 = vpop.f32.mrb[0].mxu0
    %4992 = vdwg.mxu0
    %4993 = vmatprep.subr.mxu0 0.0
    %4994 = vmatpush1.msra.mxu0 %v4881
    %4995 = vmatprep.subr.mxu0 0.0
    %4996 = vmatpush1.msra.mxu0 %v4882
    %4997 = vmatprep.subr.mxu0 0.0
    %4998 = vmatpush1.msra.mxu0 %v4883
    %4999 = vmatprep.subr.mxu0 0.0
    %5000 = vmatpush1.msra.mxu0 %v4884
    %5001 = vmatprep.subr.mxu0 0.0
    %5002 = vmatpush1.msra.mxu0 %v4885
    %5003 = vmatprep.subr.mxu0 0.0
    %5004 = vmatpush1.msra.mxu0 %v4886
    %5005 = vmatprep.subr.mxu0 0.0
    %5006 = vmatpush1.msra.mxu0 %v4887
    %5007 = vmatprep.subr.mxu0 0.0
    %5008 = vmatpush1.msra.mxu0 %v4888
    %5009 = vmatprep.subr.mxu0 0.0
    %5010 = vmatpush1.msra.mxu0 %v4889
    %5011 = vmatprep.subr.mxu0 0.0
    %5012 = vmatpush1.msra.mxu0 %v4890
    %5013 = vmatprep.subr.mxu0 0.0
    %5014 = vmatpush1.msra.mxu0 %v4891
    %5015 = vmatprep.subr.mxu0 0.0
    %5016 = vmatpush1.msra.mxu0 %v4892
    %5017 = vmatprep.subr.mxu0 0.0
    %5018 = vmatpush1.msra.mxu0 %v4893
    %5019 = vmatprep.subr.mxu0 0.0
    %5020 = vmatpush1.msra.mxu0 %v4894
    %5021 = vmatprep.subr.mxu0 0.0
    %5022 = vmatpush1.msra.mxu0 %v4895
    %5023 = vmatprep.subr.mxu0 0.0
    %5024 = vmatpush1.msra.mxu0 %v4896
    %5025 = vmatprep.subr.mxu0 0.0
    %5026 = vmatpush1.msra.mxu0 %v4897
    %5027 = vmatprep.subr.mxu0 0.0
    %5028 = vmatpush1.msra.mxu0 %v4898
    %5029 = vmatprep.subr.mxu0 0.0
    %5030 = vmatpush1.msra.mxu0 %v4899
    %5031 = vmatprep.subr.mxu0 0.0
    %5032 = vmatpush1.msra.mxu0 %v4900
    %5033 = vmatprep.subr.mxu0 0.0
    %5034 = vmatpush1.msra.mxu0 %v4901
    %5035 = vmatprep.subr.mxu0 0.0
    %5036 = vmatpush1.msra.mxu0 %v4902
    %5037 = vmatprep.subr.mxu0 0.0
    %5038 = vmatpush1.msra.mxu0 %v4903
    %5039 = vmatprep.subr.mxu0 0.0
    %5040 = vmatpush1.msra.mxu0 %v4904
    %5041 = vmatprep.subr.mxu0 0.0
    %5042 = vmatpush1.msra.mxu0 %v4905
    %5043 = vmatprep.subr.mxu0 0.0
    %5044 = vmatpush1.msra.mxu0 %v4906
    %5045 = vmatprep.subr.mxu0 0.0
    %5046 = vmatpush1.msra.mxu0 %v4907
    %5047 = vmatprep.subr.mxu0 0.0
    %5048 = vmatpush1.msra.mxu0 %v4908
    %5049 = vmatprep.subr.mxu0 0.0
    %5050 = vmatpush1.msra.mxu0 %v4909
    %5051 = vmatprep.subr.mxu0 0.0
    %5052 = vmatpush1.msra.mxu0 %v4910
    %5053 = vmatprep.subr.mxu0 0.0
    %5054 = vmatpush1.msra.mxu0 %v4911
    %5055 = vmatprep.subr.mxu0 0.0
    %5056 = vmatpush1.msra.mxu0 %v4912
    %5057 = vmatprep.mubr.f32.mxu0 %v4880
    %5058 = vmatmul.mubr.f32.gmra.mrb[0].mxu0 %v4879
    %v5059 = vpop.f32.mrb[0].mxu0
    %v5060 = vadd.f32 %v4990, %v5059
    %v5061 = vpop.f32.mrb[0].mxu0
    %5062 = vdwg.mxu0
    %v5063 = vld [vmem:[#allocation12] sm:$0x1]
    %v5065 = vlaneseq
    %v5066 = vshrl.u32 %v5065, 7
    %v5067 = vsub.s32 0, %v5066
    %v5068 = vrot.slane %v5063, %v5067
    %v5070 = vadd.f32 %v5060, %v5068
    %v5071 = vmax.f32 %v5070, 0.0
    %v5072 = vld [vmem:[%s11] sm:$0xff]
    %v5073 = vld [vmem:[%s11 + $0x8] sm:$0xff]
    %v5074 = vld [vmem:[%s11 + $0x10] sm:$0xff]
    %v5075 = vld [vmem:[%s11 + $0x18] sm:$0xff]
    %v5076 = vld [vmem:[%s11 + $0x20] sm:$0xff]
    %v5077 = vld [vmem:[%s11 + $0x28] sm:$0xff]
    %v5078 = vld [vmem:[%s11 + $0x30] sm:$0xff]
    %v5079 = vld [vmem:[%s11 + $0x38] sm:$0xff]
    %v5080 = vld [vmem:[%s11 + $0x40] sm:$0xff]
    %v5081 = vld [vmem:[%s11 + $0x48] sm:$0xff]
    %v5082 = vld [vmem:[%s11 + $0x50] sm:$0xff]
    %v5083 = vld [vmem:[%s11 + $0x58] sm:$0xff]
    %v5084 = vld [vmem:[%s11 + $0x60] sm:$0xff]
    %v5085 = vld [vmem:[%s11 + $0x68] sm:$0xff]
    %v5086 = vld [vmem:[%s11 + $0x70] sm:$0xff]
    %v5087 = vld [vmem:[%s11 + $0x78] sm:$0xff]
    %v5088 = vld [vmem:[#allocation13] sm:$0x1]
    %v5090 = vlaneseq
    %v5091 = vshrl.u32 %v5090, 7
    %v5092 = vsub.s32 0, %v5091
    %v5093 = vrot.slane %v5088, %v5092
    %5095 = vmatprep.subr.mxu0 0.0
    %5096 = vmatpush1.msra.mxu0 %v5072
    %5097 = vmatprep.subr.mxu0 0.0
    %5098 = vmatpush1.msra.mxu0 %v5073
    %5099 = vmatprep.subr.mxu0 0.0
    %5100 = vmatpush1.msra.mxu0 %v5074
    %5101 = vmatprep.subr.mxu0 0.0
    %5102 = vmatpush1.msra.mxu0 %v5075
    %5103 = vmatprep.subr.mxu0 0.0
    %5104 = vmatpush1.msra.mxu0 %v5076
    %5105 = vmatprep.subr.mxu0 0.0
    %5106 = vmatpush1.msra.mxu0 %v5077
    %5107 = vmatprep.subr.mxu0 0.0
    %5108 = vmatpush1.msra.mxu0 %v5078
    %5109 = vmatprep.subr.mxu0 0.0
    %5110 = vmatpush1.msra.mxu0 %v5079
    %5111 = vmatprep.subr.mxu0 0.0
    %5112 = vmatpush1.msra.mxu0 %v5080
    %5113 = vmatprep.subr.mxu0 0.0
    %5114 = vmatpush1.msra.mxu0 %v5081
    %5115 = vmatprep.subr.mxu0 0.0
    %5116 = vmatpush1.msra.mxu0 %v5082
    %5117 = vmatprep.subr.mxu0 0.0
    %5118 = vmatpush1.msra.mxu0 %v5083
    %5119 = vmatprep.subr.mxu0 0.0
    %5120 = vmatpush1.msra.mxu0 %v5084
    %5121 = vmatprep.subr.mxu0 0.0
    %5122 = vmatpush1.msra.mxu0 %v5085
    %5123 = vmatprep.subr.mxu0 0.0
    %5124 = vmatpush1.msra.mxu0 %v5086
    %5125 = vmatprep.subr.mxu0 0.0
    %5126 = vmatpush1.msra.mxu0 %v5087
    %5127 = vmatprep.subr.mxu0 0.0
    %5128 = vmatpush1.msra.mxu0 0.0
    %5129 = vmatprep.subr.mxu0 0.0
    %5130 = vmatpush1.msra.mxu0 0.0
    %5131 = vmatprep.subr.mxu0 0.0
    %5132 = vmatpush1.msra.mxu0 0.0
    %5133 = vmatprep.subr.mxu0 0.0
    %5134 = vmatpush1.msra.mxu0 0.0
    %5135 = vmatprep.subr.mxu0 0.0
    %5136 = vmatpush1.msra.mxu0 0.0
    %5137 = vmatprep.subr.mxu0 0.0
    %5138 = vmatpush1.msra.mxu0 0.0
    %5139 = vmatprep.subr.mxu0 0.0
    %5140 = vmatpush1.msra.mxu0 0.0
    %5141 = vmatprep.subr.mxu0 0.0
    %5142 = vmatpush1.msra.mxu0 0.0
    %5143 = vmatprep.subr.mxu0 0.0
    %5144 = vmatpush1.msra.mxu0 0.0
    %5145 = vmatprep.subr.mxu0 0.0
    %5146 = vmatpush1.msra.mxu0 0.0
    %5147 = vmatprep.subr.mxu0 0.0
    %5148 = vmatpush1.msra.mxu0 0.0
    %5149 = vmatprep.subr.mxu0 0.0
    %5150 = vmatpush1.msra.mxu0 0.0
    %5151 = vmatprep.subr.mxu0 0.0
    %5152 = vmatpush1.msra.mxu0 0.0
    %5153 = vmatprep.subr.mxu0 0.0
    %5154 = vmatpush1.msra.mxu0 0.0
    %5155 = vmatprep.subr.mxu0 0.0
    %5156 = vmatpush1.msra.mxu0 0.0
    %5157 = vmatprep.subr.mxu0 0.0
    %5158 = vmatpush1.msra.mxu0 0.0
    %5159 = vmatprep.mubr.f32.mxu0 0.0
    %5160 = vmatmul.mubr.f32.gmra.mrb[0].mxu0 %v5071
    %v5161 = vpop.f32.mrb[0].mxu0
    %v5162 = vadd.f32 %v5093, %v5161
    %v5163 = vpop.f32.mrb[0].mxu0
    %5164 = vdwg.mxu0
    %vm5165 = vcmp.eq.s32.totalorder %v154, 0
    %v5166 = vxor.u32 %v5162, 2147483648
    %v5167 = vmul.f32 %v5166, 1.442695
    %v5168 = vpow.pop %v5167
    %v5169 = vadd.f32 %v5168, 1.0
    %v5170 = vrcp.pop %v5169
    %v5171 = vmul.f32 1.0, %v5170
    %v5172 = vtanh.pop %v5162
    %v5173 = vsel %vm5165, %v5171, %v5172
    %vm5174 = vcmask 9216
    %5175 = vst.msk [vmem:[#allocation15] sm:$0x3] %vm5174, %v5173
    // Predicated region
    $region74: #{actor_net_forward.1} parent=1 // pred_check
      _
    $region75: #{actor_net_forward.1} parent=1 // pred_check_branch
      %5177 = sbr.rel (0) target = $region77
    $region76: #{actor_net_forward.1} parent=1 // pred_region
      %s5179 = ssub.s32 32, 32
      %5180 = vsyncadd [#allocation6], %s5179
      %s5182 = sshll.u32 [#allocation15], 4
      %s5183 = int_to_ptr.vmem [resolvable:$true] %s5182
      %5185 = dma.vmem_to_hbm [thread:$0]  %s5183, 32, %s13, [#allocation6]
    $region77: #{actor_net_forward.1} parent=1 // pred_fallthru
      _
    // Predicated region
    $region78: #{actor_net_forward.1} parent=1 // pred_check
      _
    $region79: #{actor_net_forward.1} parent=1 // pred_check_branch
      %5187 = sbr.rel (0) target = $region81
    $region80: #{actor_net_forward.1} parent=1 // pred_region
      %5188 = dma.done [#allocation6], 32
    $region81: #{actor_net_forward.1} parent=1 // pred_fallthru
      _
    %5189 = vsyncpa [#allocation5], 1
    %5190 = vsyncpa [#allocation8], 1
    %5191 = vsyncpa [#allocation11], 1
    %5192 = vsyncpa [#allocation14], 1
    %5193 = vsyncpa [#allocation6], 1
  %5194 = vsyncmov [#allocation3]
  %s5195 = vpop.sfrf %5194
  %p5196 = scmp.eq.s32.totalorder %s5195, 0
  %p5197 = pneg %p5196
  %5199 = shalt.err (%p5197)

</llo_original>
